<compile_context>
chip_gen: v7x
topology: tpu7x:2x2x1
jax: 0.10.0
libtpu: 0.0.40
codegen_flags: <defaults>
</compile_context>

<pallas_src>
import math
import jax
import jax.numpy as jnp
from jax import lax
from jax.experimental import pallas as pl
from jax.experimental.pallas import tpu as pltpu

HIDDEN = 768
N_HEAD = 12
HEAD_DIM = HIDDEN // N_HEAD          # 64
N_PAIR = N_HEAD // 2                 # 6 head-pairs -> 128-lane pv stores
INNER = 4 * HIDDEN                   # 3072
MLP_KT = 1024                        # in-kernel inner-dim chunk (3 chunks)
LN_EPS = 1e-5
NEG_INF = -1e30                      # additive causal mask value (prob -> 0)
MASK_VALUE = float(jnp.finfo(jnp.float32).min)   # reference parity (HF GPT-2)
INV_ATTN_SCALE = 1.0 / math.sqrt(HEAD_DIM)
GELU_C = math.sqrt(2.0 / math.pi)


def _layernorm(x, g, b):
    mu = jnp.mean(x, axis=-1, keepdims=True)
    var = jnp.mean((x - mu) ** 2, axis=-1, keepdims=True)
    return (x - mu) * lax.rsqrt(var + LN_EPS) * g + b


def _gelu_new(x):
    return 0.5 * x * (1.0 + jnp.tanh(GELU_C * (x + 0.044715 * x * x * x)))


# ---------- Kernel 1: q,k,v = split(LN1(x) @ Wqkv + b); q pre-scaled; bf16 ----------
def qkv_kernel(x_ref, g_ref, b_ref, wq_ref, wk_ref, wv_ref,
               bq_ref, bk_ref, bv_ref, q_ref, k_ref, v_ref):
    z = _layernorm(x_ref[...], g_ref[...], b_ref[...]).astype(jnp.bfloat16)
    # Three (TS,768)@(768,768) dots so no (TS,2304) f32 intermediate stays live.
    q = jnp.dot(z, wq_ref[...], preferred_element_type=jnp.float32) + bq_ref[...]
    q_ref[...] = (q * jnp.float32(INV_ATTN_SCALE)).astype(jnp.bfloat16)
    k = jnp.dot(z, wk_ref[...], preferred_element_type=jnp.float32) + bk_ref[...]
    k_ref[...] = k.astype(jnp.bfloat16)
    v = jnp.dot(z, wv_ref[...], preferred_element_type=jnp.float32) + bv_ref[...]
    v_ref[...] = v.astype(jnp.bfloat16)


# ---------- Kernel 2: h1 = x + softmax(causal(q k^T)) v @ Wproj + bproj ----------
def attn_kernel(x_ref, q_ref, k_ref, v_ref, wproj_ref, bproj_ref, o_ref, pv_scr):
    TQ = x_ref.shape[0]
    S = k_ref.shape[0]

    # Single additive causal mask (one select per kernel call, not per head).
    q_off = pl.program_id(1) * TQ
    rows = lax.broadcasted_iota(jnp.int32, (TQ, S), 0) + q_off
    cols = lax.broadcasted_iota(jnp.int32, (TQ, S), 1)
    mask_add = jnp.where(rows >= cols, jnp.float32(0.0), jnp.float32(NEG_INF))

    # Per head-pair: two K=64 attention heads, one 128-lane-dense scratch store.
    for hp in range(N_PAIR):
        pv_pair = []
        for sub in range(2):
            lo = (2 * hp + sub) * HEAD_DIM
            qh = q_ref[:, lo:lo + HEAD_DIM]          # (TQ, 64) bf16, pre-scaled
            kh = k_ref[:, lo:lo + HEAD_DIM]          # (S, 64)  bf16
            vh = v_ref[:, lo:lo + HEAD_DIM]          # (S, 64)  bf16
            s = lax.dot_general(qh, kh, (((1,), (1,)), ((), ())),
                                preferred_element_type=jnp.float32) + mask_add
            m = jnp.max(s, axis=-1, keepdims=True)
            e = jnp.exp(s - m)
            denom = jnp.sum(e, axis=-1, keepdims=True)
            pv = jnp.dot(e.astype(jnp.bfloat16), vh,
                         preferred_element_type=jnp.float32)   # (TQ, 64) f32
            # Deferred normalization: scale the small pv tile, not the (TQ,S) probs.
            pv_pair.append(pv * pl.reciprocal(denom, approx=True))
        lo2 = 2 * hp * HEAD_DIM
        pv_scr[:, lo2:lo2 + 2 * HEAD_DIM] = (
            jnp.concatenate(pv_pair, axis=-1).astype(jnp.bfloat16))

    # Single fused output projection (K=768) + residual + proj bias.
    o_ref[...] = (x_ref[...] + bproj_ref[...] +
                  jnp.dot(pv_scr[...], wproj_ref[...],
                          preferred_element_type=jnp.float32))


# ---------- Kernel 3: out = h1 + geluNew(LN2(h1)@Wfc+bfc) @ Wproj + bproj ----------
def mlp_kernel(h_ref, g_ref, b_ref, wfc_ref, bfc_ref, wproj_ref, bproj_ref,
               o_ref, z_scr):
    h = h_ref[...]                                                # (TS, D) f32
    z_scr[...] = _layernorm(h, g_ref[...], b_ref[...]).astype(jnp.bfloat16)
    o_ref[...] = h + bproj_ref[...]                               # residual + bias
    # Walk the 3072-wide inner dim in static 1024 chunks; weights are VMEM-resident.
    for ki in range(INNER // MLP_KT):
        lo = ki * MLP_KT
        y = jnp.dot(z_scr[...], wfc_ref[:, lo:lo + MLP_KT],
                    preferred_element_type=jnp.float32) + bfc_ref[:, lo:lo + MLP_KT]
        a = _gelu_new(y).astype(jnp.bfloat16)
        o_ref[...] += jnp.dot(a, wproj_ref[lo:lo + MLP_KT, :],
                              preferred_element_type=jnp.float32)


# ---------------- wrapper ----------------
def _tpu_vmem_capacity():
    try:
        return int(pltpu.get_tpu_info().vmem_capacity_bytes)
    except Exception:
        return 64 * 1024 * 1024          # conservative (v7x) fallback


def _seq_tile(S, vmem_cap):
    # Bigger tiles on 128-MiB-VMEM generations (v5e/v6e), 512 cap on v7x.
    cands = (1024, 512, 256, 128) if vmem_cap >= 100 * 1024 * 1024 else (512, 256, 128)
    for ts in cands:
        if ts <= S and S % ts == 0:
            return ts
    return S


def gpt2_block(x, p):
    B, S, D = x.shape
    assert D == HIDDEN

    cap = _tpu_vmem_capacity()
    vlim = max(32 * 1024 * 1024, (cap * 3) // 4)
    TS = _seq_tile(S, cap)               # seq tile for QKV / MLP kernels
    TQ = min(TS, 512)                    # query tile for attention
    if S % TQ != 0:
        TQ = TS

    bf16 = jnp.bfloat16
    wqkv = p["wqkv"].astype(bf16)
    wq, wk, wv = wqkv[:, :D], wqkv[:, D:2 * D], wqkv[:, 2 * D:]
    bqkv = p["bqkv"]
    bq, bk, bv = bqkv[:, :D], bqkv[:, D:2 * D], bqkv[:, 2 * D:]
    wattn_proj = p["wattn_proj"].astype(bf16)
    wfc = p["wfc"].astype(bf16)
    wmlp_proj = p["wmlp_proj"].astype(bf16)

    def const2(shape):                    # weight/bias: resident, DMA'd once
        return pl.BlockSpec(shape, lambda b, s: (0, 0))

    # ---- kernel 1: LN1 + QKV projection (q pre-scaled, bf16 outputs) ----
    q, k, v = pl.pallas_call(
        qkv_kernel,
        out_shape=(jax.ShapeDtypeStruct((B, S, D), bf16),
                   jax.ShapeDtypeStruct((B, S, D), bf16),
                   jax.ShapeDtypeStruct((B, S, D), bf16)),
        grid=(B, S // TS),
        in_specs=[
            pl.BlockSpec((None, TS, D), lambda b, s: (b, s, 0)),
            const2((1, D)), const2((1, D)),
            const2((D, D)), const2((D, D)), const2((D, D)),
            const2((1, D)), const2((1, D)), const2((1, D)),
        ],
        out_specs=(pl.BlockSpec((None, TS, D), lambda b, s: (b, s, 0)),
                   pl.BlockSpec((None, TS, D), lambda b, s: (b, s, 0)),
                   pl.BlockSpec((None, TS, D), lambda b, s: (b, s, 0))),
        compiler_params=pltpu.CompilerParams(
            dimension_semantics=("parallel", "parallel"),
            vmem_limit_bytes=vlim),
    )(x, p["ln1_g"], p["ln1_b"], wq, wk, wv, bq, bk, bv)

    # ---- kernel 2: query-tiled causal attention + output proj + residual ----
    h1 = pl.pallas_call(
        attn_kernel,
        out_shape=jax.ShapeDtypeStruct((B, S, D), x.dtype),
        grid=(B, S // TQ),
        in_specs=[
            pl.BlockSpec((None, TQ, D), lambda b, qi: (b, qi, 0)),   # x (residual)
            pl.BlockSpec((None, TQ, D), lambda b, qi: (b, qi, 0)),   # q tile
            pl.BlockSpec((None, S, D), lambda b, qi: (b, 0, 0)),     # k (full seq)
            pl.BlockSpec((None, S, D), lambda b, qi: (b, 0, 0)),     # v (full seq)
            const2((D, D)),                                          # Wproj
            const2((1, D)),                                          # bproj
        ],
        out_specs=pl.BlockSpec((None, TQ, D), lambda b, qi: (b, qi, 0)),
        scratch_shapes=[pltpu.VMEM((TQ, HIDDEN), jnp.bfloat16)],     # pv scratch
        compiler_params=pltpu.CompilerParams(
            dimension_semantics=("parallel", "parallel"),
            vmem_limit_bytes=vlim),
    )(x, q, k, v, wattn_proj, p["battn_proj"])

    # ---- kernel 3: fused MLP with VMEM-resident weights ----
    out = pl.pallas_call(
        mlp_kernel,
        out_shape=jax.ShapeDtypeStruct((B, S, D), x.dtype),
        grid=(B, S // TS),
        in_specs=[
            pl.BlockSpec((None, TS, D), lambda b, s: (b, s, 0)),
            const2((1, D)), const2((1, D)),
            const2((D, INNER)), const2((1, INNER)),
            const2((INNER, D)), const2((1, D)),
        ],
        out_specs=pl.BlockSpec((None, TS, D), lambda b, s: (b, s, 0)),
        scratch_shapes=[pltpu.VMEM((TS, HIDDEN), jnp.bfloat16)],     # LN2 cache
        compiler_params=pltpu.CompilerParams(
            dimension_semantics=("parallel", "parallel"),
            vmem_limit_bytes=vlim),
    )(h1, p["ln2_g"], p["ln2_b"], wfc, p["bfc"], wmlp_proj, p["bmlp_proj"])

    return out


# ---------------- pure-JAX f32 reference (numerical sanity) ----------------
def reference_block(x, p):
    def ln(v, g, b):
        mu = v.mean(-1, keepdims=True)
        var = ((v - mu) ** 2).mean(-1, keepdims=True)
        return (v - mu) / jnp.sqrt(var + LN_EPS) * g + b

    B, S, D = x.shape
    h = ln(x, p["ln1_g"][0], p["ln1_b"][0])
    qkv = h @ p["wqkv"] + p["bqkv"][0]
    q, k, v = jnp.split(qkv, 3, axis=-1)
    q = q.reshape(B, S, N_HEAD, HEAD_DIM).transpose(0, 2, 1, 3)
    k = k.reshape(B, S, N_HEAD, HEAD_DIM).transpose(0, 2, 1, 3)
    v = v.reshape(B, S, N_HEAD, HEAD_DIM).transpose(0, 2, 1, 3)
    w = jnp.einsum("bhqd,bhkd->bhqk", q, k) / math.sqrt(HEAD_DIM)
    causal = jnp.tril(jnp.ones((S, S), dtype=bool))
    w = jnp.where(causal[None, None], w, MASK_VALUE)
    w = jax.nn.softmax(w, axis=-1)
    a = jnp.einsum("bhqk,bhkd->bhqd", w, v).transpose(0, 2, 1, 3).reshape(B, S, D)
    attn_out = a @ p["wattn_proj"] + p["battn_proj"][0]
    h1 = attn_out + x

    z = ln(h1, p["ln2_g"][0], p["ln2_b"][0])
    y = z @ p["wfc"] + p["bfc"][0]
    y = 0.5 * y * (1.0 + jnp.tanh(GELU_C * (y + 0.044715 * y ** 3)))
    return h1 + y @ p["wmlp_proj"] + p["bmlp_proj"][0]


if __name__ == "__main__":
    B, S = 2, 128
    key = jax.random.PRNGKey(0)
    ks = jax.random.split(key, 9)

    def rnd(k, shape, scale=0.02):
        return (scale * jax.random.normal(k, shape)).astype(jnp.float32)

    params = {
        # LayerNorms init like nn.LayerNorm (weight=1, bias=0)
        "ln1_g": jnp.ones((1, HIDDEN), jnp.float32),
        "ln1_b": jnp.zeros((1, HIDDEN), jnp.float32),
        "ln2_g": jnp.ones((1, HIDDEN), jnp.float32),
        "ln2_b": jnp.zeros((1, HIDDEN), jnp.float32),
        # GPT-2 Conv1D weights ~ N(0, 0.02); biases given small random values
        "wqkv": rnd(ks[0], (HIDDEN, 3 * HIDDEN)),
        "bqkv": rnd(ks[1], (1, 3 * HIDDEN)),
        "wattn_proj": rnd(ks[2], (HIDDEN, HIDDEN)),
        "battn_proj": rnd(ks[3], (1, HIDDEN)),
        "wfc": rnd(ks[4], (HIDDEN, INNER)),
        "bfc": rnd(ks[5], (1, INNER)),
        "wmlp_proj": rnd(ks[6], (INNER, HIDDEN)),
        "bmlp_proj": rnd(ks[7], (1, HIDDEN)),
    }
    x = jax.random.normal(ks[8], (B, S, HIDDEN), dtype=jnp.float32)

    out = gpt2_block(x, params)
    out = jax.block_until_ready(out)
    assert out.shape == (B, S, HIDDEN) and out.dtype == jnp.float32

    ref = reference_block(x, params)
    err = float(jnp.max(jnp.abs(out - ref)))
    # bf16 MXU operands (f32 accumulation / LN / softmax / residuals) -> loose tol
    if err > 6e-2:
        raise SystemExit(f"mismatch vs reference: max abs err = {err}")
    print("KERNEL_OK")
</pallas_src>

<mosaic_0001>
module attributes {stable_mosaic.version = 11 : i64} {
  func.func @qkv_kernel(%arg0: i32, %arg1: i32, %arg2: memref<1x128x768xf32, #tpu.memory_space<vmem>>, %arg3: memref<1x768xf32, #tpu.memory_space<vmem>>, %arg4: memref<1x768xf32, #tpu.memory_space<vmem>>, %arg5: memref<768x768xbf16, #tpu.memory_space<vmem>>, %arg6: memref<768x768xbf16, #tpu.memory_space<vmem>>, %arg7: memref<768x768xbf16, #tpu.memory_space<vmem>>, %arg8: memref<1x768xf32, #tpu.memory_space<vmem>>, %arg9: memref<1x768xf32, #tpu.memory_space<vmem>>, %arg10: memref<1x768xf32, #tpu.memory_space<vmem>>, %arg11: memref<1x128x768xbf16, #tpu.memory_space<vmem>>, %arg12: memref<1x128x768xbf16, #tpu.memory_space<vmem>>, %arg13: memref<1x128x768xbf16, #tpu.memory_space<vmem>>) attributes {dimension_semantics = [#tpu.dimension_semantics<parallel>, #tpu.dimension_semantics<parallel>], iteration_bounds = array<i64: 2, 1>, scalar_prefetch = 0 : i64, scratch_operands = 0 : i64, tpu.core_type = #tpu.core_type<tc>, window_params = [{transform_indices = @transform_0, window_bounds = array<i64: 1, 128, 768>}, {pipeline_mode = #tpu.pipeline_mode<synchronous>, transform_indices = @transform_1, window_bounds = array<i64: 1, 768>}, {pipeline_mode = #tpu.pipeline_mode<synchronous>, transform_indices = @transform_2, window_bounds = array<i64: 1, 768>}, {pipeline_mode = #tpu.pipeline_mode<synchronous>, transform_indices = @transform_3, window_bounds = array<i64: 768, 768>}, {pipeline_mode = #tpu.pipeline_mode<synchronous>, transform_indices = @transform_4, window_bounds = array<i64: 768, 768>}, {pipeline_mode = #tpu.pipeline_mode<synchronous>, transform_indices = @transform_5, window_bounds = array<i64: 768, 768>}, {pipeline_mode = #tpu.pipeline_mode<synchronous>, transform_indices = @transform_6, window_bounds = array<i64: 1, 768>}, {pipeline_mode = #tpu.pipeline_mode<synchronous>, transform_indices = @transform_7, window_bounds = array<i64: 1, 768>}, {pipeline_mode = #tpu.pipeline_mode<synchronous>, transform_indices = @transform_8, window_bounds = array<i64: 1, 768>}, {transform_indices = @transform_9, window_bounds = array<i64: 1, 128, 768>}, {transform_indices = @transform_10, window_bounds = array<i64: 1, 128, 768>}, {transform_indices = @transform_11, window_bounds = array<i64: 1, 128, 768>}]} {
    %c0 = arith.constant 0 : index
    %c0_0 = arith.constant 0 : index
    %c0_1 = arith.constant 0 : index
    %0 = vector.load %arg2[%c0, %c0_0, %c0_1] : memref<1x128x768xf32, #tpu.memory_space<vmem>>, vector<1x128x768xf32>
    %1 = vector.shape_cast %0 : vector<1x128x768xf32> to vector<128x768xf32>
    %c0_2 = arith.constant 0 : index
    %c0_3 = arith.constant 0 : index
    %2 = vector.load %arg3[%c0_2, %c0_3] : memref<1x768xf32, #tpu.memory_space<vmem>>, vector<1x768xf32>
    %c0_4 = arith.constant 0 : index
    %c0_5 = arith.constant 0 : index
    %3 = vector.load %arg4[%c0_4, %c0_5] : memref<1x768xf32, #tpu.memory_space<vmem>>, vector<1x768xf32>
    %cst = arith.constant dense<0.000000e+00> : vector<128xf32>
    %4 = vector.multi_reduction <add>, %1, %cst [1] : vector<128x768xf32> to vector<128xf32>
    %5 = vector.shape_cast %4 : vector<128xf32> to vector<128x1xf32>
    %cst_6 = arith.constant 7.680000e+02 : f32
    %6 = vector.broadcast %cst_6 : f32 to vector<128x1xf32>
    %7 = arith.divf %5, %6 : vector<128x1xf32>
    %8 = vector.broadcast %7 : vector<128x1xf32> to vector<128x768xf32>
    %9 = arith.subf %1, %8 : vector<128x768xf32>
    %10 = arith.mulf %9, %9 : vector<128x768xf32>
    %cst_7 = arith.constant dense<0.000000e+00> : vector<128xf32>
    %11 = vector.multi_reduction <add>, %10, %cst_7 [1] : vector<128x768xf32> to vector<128xf32>
    %12 = vector.shape_cast %11 : vector<128xf32> to vector<128x1xf32>
    %cst_8 = arith.constant 7.680000e+02 : f32
    %13 = vector.broadcast %cst_8 : f32 to vector<128x1xf32>
    %14 = arith.divf %12, %13 : vector<128x1xf32>
    %15 = vector.broadcast %7 : vector<128x1xf32> to vector<128x768xf32>
    %16 = arith.subf %1, %15 : vector<128x768xf32>
    %cst_9 = arith.constant 9.99999974E-6 : f32
    %17 = vector.broadcast %cst_9 : f32 to vector<128x1xf32>
    %18 = arith.addf %14, %17 : vector<128x1xf32>
    %19 = math.rsqrt %18 : vector<128x1xf32>
    %20 = vector.broadcast %19 : vector<128x1xf32> to vector<128x768xf32>
    %21 = arith.mulf %16, %20 : vector<128x768xf32>
    %22 = vector.broadcast %2 : vector<1x768xf32> to vector<128x768xf32>
    %23 = arith.mulf %21, %22 : vector<128x768xf32>
    %24 = vector.broadcast %3 : vector<1x768xf32> to vector<128x768xf32>
    %25 = arith.addf %23, %24 : vector<128x768xf32>
    %26 = arith.truncf %25 : vector<128x768xf32> to vector<128x768xbf16>
    %c0_10 = arith.constant 0 : index
    %c0_11 = arith.constant 0 : index
    %27 = vector.load %arg5[%c0_10, %c0_11] : memref<768x768xbf16, #tpu.memory_space<vmem>>, vector<768x768xbf16>
    %cst_12 = arith.constant dense<0.000000e+00> : vector<128x768xf32>
    %28 = tpu.matmul %26, %27, %cst_12 {dimension_numbers = #tpu.dot_dimension_numbers<[1], [0], [0], [1], [0, 0, 1, 1], [], []>} : vector<128x768xbf16>, vector<768x768xbf16>, vector<128x768xf32> -> vector<128x768xf32>
    %c0_13 = arith.constant 0 : index
    %c0_14 = arith.constant 0 : index
    %29 = vector.load %arg8[%c0_13, %c0_14] : memref<1x768xf32, #tpu.memory_space<vmem>>, vector<1x768xf32>
    %30 = vector.broadcast %29 : vector<1x768xf32> to vector<128x768xf32>
    %31 = arith.addf %28, %30 : vector<128x768xf32>
    %cst_15 = arith.constant 1.250000e-01 : f32
    %32 = vector.broadcast %cst_15 : f32 to vector<128x768xf32>
    %33 = arith.mulf %31, %32 : vector<128x768xf32>
    %34 = arith.truncf %33 : vector<128x768xf32> to vector<128x768xbf16>
    %c0_16 = arith.constant 0 : index
    %c0_17 = arith.constant 0 : index
    %c0_18 = arith.constant 0 : index
    %35 = vector.load %arg11[%c0_16, %c0_17, %c0_18] : memref<1x128x768xbf16, #tpu.memory_space<vmem>>, vector<1x128x768xbf16>
    %36 = vector.shape_cast %35 : vector<1x128x768xbf16> to vector<128x768xbf16>
    %37 = vector.shape_cast %34 : vector<128x768xbf16> to vector<1x128x768xbf16>
    tpu.vector_store %arg11[%c0_16, %c0_17, %c0_18], %37 {strides = array<i32>} : memref<1x128x768xbf16, #tpu.memory_space<vmem>>, vector<1x128x768xbf16>,
    %c0_19 = arith.constant 0 : index
    %c0_20 = arith.constant 0 : index
    %38 = vector.load %arg6[%c0_19, %c0_20] : memref<768x768xbf16, #tpu.memory_space<vmem>>, vector<768x768xbf16>
    %cst_21 = arith.constant dense<0.000000e+00> : vector<128x768xf32>
    %39 = tpu.matmul %26, %38, %cst_21 {dimension_numbers = #tpu.dot_dimension_numbers<[1], [0], [0], [1], [0, 0, 1, 1], [], []>} : vector<128x768xbf16>, vector<768x768xbf16>, vector<128x768xf32> -> vector<128x768xf32>
    %c0_22 = arith.constant 0 : index
    %c0_23 = arith.constant 0 : index
    %40 = vector.load %arg9[%c0_22, %c0_23] : memref<1x768xf32, #tpu.memory_space<vmem>>, vector<1x768xf32>
    %41 = vector.broadcast %40 : vector<1x768xf32> to vector<128x768xf32>
    %42 = arith.addf %39, %41 : vector<128x768xf32>
    %43 = arith.truncf %42 : vector<128x768xf32> to vector<128x768xbf16>
    %c0_24 = arith.constant 0 : index
    %c0_25 = arith.constant 0 : index
    %c0_26 = arith.constant 0 : index
    %44 = vector.load %arg12[%c0_24, %c0_25, %c0_26] : memref<1x128x768xbf16, #tpu.memory_space<vmem>>, vector<1x128x768xbf16>
    %45 = vector.shape_cast %44 : vector<1x128x768xbf16> to vector<128x768xbf16>
    %46 = vector.shape_cast %43 : vector<128x768xbf16> to vector<1x128x768xbf16>
    tpu.vector_store %arg12[%c0_24, %c0_25, %c0_26], %46 {strides = array<i32>} : memref<1x128x768xbf16, #tpu.memory_space<vmem>>, vector<1x128x768xbf16>,
    %c0_27 = arith.constant 0 : index
    %c0_28 = arith.constant 0 : index
    %47 = vector.load %arg7[%c0_27, %c0_28] : memref<768x768xbf16, #tpu.memory_space<vmem>>, vector<768x768xbf16>
    %cst_29 = arith.constant dense<0.000000e+00> : vector<128x768xf32>
    %48 = tpu.matmul %26, %47, %cst_29 {dimension_numbers = #tpu.dot_dimension_numbers<[1], [0], [0], [1], [0, 0, 1, 1], [], []>} : vector<128x768xbf16>, vector<768x768xbf16>, vector<128x768xf32> -> vector<128x768xf32>
    %c0_30 = arith.constant 0 : index
    %c0_31 = arith.constant 0 : index
    %49 = vector.load %arg10[%c0_30, %c0_31] : memref<1x768xf32, #tpu.memory_space<vmem>>, vector<1x768xf32>
    %50 = vector.broadcast %49 : vector<1x768xf32> to vector<128x768xf32>
    %51 = arith.addf %48, %50 : vector<128x768xf32>
    %52 = arith.truncf %51 : vector<128x768xf32> to vector<128x768xbf16>
    %c0_32 = arith.constant 0 : index
    %c0_33 = arith.constant 0 : index
    %c0_34 = arith.constant 0 : index
    %53 = vector.load %arg13[%c0_32, %c0_33, %c0_34] : memref<1x128x768xbf16, #tpu.memory_space<vmem>>, vector<1x128x768xbf16>
    %54 = vector.shape_cast %53 : vector<1x128x768xbf16> to vector<128x768xbf16>
    %55 = vector.shape_cast %52 : vector<128x768xbf16> to vector<1x128x768xbf16>
    tpu.vector_store %arg13[%c0_32, %c0_33, %c0_34], %55 {strides = array<i32>} : memref<1x128x768xbf16, #tpu.memory_space<vmem>>, vector<1x128x768xbf16>,
    return
  }
  func.func @transform_0(%arg0: i32, %arg1: i32) -> (i32, i32, i32) {
    %c0_i32 = arith.constant 0 : i32
    %c0_i32_0 = arith.constant 0 : i32
    return %arg0, %arg1, %c0_i32 : i32, i32, i32
  }
  func.func @transform_1(%arg0: i32, %arg1: i32) -> (i32, i32) {
    %c0_i32 = arith.constant 0 : i32
    %c0_i32_0 = arith.constant 0 : i32
    %c0_i32_1 = arith.constant 0 : i32
    return %c0_i32, %c0_i32_0 : i32, i32
  }
  func.func @transform_2(%arg0: i32, %arg1: i32) -> (i32, i32) {
    %c0_i32 = arith.constant 0 : i32
    %c0_i32_0 = arith.constant 0 : i32
    %c0_i32_1 = arith.constant 0 : i32
    return %c0_i32, %c0_i32_0 : i32, i32
  }
  func.func @transform_3(%arg0: i32, %arg1: i32) -> (i32, i32) {
    %c0_i32 = arith.constant 0 : i32
    %c0_i32_0 = arith.constant 0 : i32
    %c0_i32_1 = arith.constant 0 : i32
    return %c0_i32, %c0_i32_0 : i32, i32
  }
  func.func @transform_4(%arg0: i32, %arg1: i32) -> (i32, i32) {
    %c0_i32 = arith.constant 0 : i32
    %c0_i32_0 = arith.constant 0 : i32
    %c0_i32_1 = arith.constant 0 : i32
    return %c0_i32, %c0_i32_0 : i32, i32
  }
  func.func @transform_5(%arg0: i32, %arg1: i32) -> (i32, i32) {
    %c0_i32 = arith.constant 0 : i32
    %c0_i32_0 = arith.constant 0 : i32
    %c0_i32_1 = arith.constant 0 : i32
    return %c0_i32, %c0_i32_0 : i32, i32
  }
  func.func @transform_6(%arg0: i32, %arg1: i32) -> (i32, i32) {
    %c0_i32 = arith.constant 0 : i32
    %c0_i32_0 = arith.constant 0 : i32
    %c0_i32_1 = arith.constant 0 : i32
    return %c0_i32, %c0_i32_0 : i32, i32
  }
  func.func @transform_7(%arg0: i32, %arg1: i32) -> (i32, i32) {
    %c0_i32 = arith.constant 0 : i32
    %c0_i32_0 = arith.constant 0 : i32
    %c0_i32_1 = arith.constant 0 : i32
    return %c0_i32, %c0_i32_0 : i32, i32
  }
  func.func @transform_8(%arg0: i32, %arg1: i32) -> (i32, i32) {
    %c0_i32 = arith.constant 0 : i32
    %c0_i32_0 = arith.constant 0 : i32
    %c0_i32_1 = arith.constant 0 : i32
    return %c0_i32, %c0_i32_0 : i32, i32
  }
  func.func @transform_9(%arg0: i32, %arg1: i32) -> (i32, i32, i32) {
    %c0_i32 = arith.constant 0 : i32
    %c0_i32_0 = arith.constant 0 : i32
    return %arg0, %arg1, %c0_i32 : i32, i32, i32
  }
  func.func @transform_10(%arg0: i32, %arg1: i32) -> (i32, i32, i32) {
    %c0_i32 = arith.constant 0 : i32
    %c0_i32_0 = arith.constant 0 : i32
    return %arg0, %arg1, %c0_i32 : i32, i32, i32
  }
  func.func @transform_11(%arg0: i32, %arg1: i32) -> (i32, i32, i32) {
    %c0_i32 = arith.constant 0 : i32
    %c0_i32_0 = arith.constant 0 : i32
    return %arg0, %arg1, %c0_i32 : i32, i32, i32
  }
}

</mosaic_0001>

<llo_original>
// kernel: tpu_custom_call.1
$region0: #{tpu_custom_call.1}
  #allocation0 [shape = 'u32[]', space=smem, size = 0x4, offset = 0x4, fixed_abs, tag = 'smem constant byte address 0x4 - core index']
  #allocation1 [shape = 'u32[144,128]{1,0:T(1,128)}', space=vmem, size = 0x12000, scoped, tag = 'internal scratch']
  %s0 = inlined_call_operand.hbm [shape: f32[2,128,768], index: 0, kind: input, shape index: {}]
  %s1 = inlined_call_operand.hbm [shape: f32[1,768], index: 1, kind: input, shape index: {}]
  %s2 = inlined_call_operand.hbm [shape: f32[1,768], index: 2, kind: input, shape index: {}]
  %s3 = inlined_call_operand.hbm [shape: bf16[768,768], index: 3, kind: input, shape index: {}]
  %s4 = inlined_call_operand.hbm [shape: bf16[768,768], index: 4, kind: input, shape index: {}]
  %s5 = inlined_call_operand.hbm [shape: bf16[768,768], index: 5, kind: input, shape index: {}]
  %s6 = inlined_call_operand.hbm [shape: f32[1,768], index: 6, kind: input, shape index: {}]
  %s7 = inlined_call_operand.hbm [shape: f32[1,768], index: 7, kind: input, shape index: {}]
  %s8 = inlined_call_operand.hbm [shape: f32[1,768], index: 8, kind: input, shape index: {}]
  %s9 = inlined_call_operand.hbm [shape: bf16[2,128,768], index: 9, kind: output, shape index: {0}]
  %s10 = inlined_call_operand.hbm [shape: bf16[2,128,768], index: 10, kind: output, shape index: {1}]
  %s11 = inlined_call_operand.hbm [shape: bf16[2,128,768], index: 11, kind: output, shape index: {2}]
  %12 = xla_tuple %s9, %s10, %s11
  %s13 = sld [smem:[#allocation0]]
  $region121: #{tpu_custom_call.1} parent=0
    _
  %s15 = ssub.s32 1, %s13
  %s16 = scalar_select 0, %s15, %s13
  $region1: #{tpu_custom_call.1} parent=0
    #allocation2 [shape = 'u8[786432]{0}', space=vmem, size = 0xc0000, scoped, tag = 'input window, operand 0']
    #allocation3 [shape = 's32[2]{0}', space=sflag, size = 0x8, scoped, tag = 'scoped memory for tpu_custom_call.1']
    #allocation4 [shape = 's32[2]{0}', space=sflag, size = 0x8, scoped, tag = 'scoped memory for tpu_custom_call.1']
    #allocation5 [shape = 'u8[3072]{0}', space=vmem, size = 0xc00, scoped, tag = 'input window, operand 1, single buffered']
    #allocation6 [shape = 's32[1]{0}', space=sflag, size = 0x4, scoped, tag = 'scoped memory for tpu_custom_call.1']
    #allocation7 [shape = 'u8[3072]{0}', space=vmem, size = 0xc00, scoped, tag = 'input window, operand 2, single buffered']
    #allocation8 [shape = 'u8[1179648]{0}', space=vmem, size = 0x120000, scoped, tag = 'input window, operand 3, single buffered']
    #allocation9 [shape = 's32[1]{0}', space=sflag, size = 0x4, scoped, tag = 'scoped memory for tpu_custom_call.1']
    #allocation10 [shape = 'u8[1179648]{0}', space=vmem, size = 0x120000, scoped, tag = 'input window, operand 4, single buffered']
    #allocation11 [shape = 'u8[1179648]{0}', space=vmem, size = 0x120000, scoped, tag = 'input window, operand 5, single buffered']
    #allocation12 [shape = 's32[1]{0}', space=sflag, size = 0x4, scoped, tag = 'scoped memory for tpu_custom_call.1']
    #allocation13 [shape = 'u8[3072]{0}', space=vmem, size = 0xc00, scoped, tag = 'input window, operand 6, single buffered']
    #allocation14 [shape = 'u8[3072]{0}', space=vmem, size = 0xc00, scoped, tag = 'input window, operand 7, single buffered']
    #allocation15 [shape = 's32[1]{0}', space=sflag, size = 0x4, scoped, tag = 'scoped memory for tpu_custom_call.1']
    #allocation16 [shape = 'u8[3072]{0}', space=vmem, size = 0xc00, scoped, tag = 'input window, operand 8, single buffered']
    #allocation17 [shape = 'u8[393216]{0}', space=vmem, size = 0x60000, scoped, tag = 'output window, operand 0']
    #allocation18 [shape = 'u8[393216]{0}', space=vmem, size = 0x60000, scoped, tag = 'output window, operand 1']
    #allocation19 [shape = 's32[2]{0}', space=sflag, size = 0x8, scoped, tag = 'scoped memory for tpu_custom_call.1']
    #allocation20 [shape = 'u8[393216]{0}', space=vmem, size = 0x60000, scoped, tag = 'output window, operand 2']
    %17 = vsyncpa [#allocation3], 0
    %s18 = scalar_lea.sflag [#allocation3], 1
    %19 = vsyncpa %s18, 0
    %20 = vsyncpa [#allocation6], 0
    %21 = vsyncpa [#allocation9], 0
    %22 = vsyncpa [#allocation12], 0
    %23 = vsyncpa [#allocation15], 0
    %24 = vsyncpa [#allocation4], 0
    %s25 = scalar_lea.sflag [#allocation4], 1
    %26 = vsyncpa %s25, 0
    %27 = vsyncpa [#allocation19], 0
    %s28 = scalar_lea.sflag [#allocation19], 1
    %29 = vsyncpa %s28, 0
    loop: start=0, step=1, limit=4
    $region2: #{tpu_custom_call.1} parent=1 // loop_pre_header
      _
    $region3: #{tpu_custom_call.1} parent=1 // loop_header
      %s31 = sphi 0, %s35
      %p32 = scmp.ge.s32.totalorder %s31, 4
      %s38 = sphi 0, %s50
      %s39 = sphi 0, %s46
      %s40 = sphi 0, %s38
      %s41 = sphi 0, %s39
      %s42 = sphi 0, %s40
      %s43 = sphi 0, %s41
      %s55 = sphi 0, %s57
      %s58 = sphi 0, %s55
      %s59 = sphi 0, %s58
      %s75 = sphi 0, %s59
      %s79 = sphi 0, %s79
      %s81 = sphi 0, %s79
      %s82 = sphi 0, %s81
      %s96 = sphi 0, %s82
      %s100 = sphi 0, %s100
      %s102 = sphi 0, %s100
      %s103 = sphi 0, %s102
      %s117 = sphi 0, %s103
      %s121 = sphi 0, %s121
      %s123 = sphi 0, %s121
      %s124 = sphi 0, %s123
      %s138 = sphi 0, %s124
      %s142 = sphi 0, %s142
      %s144 = sphi 0, %s142
      %s145 = sphi 0, %s144
      %s159 = sphi 0, %s145
      %s163 = sphi 0, %s163
      %s165 = sphi 0, %s163
      %s166 = sphi 0, %s165
      %s180 = sphi 0, %s166
      %s184 = sphi 0, %s184
      %s186 = sphi 0, %s184
      %s187 = sphi 0, %s186
      %s201 = sphi 0, %s187
      %s205 = sphi 0, %s205
      %s207 = sphi 0, %s205
      %s208 = sphi 0, %s207
      %s222 = sphi 0, %s208
      %s226 = sphi 0, %s226
      %s228 = sphi 0, %s226
      %s229 = sphi 0, %s228
      %s243 = sphi 0, %s229
      %s251 = sphi 0, %s253
      %s254 = sphi 0, %s251
      %s255 = sphi 0, %s254
      %s271 = sphi 0, %s255
      %s279 = sphi 0, %s281
      %s282 = sphi 0, %s279
      %s283 = sphi 0, %s282
      %s299 = sphi 0, %s283
      %s307 = sphi 0, %s309
      %s310 = sphi 0, %s307
      %s311 = sphi 0, %s310
      %s327 = sphi 0, %s311
    $region4: #{tpu_custom_call.1} parent=1 // loop_header_branch
      %34 = sbr.rel (%p32) target = $region8
    $region5: #{tpu_custom_call.1} parent=1 // loop_body
      %s36 = ssub.s32 %s31, 1
      %s37 = ssub.s32 %s31, 2
      %s44 = sadd.s32 1, %s39
      %p45 = scmp.ge.s32.totalorder %s44, 1
      %s46 = scalar_select %p45, 0, %s44
      %s47 = sadd.s32 1, %s38
      %s48 = scalar_select %p45, %s47, %s38
      %p49 = scmp.ge.s32.totalorder %s48, 2
      %s50 = scalar_select %p49, 0, %s48
      %s51 = ssub.s32 %s38, %s50
      %s52 = ssub.s32 %s39, %s46
      %s53 = sor.u32 %s51, %s52
      %p54 = scmp.eq.s32.totalorder %s53, 0
      %s56 = sadd.s32 %s55, 1
      %s57 = scalar_select %p54, %s55, %s56
      %p60 = pneg %p54
      %p61 = scmp.eq.s32.totalorder %s31, 1
      %p62 = por %p60, %p61
      %p63 = scmp.ne.s32.totalorder %s55, %s58
      %p64 = scmp.eq.s32.totalorder %s31, 0
      %p65 = por %p63, %p64
      %p66 = scmp.ne.s32.totalorder %s55, %s58
      %p67 = scmp.eq.s32.totalorder %s36, 1
      %p68 = por %p66, %p67
      %p69 = scmp.ne.s32.totalorder %s58, %s59
      %p70 = scmp.eq.s32.totalorder %s36, 0
      %p71 = por %p69, %p70
      %p72 = scmp.ne.s32.totalorder %s58, %s59
      %p73 = scmp.eq.s32.totalorder %s37, 1
      %p74 = por %p72, %p73
      %p76 = scmp.ne.s32.totalorder %s59, %s75
      %p77 = scmp.eq.s32.totalorder %s37, 0
      %p78 = por %p76, %p77
      %s80 = sadd.s32 %s79, 1
      %p83 = scmp.eq.s32.totalorder %s31, 1
      %p84 = scmp.ne.s32.totalorder %s79, %s81
      %p85 = scmp.eq.s32.totalorder %s31, 0
      %p86 = por %p84, %p85
      %p87 = scmp.ne.s32.totalorder %s79, %s81
      %p88 = scmp.eq.s32.totalorder %s36, 1
      %p89 = por %p87, %p88
      %p90 = scmp.ne.s32.totalorder %s81, %s82
      %p91 = scmp.eq.s32.totalorder %s36, 0
      %p92 = por %p90, %p91
      %p93 = scmp.ne.s32.totalorder %s81, %s82
      %p94 = scmp.eq.s32.totalorder %s37, 1
      %p95 = por %p93, %p94
      %p97 = scmp.ne.s32.totalorder %s82, %s96
      %p98 = scmp.eq.s32.totalorder %s37, 0
      %p99 = por %p97, %p98
      %s101 = sadd.s32 %s100, 1
      %p104 = scmp.eq.s32.totalorder %s31, 1
      %p105 = scmp.ne.s32.totalorder %s100, %s102
      %p106 = scmp.eq.s32.totalorder %s31, 0
      %p107 = por %p105, %p106
      %p108 = scmp.ne.s32.totalorder %s100, %s102
      %p109 = scmp.eq.s32.totalorder %s36, 1
      %p110 = por %p108, %p109
      %p111 = scmp.ne.s32.totalorder %s102, %s103
      %p112 = scmp.eq.s32.totalorder %s36, 0
      %p113 = por %p111, %p112
      %p114 = scmp.ne.s32.totalorder %s102, %s103
      %p115 = scmp.eq.s32.totalorder %s37, 1
      %p116 = por %p114, %p115
      %p118 = scmp.ne.s32.totalorder %s103, %s117
      %p119 = scmp.eq.s32.totalorder %s37, 0
      %p120 = por %p118, %p119
      %s122 = sadd.s32 %s121, 1
      %p125 = scmp.eq.s32.totalorder %s31, 1
      %p126 = scmp.ne.s32.totalorder %s121, %s123
      %p127 = scmp.eq.s32.totalorder %s31, 0
      %p128 = por %p126, %p127
      %p129 = scmp.ne.s32.totalorder %s121, %s123
      %p130 = scmp.eq.s32.totalorder %s36, 1
      %p131 = por %p129, %p130
      %p132 = scmp.ne.s32.totalorder %s123, %s124
      %p133 = scmp.eq.s32.totalorder %s36, 0
      %p134 = por %p132, %p133
      %p135 = scmp.ne.s32.totalorder %s123, %s124
      %p136 = scmp.eq.s32.totalorder %s37, 1
      %p137 = por %p135, %p136
      %p139 = scmp.ne.s32.totalorder %s124, %s138
      %p140 = scmp.eq.s32.totalorder %s37, 0
      %p141 = por %p139, %p140
      %s143 = sadd.s32 %s142, 1
      %p146 = scmp.eq.s32.totalorder %s31, 1
      %p147 = scmp.ne.s32.totalorder %s142, %s144
      %p148 = scmp.eq.s32.totalorder %s31, 0
      %p149 = por %p147, %p148
      %p150 = scmp.ne.s32.totalorder %s142, %s144
      %p151 = scmp.eq.s32.totalorder %s36, 1
      %p152 = por %p150, %p151
      %p153 = scmp.ne.s32.totalorder %s144, %s145
      %p154 = scmp.eq.s32.totalorder %s36, 0
      %p155 = por %p153, %p154
      %p156 = scmp.ne.s32.totalorder %s144, %s145
      %p157 = scmp.eq.s32.totalorder %s37, 1
      %p158 = por %p156, %p157
      %p160 = scmp.ne.s32.totalorder %s145, %s159
      %p161 = scmp.eq.s32.totalorder %s37, 0
      %p162 = por %p160, %p161
      %s164 = sadd.s32 %s163, 1
      %p167 = scmp.eq.s32.totalorder %s31, 1
      %p168 = scmp.ne.s32.totalorder %s163, %s165
      %p169 = scmp.eq.s32.totalorder %s31, 0
      %p170 = por %p168, %p169
      %p171 = scmp.ne.s32.totalorder %s163, %s165
      %p172 = scmp.eq.s32.totalorder %s36, 1
      %p173 = por %p171, %p172
      %p174 = scmp.ne.s32.totalorder %s165, %s166
      %p175 = scmp.eq.s32.totalorder %s36, 0
      %p176 = por %p174, %p175
      %p177 = scmp.ne.s32.totalorder %s165, %s166
      %p178 = scmp.eq.s32.totalorder %s37, 1
      %p179 = por %p177, %p178
      %p181 = scmp.ne.s32.totalorder %s166, %s180
      %p182 = scmp.eq.s32.totalorder %s37, 0
      %p183 = por %p181, %p182
      %s185 = sadd.s32 %s184, 1
      %p188 = scmp.eq.s32.totalorder %s31, 1
      %p189 = scmp.ne.s32.totalorder %s184, %s186
      %p190 = scmp.eq.s32.totalorder %s31, 0
      %p191 = por %p189, %p190
      %p192 = scmp.ne.s32.totalorder %s184, %s186
      %p193 = scmp.eq.s32.totalorder %s36, 1
      %p194 = por %p192, %p193
      %p195 = scmp.ne.s32.totalorder %s186, %s187
      %p196 = scmp.eq.s32.totalorder %s36, 0
      %p197 = por %p195, %p196
      %p198 = scmp.ne.s32.totalorder %s186, %s187
      %p199 = scmp.eq.s32.totalorder %s37, 1
      %p200 = por %p198, %p199
      %p202 = scmp.ne.s32.totalorder %s187, %s201
      %p203 = scmp.eq.s32.totalorder %s37, 0
      %p204 = por %p202, %p203
      %s206 = sadd.s32 %s205, 1
      %p209 = scmp.eq.s32.totalorder %s31, 1
      %p210 = scmp.ne.s32.totalorder %s205, %s207
      %p211 = scmp.eq.s32.totalorder %s31, 0
      %p212 = por %p210, %p211
      %p213 = scmp.ne.s32.totalorder %s205, %s207
      %p214 = scmp.eq.s32.totalorder %s36, 1
      %p215 = por %p213, %p214
      %p216 = scmp.ne.s32.totalorder %s207, %s208
      %p217 = scmp.eq.s32.totalorder %s36, 0
      %p218 = por %p216, %p217
      %p219 = scmp.ne.s32.totalorder %s207, %s208
      %p220 = scmp.eq.s32.totalorder %s37, 1
      %p221 = por %p219, %p220
      %p223 = scmp.ne.s32.totalorder %s208, %s222
      %p224 = scmp.eq.s32.totalorder %s37, 0
      %p225 = por %p223, %p224
      %s227 = sadd.s32 %s226, 1
      %p230 = scmp.eq.s32.totalorder %s31, 1
      %p231 = scmp.ne.s32.totalorder %s226, %s228
      %p232 = scmp.eq.s32.totalorder %s31, 0
      %p233 = por %p231, %p232
      %p234 = scmp.ne.s32.totalorder %s226, %s228
      %p235 = scmp.eq.s32.totalorder %s36, 1
      %p236 = por %p234, %p235
      %p237 = scmp.ne.s32.totalorder %s228, %s229
      %p238 = scmp.eq.s32.totalorder %s36, 0
      %p239 = por %p237, %p238
      %p240 = scmp.ne.s32.totalorder %s228, %s229
      %p241 = scmp.eq.s32.totalorder %s37, 1
      %p242 = por %p240, %p241
      %p244 = scmp.ne.s32.totalorder %s229, %s243
      %p245 = scmp.eq.s32.totalorder %s37, 0
      %p246 = por %p244, %p245
      %s247 = ssub.s32 %s38, %s50
      %s248 = ssub.s32 %s39, %s46
      %s249 = sor.u32 %s247, %s248
      %p250 = scmp.eq.s32.totalorder %s249, 0
      %s252 = sadd.s32 %s251, 1
      %s253 = scalar_select %p250, %s251, %s252
      %p256 = pneg %p250
      %p257 = scmp.eq.s32.totalorder %s31, 1
      %p258 = por %p256, %p257
      %p259 = scmp.ne.s32.totalorder %s251, %s254
      %p260 = scmp.eq.s32.totalorder %s31, 0
      %p261 = por %p259, %p260
      %p262 = scmp.ne.s32.totalorder %s251, %s254
      %p263 = scmp.eq.s32.totalorder %s36, 1
      %p264 = por %p262, %p263
      %p265 = scmp.ne.s32.totalorder %s254, %s255
      %p266 = scmp.eq.s32.totalorder %s36, 0
      %p267 = por %p265, %p266
      %p268 = scmp.ne.s32.totalorder %s254, %s255
      %p269 = scmp.eq.s32.totalorder %s37, 1
      %p270 = por %p268, %p269
      %p272 = scmp.ne.s32.totalorder %s255, %s271
      %p273 = scmp.eq.s32.totalorder %s37, 0
      %p274 = por %p272, %p273
      %s275 = ssub.s32 %s38, %s50
      %s276 = ssub.s32 %s39, %s46
      %s277 = sor.u32 %s275, %s276
      %p278 = scmp.eq.s32.totalorder %s277, 0
      %s280 = sadd.s32 %s279, 1
      %s281 = scalar_select %p278, %s279, %s280
      %p284 = pneg %p278
      %p285 = scmp.eq.s32.totalorder %s31, 1
      %p286 = por %p284, %p285
      %p287 = scmp.ne.s32.totalorder %s279, %s282
      %p288 = scmp.eq.s32.totalorder %s31, 0
      %p289 = por %p287, %p288
      %p290 = scmp.ne.s32.totalorder %s279, %s282
      %p291 = scmp.eq.s32.totalorder %s36, 1
      %p292 = por %p290, %p291
      %p293 = scmp.ne.s32.totalorder %s282, %s283
      %p294 = scmp.eq.s32.totalorder %s36, 0
      %p295 = por %p293, %p294
      %p296 = scmp.ne.s32.totalorder %s282, %s283
      %p297 = scmp.eq.s32.totalorder %s37, 1
      %p298 = por %p296, %p297
      %p300 = scmp.ne.s32.totalorder %s283, %s299
      %p301 = scmp.eq.s32.totalorder %s37, 0
      %p302 = por %p300, %p301
      %s303 = ssub.s32 %s38, %s50
      %s304 = ssub.s32 %s39, %s46
      %s305 = sor.u32 %s303, %s304
      %p306 = scmp.eq.s32.totalorder %s305, 0
      %s308 = sadd.s32 %s307, 1
      %s309 = scalar_select %p306, %s307, %s308
      %p312 = pneg %p306
      %p313 = scmp.eq.s32.totalorder %s31, 1
      %p314 = por %p312, %p313
      %p315 = scmp.ne.s32.totalorder %s307, %s310
      %p316 = scmp.eq.s32.totalorder %s31, 0
      %p317 = por %p315, %p316
      %p318 = scmp.ne.s32.totalorder %s307, %s310
      %p319 = scmp.eq.s32.totalorder %s36, 1
      %p320 = por %p318, %p319
      %p321 = scmp.ne.s32.totalorder %s310, %s311
      %p322 = scmp.eq.s32.totalorder %s36, 0
      %p323 = por %p321, %p322
      %p324 = scmp.ne.s32.totalorder %s310, %s311
      %p325 = scmp.eq.s32.totalorder %s37, 1
      %p326 = por %p324, %p325
      %p328 = scmp.ne.s32.totalorder %s311, %s327
      %p329 = scmp.eq.s32.totalorder %s37, 0
      %p330 = por %p328, %p329
      %p331 = scmp.le.s32.totalorder 1, %s31
      %p332 = scmp.lt.s32.totalorder %s31, 3
      %p333 = pnand %p331, %p332
      %p334 = pneg %p333
      // Predicated region
      $region9: #{tpu_custom_call.1} parent=5 // pred_check
        _
      $region10: #{tpu_custom_call.1} parent=5 // pred_check_branch
        %336 = sbr.rel (%p333) target = $region12
      $region11: #{tpu_custom_call.1} parent=5 // pred_region
        %s337 = ssub.s32 %s31, 1
        // Predicated region
        $region13: #{tpu_custom_call.1} parent=11 // pred_check
          %p338 = pneg %p92
        $region14: #{tpu_custom_call.1} parent=11 // pred_check_branch
          %340 = sbr.rel (%p338) target = $region16
        $region15: #{tpu_custom_call.1} parent=11 // pred_region
          %s342 = ssub.s32 96, 96
          %343 = vsyncadd [#allocation6], %s342
          %s345 = sshll.u32 [#allocation5], 4
          %s346 = int_to_ptr.vmem [resolvable:$true] %s345
          %348 = dma.hbm_to_vmem [thread:$0]  %s1, 96, %s346, [#allocation6]
        $region16: #{tpu_custom_call.1} parent=11 // pred_fallthru
          _
        // Predicated region
        $region17: #{tpu_custom_call.1} parent=11 // pred_check
          %p349 = pneg %p113
        $region18: #{tpu_custom_call.1} parent=11 // pred_check_branch
          %351 = sbr.rel (%p349) target = $region20
        $region19: #{tpu_custom_call.1} parent=11 // pred_region
          %s353 = ssub.s32 96, 96
          %354 = vsyncadd [#allocation6], %s353
          %s356 = sshll.u32 [#allocation7], 4
          %s357 = int_to_ptr.vmem [resolvable:$true] %s356
          %359 = dma.hbm_to_vmem [thread:$0]  %s2, 96, %s357, [#allocation6]
        $region20: #{tpu_custom_call.1} parent=11 // pred_fallthru
          _
        // Predicated region
        $region21: #{tpu_custom_call.1} parent=11 // pred_check
          %p360 = pneg %p134
        $region22: #{tpu_custom_call.1} parent=11 // pred_check_branch
          %362 = sbr.rel (%p360) target = $region24
        $region23: #{tpu_custom_call.1} parent=11 // pred_region
          %s364 = ssub.s32 36864, 36864
          %365 = vsyncadd [#allocation9], %s364
          %s366 = sshll.u32 [#allocation8], 4
          %s367 = int_to_ptr.vmem [resolvable:$true] %s366
          %372 = dma.hbm_to_vmem [thread:$0]  %s3, 36864, %s367, [#allocation9], 384, 384, 24
        $region24: #{tpu_custom_call.1} parent=11 // pred_fallthru
          _
        // Predicated region
        $region25: #{tpu_custom_call.1} parent=11 // pred_check
          %p373 = pneg %p155
        $region26: #{tpu_custom_call.1} parent=11 // pred_check_branch
          %375 = sbr.rel (%p373) target = $region28
        $region27: #{tpu_custom_call.1} parent=11 // pred_region
          %s377 = ssub.s32 36864, 36864
          %378 = vsyncadd [#allocation9], %s377
          %s379 = sshll.u32 [#allocation10], 4
          %s380 = int_to_ptr.vmem [resolvable:$true] %s379
          %385 = dma.hbm_to_vmem [thread:$0]  %s4, 36864, %s380, [#allocation9], 384, 384, 24
        $region28: #{tpu_custom_call.1} parent=11 // pred_fallthru
          _
        // Predicated region
        $region29: #{tpu_custom_call.1} parent=11 // pred_check
          %p386 = pneg %p176
        $region30: #{tpu_custom_call.1} parent=11 // pred_check_branch
          %388 = sbr.rel (%p386) target = $region32
        $region31: #{tpu_custom_call.1} parent=11 // pred_region
          %s390 = ssub.s32 36864, 36864
          %391 = vsyncadd [#allocation12], %s390
          %s392 = sshll.u32 [#allocation11], 4
          %s393 = int_to_ptr.vmem [resolvable:$true] %s392
          %398 = dma.hbm_to_vmem [thread:$0]  %s5, 36864, %s393, [#allocation12], 384, 384, 24
        $region32: #{tpu_custom_call.1} parent=11 // pred_fallthru
          _
        // Predicated region
        $region33: #{tpu_custom_call.1} parent=11 // pred_check
          %p399 = pneg %p197
        $region34: #{tpu_custom_call.1} parent=11 // pred_check_branch
          %401 = sbr.rel (%p399) target = $region36
        $region35: #{tpu_custom_call.1} parent=11 // pred_region
          %s403 = ssub.s32 96, 96
          %404 = vsyncadd [#allocation12], %s403
          %s406 = sshll.u32 [#allocation13], 4
          %s407 = int_to_ptr.vmem [resolvable:$true] %s406
          %409 = dma.hbm_to_vmem [thread:$0]  %s6, 96, %s407, [#allocation12]
        $region36: #{tpu_custom_call.1} parent=11 // pred_fallthru
          _
        // Predicated region
        $region37: #{tpu_custom_call.1} parent=11 // pred_check
          %p410 = pneg %p218
        $region38: #{tpu_custom_call.1} parent=11 // pred_check_branch
          %412 = sbr.rel (%p410) target = $region40
        $region39: #{tpu_custom_call.1} parent=11 // pred_region
          %s414 = ssub.s32 96, 96
          %415 = vsyncadd [#allocation15], %s414
          %s417 = sshll.u32 [#allocation14], 4
          %s418 = int_to_ptr.vmem [resolvable:$true] %s417
          %420 = dma.hbm_to_vmem [thread:$0]  %s7, 96, %s418, [#allocation15]
        $region40: #{tpu_custom_call.1} parent=11 // pred_fallthru
          _
        // Predicated region
        $region41: #{tpu_custom_call.1} parent=11 // pred_check
          %p421 = pneg %p239
        $region42: #{tpu_custom_call.1} parent=11 // pred_check_branch
          %423 = sbr.rel (%p421) target = $region44
        $region43: #{tpu_custom_call.1} parent=11 // pred_region
          %s425 = ssub.s32 96, 96
          %426 = vsyncadd [#allocation15], %s425
          %s428 = sshll.u32 [#allocation16], 4
          %s429 = int_to_ptr.vmem [resolvable:$true] %s428
          %431 = dma.hbm_to_vmem [thread:$0]  %s8, 96, %s429, [#allocation15]
        $region44: #{tpu_custom_call.1} parent=11 // pred_fallthru
          _
      $region12: #{tpu_custom_call.1} parent=5 // pred_fallthru
        _
      %p432 = scmp.lt.s32.totalorder %s31, 2
      // Predicated region
      $region45: #{tpu_custom_call.1} parent=5 // pred_check
        %p433 = pneg %p432
      $region46: #{tpu_custom_call.1} parent=5 // pred_check_branch
        %435 = sbr.rel (%p433) target = $region48
      $region47: #{tpu_custom_call.1} parent=5 // pred_region
        // Predicated region
        $region49: #{tpu_custom_call.1} parent=47 // pred_check
          %p436 = pneg %p65
        $region50: #{tpu_custom_call.1} parent=47 // pred_check_branch
          %438 = sbr.rel (%p436) target = $region52
        $region51: #{tpu_custom_call.1} parent=47 // pred_region
          %s439 = sand.u32 %s55, 1
          %s440 = scalar_lea.sflag [#allocation3], %s439
          %s441 = sand.u32 %s55, 1
          %s442 = smul.addr %s441, 768
          %s443 = scalar_lea.vmem [#allocation2], %s442
          %s444 = smul.u32 16, %s39
          %s446 = ssub.s32 12288, 12288
          %447 = vsyncadd %s440, %s446
          %s448 = smul.addr %s444, 6
          %s449 = smul.addr %s38, 96
          %s450 = sadd.s32 %s448, %s449
          %s451 = smul.addr %s450, 128
          %s452 = scalar_lea.hbm %s0, %s451
          %s453 = sshll.u32 %s443, 4
          %s454 = int_to_ptr.vmem [resolvable:$true] %s453
          %459 = dma.hbm_to_vmem [thread:$0]  %s452, 12288, %s454, %s440, 768, 768, 48
        $region52: #{tpu_custom_call.1} parent=47 // pred_fallthru
          _
      $region48: #{tpu_custom_call.1} parent=5 // pred_fallthru
        _
      %p460 = scmp.le.s32.totalorder 1, %s31
      %p461 = scmp.lt.s32.totalorder %s31, 3
      %p462 = pnand %p460, %p461
      %p463 = pneg %p462
      // Predicated region
      $region53: #{tpu_custom_call.1} parent=5 // pred_check
        _
      $region54: #{tpu_custom_call.1} parent=5 // pred_check_branch
        %465 = sbr.rel (%p462) target = $region56
      $region55: #{tpu_custom_call.1} parent=5 // pred_region
        %s466 = ssub.s32 %s31, 1
        %s467 = sand.u32 %s58, 1
        %s468 = scalar_lea.sflag [#allocation3], %s467
        %s469 = sand.u32 %s58, 1
        %s470 = smul.addr %s469, 768
        %s471 = scalar_lea.vmem [#allocation2], %s470
        // Predicated region
        $region57: #{tpu_custom_call.1} parent=55 // pred_check
          %p472 = pneg %p71
        $region58: #{tpu_custom_call.1} parent=55 // pred_check_branch
          %474 = sbr.rel (%p472) target = $region60
        $region59: #{tpu_custom_call.1} parent=55 // pred_region
          %475 = dma.done %s468, 12288
        $region60: #{tpu_custom_call.1} parent=55 // pred_fallthru
          _
        // Predicated region
        $region61: #{tpu_custom_call.1} parent=55 // pred_check
          %p476 = pneg %p92
        $region62: #{tpu_custom_call.1} parent=55 // pred_check_branch
          %478 = sbr.rel (%p476) target = $region64
        $region63: #{tpu_custom_call.1} parent=55 // pred_region
          %479 = dma.done [#allocation6], 96
        $region64: #{tpu_custom_call.1} parent=55 // pred_fallthru
          _
        // Predicated region
        $region65: #{tpu_custom_call.1} parent=55 // pred_check
          %p480 = pneg %p113
        $region66: #{tpu_custom_call.1} parent=55 // pred_check_branch
          %482 = sbr.rel (%p480) target = $region68
        $region67: #{tpu_custom_call.1} parent=55 // pred_region
          %483 = dma.done [#allocation6], 96
        $region68: #{tpu_custom_call.1} parent=55 // pred_fallthru
          _
        // Predicated region
        $region69: #{tpu_custom_call.1} parent=55 // pred_check
          %p484 = pneg %p134
        $region70: #{tpu_custom_call.1} parent=55 // pred_check_branch
          %486 = sbr.rel (%p484) target = $region72
        $region71: #{tpu_custom_call.1} parent=55 // pred_region
          %487 = dma.done [#allocation9], 36864
        $region72: #{tpu_custom_call.1} parent=55 // pred_fallthru
          _
        // Predicated region
        $region73: #{tpu_custom_call.1} parent=55 // pred_check
          %p488 = pneg %p155
        $region74: #{tpu_custom_call.1} parent=55 // pred_check_branch
          %490 = sbr.rel (%p488) target = $region76
        $region75: #{tpu_custom_call.1} parent=55 // pred_region
          %491 = dma.done [#allocation9], 36864
        $region76: #{tpu_custom_call.1} parent=55 // pred_fallthru
          _
        // Predicated region
        $region77: #{tpu_custom_call.1} parent=55 // pred_check
          %p492 = pneg %p176
        $region78: #{tpu_custom_call.1} parent=55 // pred_check_branch
          %494 = sbr.rel (%p492) target = $region80
        $region79: #{tpu_custom_call.1} parent=55 // pred_region
          %495 = dma.done [#allocation12], 36864
        $region80: #{tpu_custom_call.1} parent=55 // pred_fallthru
          _
        // Predicated region
        $region81: #{tpu_custom_call.1} parent=55 // pred_check
          %p496 = pneg %p197
        $region82: #{tpu_custom_call.1} parent=55 // pred_check_branch
          %498 = sbr.rel (%p496) target = $region84
        $region83: #{tpu_custom_call.1} parent=55 // pred_region
          %499 = dma.done [#allocation12], 96
        $region84: #{tpu_custom_call.1} parent=55 // pred_fallthru
          _
        // Predicated region
        $region85: #{tpu_custom_call.1} parent=55 // pred_check
          %p500 = pneg %p218
        $region86: #{tpu_custom_call.1} parent=55 // pred_check_branch
          %502 = sbr.rel (%p500) target = $region88
        $region87: #{tpu_custom_call.1} parent=55 // pred_region
          %503 = dma.done [#allocation15], 96
        $region88: #{tpu_custom_call.1} parent=55 // pred_fallthru
          _
        // Predicated region
        $region89: #{tpu_custom_call.1} parent=55 // pred_check
          %p504 = pneg %p239
        $region90: #{tpu_custom_call.1} parent=55 // pred_check_branch
          %506 = sbr.rel (%p504) target = $region92
        $region91: #{tpu_custom_call.1} parent=55 // pred_region
          %507 = dma.done [#allocation15], 96
        $region92: #{tpu_custom_call.1} parent=55 // pred_fallthru
          _
        %s508 = sand.u32 %s58, 1
        %s509 = scalar_lea.sflag [#allocation3], %s508
        %s510 = sand.u32 %s58, 1
        %s511 = smul.addr %s510, 768
        %s512 = scalar_lea.vmem [#allocation2], %s511
        %p513 = pneg %p71
        %p514 = pneg %p68
        %p515 = pneg %p92
        %p516 = pneg %p89
        %p517 = pneg %p113
        %p518 = pneg %p110
        %p519 = pneg %p134
        %p520 = pneg %p131
        %p521 = pneg %p155
        %p522 = pneg %p152
        %p523 = pneg %p176
        %p524 = pneg %p173
        %p525 = pneg %p197
        %p526 = pneg %p194
        %p527 = pneg %p218
        %p528 = pneg %p215
        %p529 = pneg %p239
        %p530 = pneg %p236
        %p531 = pneg %p267
        %p532 = pneg %p264
        %s533 = sand.u32 %s254, 1
        %s534 = scalar_lea.sflag [#allocation4], %s533
        %s535 = sand.u32 %s254, 1
        %s536 = smul.addr %s535, 384
        %s537 = scalar_lea.vmem [#allocation17], %s536
        %p538 = pneg %p295
        %p539 = pneg %p292
        %s540 = sand.u32 %s36, 1
        %s541 = scalar_lea.sflag [#allocation19], %s540
        %s542 = sand.u32 %s282, 1
        %s543 = smul.addr %s542, 384
        %s544 = scalar_lea.vmem [#allocation18], %s543
        %p545 = pneg %p323
        %p546 = pneg %p320
        %s547 = sand.u32 %s36, 1
        %s548 = scalar_lea.sflag [#allocation19], %s547
        %s549 = sand.u32 %s310, 1
        %s550 = smul.addr %s549, 384
        %s551 = scalar_lea.vmem [#allocation20], %s550
        %s552 = smul.u32 16, %s41
        %s553 = smul.u32 16, %s41
        %s554 = smul.u32 16, %s41
        %s555 = smul.u32 16, %s41
        %v556 = vld [vmem:[%s471] sm:$0xff]
        %v557 = vld [vmem:[%s471 + $0x8] sm:$0xff]
        %v558 = vld [vmem:[%s471 + $0x10] sm:$0xff]
        %v559 = vld [vmem:[%s471 + $0x18] sm:$0xff]
        %v560 = vld [vmem:[%s471 + $0x20] sm:$0xff]
        %v561 = vld [vmem:[%s471 + $0x28] sm:$0xff]
        %v562 = vld [vmem:[%s471 + $0x30] sm:$0xff]
        %v563 = vld [vmem:[%s471 + $0x38] sm:$0xff]
        %v564 = vld [vmem:[%s471 + $0x40] sm:$0xff]
        %v565 = vld [vmem:[%s471 + $0x48] sm:$0xff]
        %v566 = vld [vmem:[%s471 + $0x50] sm:$0xff]
        %v567 = vld [vmem:[%s471 + $0x58] sm:$0xff]
        %v568 = vld [vmem:[%s471 + $0x60] sm:$0xff]
        %v569 = vld [vmem:[%s471 + $0x68] sm:$0xff]
        %v570 = vld [vmem:[%s471 + $0x70] sm:$0xff]
        %v571 = vld [vmem:[%s471 + $0x78] sm:$0xff]
        %v572 = vld [vmem:[%s471 + $0x80] sm:$0xff]
        %v573 = vld [vmem:[%s471 + $0x88] sm:$0xff]
        %v574 = vld [vmem:[%s471 + $0x90] sm:$0xff]
        %v575 = vld [vmem:[%s471 + $0x98] sm:$0xff]
        %v576 = vld [vmem:[%s471 + $0xa0] sm:$0xff]
        %v577 = vld [vmem:[%s471 + $0xa8] sm:$0xff]
        %v578 = vld [vmem:[%s471 + $0xb0] sm:$0xff]
        %v579 = vld [vmem:[%s471 + $0xb8] sm:$0xff]
        %v580 = vld [vmem:[%s471 + $0xc0] sm:$0xff]
        %v581 = vld [vmem:[%s471 + $0xc8] sm:$0xff]
        %v582 = vld [vmem:[%s471 + $0xd0] sm:$0xff]
        %v583 = vld [vmem:[%s471 + $0xd8] sm:$0xff]
        %v584 = vld [vmem:[%s471 + $0xe0] sm:$0xff]
        %v585 = vld [vmem:[%s471 + $0xe8] sm:$0xff]
        %v586 = vld [vmem:[%s471 + $0xf0] sm:$0xff]
        %v587 = vld [vmem:[%s471 + $0xf8] sm:$0xff]
        %v588 = vld [vmem:[%s471 + $0x100] sm:$0xff]
        %v589 = vld [vmem:[%s471 + $0x108] sm:$0xff]
        %v590 = vld [vmem:[%s471 + $0x110] sm:$0xff]
        %v591 = vld [vmem:[%s471 + $0x118] sm:$0xff]
        %v592 = vld [vmem:[%s471 + $0x120] sm:$0xff]
        %v593 = vld [vmem:[%s471 + $0x128] sm:$0xff]
        %v594 = vld [vmem:[%s471 + $0x130] sm:$0xff]
        %v595 = vld [vmem:[%s471 + $0x138] sm:$0xff]
        %v596 = vld [vmem:[%s471 + $0x140] sm:$0xff]
        %v597 = vld [vmem:[%s471 + $0x148] sm:$0xff]
        %v598 = vld [vmem:[%s471 + $0x150] sm:$0xff]
        %v599 = vld [vmem:[%s471 + $0x158] sm:$0xff]
        %v600 = vld [vmem:[%s471 + $0x160] sm:$0xff]
        %v601 = vld [vmem:[%s471 + $0x168] sm:$0xff]
        %v602 = vld [vmem:[%s471 + $0x170] sm:$0xff]
        %v603 = vld [vmem:[%s471 + $0x178] sm:$0xff]
        %v604 = vld [vmem:[%s471 + $0x180] sm:$0xff]
        %v605 = vld [vmem:[%s471 + $0x188] sm:$0xff]
        %v606 = vld [vmem:[%s471 + $0x190] sm:$0xff]
        %v607 = vld [vmem:[%s471 + $0x198] sm:$0xff]
        %v608 = vld [vmem:[%s471 + $0x1a0] sm:$0xff]
        %v609 = vld [vmem:[%s471 + $0x1a8] sm:$0xff]
        %v610 = vld [vmem:[%s471 + $0x1b0] sm:$0xff]
        %v611 = vld [vmem:[%s471 + $0x1b8] sm:$0xff]
        %v612 = vld [vmem:[%s471 + $0x1c0] sm:$0xff]
        %v613 = vld [vmem:[%s471 + $0x1c8] sm:$0xff]
        %v614 = vld [vmem:[%s471 + $0x1d0] sm:$0xff]
        %v615 = vld [vmem:[%s471 + $0x1d8] sm:$0xff]
        %v616 = vld [vmem:[%s471 + $0x1e0] sm:$0xff]
        %v617 = vld [vmem:[%s471 + $0x1e8] sm:$0xff]
        %v618 = vld [vmem:[%s471 + $0x1f0] sm:$0xff]
        %v619 = vld [vmem:[%s471 + $0x1f8] sm:$0xff]
        %v620 = vld [vmem:[%s471 + $0x200] sm:$0xff]
        %v621 = vld [vmem:[%s471 + $0x208] sm:$0xff]
        %v622 = vld [vmem:[%s471 + $0x210] sm:$0xff]
        %v623 = vld [vmem:[%s471 + $0x218] sm:$0xff]
        %v624 = vld [vmem:[%s471 + $0x220] sm:$0xff]
        %v625 = vld [vmem:[%s471 + $0x228] sm:$0xff]
        %v626 = vld [vmem:[%s471 + $0x230] sm:$0xff]
        %v627 = vld [vmem:[%s471 + $0x238] sm:$0xff]
        %v628 = vld [vmem:[%s471 + $0x240] sm:$0xff]
        %v629 = vld [vmem:[%s471 + $0x248] sm:$0xff]
        %v630 = vld [vmem:[%s471 + $0x250] sm:$0xff]
        %v631 = vld [vmem:[%s471 + $0x258] sm:$0xff]
        %v632 = vld [vmem:[%s471 + $0x260] sm:$0xff]
        %v633 = vld [vmem:[%s471 + $0x268] sm:$0xff]
        %v634 = vld [vmem:[%s471 + $0x270] sm:$0xff]
        %v635 = vld [vmem:[%s471 + $0x278] sm:$0xff]
        %v636 = vld [vmem:[%s471 + $0x280] sm:$0xff]
        %v637 = vld [vmem:[%s471 + $0x288] sm:$0xff]
        %v638 = vld [vmem:[%s471 + $0x290] sm:$0xff]
        %v639 = vld [vmem:[%s471 + $0x298] sm:$0xff]
        %v640 = vld [vmem:[%s471 + $0x2a0] sm:$0xff]
        %v641 = vld [vmem:[%s471 + $0x2a8] sm:$0xff]
        %v642 = vld [vmem:[%s471 + $0x2b0] sm:$0xff]
        %v643 = vld [vmem:[%s471 + $0x2b8] sm:$0xff]
        %v644 = vld [vmem:[%s471 + $0x2c0] sm:$0xff]
        %v645 = vld [vmem:[%s471 + $0x2c8] sm:$0xff]
        %v646 = vld [vmem:[%s471 + $0x2d0] sm:$0xff]
        %v647 = vld [vmem:[%s471 + $0x2d8] sm:$0xff]
        %v648 = vld [vmem:[%s471 + $0x2e0] sm:$0xff]
        %v649 = vld [vmem:[%s471 + $0x2e8] sm:$0xff]
        %v650 = vld [vmem:[%s471 + $0x2f0] sm:$0xff]
        %v651 = vld [vmem:[%s471 + $0x2f8] sm:$0xff]
        %v652 = vld [vmem:[#allocation5] sm:$0x3f]
        %v653 = vld [vmem:[#allocation7] sm:$0x3f]
        %v654 = vadd.f32 %v556, %v557
        %v655 = vadd.f32 %v654, %v558
        %v656 = vadd.f32 %v655, %v559
        %v657 = vadd.f32 %v656, %v560
        %v658 = vadd.f32 %v657, %v561
        %659 = vadd.xlane.f32.xlu0 %v658
        %v660 = vpop.xlane.xlu0 %659
        %v661 = vadd.f32 %v562, %v563
        %v662 = vadd.f32 %v661, %v564
        %v663 = vadd.f32 %v662, %v565
        %v664 = vadd.f32 %v663, %v566
        %v665 = vadd.f32 %v664, %v567
        %666 = vadd.xlane.f32.xlu0 %v665
        %v667 = vpop.xlane.xlu0 %666
        %v668 = vadd.f32 %v568, %v569
        %v669 = vadd.f32 %v668, %v570
        %v670 = vadd.f32 %v669, %v571
        %v671 = vadd.f32 %v670, %v572
        %v672 = vadd.f32 %v671, %v573
        %673 = vadd.xlane.f32.xlu0 %v672
        %v674 = vpop.xlane.xlu0 %673
        %v675 = vadd.f32 %v574, %v575
        %v676 = vadd.f32 %v675, %v576
        %v677 = vadd.f32 %v676, %v577
        %v678 = vadd.f32 %v677, %v578
        %v679 = vadd.f32 %v678, %v579
        %680 = vadd.xlane.f32.xlu0 %v679
        %v681 = vpop.xlane.xlu0 %680
        %v682 = vadd.f32 %v580, %v581
        %v683 = vadd.f32 %v682, %v582
        %v684 = vadd.f32 %v683, %v583
        %v685 = vadd.f32 %v684, %v584
        %v686 = vadd.f32 %v685, %v585
        %687 = vadd.xlane.f32.xlu0 %v686
        %v688 = vpop.xlane.xlu0 %687
        %v689 = vadd.f32 %v586, %v587
        %v690 = vadd.f32 %v689, %v588
        %v691 = vadd.f32 %v690, %v589
        %v692 = vadd.f32 %v691, %v590
        %v693 = vadd.f32 %v692, %v591
        %694 = vadd.xlane.f32.xlu0 %v693
        %v695 = vpop.xlane.xlu0 %694
        %v696 = vadd.f32 %v592, %v593
        %v697 = vadd.f32 %v696, %v594
        %v698 = vadd.f32 %v697, %v595
        %v699 = vadd.f32 %v698, %v596
        %v700 = vadd.f32 %v699, %v597
        %701 = vadd.xlane.f32.xlu0 %v700
        %v702 = vpop.xlane.xlu0 %701
        %v703 = vadd.f32 %v598, %v599
        %v704 = vadd.f32 %v703, %v600
        %v705 = vadd.f32 %v704, %v601
        %v706 = vadd.f32 %v705, %v602
        %v707 = vadd.f32 %v706, %v603
        %708 = vadd.xlane.f32.xlu0 %v707
        %v709 = vpop.xlane.xlu0 %708
        %v710 = vadd.f32 %v604, %v605
        %v711 = vadd.f32 %v710, %v606
        %v712 = vadd.f32 %v711, %v607
        %v713 = vadd.f32 %v712, %v608
        %v714 = vadd.f32 %v713, %v609
        %715 = vadd.xlane.f32.xlu0 %v714
        %v716 = vpop.xlane.xlu0 %715
        %v717 = vadd.f32 %v610, %v611
        %v718 = vadd.f32 %v717, %v612
        %v719 = vadd.f32 %v718, %v613
        %v720 = vadd.f32 %v719, %v614
        %v721 = vadd.f32 %v720, %v615
        %722 = vadd.xlane.f32.xlu0 %v721
        %v723 = vpop.xlane.xlu0 %722
        %v724 = vadd.f32 %v616, %v617
        %v725 = vadd.f32 %v724, %v618
        %v726 = vadd.f32 %v725, %v619
        %v727 = vadd.f32 %v726, %v620
        %v728 = vadd.f32 %v727, %v621
        %729 = vadd.xlane.f32.xlu0 %v728
        %v730 = vpop.xlane.xlu0 %729
        %v731 = vadd.f32 %v622, %v623
        %v732 = vadd.f32 %v731, %v624
        %v733 = vadd.f32 %v732, %v625
        %v734 = vadd.f32 %v733, %v626
        %v735 = vadd.f32 %v734, %v627
        %736 = vadd.xlane.f32.xlu0 %v735
        %v737 = vpop.xlane.xlu0 %736
        %v738 = vadd.f32 %v628, %v629
        %v739 = vadd.f32 %v738, %v630
        %v740 = vadd.f32 %v739, %v631
        %v741 = vadd.f32 %v740, %v632
        %v742 = vadd.f32 %v741, %v633
        %743 = vadd.xlane.f32.xlu0 %v742
        %v744 = vpop.xlane.xlu0 %743
        %v745 = vadd.f32 %v634, %v635
        %v746 = vadd.f32 %v745, %v636
        %v747 = vadd.f32 %v746, %v637
        %v748 = vadd.f32 %v747, %v638
        %v749 = vadd.f32 %v748, %v639
        %750 = vadd.xlane.f32.xlu0 %v749
        %v751 = vpop.xlane.xlu0 %750
        %v752 = vadd.f32 %v640, %v641
        %v753 = vadd.f32 %v752, %v642
        %v754 = vadd.f32 %v753, %v643
        %v755 = vadd.f32 %v754, %v644
        %v756 = vadd.f32 %v755, %v645
        %757 = vadd.xlane.f32.xlu0 %v756
        %v758 = vpop.xlane.xlu0 %757
        %v759 = vadd.f32 %v646, %v647
        %v760 = vadd.f32 %v759, %v648
        %v761 = vadd.f32 %v760, %v649
        %v762 = vadd.f32 %v761, %v650
        %v763 = vadd.f32 %v762, %v651
        %764 = vadd.xlane.f32.xlu0 %v763
        %v765 = vpop.xlane.xlu0 %764
        %v766 = vrcp.pop 768.0
        %v767 = vmul.f32 %v660, %v766
        %v768 = vmul.f32 %v667, %v766
        %v769 = vmul.f32 %v674, %v766
        %v770 = vmul.f32 %v681, %v766
        %v771 = vmul.f32 %v688, %v766
        %v772 = vmul.f32 %v695, %v766
        %v773 = vmul.f32 %v702, %v766
        %v774 = vmul.f32 %v709, %v766
        %v775 = vmul.f32 %v716, %v766
        %v776 = vmul.f32 %v723, %v766
        %v777 = vmul.f32 %v730, %v766
        %v778 = vmul.f32 %v737, %v766
        %v779 = vmul.f32 %v744, %v766
        %v780 = vmul.f32 %v751, %v766
        %v781 = vmul.f32 %v758, %v766
        %v782 = vmul.f32 %v765, %v766
        %v783 = vsub.f32 %v556, %v767
        %v784 = vsub.f32 %v557, %v767
        %v785 = vsub.f32 %v558, %v767
        %v786 = vsub.f32 %v559, %v767
        %v787 = vsub.f32 %v560, %v767
        %v788 = vsub.f32 %v561, %v767
        %v789 = vsub.f32 %v562, %v768
        %v790 = vsub.f32 %v563, %v768
        %v791 = vsub.f32 %v564, %v768
        %v792 = vsub.f32 %v565, %v768
        %v793 = vsub.f32 %v566, %v768
        %v794 = vsub.f32 %v567, %v768
        %v795 = vsub.f32 %v568, %v769
        %v796 = vsub.f32 %v569, %v769
        %v797 = vsub.f32 %v570, %v769
        %v798 = vsub.f32 %v571, %v769
        %v799 = vsub.f32 %v572, %v769
        %v800 = vsub.f32 %v573, %v769
        %v801 = vsub.f32 %v574, %v770
        %v802 = vsub.f32 %v575, %v770
        %v803 = vsub.f32 %v576, %v770
        %v804 = vsub.f32 %v577, %v770
        %v805 = vsub.f32 %v578, %v770
        %v806 = vsub.f32 %v579, %v770
        %v807 = vsub.f32 %v580, %v771
        %v808 = vsub.f32 %v581, %v771
        %v809 = vsub.f32 %v582, %v771
        %v810 = vsub.f32 %v583, %v771
        %v811 = vsub.f32 %v584, %v771
        %v812 = vsub.f32 %v585, %v771
        %v813 = vsub.f32 %v586, %v772
        %v814 = vsub.f32 %v587, %v772
        %v815 = vsub.f32 %v588, %v772
        %v816 = vsub.f32 %v589, %v772
        %v817 = vsub.f32 %v590, %v772
        %v818 = vsub.f32 %v591, %v772
        %v819 = vsub.f32 %v592, %v773
        %v820 = vsub.f32 %v593, %v773
        %v821 = vsub.f32 %v594, %v773
        %v822 = vsub.f32 %v595, %v773
        %v823 = vsub.f32 %v596, %v773
        %v824 = vsub.f32 %v597, %v773
        %v825 = vsub.f32 %v598, %v774
        %v826 = vsub.f32 %v599, %v774
        %v827 = vsub.f32 %v600, %v774
        %v828 = vsub.f32 %v601, %v774
        %v829 = vsub.f32 %v602, %v774
        %v830 = vsub.f32 %v603, %v774
        %v831 = vsub.f32 %v604, %v775
        %v832 = vsub.f32 %v605, %v775
        %v833 = vsub.f32 %v606, %v775
        %v834 = vsub.f32 %v607, %v775
        %v835 = vsub.f32 %v608, %v775
        %v836 = vsub.f32 %v609, %v775
        %v837 = vsub.f32 %v610, %v776
        %v838 = vsub.f32 %v611, %v776
        %v839 = vsub.f32 %v612, %v776
        %v840 = vsub.f32 %v613, %v776
        %v841 = vsub.f32 %v614, %v776
        %v842 = vsub.f32 %v615, %v776
        %v843 = vsub.f32 %v616, %v777
        %v844 = vsub.f32 %v617, %v777
        %v845 = vsub.f32 %v618, %v777
        %v846 = vsub.f32 %v619, %v777
        %v847 = vsub.f32 %v620, %v777
        %v848 = vsub.f32 %v621, %v777
        %v849 = vsub.f32 %v622, %v778
        %v850 = vsub.f32 %v623, %v778
        %v851 = vsub.f32 %v624, %v778
        %v852 = vsub.f32 %v625, %v778
        %v853 = vsub.f32 %v626, %v778
        %v854 = vsub.f32 %v627, %v778
        %v855 = vsub.f32 %v628, %v779
        %v856 = vsub.f32 %v629, %v779
        %v857 = vsub.f32 %v630, %v779
        %v858 = vsub.f32 %v631, %v779
        %v859 = vsub.f32 %v632, %v779
        %v860 = vsub.f32 %v633, %v779
        %v861 = vsub.f32 %v634, %v780
        %v862 = vsub.f32 %v635, %v780
        %v863 = vsub.f32 %v636, %v780
        %v864 = vsub.f32 %v637, %v780
        %v865 = vsub.f32 %v638, %v780
        %v866 = vsub.f32 %v639, %v780
        %v867 = vsub.f32 %v640, %v781
        %v868 = vsub.f32 %v641, %v781
        %v869 = vsub.f32 %v642, %v781
        %v870 = vsub.f32 %v643, %v781
        %v871 = vsub.f32 %v644, %v781
        %v872 = vsub.f32 %v645, %v781
        %v873 = vsub.f32 %v646, %v782
        %v874 = vsub.f32 %v647, %v782
        %v875 = vsub.f32 %v648, %v782
        %v876 = vsub.f32 %v649, %v782
        %v877 = vsub.f32 %v650, %v782
        %v878 = vsub.f32 %v651, %v782
        %v879 = vmul.f32 %v783, %v783
        %v880 = vmul.f32 %v784, %v784
        %v881 = vmul.f32 %v785, %v785
        %v882 = vmul.f32 %v786, %v786
        %v883 = vmul.f32 %v787, %v787
        %v884 = vmul.f32 %v788, %v788
        %v885 = vmul.f32 %v789, %v789
        %v886 = vmul.f32 %v790, %v790
        %v887 = vmul.f32 %v791, %v791
        %v888 = vmul.f32 %v792, %v792
        %v889 = vmul.f32 %v793, %v793
        %v890 = vmul.f32 %v794, %v794
        %v891 = vmul.f32 %v795, %v795
        %v892 = vmul.f32 %v796, %v796
        %v893 = vmul.f32 %v797, %v797
        %v894 = vmul.f32 %v798, %v798
        %v895 = vmul.f32 %v799, %v799
        %v896 = vmul.f32 %v800, %v800
        %v897 = vmul.f32 %v801, %v801
        %v898 = vmul.f32 %v802, %v802
        %v899 = vmul.f32 %v803, %v803
        %v900 = vmul.f32 %v804, %v804
        %v901 = vmul.f32 %v805, %v805
        %v902 = vmul.f32 %v806, %v806
        %v903 = vmul.f32 %v807, %v807
        %v904 = vmul.f32 %v808, %v808
        %v905 = vmul.f32 %v809, %v809
        %v906 = vmul.f32 %v810, %v810
        %v907 = vmul.f32 %v811, %v811
        %v908 = vmul.f32 %v812, %v812
        %v909 = vmul.f32 %v813, %v813
        %v910 = vmul.f32 %v814, %v814
        %v911 = vmul.f32 %v815, %v815
        %v912 = vmul.f32 %v816, %v816
        %v913 = vmul.f32 %v817, %v817
        %v914 = vmul.f32 %v818, %v818
        %v915 = vmul.f32 %v819, %v819
        %v916 = vmul.f32 %v820, %v820
        %v917 = vmul.f32 %v821, %v821
        %v918 = vmul.f32 %v822, %v822
        %v919 = vmul.f32 %v823, %v823
        %v920 = vmul.f32 %v824, %v824
        %v921 = vmul.f32 %v825, %v825
        %v922 = vmul.f32 %v826, %v826
        %v923 = vmul.f32 %v827, %v827
        %v924 = vmul.f32 %v828, %v828
        %v925 = vmul.f32 %v829, %v829
        %v926 = vmul.f32 %v830, %v830
        %v927 = vmul.f32 %v831, %v831
        %v928 = vmul.f32 %v832, %v832
        %v929 = vmul.f32 %v833, %v833
        %v930 = vmul.f32 %v834, %v834
        %v931 = vmul.f32 %v835, %v835
        %v932 = vmul.f32 %v836, %v836
        %v933 = vmul.f32 %v837, %v837
        %v934 = vmul.f32 %v838, %v838
        %v935 = vmul.f32 %v839, %v839
        %v936 = vmul.f32 %v840, %v840
        %v937 = vmul.f32 %v841, %v841
        %v938 = vmul.f32 %v842, %v842
        %v939 = vmul.f32 %v843, %v843
        %v940 = vmul.f32 %v844, %v844
        %v941 = vmul.f32 %v845, %v845
        %v942 = vmul.f32 %v846, %v846
        %v943 = vmul.f32 %v847, %v847
        %v944 = vmul.f32 %v848, %v848
        %v945 = vmul.f32 %v849, %v849
        %v946 = vmul.f32 %v850, %v850
        %v947 = vmul.f32 %v851, %v851
        %v948 = vmul.f32 %v852, %v852
        %v949 = vmul.f32 %v853, %v853
        %v950 = vmul.f32 %v854, %v854
        %v951 = vmul.f32 %v855, %v855
        %v952 = vmul.f32 %v856, %v856
        %v953 = vmul.f32 %v857, %v857
        %v954 = vmul.f32 %v858, %v858
        %v955 = vmul.f32 %v859, %v859
        %v956 = vmul.f32 %v860, %v860
        %v957 = vmul.f32 %v861, %v861
        %v958 = vmul.f32 %v862, %v862
        %v959 = vmul.f32 %v863, %v863
        %v960 = vmul.f32 %v864, %v864
        %v961 = vmul.f32 %v865, %v865
        %v962 = vmul.f32 %v866, %v866
        %v963 = vmul.f32 %v867, %v867
        %v964 = vmul.f32 %v868, %v868
        %v965 = vmul.f32 %v869, %v869
        %v966 = vmul.f32 %v870, %v870
        %v967 = vmul.f32 %v871, %v871
        %v968 = vmul.f32 %v872, %v872
        %v969 = vmul.f32 %v873, %v873
        %v970 = vmul.f32 %v874, %v874
        %v971 = vmul.f32 %v875, %v875
        %v972 = vmul.f32 %v876, %v876
        %v973 = vmul.f32 %v877, %v877
        %v974 = vmul.f32 %v878, %v878
        %v975 = vadd.f32 %v879, %v880
        %v976 = vadd.f32 %v975, %v881
        %v977 = vadd.f32 %v976, %v882
        %v978 = vadd.f32 %v977, %v883
        %v979 = vadd.f32 %v978, %v884
        %980 = vadd.xlane.f32.xlu0 %v979
        %v981 = vpop.xlane.xlu0 %980
        %v982 = vadd.f32 %v885, %v886
        %v983 = vadd.f32 %v982, %v887
        %v984 = vadd.f32 %v983, %v888
        %v985 = vadd.f32 %v984, %v889
        %v986 = vadd.f32 %v985, %v890
        %987 = vadd.xlane.f32.xlu0 %v986
        %v988 = vpop.xlane.xlu0 %987
        %v989 = vadd.f32 %v891, %v892
        %v990 = vadd.f32 %v989, %v893
        %v991 = vadd.f32 %v990, %v894
        %v992 = vadd.f32 %v991, %v895
        %v993 = vadd.f32 %v992, %v896
        %994 = vadd.xlane.f32.xlu0 %v993
        %v995 = vpop.xlane.xlu0 %994
        %v996 = vadd.f32 %v897, %v898
        %v997 = vadd.f32 %v996, %v899
        %v998 = vadd.f32 %v997, %v900
        %v999 = vadd.f32 %v998, %v901
        %v1000 = vadd.f32 %v999, %v902
        %1001 = vadd.xlane.f32.xlu0 %v1000
        %v1002 = vpop.xlane.xlu0 %1001
        %v1003 = vadd.f32 %v903, %v904
        %v1004 = vadd.f32 %v1003, %v905
        %v1005 = vadd.f32 %v1004, %v906
        %v1006 = vadd.f32 %v1005, %v907
        %v1007 = vadd.f32 %v1006, %v908
        %1008 = vadd.xlane.f32.xlu0 %v1007
        %v1009 = vpop.xlane.xlu0 %1008
        %v1010 = vadd.f32 %v909, %v910
        %v1011 = vadd.f32 %v1010, %v911
        %v1012 = vadd.f32 %v1011, %v912
        %v1013 = vadd.f32 %v1012, %v913
        %v1014 = vadd.f32 %v1013, %v914
        %1015 = vadd.xlane.f32.xlu0 %v1014
        %v1016 = vpop.xlane.xlu0 %1015
        %v1017 = vadd.f32 %v915, %v916
        %v1018 = vadd.f32 %v1017, %v917
        %v1019 = vadd.f32 %v1018, %v918
        %v1020 = vadd.f32 %v1019, %v919
        %v1021 = vadd.f32 %v1020, %v920
        %1022 = vadd.xlane.f32.xlu0 %v1021
        %v1023 = vpop.xlane.xlu0 %1022
        %v1024 = vadd.f32 %v921, %v922
        %v1025 = vadd.f32 %v1024, %v923
        %v1026 = vadd.f32 %v1025, %v924
        %v1027 = vadd.f32 %v1026, %v925
        %v1028 = vadd.f32 %v1027, %v926
        %1029 = vadd.xlane.f32.xlu0 %v1028
        %v1030 = vpop.xlane.xlu0 %1029
        %v1031 = vadd.f32 %v927, %v928
        %v1032 = vadd.f32 %v1031, %v929
        %v1033 = vadd.f32 %v1032, %v930
        %v1034 = vadd.f32 %v1033, %v931
        %v1035 = vadd.f32 %v1034, %v932
        %1036 = vadd.xlane.f32.xlu0 %v1035
        %v1037 = vpop.xlane.xlu0 %1036
        %v1038 = vadd.f32 %v933, %v934
        %v1039 = vadd.f32 %v1038, %v935
        %v1040 = vadd.f32 %v1039, %v936
        %v1041 = vadd.f32 %v1040, %v937
        %v1042 = vadd.f32 %v1041, %v938
        %1043 = vadd.xlane.f32.xlu0 %v1042
        %v1044 = vpop.xlane.xlu0 %1043
        %v1045 = vadd.f32 %v939, %v940
        %v1046 = vadd.f32 %v1045, %v941
        %v1047 = vadd.f32 %v1046, %v942
        %v1048 = vadd.f32 %v1047, %v943
        %v1049 = vadd.f32 %v1048, %v944
        %1050 = vadd.xlane.f32.xlu0 %v1049
        %v1051 = vpop.xlane.xlu0 %1050
        %v1052 = vadd.f32 %v945, %v946
        %v1053 = vadd.f32 %v1052, %v947
        %v1054 = vadd.f32 %v1053, %v948
        %v1055 = vadd.f32 %v1054, %v949
        %v1056 = vadd.f32 %v1055, %v950
        %1057 = vadd.xlane.f32.xlu0 %v1056
        %v1058 = vpop.xlane.xlu0 %1057
        %v1059 = vadd.f32 %v951, %v952
        %v1060 = vadd.f32 %v1059, %v953
        %v1061 = vadd.f32 %v1060, %v954
        %v1062 = vadd.f32 %v1061, %v955
        %v1063 = vadd.f32 %v1062, %v956
        %1064 = vadd.xlane.f32.xlu0 %v1063
        %v1065 = vpop.xlane.xlu0 %1064
        %v1066 = vadd.f32 %v957, %v958
        %v1067 = vadd.f32 %v1066, %v959
        %v1068 = vadd.f32 %v1067, %v960
        %v1069 = vadd.f32 %v1068, %v961
        %v1070 = vadd.f32 %v1069, %v962
        %1071 = vadd.xlane.f32.xlu0 %v1070
        %v1072 = vpop.xlane.xlu0 %1071
        %v1073 = vadd.f32 %v963, %v964
        %v1074 = vadd.f32 %v1073, %v965
        %v1075 = vadd.f32 %v1074, %v966
        %v1076 = vadd.f32 %v1075, %v967
        %v1077 = vadd.f32 %v1076, %v968
        %1078 = vadd.xlane.f32.xlu0 %v1077
        %v1079 = vpop.xlane.xlu0 %1078
        %v1080 = vadd.f32 %v969, %v970
        %v1081 = vadd.f32 %v1080, %v971
        %v1082 = vadd.f32 %v1081, %v972
        %v1083 = vadd.f32 %v1082, %v973
        %v1084 = vadd.f32 %v1083, %v974
        %1085 = vadd.xlane.f32.xlu0 %v1084
        %v1086 = vpop.xlane.xlu0 %1085
        %v1087 = vmul.f32 %v981, %v766
        %v1088 = vmul.f32 %v988, %v766
        %v1089 = vmul.f32 %v995, %v766
        %v1090 = vmul.f32 %v1002, %v766
        %v1091 = vmul.f32 %v1009, %v766
        %v1092 = vmul.f32 %v1016, %v766
        %v1093 = vmul.f32 %v1023, %v766
        %v1094 = vmul.f32 %v1030, %v766
        %v1095 = vmul.f32 %v1037, %v766
        %v1096 = vmul.f32 %v1044, %v766
        %v1097 = vmul.f32 %v1051, %v766
        %v1098 = vmul.f32 %v1058, %v766
        %v1099 = vmul.f32 %v1065, %v766
        %v1100 = vmul.f32 %v1072, %v766
        %v1101 = vmul.f32 %v1079, %v766
        %v1102 = vmul.f32 %v1086, %v766
        %v1103 = vadd.f32 %v1087, 1e-05
        %v1104 = vadd.f32 %v1088, 1e-05
        %v1105 = vadd.f32 %v1089, 1e-05
        %v1106 = vadd.f32 %v1090, 1e-05
        %v1107 = vadd.f32 %v1091, 1e-05
        %v1108 = vadd.f32 %v1092, 1e-05
        %v1109 = vadd.f32 %v1093, 1e-05
        %v1110 = vadd.f32 %v1094, 1e-05
        %v1111 = vadd.f32 %v1095, 1e-05
        %v1112 = vadd.f32 %v1096, 1e-05
        %v1113 = vadd.f32 %v1097, 1e-05
        %v1114 = vadd.f32 %v1098, 1e-05
        %v1115 = vadd.f32 %v1099, 1e-05
        %v1116 = vadd.f32 %v1100, 1e-05
        %v1117 = vadd.f32 %v1101, 1e-05
        %v1118 = vadd.f32 %v1102, 1e-05
        %v1119 = vrsqrt.pop %v1103
        %v1120 = vrsqrt.pop %v1104
        %v1121 = vrsqrt.pop %v1105
        %v1122 = vrsqrt.pop %v1106
        %v1123 = vrsqrt.pop %v1107
        %v1124 = vrsqrt.pop %v1108
        %v1125 = vrsqrt.pop %v1109
        %v1126 = vrsqrt.pop %v1110
        %v1127 = vrsqrt.pop %v1111
        %v1128 = vrsqrt.pop %v1112
        %v1129 = vrsqrt.pop %v1113
        %v1130 = vrsqrt.pop %v1114
        %v1131 = vrsqrt.pop %v1115
        %v1132 = vrsqrt.pop %v1116
        %v1133 = vrsqrt.pop %v1117
        %v1134 = vrsqrt.pop %v1118
        %v1135 = vmul.f32 %v783, %v1119
        %v1136 = vmul.f32 %v784, %v1119
        %v1137 = vmul.f32 %v785, %v1119
        %v1138 = vmul.f32 %v786, %v1119
        %v1139 = vmul.f32 %v787, %v1119
        %v1140 = vmul.f32 %v788, %v1119
        %v1141 = vmul.f32 %v789, %v1120
        %v1142 = vmul.f32 %v790, %v1120
        %v1143 = vmul.f32 %v791, %v1120
        %v1144 = vmul.f32 %v792, %v1120
        %v1145 = vmul.f32 %v793, %v1120
        %v1146 = vmul.f32 %v794, %v1120
        %v1147 = vmul.f32 %v795, %v1121
        %v1148 = vmul.f32 %v796, %v1121
        %v1149 = vmul.f32 %v797, %v1121
        %v1150 = vmul.f32 %v798, %v1121
        %v1151 = vmul.f32 %v799, %v1121
        %v1152 = vmul.f32 %v800, %v1121
        %v1153 = vmul.f32 %v801, %v1122
        %v1154 = vmul.f32 %v802, %v1122
        %v1155 = vmul.f32 %v803, %v1122
        %v1156 = vmul.f32 %v804, %v1122
        %v1157 = vmul.f32 %v805, %v1122
        %v1158 = vmul.f32 %v806, %v1122
        %v1159 = vmul.f32 %v807, %v1123
        %v1160 = vmul.f32 %v808, %v1123
        %v1161 = vmul.f32 %v809, %v1123
        %v1162 = vmul.f32 %v810, %v1123
        %v1163 = vmul.f32 %v811, %v1123
        %v1164 = vmul.f32 %v812, %v1123
        %v1165 = vmul.f32 %v813, %v1124
        %v1166 = vmul.f32 %v814, %v1124
        %v1167 = vmul.f32 %v815, %v1124
        %v1168 = vmul.f32 %v816, %v1124
        %v1169 = vmul.f32 %v817, %v1124
        %v1170 = vmul.f32 %v818, %v1124
        %v1171 = vmul.f32 %v819, %v1125
        %v1172 = vmul.f32 %v820, %v1125
        %v1173 = vmul.f32 %v821, %v1125
        %v1174 = vmul.f32 %v822, %v1125
        %v1175 = vmul.f32 %v823, %v1125
        %v1176 = vmul.f32 %v824, %v1125
        %v1177 = vmul.f32 %v825, %v1126
        %v1178 = vmul.f32 %v826, %v1126
        %v1179 = vmul.f32 %v827, %v1126
        %v1180 = vmul.f32 %v828, %v1126
        %v1181 = vmul.f32 %v829, %v1126
        %v1182 = vmul.f32 %v830, %v1126
        %v1183 = vmul.f32 %v831, %v1127
        %v1184 = vmul.f32 %v832, %v1127
        %v1185 = vmul.f32 %v833, %v1127
        %v1186 = vmul.f32 %v834, %v1127
        %v1187 = vmul.f32 %v835, %v1127
        %v1188 = vmul.f32 %v836, %v1127
        %v1189 = vmul.f32 %v837, %v1128
        %v1190 = vmul.f32 %v838, %v1128
        %v1191 = vmul.f32 %v839, %v1128
        %v1192 = vmul.f32 %v840, %v1128
        %v1193 = vmul.f32 %v841, %v1128
        %v1194 = vmul.f32 %v842, %v1128
        %v1195 = vmul.f32 %v843, %v1129
        %v1196 = vmul.f32 %v844, %v1129
        %v1197 = vmul.f32 %v845, %v1129
        %v1198 = vmul.f32 %v846, %v1129
        %v1199 = vmul.f32 %v847, %v1129
        %v1200 = vmul.f32 %v848, %v1129
        %v1201 = vmul.f32 %v849, %v1130
        %v1202 = vmul.f32 %v850, %v1130
        %v1203 = vmul.f32 %v851, %v1130
        %v1204 = vmul.f32 %v852, %v1130
        %v1205 = vmul.f32 %v853, %v1130
        %v1206 = vmul.f32 %v854, %v1130
        %v1207 = vmul.f32 %v855, %v1131
        %v1208 = vmul.f32 %v856, %v1131
        %v1209 = vmul.f32 %v857, %v1131
        %v1210 = vmul.f32 %v858, %v1131
        %v1211 = vmul.f32 %v859, %v1131
        %v1212 = vmul.f32 %v860, %v1131
        %v1213 = vmul.f32 %v861, %v1132
        %v1214 = vmul.f32 %v862, %v1132
        %v1215 = vmul.f32 %v863, %v1132
        %v1216 = vmul.f32 %v864, %v1132
        %v1217 = vmul.f32 %v865, %v1132
        %v1218 = vmul.f32 %v866, %v1132
        %v1219 = vmul.f32 %v867, %v1133
        %v1220 = vmul.f32 %v868, %v1133
        %v1221 = vmul.f32 %v869, %v1133
        %v1222 = vmul.f32 %v870, %v1133
        %v1223 = vmul.f32 %v871, %v1133
        %v1224 = vmul.f32 %v872, %v1133
        %v1225 = vmul.f32 %v873, %v1134
        %v1226 = vmul.f32 %v874, %v1134
        %v1227 = vmul.f32 %v875, %v1134
        %v1228 = vmul.f32 %v876, %v1134
        %v1229 = vmul.f32 %v877, %v1134
        %v1230 = vmul.f32 %v878, %v1134
        %v1232 = vlaneseq
        %v1233 = vshrl.u32 %v1232, 7
        %v1234 = vsub.s32 0, %v1233
        %v1235 = vrot.slane %v652, %v1234
        %v1236 = vlaneseq
        %v1237 = vshrl.u32 %v1236, 7
        %v1238 = vsub.s32 1, %v1237
        %v1239 = vrot.slane %v652, %v1238
        %v1240 = vlaneseq
        %v1241 = vshrl.u32 %v1240, 7
        %v1242 = vsub.s32 2, %v1241
        %v1243 = vrot.slane %v652, %v1242
        %v1244 = vlaneseq
        %v1245 = vshrl.u32 %v1244, 7
        %v1246 = vsub.s32 3, %v1245
        %v1247 = vrot.slane %v652, %v1246
        %v1248 = vlaneseq
        %v1249 = vshrl.u32 %v1248, 7
        %v1250 = vsub.s32 4, %v1249
        %v1251 = vrot.slane %v652, %v1250
        %v1252 = vlaneseq
        %v1253 = vshrl.u32 %v1252, 7
        %v1254 = vsub.s32 5, %v1253
        %v1255 = vrot.slane %v652, %v1254
        %v1262 = vmul.f32 %v1135, %v1235
        %v1263 = vmul.f32 %v1136, %v1239
        %v1264 = vmul.f32 %v1137, %v1243
        %v1265 = vmul.f32 %v1138, %v1247
        %v1266 = vmul.f32 %v1139, %v1251
        %v1267 = vmul.f32 %v1140, %v1255
        %v1268 = vmul.f32 %v1141, %v1235
        %v1269 = vmul.f32 %v1142, %v1239
        %v1270 = vmul.f32 %v1143, %v1243
        %v1271 = vmul.f32 %v1144, %v1247
        %v1272 = vmul.f32 %v1145, %v1251
        %v1273 = vmul.f32 %v1146, %v1255
        %v1274 = vmul.f32 %v1147, %v1235
        %v1275 = vmul.f32 %v1148, %v1239
        %v1276 = vmul.f32 %v1149, %v1243
        %v1277 = vmul.f32 %v1150, %v1247
        %v1278 = vmul.f32 %v1151, %v1251
        %v1279 = vmul.f32 %v1152, %v1255
        %v1280 = vmul.f32 %v1153, %v1235
        %v1281 = vmul.f32 %v1154, %v1239
        %v1282 = vmul.f32 %v1155, %v1243
        %v1283 = vmul.f32 %v1156, %v1247
        %v1284 = vmul.f32 %v1157, %v1251
        %v1285 = vmul.f32 %v1158, %v1255
        %v1286 = vmul.f32 %v1159, %v1235
        %v1287 = vmul.f32 %v1160, %v1239
        %v1288 = vmul.f32 %v1161, %v1243
        %v1289 = vmul.f32 %v1162, %v1247
        %v1290 = vmul.f32 %v1163, %v1251
        %v1291 = vmul.f32 %v1164, %v1255
        %v1292 = vmul.f32 %v1165, %v1235
        %v1293 = vmul.f32 %v1166, %v1239
        %v1294 = vmul.f32 %v1167, %v1243
        %v1295 = vmul.f32 %v1168, %v1247
        %v1296 = vmul.f32 %v1169, %v1251
        %v1297 = vmul.f32 %v1170, %v1255
        %v1298 = vmul.f32 %v1171, %v1235
        %v1299 = vmul.f32 %v1172, %v1239
        %v1300 = vmul.f32 %v1173, %v1243
        %v1301 = vmul.f32 %v1174, %v1247
        %v1302 = vmul.f32 %v1175, %v1251
        %v1303 = vmul.f32 %v1176, %v1255
        %v1304 = vmul.f32 %v1177, %v1235
        %v1305 = vmul.f32 %v1178, %v1239
        %v1306 = vmul.f32 %v1179, %v1243
        %v1307 = vmul.f32 %v1180, %v1247
        %v1308 = vmul.f32 %v1181, %v1251
        %v1309 = vmul.f32 %v1182, %v1255
        %v1310 = vmul.f32 %v1183, %v1235
        %v1311 = vmul.f32 %v1184, %v1239
        %v1312 = vmul.f32 %v1185, %v1243
        %v1313 = vmul.f32 %v1186, %v1247
        %v1314 = vmul.f32 %v1187, %v1251
        %v1315 = vmul.f32 %v1188, %v1255
        %v1316 = vmul.f32 %v1189, %v1235
        %v1317 = vmul.f32 %v1190, %v1239
        %v1318 = vmul.f32 %v1191, %v1243
        %v1319 = vmul.f32 %v1192, %v1247
        %v1320 = vmul.f32 %v1193, %v1251
        %v1321 = vmul.f32 %v1194, %v1255
        %v1322 = vmul.f32 %v1195, %v1235
        %v1323 = vmul.f32 %v1196, %v1239
        %v1324 = vmul.f32 %v1197, %v1243
        %v1325 = vmul.f32 %v1198, %v1247
        %v1326 = vmul.f32 %v1199, %v1251
        %v1327 = vmul.f32 %v1200, %v1255
        %v1328 = vmul.f32 %v1201, %v1235
        %v1329 = vmul.f32 %v1202, %v1239
        %v1330 = vmul.f32 %v1203, %v1243
        %v1331 = vmul.f32 %v1204, %v1247
        %v1332 = vmul.f32 %v1205, %v1251
        %v1333 = vmul.f32 %v1206, %v1255
        %v1334 = vmul.f32 %v1207, %v1235
        %v1335 = vmul.f32 %v1208, %v1239
        %v1336 = vmul.f32 %v1209, %v1243
        %v1337 = vmul.f32 %v1210, %v1247
        %v1338 = vmul.f32 %v1211, %v1251
        %v1339 = vmul.f32 %v1212, %v1255
        %v1340 = vmul.f32 %v1213, %v1235
        %v1341 = vmul.f32 %v1214, %v1239
        %v1342 = vmul.f32 %v1215, %v1243
        %v1343 = vmul.f32 %v1216, %v1247
        %v1344 = vmul.f32 %v1217, %v1251
        %v1345 = vmul.f32 %v1218, %v1255
        %v1346 = vmul.f32 %v1219, %v1235
        %v1347 = vmul.f32 %v1220, %v1239
        %v1348 = vmul.f32 %v1221, %v1243
        %v1349 = vmul.f32 %v1222, %v1247
        %v1350 = vmul.f32 %v1223, %v1251
        %v1351 = vmul.f32 %v1224, %v1255
        %v1352 = vmul.f32 %v1225, %v1235
        %v1353 = vmul.f32 %v1226, %v1239
        %v1354 = vmul.f32 %v1227, %v1243
        %v1355 = vmul.f32 %v1228, %v1247
        %v1356 = vmul.f32 %v1229, %v1251
        %v1357 = vmul.f32 %v1230, %v1255
        %v1359 = vlaneseq
        %v1360 = vshrl.u32 %v1359, 7
        %v1361 = vsub.s32 0, %v1360
        %v1362 = vrot.slane %v653, %v1361
        %v1363 = vlaneseq
        %v1364 = vshrl.u32 %v1363, 7
        %v1365 = vsub.s32 1, %v1364
        %v1366 = vrot.slane %v653, %v1365
        %v1367 = vlaneseq
        %v1368 = vshrl.u32 %v1367, 7
        %v1369 = vsub.s32 2, %v1368
        %v1370 = vrot.slane %v653, %v1369
        %v1371 = vlaneseq
        %v1372 = vshrl.u32 %v1371, 7
        %v1373 = vsub.s32 3, %v1372
        %v1374 = vrot.slane %v653, %v1373
        %v1375 = vlaneseq
        %v1376 = vshrl.u32 %v1375, 7
        %v1377 = vsub.s32 4, %v1376
        %v1378 = vrot.slane %v653, %v1377
        %v1379 = vlaneseq
        %v1380 = vshrl.u32 %v1379, 7
        %v1381 = vsub.s32 5, %v1380
        %v1382 = vrot.slane %v653, %v1381
        %v1389 = vadd.f32 %v1262, %v1362
        %v1390 = vadd.f32 %v1263, %v1366
        %v1391 = vadd.f32 %v1264, %v1370
        %v1392 = vadd.f32 %v1265, %v1374
        %v1393 = vadd.f32 %v1266, %v1378
        %v1394 = vadd.f32 %v1267, %v1382
        %v1395 = vadd.f32 %v1268, %v1362
        %v1396 = vadd.f32 %v1269, %v1366
        %v1397 = vadd.f32 %v1270, %v1370
        %v1398 = vadd.f32 %v1271, %v1374
        %v1399 = vadd.f32 %v1272, %v1378
        %v1400 = vadd.f32 %v1273, %v1382
        %v1401 = vadd.f32 %v1274, %v1362
        %v1402 = vadd.f32 %v1275, %v1366
        %v1403 = vadd.f32 %v1276, %v1370
        %v1404 = vadd.f32 %v1277, %v1374
        %v1405 = vadd.f32 %v1278, %v1378
        %v1406 = vadd.f32 %v1279, %v1382
        %v1407 = vadd.f32 %v1280, %v1362
        %v1408 = vadd.f32 %v1281, %v1366
        %v1409 = vadd.f32 %v1282, %v1370
        %v1410 = vadd.f32 %v1283, %v1374
        %v1411 = vadd.f32 %v1284, %v1378
        %v1412 = vadd.f32 %v1285, %v1382
        %v1413 = vadd.f32 %v1286, %v1362
        %v1414 = vadd.f32 %v1287, %v1366
        %v1415 = vadd.f32 %v1288, %v1370
        %v1416 = vadd.f32 %v1289, %v1374
        %v1417 = vadd.f32 %v1290, %v1378
        %v1418 = vadd.f32 %v1291, %v1382
        %v1419 = vadd.f32 %v1292, %v1362
        %v1420 = vadd.f32 %v1293, %v1366
        %v1421 = vadd.f32 %v1294, %v1370
        %v1422 = vadd.f32 %v1295, %v1374
        %v1423 = vadd.f32 %v1296, %v1378
        %v1424 = vadd.f32 %v1297, %v1382
        %v1425 = vadd.f32 %v1298, %v1362
        %v1426 = vadd.f32 %v1299, %v1366
        %v1427 = vadd.f32 %v1300, %v1370
        %v1428 = vadd.f32 %v1301, %v1374
        %v1429 = vadd.f32 %v1302, %v1378
        %v1430 = vadd.f32 %v1303, %v1382
        %v1431 = vadd.f32 %v1304, %v1362
        %v1432 = vadd.f32 %v1305, %v1366
        %v1433 = vadd.f32 %v1306, %v1370
        %v1434 = vadd.f32 %v1307, %v1374
        %v1435 = vadd.f32 %v1308, %v1378
        %v1436 = vadd.f32 %v1309, %v1382
        %v1437 = vadd.f32 %v1310, %v1362
        %v1438 = vadd.f32 %v1311, %v1366
        %v1439 = vadd.f32 %v1312, %v1370
        %v1440 = vadd.f32 %v1313, %v1374
        %v1441 = vadd.f32 %v1314, %v1378
        %v1442 = vadd.f32 %v1315, %v1382
        %v1443 = vadd.f32 %v1316, %v1362
        %v1444 = vadd.f32 %v1317, %v1366
        %v1445 = vadd.f32 %v1318, %v1370
        %v1446 = vadd.f32 %v1319, %v1374
        %v1447 = vadd.f32 %v1320, %v1378
        %v1448 = vadd.f32 %v1321, %v1382
        %v1449 = vadd.f32 %v1322, %v1362
        %v1450 = vadd.f32 %v1323, %v1366
        %v1451 = vadd.f32 %v1324, %v1370
        %v1452 = vadd.f32 %v1325, %v1374
        %v1453 = vadd.f32 %v1326, %v1378
        %v1454 = vadd.f32 %v1327, %v1382
        %v1455 = vadd.f32 %v1328, %v1362
        %v1456 = vadd.f32 %v1329, %v1366
        %v1457 = vadd.f32 %v1330, %v1370
        %v1458 = vadd.f32 %v1331, %v1374
        %v1459 = vadd.f32 %v1332, %v1378
        %v1460 = vadd.f32 %v1333, %v1382
        %v1461 = vadd.f32 %v1334, %v1362
        %v1462 = vadd.f32 %v1335, %v1366
        %v1463 = vadd.f32 %v1336, %v1370
        %v1464 = vadd.f32 %v1337, %v1374
        %v1465 = vadd.f32 %v1338, %v1378
        %v1466 = vadd.f32 %v1339, %v1382
        %v1467 = vadd.f32 %v1340, %v1362
        %v1468 = vadd.f32 %v1341, %v1366
        %v1469 = vadd.f32 %v1342, %v1370
        %v1470 = vadd.f32 %v1343, %v1374
        %v1471 = vadd.f32 %v1344, %v1378
        %v1472 = vadd.f32 %v1345, %v1382
        %v1473 = vadd.f32 %v1346, %v1362
        %v1474 = vadd.f32 %v1347, %v1366
        %v1475 = vadd.f32 %v1348, %v1370
        %v1476 = vadd.f32 %v1349, %v1374
        %v1477 = vadd.f32 %v1350, %v1378
        %v1478 = vadd.f32 %v1351, %v1382
        %v1479 = vadd.f32 %v1352, %v1362
        %v1480 = vadd.f32 %v1353, %v1366
        %v1481 = vadd.f32 %v1354, %v1370
        %v1482 = vadd.f32 %v1355, %v1374
        %v1483 = vadd.f32 %v1356, %v1378
        %v1484 = vadd.f32 %v1357, %v1382
        %v1485 = vpack.c.bf16 %v1395, %v1389
        %v1486 = vpack.c.bf16 %v1396, %v1390
        %v1487 = vpack.c.bf16 %v1397, %v1391
        %v1488 = vpack.c.bf16 %v1398, %v1392
        %v1489 = vpack.c.bf16 %v1399, %v1393
        %v1490 = vpack.c.bf16 %v1400, %v1394
        %v1491 = vpack.c.bf16 %v1407, %v1401
        %v1492 = vpack.c.bf16 %v1408, %v1402
        %v1493 = vpack.c.bf16 %v1409, %v1403
        %v1494 = vpack.c.bf16 %v1410, %v1404
        %v1495 = vpack.c.bf16 %v1411, %v1405
        %v1496 = vpack.c.bf16 %v1412, %v1406
        %v1497 = vpack.c.bf16 %v1419, %v1413
        %v1498 = vpack.c.bf16 %v1420, %v1414
        %v1499 = vpack.c.bf16 %v1421, %v1415
        %v1500 = vpack.c.bf16 %v1422, %v1416
        %v1501 = vpack.c.bf16 %v1423, %v1417
        %v1502 = vpack.c.bf16 %v1424, %v1418
        %v1503 = vpack.c.bf16 %v1431, %v1425
        %v1504 = vpack.c.bf16 %v1432, %v1426
        %v1505 = vpack.c.bf16 %v1433, %v1427
        %v1506 = vpack.c.bf16 %v1434, %v1428
        %v1507 = vpack.c.bf16 %v1435, %v1429
        %v1508 = vpack.c.bf16 %v1436, %v1430
        %v1509 = vpack.c.bf16 %v1443, %v1437
        %v1510 = vpack.c.bf16 %v1444, %v1438
        %v1511 = vpack.c.bf16 %v1445, %v1439
        %v1512 = vpack.c.bf16 %v1446, %v1440
        %v1513 = vpack.c.bf16 %v1447, %v1441
        %v1514 = vpack.c.bf16 %v1448, %v1442
        %v1515 = vpack.c.bf16 %v1455, %v1449
        %v1516 = vpack.c.bf16 %v1456, %v1450
        %v1517 = vpack.c.bf16 %v1457, %v1451
        %v1518 = vpack.c.bf16 %v1458, %v1452
        %v1519 = vpack.c.bf16 %v1459, %v1453
        %v1520 = vpack.c.bf16 %v1460, %v1454
        %v1521 = vpack.c.bf16 %v1467, %v1461
        %v1522 = vpack.c.bf16 %v1468, %v1462
        %v1523 = vpack.c.bf16 %v1469, %v1463
        %v1524 = vpack.c.bf16 %v1470, %v1464
        %v1525 = vpack.c.bf16 %v1471, %v1465
        %v1526 = vpack.c.bf16 %v1472, %v1466
        %v1527 = vpack.c.bf16 %v1479, %v1473
        %v1528 = vpack.c.bf16 %v1480, %v1474
        %v1529 = vpack.c.bf16 %v1481, %v1475
        %v1530 = vpack.c.bf16 %v1482, %v1476
        %v1531 = vpack.c.bf16 %v1483, %v1477
        %v1532 = vpack.c.bf16 %v1484, %v1478
        %v1533 = vld [vmem:[#allocation8] sm:$0xff]
        %v1534 = vld [vmem:[#allocation8 + $0x8] sm:$0xff]
        %v1535 = vld [vmem:[#allocation8 + $0x10] sm:$0xff]
        %v1536 = vld [vmem:[#allocation8 + $0x18] sm:$0xff]
        %v1537 = vld [vmem:[#allocation8 + $0x20] sm:$0xff]
        %v1538 = vld [vmem:[#allocation8 + $0x28] sm:$0xff]
        %v1539 = vld [vmem:[#allocation8 + $0x30] sm:$0xff]
        %v1540 = vld [vmem:[#allocation8 + $0x38] sm:$0xff]
        %v1541 = vld [vmem:[#allocation8 + $0x40] sm:$0xff]
        %v1542 = vld [vmem:[#allocation8 + $0x48] sm:$0xff]
        %v1543 = vld [vmem:[#allocation8 + $0x50] sm:$0xff]
        %v1544 = vld [vmem:[#allocation8 + $0x58] sm:$0xff]
        %v1545 = vld [vmem:[#allocation8 + $0x60] sm:$0xff]
        %v1546 = vld [vmem:[#allocation8 + $0x68] sm:$0xff]
        %v1547 = vld [vmem:[#allocation8 + $0x70] sm:$0xff]
        %v1548 = vld [vmem:[#allocation8 + $0x78] sm:$0xff]
        %v1549 = vld [vmem:[#allocation8 + $0x80] sm:$0xff]
        %v1550 = vld [vmem:[#allocation8 + $0x88] sm:$0xff]
        %v1551 = vld [vmem:[#allocation8 + $0x90] sm:$0xff]
        %v1552 = vld [vmem:[#allocation8 + $0x98] sm:$0xff]
        %v1553 = vld [vmem:[#allocation8 + $0xa0] sm:$0xff]
        %v1554 = vld [vmem:[#allocation8 + $0xa8] sm:$0xff]
        %v1555 = vld [vmem:[#allocation8 + $0xb0] sm:$0xff]
        %v1556 = vld [vmem:[#allocation8 + $0xb8] sm:$0xff]
        %v1557 = vld [vmem:[#allocation8 + $0xc0] sm:$0xff]
        %v1558 = vld [vmem:[#allocation8 + $0xc8] sm:$0xff]
        %v1559 = vld [vmem:[#allocation8 + $0xd0] sm:$0xff]
        %v1560 = vld [vmem:[#allocation8 + $0xd8] sm:$0xff]
        %v1561 = vld [vmem:[#allocation8 + $0xe0] sm:$0xff]
        %v1562 = vld [vmem:[#allocation8 + $0xe8] sm:$0xff]
        %v1563 = vld [vmem:[#allocation8 + $0xf0] sm:$0xff]
        %v1564 = vld [vmem:[#allocation8 + $0xf8] sm:$0xff]
        %v1565 = vld [vmem:[#allocation8 + $0x100] sm:$0xff]
        %v1566 = vld [vmem:[#allocation8 + $0x108] sm:$0xff]
        %v1567 = vld [vmem:[#allocation8 + $0x110] sm:$0xff]
        %v1568 = vld [vmem:[#allocation8 + $0x118] sm:$0xff]
        %v1569 = vld [vmem:[#allocation8 + $0x120] sm:$0xff]
        %v1570 = vld [vmem:[#allocation8 + $0x128] sm:$0xff]
        %v1571 = vld [vmem:[#allocation8 + $0x130] sm:$0xff]
        %v1572 = vld [vmem:[#allocation8 + $0x138] sm:$0xff]
        %v1573 = vld [vmem:[#allocation8 + $0x140] sm:$0xff]
        %v1574 = vld [vmem:[#allocation8 + $0x148] sm:$0xff]
        %v1575 = vld [vmem:[#allocation8 + $0x150] sm:$0xff]
        %v1576 = vld [vmem:[#allocation8 + $0x158] sm:$0xff]
        %v1577 = vld [vmem:[#allocation8 + $0x160] sm:$0xff]
        %v1578 = vld [vmem:[#allocation8 + $0x168] sm:$0xff]
        %v1579 = vld [vmem:[#allocation8 + $0x170] sm:$0xff]
        %v1580 = vld [vmem:[#allocation8 + $0x178] sm:$0xff]
        %v1581 = vld [vmem:[#allocation8 + $0x180] sm:$0xff]
        %v1582 = vld [vmem:[#allocation8 + $0x188] sm:$0xff]
        %v1583 = vld [vmem:[#allocation8 + $0x190] sm:$0xff]
        %v1584 = vld [vmem:[#allocation8 + $0x198] sm:$0xff]
        %v1585 = vld [vmem:[#allocation8 + $0x1a0] sm:$0xff]
        %v1586 = vld [vmem:[#allocation8 + $0x1a8] sm:$0xff]
        %v1587 = vld [vmem:[#allocation8 + $0x1b0] sm:$0xff]
        %v1588 = vld [vmem:[#allocation8 + $0x1b8] sm:$0xff]
        %v1589 = vld [vmem:[#allocation8 + $0x1c0] sm:$0xff]
        %v1590 = vld [vmem:[#allocation8 + $0x1c8] sm:$0xff]
        %v1591 = vld [vmem:[#allocation8 + $0x1d0] sm:$0xff]
        %v1592 = vld [vmem:[#allocation8 + $0x1d8] sm:$0xff]
        %v1593 = vld [vmem:[#allocation8 + $0x1e0] sm:$0xff]
        %v1594 = vld [vmem:[#allocation8 + $0x1e8] sm:$0xff]
        %v1595 = vld [vmem:[#allocation8 + $0x1f0] sm:$0xff]
        %v1596 = vld [vmem:[#allocation8 + $0x1f8] sm:$0xff]
        %v1597 = vld [vmem:[#allocation8 + $0x200] sm:$0xff]
        %v1598 = vld [vmem:[#allocation8 + $0x208] sm:$0xff]
        %v1599 = vld [vmem:[#allocation8 + $0x210] sm:$0xff]
        %v1600 = vld [vmem:[#allocation8 + $0x218] sm:$0xff]
        %v1601 = vld [vmem:[#allocation8 + $0x220] sm:$0xff]
        %v1602 = vld [vmem:[#allocation8 + $0x228] sm:$0xff]
        %v1603 = vld [vmem:[#allocation8 + $0x230] sm:$0xff]
        %v1604 = vld [vmem:[#allocation8 + $0x238] sm:$0xff]
        %v1605 = vld [vmem:[#allocation8 + $0x240] sm:$0xff]
        %v1606 = vld [vmem:[#allocation8 + $0x248] sm:$0xff]
        %v1607 = vld [vmem:[#allocation8 + $0x250] sm:$0xff]
        %v1608 = vld [vmem:[#allocation8 + $0x258] sm:$0xff]
        %v1609 = vld [vmem:[#allocation8 + $0x260] sm:$0xff]
        %v1610 = vld [vmem:[#allocation8 + $0x268] sm:$0xff]
        %v1611 = vld [vmem:[#allocation8 + $0x270] sm:$0xff]
        %v1612 = vld [vmem:[#allocation8 + $0x278] sm:$0xff]
        %v1613 = vld [vmem:[#allocation8 + $0x280] sm:$0xff]
        %v1614 = vld [vmem:[#allocation8 + $0x288] sm:$0xff]
        %v1615 = vld [vmem:[#allocation8 + $0x290] sm:$0xff]
        %v1616 = vld [vmem:[#allocation8 + $0x298] sm:$0xff]
        %v1617 = vld [vmem:[#allocation8 + $0x2a0] sm:$0xff]
        %v1618 = vld [vmem:[#allocation8 + $0x2a8] sm:$0xff]
        %v1619 = vld [vmem:[#allocation8 + $0x2b0] sm:$0xff]
        %v1620 = vld [vmem:[#allocation8 + $0x2b8] sm:$0xff]
        %v1621 = vld [vmem:[#allocation8 + $0x2c0] sm:$0xff]
        %v1622 = vld [vmem:[#allocation8 + $0x2c8] sm:$0xff]
        %v1623 = vld [vmem:[#allocation8 + $0x2d0] sm:$0xff]
        %v1624 = vld [vmem:[#allocation8 + $0x2d8] sm:$0xff]
        %v1625 = vld [vmem:[#allocation8 + $0x2e0] sm:$0xff]
        %v1626 = vld [vmem:[#allocation8 + $0x2e8] sm:$0xff]
        %v1627 = vld [vmem:[#allocation8 + $0x2f0] sm:$0xff]
        %v1628 = vld [vmem:[#allocation8 + $0x2f8] sm:$0xff]
        %v1629 = vld [vmem:[#allocation8 + $0x300] sm:$0xff]
        %v1630 = vld [vmem:[#allocation8 + $0x308] sm:$0xff]
        %v1631 = vld [vmem:[#allocation8 + $0x310] sm:$0xff]
        %v1632 = vld [vmem:[#allocation8 + $0x318] sm:$0xff]
        %v1633 = vld [vmem:[#allocation8 + $0x320] sm:$0xff]
        %v1634 = vld [vmem:[#allocation8 + $0x328] sm:$0xff]
        %v1635 = vld [vmem:[#allocation8 + $0x330] sm:$0xff]
        %v1636 = vld [vmem:[#allocation8 + $0x338] sm:$0xff]
        %v1637 = vld [vmem:[#allocation8 + $0x340] sm:$0xff]
        %v1638 = vld [vmem:[#allocation8 + $0x348] sm:$0xff]
        %v1639 = vld [vmem:[#allocation8 + $0x350] sm:$0xff]
        %v1640 = vld [vmem:[#allocation8 + $0x358] sm:$0xff]
        %v1641 = vld [vmem:[#allocation8 + $0x360] sm:$0xff]
        %v1642 = vld [vmem:[#allocation8 + $0x368] sm:$0xff]
        %v1643 = vld [vmem:[#allocation8 + $0x370] sm:$0xff]
        %v1644 = vld [vmem:[#allocation8 + $0x378] sm:$0xff]
        %v1645 = vld [vmem:[#allocation8 + $0x380] sm:$0xff]
        %v1646 = vld [vmem:[#allocation8 + $0x388] sm:$0xff]
        %v1647 = vld [vmem:[#allocation8 + $0x390] sm:$0xff]
        %v1648 = vld [vmem:[#allocation8 + $0x398] sm:$0xff]
        %v1649 = vld [vmem:[#allocation8 + $0x3a0] sm:$0xff]
        %v1650 = vld [vmem:[#allocation8 + $0x3a8] sm:$0xff]
        %v1651 = vld [vmem:[#allocation8 + $0x3b0] sm:$0xff]
        %v1652 = vld [vmem:[#allocation8 + $0x3b8] sm:$0xff]
        %v1653 = vld [vmem:[#allocation8 + $0x3c0] sm:$0xff]
        %v1654 = vld [vmem:[#allocation8 + $0x3c8] sm:$0xff]
        %v1655 = vld [vmem:[#allocation8 + $0x3d0] sm:$0xff]
        %v1656 = vld [vmem:[#allocation8 + $0x3d8] sm:$0xff]
        %v1657 = vld [vmem:[#allocation8 + $0x3e0] sm:$0xff]
        %v1658 = vld [vmem:[#allocation8 + $0x3e8] sm:$0xff]
        %v1659 = vld [vmem:[#allocation8 + $0x3f0] sm:$0xff]
        %v1660 = vld [vmem:[#allocation8 + $0x3f8] sm:$0xff]
        %v1661 = vld [vmem:[#allocation8 + $0x400] sm:$0xff]
        %v1662 = vld [vmem:[#allocation8 + $0x408] sm:$0xff]
        %v1663 = vld [vmem:[#allocation8 + $0x410] sm:$0xff]
        %v1664 = vld [vmem:[#allocation8 + $0x418] sm:$0xff]
        %v1665 = vld [vmem:[#allocation8 + $0x420] sm:$0xff]
        %v1666 = vld [vmem:[#allocation8 + $0x428] sm:$0xff]
        %v1667 = vld [vmem:[#allocation8 + $0x430] sm:$0xff]
        %v1668 = vld [vmem:[#allocation8 + $0x438] sm:$0xff]
        %v1669 = vld [vmem:[#allocation8 + $0x440] sm:$0xff]
        %v1670 = vld [vmem:[#allocation8 + $0x448] sm:$0xff]
        %v1671 = vld [vmem:[#allocation8 + $0x450] sm:$0xff]
        %v1672 = vld [vmem:[#allocation8 + $0x458] sm:$0xff]
        %v1673 = vld [vmem:[#allocation8 + $0x460] sm:$0xff]
        %v1674 = vld [vmem:[#allocation8 + $0x468] sm:$0xff]
        %v1675 = vld [vmem:[#allocation8 + $0x470] sm:$0xff]
        %v1676 = vld [vmem:[#allocation8 + $0x478] sm:$0xff]
        %v1677 = vld [vmem:[#allocation8 + $0x480] sm:$0xff]
        %v1678 = vld [vmem:[#allocation8 + $0x488] sm:$0xff]
        %v1679 = vld [vmem:[#allocation8 + $0x490] sm:$0xff]
        %v1680 = vld [vmem:[#allocation8 + $0x498] sm:$0xff]
        %v1681 = vld [vmem:[#allocation8 + $0x4a0] sm:$0xff]
        %v1682 = vld [vmem:[#allocation8 + $0x4a8] sm:$0xff]
        %v1683 = vld [vmem:[#allocation8 + $0x4b0] sm:$0xff]
        %v1684 = vld [vmem:[#allocation8 + $0x4b8] sm:$0xff]
        %v1685 = vld [vmem:[#allocation8 + $0x4c0] sm:$0xff]
        %v1686 = vld [vmem:[#allocation8 + $0x4c8] sm:$0xff]
        %v1687 = vld [vmem:[#allocation8 + $0x4d0] sm:$0xff]
        %v1688 = vld [vmem:[#allocation8 + $0x4d8] sm:$0xff]
        %v1689 = vld [vmem:[#allocation8 + $0x4e0] sm:$0xff]
        %v1690 = vld [vmem:[#allocation8 + $0x4e8] sm:$0xff]
        %v1691 = vld [vmem:[#allocation8 + $0x4f0] sm:$0xff]
        %v1692 = vld [vmem:[#allocation8 + $0x4f8] sm:$0xff]
        %v1693 = vld [vmem:[#allocation8 + $0x500] sm:$0xff]
        %v1694 = vld [vmem:[#allocation8 + $0x508] sm:$0xff]
        %v1695 = vld [vmem:[#allocation8 + $0x510] sm:$0xff]
        %v1696 = vld [vmem:[#allocation8 + $0x518] sm:$0xff]
        %v1697 = vld [vmem:[#allocation8 + $0x520] sm:$0xff]
        %v1698 = vld [vmem:[#allocation8 + $0x528] sm:$0xff]
        %v1699 = vld [vmem:[#allocation8 + $0x530] sm:$0xff]
        %v1700 = vld [vmem:[#allocation8 + $0x538] sm:$0xff]
        %v1701 = vld [vmem:[#allocation8 + $0x540] sm:$0xff]
        %v1702 = vld [vmem:[#allocation8 + $0x548] sm:$0xff]
        %v1703 = vld [vmem:[#allocation8 + $0x550] sm:$0xff]
        %v1704 = vld [vmem:[#allocation8 + $0x558] sm:$0xff]
        %v1705 = vld [vmem:[#allocation8 + $0x560] sm:$0xff]
        %v1706 = vld [vmem:[#allocation8 + $0x568] sm:$0xff]
        %v1707 = vld [vmem:[#allocation8 + $0x570] sm:$0xff]
        %v1708 = vld [vmem:[#allocation8 + $0x578] sm:$0xff]
        %v1709 = vld [vmem:[#allocation8 + $0x580] sm:$0xff]
        %v1710 = vld [vmem:[#allocation8 + $0x588] sm:$0xff]
        %v1711 = vld [vmem:[#allocation8 + $0x590] sm:$0xff]
        %v1712 = vld [vmem:[#allocation8 + $0x598] sm:$0xff]
        %v1713 = vld [vmem:[#allocation8 + $0x5a0] sm:$0xff]
        %v1714 = vld [vmem:[#allocation8 + $0x5a8] sm:$0xff]
        %v1715 = vld [vmem:[#allocation8 + $0x5b0] sm:$0xff]
        %v1716 = vld [vmem:[#allocation8 + $0x5b8] sm:$0xff]
        %v1717 = vld [vmem:[#allocation8 + $0x5c0] sm:$0xff]
        %v1718 = vld [vmem:[#allocation8 + $0x5c8] sm:$0xff]
        %v1719 = vld [vmem:[#allocation8 + $0x5d0] sm:$0xff]
        %v1720 = vld [vmem:[#allocation8 + $0x5d8] sm:$0xff]
        %v1721 = vld [vmem:[#allocation8 + $0x5e0] sm:$0xff]
        %v1722 = vld [vmem:[#allocation8 + $0x5e8] sm:$0xff]
        %v1723 = vld [vmem:[#allocation8 + $0x5f0] sm:$0xff]
        %v1724 = vld [vmem:[#allocation8 + $0x5f8] sm:$0xff]
        %v1725 = vld [vmem:[#allocation8 + $0x600] sm:$0xff]
        %v1726 = vld [vmem:[#allocation8 + $0x608] sm:$0xff]
        %v1727 = vld [vmem:[#allocation8 + $0x610] sm:$0xff]
        %v1728 = vld [vmem:[#allocation8 + $0x618] sm:$0xff]
        %v1729 = vld [vmem:[#allocation8 + $0x620] sm:$0xff]
        %v1730 = vld [vmem:[#allocation8 + $0x628] sm:$0xff]
        %v1731 = vld [vmem:[#allocation8 + $0x630] sm:$0xff]
        %v1732 = vld [vmem:[#allocation8 + $0x638] sm:$0xff]
        %v1733 = vld [vmem:[#allocation8 + $0x640] sm:$0xff]
        %v1734 = vld [vmem:[#allocation8 + $0x648] sm:$0xff]
        %v1735 = vld [vmem:[#allocation8 + $0x650] sm:$0xff]
        %v1736 = vld [vmem:[#allocation8 + $0x658] sm:$0xff]
        %v1737 = vld [vmem:[#allocation8 + $0x660] sm:$0xff]
        %v1738 = vld [vmem:[#allocation8 + $0x668] sm:$0xff]
        %v1739 = vld [vmem:[#allocation8 + $0x670] sm:$0xff]
        %v1740 = vld [vmem:[#allocation8 + $0x678] sm:$0xff]
        %v1741 = vld [vmem:[#allocation8 + $0x680] sm:$0xff]
        %v1742 = vld [vmem:[#allocation8 + $0x688] sm:$0xff]
        %v1743 = vld [vmem:[#allocation8 + $0x690] sm:$0xff]
        %v1744 = vld [vmem:[#allocation8 + $0x698] sm:$0xff]
        %v1745 = vld [vmem:[#allocation8 + $0x6a0] sm:$0xff]
        %v1746 = vld [vmem:[#allocation8 + $0x6a8] sm:$0xff]
        %v1747 = vld [vmem:[#allocation8 + $0x6b0] sm:$0xff]
        %v1748 = vld [vmem:[#allocation8 + $0x6b8] sm:$0xff]
        %v1749 = vld [vmem:[#allocation8 + $0x6c0] sm:$0xff]
        %v1750 = vld [vmem:[#allocation8 + $0x6c8] sm:$0xff]
        %v1751 = vld [vmem:[#allocation8 + $0x6d0] sm:$0xff]
        %v1752 = vld [vmem:[#allocation8 + $0x6d8] sm:$0xff]
        %v1753 = vld [vmem:[#allocation8 + $0x6e0] sm:$0xff]
        %v1754 = vld [vmem:[#allocation8 + $0x6e8] sm:$0xff]
        %v1755 = vld [vmem:[#allocation8 + $0x6f0] sm:$0xff]
        %v1756 = vld [vmem:[#allocation8 + $0x6f8] sm:$0xff]
        %v1757 = vld [vmem:[#allocation8 + $0x700] sm:$0xff]
        %v1758 = vld [vmem:[#allocation8 + $0x708] sm:$0xff]
        %v1759 = vld [vmem:[#allocation8 + $0x710] sm:$0xff]
        %v1760 = vld [vmem:[#allocation8 + $0x718] sm:$0xff]
        %v1761 = vld [vmem:[#allocation8 + $0x720] sm:$0xff]
        %v1762 = vld [vmem:[#allocation8 + $0x728] sm:$0xff]
        %v1763 = vld [vmem:[#allocation8 + $0x730] sm:$0xff]
        %v1764 = vld [vmem:[#allocation8 + $0x738] sm:$0xff]
        %v1765 = vld [vmem:[#allocation8 + $0x740] sm:$0xff]
        %v1766 = vld [vmem:[#allocation8 + $0x748] sm:$0xff]
        %v1767 = vld [vmem:[#allocation8 + $0x750] sm:$0xff]
        %v1768 = vld [vmem:[#allocation8 + $0x758] sm:$0xff]
        %v1769 = vld [vmem:[#allocation8 + $0x760] sm:$0xff]
        %v1770 = vld [vmem:[#allocation8 + $0x768] sm:$0xff]
        %v1771 = vld [vmem:[#allocation8 + $0x770] sm:$0xff]
        %v1772 = vld [vmem:[#allocation8 + $0x778] sm:$0xff]
        %v1773 = vld [vmem:[#allocation8 + $0x780] sm:$0xff]
        %v1774 = vld [vmem:[#allocation8 + $0x788] sm:$0xff]
        %v1775 = vld [vmem:[#allocation8 + $0x790] sm:$0xff]
        %v1776 = vld [vmem:[#allocation8 + $0x798] sm:$0xff]
        %v1777 = vld [vmem:[#allocation8 + $0x7a0] sm:$0xff]
        %v1778 = vld [vmem:[#allocation8 + $0x7a8] sm:$0xff]
        %v1779 = vld [vmem:[#allocation8 + $0x7b0] sm:$0xff]
        %v1780 = vld [vmem:[#allocation8 + $0x7b8] sm:$0xff]
        %v1781 = vld [vmem:[#allocation8 + $0x7c0] sm:$0xff]
        %v1782 = vld [vmem:[#allocation8 + $0x7c8] sm:$0xff]
        %v1783 = vld [vmem:[#allocation8 + $0x7d0] sm:$0xff]
        %v1784 = vld [vmem:[#allocation8 + $0x7d8] sm:$0xff]
        %v1785 = vld [vmem:[#allocation8 + $0x7e0] sm:$0xff]
        %v1786 = vld [vmem:[#allocation8 + $0x7e8] sm:$0xff]
        %v1787 = vld [vmem:[#allocation8 + $0x7f0] sm:$0xff]
        %v1788 = vld [vmem:[#allocation8 + $0x7f8] sm:$0xff]
        %v1789 = vld [vmem:[#allocation8 + $0x800] sm:$0xff]
        %v1790 = vld [vmem:[#allocation8 + $0x808] sm:$0xff]
        %v1791 = vld [vmem:[#allocation8 + $0x810] sm:$0xff]
        %v1792 = vld [vmem:[#allocation8 + $0x818] sm:$0xff]
        %v1793 = vld [vmem:[#allocation8 + $0x820] sm:$0xff]
        %v1794 = vld [vmem:[#allocation8 + $0x828] sm:$0xff]
        %v1795 = vld [vmem:[#allocation8 + $0x830] sm:$0xff]
        %v1796 = vld [vmem:[#allocation8 + $0x838] sm:$0xff]
        %v1797 = vld [vmem:[#allocation8 + $0x840] sm:$0xff]
        %v1798 = vld [vmem:[#allocation8 + $0x848] sm:$0xff]
        %v1799 = vld [vmem:[#allocation8 + $0x850] sm:$0xff]
        %v1800 = vld [vmem:[#allocation8 + $0x858] sm:$0xff]
        %v1801 = vld [vmem:[#allocation8 + $0x860] sm:$0xff]
        %v1802 = vld [vmem:[#allocation8 + $0x868] sm:$0xff]
        %v1803 = vld [vmem:[#allocation8 + $0x870] sm:$0xff]
        %v1804 = vld [vmem:[#allocation8 + $0x878] sm:$0xff]
        %v1805 = vld [vmem:[#allocation8 + $0x880] sm:$0xff]
        %v1806 = vld [vmem:[#allocation8 + $0x888] sm:$0xff]
        %v1807 = vld [vmem:[#allocation8 + $0x890] sm:$0xff]
        %v1808 = vld [vmem:[#allocation8 + $0x898] sm:$0xff]
        %v1809 = vld [vmem:[#allocation8 + $0x8a0] sm:$0xff]
        %v1810 = vld [vmem:[#allocation8 + $0x8a8] sm:$0xff]
        %v1811 = vld [vmem:[#allocation8 + $0x8b0] sm:$0xff]
        %v1812 = vld [vmem:[#allocation8 + $0x8b8] sm:$0xff]
        %v1813 = vld [vmem:[#allocation8 + $0x8c0] sm:$0xff]
        %v1814 = vld [vmem:[#allocation8 + $0x8c8] sm:$0xff]
        %v1815 = vld [vmem:[#allocation8 + $0x8d0] sm:$0xff]
        %v1816 = vld [vmem:[#allocation8 + $0x8d8] sm:$0xff]
        %v1817 = vld [vmem:[#allocation8 + $0x8e0] sm:$0xff]
        %v1818 = vld [vmem:[#allocation8 + $0x8e8] sm:$0xff]
        %v1819 = vld [vmem:[#allocation8 + $0x8f0] sm:$0xff]
        %v1820 = vld [vmem:[#allocation8 + $0x8f8] sm:$0xff]
        %v1821 = vld [vmem:[#allocation13] sm:$0x3f]
        %v1823 = vlaneseq
        %v1824 = vshrl.u32 %v1823, 7
        %v1825 = vsub.s32 0, %v1824
        %v1826 = vrot.slane %v1821, %v1825
        %v1827 = vlaneseq
        %v1828 = vshrl.u32 %v1827, 7
        %v1829 = vsub.s32 1, %v1828
        %v1830 = vrot.slane %v1821, %v1829
        %v1831 = vlaneseq
        %v1832 = vshrl.u32 %v1831, 7
        %v1833 = vsub.s32 2, %v1832
        %v1834 = vrot.slane %v1821, %v1833
        %v1835 = vlaneseq
        %v1836 = vshrl.u32 %v1835, 7
        %v1837 = vsub.s32 3, %v1836
        %v1838 = vrot.slane %v1821, %v1837
        %v1839 = vlaneseq
        %v1840 = vshrl.u32 %v1839, 7
        %v1841 = vsub.s32 4, %v1840
        %v1842 = vrot.slane %v1821, %v1841
        %v1843 = vlaneseq
        %v1844 = vshrl.u32 %v1843, 7
        %v1845 = vsub.s32 5, %v1844
        %v1846 = vrot.slane %v1821, %v1845
        %v2141 = vunpack.c.l.b16 %v1533
        %v2142 = vunpack.c.h.b16 %v1533
        %v2143 = vunpack.c.l.b16 %v1534
        %v2144 = vunpack.c.h.b16 %v1534
        %v2145 = vunpack.c.l.b16 %v1535
        %v2146 = vunpack.c.h.b16 %v1535
        %v2147 = vunpack.c.l.b16 %v1536
        %v2148 = vunpack.c.h.b16 %v1536
        %v2149 = vunpack.c.l.b16 %v1537
        %v2150 = vunpack.c.h.b16 %v1537
        %v2151 = vunpack.c.l.b16 %v1538
        %v2152 = vunpack.c.h.b16 %v1538
        %v2153 = vunpack.c.l.b16 %v1539
        %v2154 = vunpack.c.h.b16 %v1539
        %v2155 = vunpack.c.l.b16 %v1540
        %v2156 = vunpack.c.h.b16 %v1540
        %v2157 = vunpack.c.l.b16 %v1541
        %v2158 = vunpack.c.h.b16 %v1541
        %v2159 = vunpack.c.l.b16 %v1542
        %v2160 = vunpack.c.h.b16 %v1542
        %v2161 = vunpack.c.l.b16 %v1543
        %v2162 = vunpack.c.h.b16 %v1543
        %v2163 = vunpack.c.l.b16 %v1544
        %v2164 = vunpack.c.h.b16 %v1544
        %v2165 = vunpack.c.l.b16 %v1545
        %v2166 = vunpack.c.h.b16 %v1545
        %v2167 = vunpack.c.l.b16 %v1546
        %v2168 = vunpack.c.h.b16 %v1546
        %v2169 = vunpack.c.l.b16 %v1547
        %v2170 = vunpack.c.h.b16 %v1547
        %v2171 = vunpack.c.l.b16 %v1548
        %v2172 = vunpack.c.h.b16 %v1548
        %v2173 = vunpack.c.l.b16 %v1549
        %v2174 = vunpack.c.h.b16 %v1549
        %v2175 = vunpack.c.l.b16 %v1550
        %v2176 = vunpack.c.h.b16 %v1550
        %v2177 = vunpack.c.l.b16 %v1551
        %v2178 = vunpack.c.h.b16 %v1551
        %v2179 = vunpack.c.l.b16 %v1552
        %v2180 = vunpack.c.h.b16 %v1552
        %v2181 = vunpack.c.l.b16 %v1553
        %v2182 = vunpack.c.h.b16 %v1553
        %v2183 = vunpack.c.l.b16 %v1554
        %v2184 = vunpack.c.h.b16 %v1554
        %v2185 = vunpack.c.l.b16 %v1555
        %v2186 = vunpack.c.h.b16 %v1555
        %v2187 = vunpack.c.l.b16 %v1556
        %v2188 = vunpack.c.h.b16 %v1556
        %v2189 = vunpack.c.l.b16 %v1557
        %v2190 = vunpack.c.h.b16 %v1557
        %v2191 = vunpack.c.l.b16 %v1558
        %v2192 = vunpack.c.h.b16 %v1558
        %v2193 = vunpack.c.l.b16 %v1559
        %v2194 = vunpack.c.h.b16 %v1559
        %v2195 = vunpack.c.l.b16 %v1560
        %v2196 = vunpack.c.h.b16 %v1560
        %v2197 = vunpack.c.l.b16 %v1561
        %v2198 = vunpack.c.h.b16 %v1561
        %v2199 = vunpack.c.l.b16 %v1562
        %v2200 = vunpack.c.h.b16 %v1562
        %v2201 = vunpack.c.l.b16 %v1563
        %v2202 = vunpack.c.h.b16 %v1563
        %v2203 = vunpack.c.l.b16 %v1564
        %v2204 = vunpack.c.h.b16 %v1564
        %v2205 = vunpack.c.l.b16 %v1565
        %v2206 = vunpack.c.h.b16 %v1565
        %v2207 = vunpack.c.l.b16 %v1566
        %v2208 = vunpack.c.h.b16 %v1566
        %v2209 = vunpack.c.l.b16 %v1567
        %v2210 = vunpack.c.h.b16 %v1567
        %v2211 = vunpack.c.l.b16 %v1568
        %v2212 = vunpack.c.h.b16 %v1568
        %v2213 = vunpack.c.l.b16 %v1569
        %v2214 = vunpack.c.h.b16 %v1569
        %v2215 = vunpack.c.l.b16 %v1570
        %v2216 = vunpack.c.h.b16 %v1570
        %v2217 = vunpack.c.l.b16 %v1571
        %v2218 = vunpack.c.h.b16 %v1571
        %v2219 = vunpack.c.l.b16 %v1572
        %v2220 = vunpack.c.h.b16 %v1572
        %v2221 = vunpack.c.l.b16 %v1573
        %v2222 = vunpack.c.h.b16 %v1573
        %v2223 = vunpack.c.l.b16 %v1574
        %v2224 = vunpack.c.h.b16 %v1574
        %v2225 = vunpack.c.l.b16 %v1575
        %v2226 = vunpack.c.h.b16 %v1575
        %v2227 = vunpack.c.l.b16 %v1576
        %v2228 = vunpack.c.h.b16 %v1576
        %v2229 = vunpack.c.l.b16 %v1577
        %v2230 = vunpack.c.h.b16 %v1577
        %v2231 = vunpack.c.l.b16 %v1578
        %v2232 = vunpack.c.h.b16 %v1578
        %v2233 = vunpack.c.l.b16 %v1579
        %v2234 = vunpack.c.h.b16 %v1579
        %v2235 = vunpack.c.l.b16 %v1580
        %v2236 = vunpack.c.h.b16 %v1580
        %v2237 = vunpack.c.l.b16 %v1581
        %v2238 = vunpack.c.h.b16 %v1581
        %v2239 = vunpack.c.l.b16 %v1582
        %v2240 = vunpack.c.h.b16 %v1582
        %v2241 = vunpack.c.l.b16 %v1583
        %v2242 = vunpack.c.h.b16 %v1583
        %v2243 = vunpack.c.l.b16 %v1584
        %v2244 = vunpack.c.h.b16 %v1584
        %v2245 = vunpack.c.l.b16 %v1585
        %v2246 = vunpack.c.h.b16 %v1585
        %v2247 = vunpack.c.l.b16 %v1586
        %v2248 = vunpack.c.h.b16 %v1586
        %v2249 = vunpack.c.l.b16 %v1587
        %v2250 = vunpack.c.h.b16 %v1587
        %v2251 = vunpack.c.l.b16 %v1588
        %v2252 = vunpack.c.h.b16 %v1588
        %v2253 = vunpack.c.l.b16 %v1589
        %v2254 = vunpack.c.h.b16 %v1589
        %v2255 = vunpack.c.l.b16 %v1590
        %v2256 = vunpack.c.h.b16 %v1590
        %v2257 = vunpack.c.l.b16 %v1591
        %v2258 = vunpack.c.h.b16 %v1591
        %v2259 = vunpack.c.l.b16 %v1592
        %v2260 = vunpack.c.h.b16 %v1592
        %v2261 = vunpack.c.l.b16 %v1593
        %v2262 = vunpack.c.h.b16 %v1593
        %v2263 = vunpack.c.l.b16 %v1594
        %v2264 = vunpack.c.h.b16 %v1594
        %v2265 = vunpack.c.l.b16 %v1595
        %v2266 = vunpack.c.h.b16 %v1595
        %v2267 = vunpack.c.l.b16 %v1596
        %v2268 = vunpack.c.h.b16 %v1596
        %v2269 = vunpack.c.l.b16 %v1597
        %v2270 = vunpack.c.h.b16 %v1597
        %v2271 = vunpack.c.l.b16 %v1598
        %v2272 = vunpack.c.h.b16 %v1598
        %v2273 = vunpack.c.l.b16 %v1599
        %v2274 = vunpack.c.h.b16 %v1599
        %v2275 = vunpack.c.l.b16 %v1600
        %v2276 = vunpack.c.h.b16 %v1600
        %v2277 = vunpack.c.l.b16 %v1601
        %v2278 = vunpack.c.h.b16 %v1601
        %v2279 = vunpack.c.l.b16 %v1602
        %v2280 = vunpack.c.h.b16 %v1602
        %v2281 = vunpack.c.l.b16 %v1603
        %v2282 = vunpack.c.h.b16 %v1603
        %v2283 = vunpack.c.l.b16 %v1604
        %v2284 = vunpack.c.h.b16 %v1604
        %v2285 = vunpack.c.l.b16 %v1605
        %v2286 = vunpack.c.h.b16 %v1605
        %v2287 = vunpack.c.l.b16 %v1606
        %v2288 = vunpack.c.h.b16 %v1606
        %v2289 = vunpack.c.l.b16 %v1607
        %v2290 = vunpack.c.h.b16 %v1607
        %v2291 = vunpack.c.l.b16 %v1608
        %v2292 = vunpack.c.h.b16 %v1608
        %v2293 = vunpack.c.l.b16 %v1609
        %v2294 = vunpack.c.h.b16 %v1609
        %v2295 = vunpack.c.l.b16 %v1610
        %v2296 = vunpack.c.h.b16 %v1610
        %v2297 = vunpack.c.l.b16 %v1611
        %v2298 = vunpack.c.h.b16 %v1611
        %v2299 = vunpack.c.l.b16 %v1612
        %v2300 = vunpack.c.h.b16 %v1612
        %v2301 = vunpack.c.l.b16 %v1613
        %v2302 = vunpack.c.h.b16 %v1613
        %v2303 = vunpack.c.l.b16 %v1614
        %v2304 = vunpack.c.h.b16 %v1614
        %v2305 = vunpack.c.l.b16 %v1615
        %v2306 = vunpack.c.h.b16 %v1615
        %v2307 = vunpack.c.l.b16 %v1616
        %v2308 = vunpack.c.h.b16 %v1616
        %v2309 = vunpack.c.l.b16 %v1617
        %v2310 = vunpack.c.h.b16 %v1617
        %v2311 = vunpack.c.l.b16 %v1618
        %v2312 = vunpack.c.h.b16 %v1618
        %v2313 = vunpack.c.l.b16 %v1619
        %v2314 = vunpack.c.h.b16 %v1619
        %v2315 = vunpack.c.l.b16 %v1620
        %v2316 = vunpack.c.h.b16 %v1620
        %v2317 = vunpack.c.l.b16 %v1621
        %v2318 = vunpack.c.h.b16 %v1621
        %v2319 = vunpack.c.l.b16 %v1622
        %v2320 = vunpack.c.h.b16 %v1622
        %v2321 = vunpack.c.l.b16 %v1623
        %v2322 = vunpack.c.h.b16 %v1623
        %v2323 = vunpack.c.l.b16 %v1624
        %v2324 = vunpack.c.h.b16 %v1624
        %v2325 = vunpack.c.l.b16 %v1625
        %v2326 = vunpack.c.h.b16 %v1625
        %v2327 = vunpack.c.l.b16 %v1626
        %v2328 = vunpack.c.h.b16 %v1626
        %v2329 = vunpack.c.l.b16 %v1627
        %v2330 = vunpack.c.h.b16 %v1627
        %v2331 = vunpack.c.l.b16 %v1628
        %v2332 = vunpack.c.h.b16 %v1628
        %v2333 = vunpack.c.l.b16 %v1629
        %v2334 = vunpack.c.h.b16 %v1629
        %v2335 = vunpack.c.l.b16 %v1630
        %v2336 = vunpack.c.h.b16 %v1630
        %v2337 = vunpack.c.l.b16 %v1631
        %v2338 = vunpack.c.h.b16 %v1631
        %v2339 = vunpack.c.l.b16 %v1632
        %v2340 = vunpack.c.h.b16 %v1632
        %v2341 = vunpack.c.l.b16 %v1633
        %v2342 = vunpack.c.h.b16 %v1633
        %v2343 = vunpack.c.l.b16 %v1634
        %v2344 = vunpack.c.h.b16 %v1634
        %v2345 = vunpack.c.l.b16 %v1635
        %v2346 = vunpack.c.h.b16 %v1635
        %v2347 = vunpack.c.l.b16 %v1636
        %v2348 = vunpack.c.h.b16 %v1636
        %v2349 = vunpack.c.l.b16 %v1637
        %v2350 = vunpack.c.h.b16 %v1637
        %v2351 = vunpack.c.l.b16 %v1638
        %v2352 = vunpack.c.h.b16 %v1638
        %v2353 = vunpack.c.l.b16 %v1639
        %v2354 = vunpack.c.h.b16 %v1639
        %v2355 = vunpack.c.l.b16 %v1640
        %v2356 = vunpack.c.h.b16 %v1640
        %v2357 = vunpack.c.l.b16 %v1641
        %v2358 = vunpack.c.h.b16 %v1641
        %v2359 = vunpack.c.l.b16 %v1642
        %v2360 = vunpack.c.h.b16 %v1642
        %v2361 = vunpack.c.l.b16 %v1643
        %v2362 = vunpack.c.h.b16 %v1643
        %v2363 = vunpack.c.l.b16 %v1644
        %v2364 = vunpack.c.h.b16 %v1644
        %v2365 = vunpack.c.l.b16 %v1645
        %v2366 = vunpack.c.h.b16 %v1645
        %v2367 = vunpack.c.l.b16 %v1646
        %v2368 = vunpack.c.h.b16 %v1646
        %v2369 = vunpack.c.l.b16 %v1647
        %v2370 = vunpack.c.h.b16 %v1647
        %v2371 = vunpack.c.l.b16 %v1648
        %v2372 = vunpack.c.h.b16 %v1648
        %v2373 = vunpack.c.l.b16 %v1649
        %v2374 = vunpack.c.h.b16 %v1649
        %v2375 = vunpack.c.l.b16 %v1650
        %v2376 = vunpack.c.h.b16 %v1650
        %v2377 = vunpack.c.l.b16 %v1651
        %v2378 = vunpack.c.h.b16 %v1651
        %v2379 = vunpack.c.l.b16 %v1652
        %v2380 = vunpack.c.h.b16 %v1652
        %v2381 = vunpack.c.l.b16 %v1653
        %v2382 = vunpack.c.h.b16 %v1653
        %v2383 = vunpack.c.l.b16 %v1654
        %v2384 = vunpack.c.h.b16 %v1654
        %v2385 = vunpack.c.l.b16 %v1655
        %v2386 = vunpack.c.h.b16 %v1655
        %v2387 = vunpack.c.l.b16 %v1656
        %v2388 = vunpack.c.h.b16 %v1656
        %v2389 = vunpack.c.l.b16 %v1657
        %v2390 = vunpack.c.h.b16 %v1657
        %v2391 = vunpack.c.l.b16 %v1658
        %v2392 = vunpack.c.h.b16 %v1658
        %v2393 = vunpack.c.l.b16 %v1659
        %v2394 = vunpack.c.h.b16 %v1659
        %v2395 = vunpack.c.l.b16 %v1660
        %v2396 = vunpack.c.h.b16 %v1660
        %v2397 = vunpack.c.l.b16 %v1661
        %v2398 = vunpack.c.h.b16 %v1661
        %v2399 = vunpack.c.l.b16 %v1662
        %v2400 = vunpack.c.h.b16 %v1662
        %v2401 = vunpack.c.l.b16 %v1663
        %v2402 = vunpack.c.h.b16 %v1663
        %v2403 = vunpack.c.l.b16 %v1664
        %v2404 = vunpack.c.h.b16 %v1664
        %v2405 = vunpack.c.l.b16 %v1665
        %v2406 = vunpack.c.h.b16 %v1665
        %v2407 = vunpack.c.l.b16 %v1666
        %v2408 = vunpack.c.h.b16 %v1666
        %v2409 = vunpack.c.l.b16 %v1667
        %v2410 = vunpack.c.h.b16 %v1667
        %v2411 = vunpack.c.l.b16 %v1668
        %v2412 = vunpack.c.h.b16 %v1668
        %v2413 = vunpack.c.l.b16 %v1669
        %v2414 = vunpack.c.h.b16 %v1669
        %v2415 = vunpack.c.l.b16 %v1670
        %v2416 = vunpack.c.h.b16 %v1670
        %v2417 = vunpack.c.l.b16 %v1671
        %v2418 = vunpack.c.h.b16 %v1671
        %v2419 = vunpack.c.l.b16 %v1672
        %v2420 = vunpack.c.h.b16 %v1672
        %v2421 = vunpack.c.l.b16 %v1673
        %v2422 = vunpack.c.h.b16 %v1673
        %v2423 = vunpack.c.l.b16 %v1674
        %v2424 = vunpack.c.h.b16 %v1674
        %v2425 = vunpack.c.l.b16 %v1675
        %v2426 = vunpack.c.h.b16 %v1675
        %v2427 = vunpack.c.l.b16 %v1676
        %v2428 = vunpack.c.h.b16 %v1676
        %v2429 = vunpack.c.l.b16 %v1677
        %v2430 = vunpack.c.h.b16 %v1677
        %v2431 = vunpack.c.l.b16 %v1678
        %v2432 = vunpack.c.h.b16 %v1678
        %v2433 = vunpack.c.l.b16 %v1679
        %v2434 = vunpack.c.h.b16 %v1679
        %v2435 = vunpack.c.l.b16 %v1680
        %v2436 = vunpack.c.h.b16 %v1680
        %v2437 = vunpack.c.l.b16 %v1681
        %v2438 = vunpack.c.h.b16 %v1681
        %v2439 = vunpack.c.l.b16 %v1682
        %v2440 = vunpack.c.h.b16 %v1682
        %v2441 = vunpack.c.l.b16 %v1683
        %v2442 = vunpack.c.h.b16 %v1683
        %v2443 = vunpack.c.l.b16 %v1684
        %v2444 = vunpack.c.h.b16 %v1684
        %v2445 = vunpack.c.l.b16 %v1685
        %v2446 = vunpack.c.h.b16 %v1685
        %v2447 = vunpack.c.l.b16 %v1686
        %v2448 = vunpack.c.h.b16 %v1686
        %v2449 = vunpack.c.l.b16 %v1687
        %v2450 = vunpack.c.h.b16 %v1687
        %v2451 = vunpack.c.l.b16 %v1688
        %v2452 = vunpack.c.h.b16 %v1688
        %v2453 = vunpack.c.l.b16 %v1689
        %v2454 = vunpack.c.h.b16 %v1689
        %v2455 = vunpack.c.l.b16 %v1690
        %v2456 = vunpack.c.h.b16 %v1690
        %v2457 = vunpack.c.l.b16 %v1691
        %v2458 = vunpack.c.h.b16 %v1691
        %v2459 = vunpack.c.l.b16 %v1692
        %v2460 = vunpack.c.h.b16 %v1692
        %v2461 = vunpack.c.l.b16 %v1693
        %v2462 = vunpack.c.h.b16 %v1693
        %v2463 = vunpack.c.l.b16 %v1694
        %v2464 = vunpack.c.h.b16 %v1694
        %v2465 = vunpack.c.l.b16 %v1695
        %v2466 = vunpack.c.h.b16 %v1695
        %v2467 = vunpack.c.l.b16 %v1696
        %v2468 = vunpack.c.h.b16 %v1696
        %v2469 = vunpack.c.l.b16 %v1697
        %v2470 = vunpack.c.h.b16 %v1697
        %v2471 = vunpack.c.l.b16 %v1698
        %v2472 = vunpack.c.h.b16 %v1698
        %v2473 = vunpack.c.l.b16 %v1699
        %v2474 = vunpack.c.h.b16 %v1699
        %v2475 = vunpack.c.l.b16 %v1700
        %v2476 = vunpack.c.h.b16 %v1700
        %v2477 = vunpack.c.l.b16 %v1701
        %v2478 = vunpack.c.h.b16 %v1701
        %v2479 = vunpack.c.l.b16 %v1702
        %v2480 = vunpack.c.h.b16 %v1702
        %v2481 = vunpack.c.l.b16 %v1703
        %v2482 = vunpack.c.h.b16 %v1703
        %v2483 = vunpack.c.l.b16 %v1704
        %v2484 = vunpack.c.h.b16 %v1704
        %v2485 = vunpack.c.l.b16 %v1705
        %v2486 = vunpack.c.h.b16 %v1705
        %v2487 = vunpack.c.l.b16 %v1706
        %v2488 = vunpack.c.h.b16 %v1706
        %v2489 = vunpack.c.l.b16 %v1707
        %v2490 = vunpack.c.h.b16 %v1707
        %v2491 = vunpack.c.l.b16 %v1708
        %v2492 = vunpack.c.h.b16 %v1708
        %v2493 = vunpack.c.l.b16 %v1709
        %v2494 = vunpack.c.h.b16 %v1709
        %v2495 = vunpack.c.l.b16 %v1710
        %v2496 = vunpack.c.h.b16 %v1710
        %v2497 = vunpack.c.l.b16 %v1711
        %v2498 = vunpack.c.h.b16 %v1711
        %v2499 = vunpack.c.l.b16 %v1712
        %v2500 = vunpack.c.h.b16 %v1712
        %v2501 = vunpack.c.l.b16 %v1713
        %v2502 = vunpack.c.h.b16 %v1713
        %v2503 = vunpack.c.l.b16 %v1714
        %v2504 = vunpack.c.h.b16 %v1714
        %v2505 = vunpack.c.l.b16 %v1715
        %v2506 = vunpack.c.h.b16 %v1715
        %v2507 = vunpack.c.l.b16 %v1716
        %v2508 = vunpack.c.h.b16 %v1716
        %v2509 = vunpack.c.l.b16 %v1717
        %v2510 = vunpack.c.h.b16 %v1717
        %v2511 = vunpack.c.l.b16 %v1718
        %v2512 = vunpack.c.h.b16 %v1718
        %v2513 = vunpack.c.l.b16 %v1719
        %v2514 = vunpack.c.h.b16 %v1719
        %v2515 = vunpack.c.l.b16 %v1720
        %v2516 = vunpack.c.h.b16 %v1720
        %v2517 = vunpack.c.l.b16 %v1721
        %v2518 = vunpack.c.h.b16 %v1721
        %v2519 = vunpack.c.l.b16 %v1722
        %v2520 = vunpack.c.h.b16 %v1722
        %v2521 = vunpack.c.l.b16 %v1723
        %v2522 = vunpack.c.h.b16 %v1723
        %v2523 = vunpack.c.l.b16 %v1724
        %v2524 = vunpack.c.h.b16 %v1724
        %v2525 = vunpack.c.l.b16 %v1725
        %v2526 = vunpack.c.h.b16 %v1725
        %v2527 = vunpack.c.l.b16 %v1726
        %v2528 = vunpack.c.h.b16 %v1726
        %v2529 = vunpack.c.l.b16 %v1727
        %v2530 = vunpack.c.h.b16 %v1727
        %v2531 = vunpack.c.l.b16 %v1728
        %v2532 = vunpack.c.h.b16 %v1728
        %v2533 = vunpack.c.l.b16 %v1729
        %v2534 = vunpack.c.h.b16 %v1729
        %v2535 = vunpack.c.l.b16 %v1730
        %v2536 = vunpack.c.h.b16 %v1730
        %v2537 = vunpack.c.l.b16 %v1731
        %v2538 = vunpack.c.h.b16 %v1731
        %v2539 = vunpack.c.l.b16 %v1732
        %v2540 = vunpack.c.h.b16 %v1732
        %v2541 = vunpack.c.l.b16 %v1733
        %v2542 = vunpack.c.h.b16 %v1733
        %v2543 = vunpack.c.l.b16 %v1734
        %v2544 = vunpack.c.h.b16 %v1734
        %v2545 = vunpack.c.l.b16 %v1735
        %v2546 = vunpack.c.h.b16 %v1735
        %v2547 = vunpack.c.l.b16 %v1736
        %v2548 = vunpack.c.h.b16 %v1736
        %v2549 = vunpack.c.l.b16 %v1737
        %v2550 = vunpack.c.h.b16 %v1737
        %v2551 = vunpack.c.l.b16 %v1738
        %v2552 = vunpack.c.h.b16 %v1738
        %v2553 = vunpack.c.l.b16 %v1739
        %v2554 = vunpack.c.h.b16 %v1739
        %v2555 = vunpack.c.l.b16 %v1740
        %v2556 = vunpack.c.h.b16 %v1740
        %v2557 = vunpack.c.l.b16 %v1741
        %v2558 = vunpack.c.h.b16 %v1741
        %v2559 = vunpack.c.l.b16 %v1742
        %v2560 = vunpack.c.h.b16 %v1742
        %v2561 = vunpack.c.l.b16 %v1743
        %v2562 = vunpack.c.h.b16 %v1743
        %v2563 = vunpack.c.l.b16 %v1744
        %v2564 = vunpack.c.h.b16 %v1744
        %v2565 = vunpack.c.l.b16 %v1745
        %v2566 = vunpack.c.h.b16 %v1745
        %v2567 = vunpack.c.l.b16 %v1746
        %v2568 = vunpack.c.h.b16 %v1746
        %v2569 = vunpack.c.l.b16 %v1747
        %v2570 = vunpack.c.h.b16 %v1747
        %v2571 = vunpack.c.l.b16 %v1748
        %v2572 = vunpack.c.h.b16 %v1748
        %v2573 = vunpack.c.l.b16 %v1749
        %v2574 = vunpack.c.h.b16 %v1749
        %v2575 = vunpack.c.l.b16 %v1750
        %v2576 = vunpack.c.h.b16 %v1750
        %v2577 = vunpack.c.l.b16 %v1751
        %v2578 = vunpack.c.h.b16 %v1751
        %v2579 = vunpack.c.l.b16 %v1752
        %v2580 = vunpack.c.h.b16 %v1752
        %v2581 = vunpack.c.l.b16 %v1753
        %v2582 = vunpack.c.h.b16 %v1753
        %v2583 = vunpack.c.l.b16 %v1754
        %v2584 = vunpack.c.h.b16 %v1754
        %v2585 = vunpack.c.l.b16 %v1755
        %v2586 = vunpack.c.h.b16 %v1755
        %v2587 = vunpack.c.l.b16 %v1756
        %v2588 = vunpack.c.h.b16 %v1756
        %v2589 = vunpack.c.l.b16 %v1757
        %v2590 = vunpack.c.h.b16 %v1757
        %v2591 = vunpack.c.l.b16 %v1758
        %v2592 = vunpack.c.h.b16 %v1758
        %v2593 = vunpack.c.l.b16 %v1759
        %v2594 = vunpack.c.h.b16 %v1759
        %v2595 = vunpack.c.l.b16 %v1760
        %v2596 = vunpack.c.h.b16 %v1760
        %v2597 = vunpack.c.l.b16 %v1761
        %v2598 = vunpack.c.h.b16 %v1761
        %v2599 = vunpack.c.l.b16 %v1762
        %v2600 = vunpack.c.h.b16 %v1762
        %v2601 = vunpack.c.l.b16 %v1763
        %v2602 = vunpack.c.h.b16 %v1763
        %v2603 = vunpack.c.l.b16 %v1764
        %v2604 = vunpack.c.h.b16 %v1764
        %v2605 = vunpack.c.l.b16 %v1765
        %v2606 = vunpack.c.h.b16 %v1765
        %v2607 = vunpack.c.l.b16 %v1766
        %v2608 = vunpack.c.h.b16 %v1766
        %v2609 = vunpack.c.l.b16 %v1767
        %v2610 = vunpack.c.h.b16 %v1767
        %v2611 = vunpack.c.l.b16 %v1768
        %v2612 = vunpack.c.h.b16 %v1768
        %v2613 = vunpack.c.l.b16 %v1769
        %v2614 = vunpack.c.h.b16 %v1769
        %v2615 = vunpack.c.l.b16 %v1770
        %v2616 = vunpack.c.h.b16 %v1770
        %v2617 = vunpack.c.l.b16 %v1771
        %v2618 = vunpack.c.h.b16 %v1771
        %v2619 = vunpack.c.l.b16 %v1772
        %v2620 = vunpack.c.h.b16 %v1772
        %v2621 = vunpack.c.l.b16 %v1773
        %v2622 = vunpack.c.h.b16 %v1773
        %v2623 = vunpack.c.l.b16 %v1774
        %v2624 = vunpack.c.h.b16 %v1774
        %v2625 = vunpack.c.l.b16 %v1775
        %v2626 = vunpack.c.h.b16 %v1775
        %v2627 = vunpack.c.l.b16 %v1776
        %v2628 = vunpack.c.h.b16 %v1776
        %v2629 = vunpack.c.l.b16 %v1777
        %v2630 = vunpack.c.h.b16 %v1777
        %v2631 = vunpack.c.l.b16 %v1778
        %v2632 = vunpack.c.h.b16 %v1778
        %v2633 = vunpack.c.l.b16 %v1779
        %v2634 = vunpack.c.h.b16 %v1779
        %v2635 = vunpack.c.l.b16 %v1780
        %v2636 = vunpack.c.h.b16 %v1780
        %v2637 = vunpack.c.l.b16 %v1781
        %v2638 = vunpack.c.h.b16 %v1781
        %v2639 = vunpack.c.l.b16 %v1782
        %v2640 = vunpack.c.h.b16 %v1782
        %v2641 = vunpack.c.l.b16 %v1783
        %v2642 = vunpack.c.h.b16 %v1783
        %v2643 = vunpack.c.l.b16 %v1784
        %v2644 = vunpack.c.h.b16 %v1784
        %v2645 = vunpack.c.l.b16 %v1785
        %v2646 = vunpack.c.h.b16 %v1785
        %v2647 = vunpack.c.l.b16 %v1786
        %v2648 = vunpack.c.h.b16 %v1786
        %v2649 = vunpack.c.l.b16 %v1787
        %v2650 = vunpack.c.h.b16 %v1787
        %v2651 = vunpack.c.l.b16 %v1788
        %v2652 = vunpack.c.h.b16 %v1788
        %v2653 = vunpack.c.l.b16 %v1789
        %v2654 = vunpack.c.h.b16 %v1789
        %v2655 = vunpack.c.l.b16 %v1790
        %v2656 = vunpack.c.h.b16 %v1790
        %v2657 = vunpack.c.l.b16 %v1791
        %v2658 = vunpack.c.h.b16 %v1791
        %v2659 = vunpack.c.l.b16 %v1792
        %v2660 = vunpack.c.h.b16 %v1792
        %v2661 = vunpack.c.l.b16 %v1793
        %v2662 = vunpack.c.h.b16 %v1793
        %v2663 = vunpack.c.l.b16 %v1794
        %v2664 = vunpack.c.h.b16 %v1794
        %v2665 = vunpack.c.l.b16 %v1795
        %v2666 = vunpack.c.h.b16 %v1795
        %v2667 = vunpack.c.l.b16 %v1796
        %v2668 = vunpack.c.h.b16 %v1796
        %v2669 = vunpack.c.l.b16 %v1797
        %v2670 = vunpack.c.h.b16 %v1797
        %v2671 = vunpack.c.l.b16 %v1798
        %v2672 = vunpack.c.h.b16 %v1798
        %v2673 = vunpack.c.l.b16 %v1799
        %v2674 = vunpack.c.h.b16 %v1799
        %v2675 = vunpack.c.l.b16 %v1800
        %v2676 = vunpack.c.h.b16 %v1800
        %v2677 = vunpack.c.l.b16 %v1801
        %v2678 = vunpack.c.h.b16 %v1801
        %v2679 = vunpack.c.l.b16 %v1802
        %v2680 = vunpack.c.h.b16 %v1802
        %v2681 = vunpack.c.l.b16 %v1803
        %v2682 = vunpack.c.h.b16 %v1803
        %v2683 = vunpack.c.l.b16 %v1804
        %v2684 = vunpack.c.h.b16 %v1804
        %v2685 = vunpack.c.l.b16 %v1805
        %v2686 = vunpack.c.h.b16 %v1805
        %v2687 = vunpack.c.l.b16 %v1806
        %v2688 = vunpack.c.h.b16 %v1806
        %v2689 = vunpack.c.l.b16 %v1807
        %v2690 = vunpack.c.h.b16 %v1807
        %v2691 = vunpack.c.l.b16 %v1808
        %v2692 = vunpack.c.h.b16 %v1808
        %v2693 = vunpack.c.l.b16 %v1809
        %v2694 = vunpack.c.h.b16 %v1809
        %v2695 = vunpack.c.l.b16 %v1810
        %v2696 = vunpack.c.h.b16 %v1810
        %v2697 = vunpack.c.l.b16 %v1811
        %v2698 = vunpack.c.h.b16 %v1811
        %v2699 = vunpack.c.l.b16 %v1812
        %v2700 = vunpack.c.h.b16 %v1812
        %v2701 = vunpack.c.l.b16 %v1813
        %v2702 = vunpack.c.h.b16 %v1813
        %v2703 = vunpack.c.l.b16 %v1814
        %v2704 = vunpack.c.h.b16 %v1814
        %v2705 = vunpack.c.l.b16 %v1815
        %v2706 = vunpack.c.h.b16 %v1815
        %v2707 = vunpack.c.l.b16 %v1816
        %v2708 = vunpack.c.h.b16 %v1816
        %v2709 = vunpack.c.l.b16 %v1817
        %v2710 = vunpack.c.h.b16 %v1817
        %v2711 = vunpack.c.l.b16 %v1818
        %v2712 = vunpack.c.h.b16 %v1818
        %v2713 = vunpack.c.l.b16 %v1819
        %v2714 = vunpack.c.h.b16 %v1819
        %v2715 = vunpack.c.l.b16 %v1820
        %v2716 = vunpack.c.h.b16 %v1820
        %v2717 = vpack.c.b16 %v2147, %v2141
        %v2718 = vpack.c.b16 %v2148, %v2142
        %v2719 = vpack.c.b16 %v2149, %v2143
        %v2720 = vpack.c.b16 %v2150, %v2144
        %v2721 = vpack.c.b16 %v2151, %v2145
        %v2722 = vpack.c.b16 %v2152, %v2146
        %v2723 = vpack.c.b16 %v2159, %v2153
        %v2724 = vpack.c.b16 %v2160, %v2154
        %v2725 = vpack.c.b16 %v2161, %v2155
        %v2726 = vpack.c.b16 %v2162, %v2156
        %v2727 = vpack.c.b16 %v2163, %v2157
        %v2728 = vpack.c.b16 %v2164, %v2158
        %v2729 = vpack.c.b16 %v2171, %v2165
        %v2730 = vpack.c.b16 %v2172, %v2166
        %v2731 = vpack.c.b16 %v2173, %v2167
        %v2732 = vpack.c.b16 %v2174, %v2168
        %v2733 = vpack.c.b16 %v2175, %v2169
        %v2734 = vpack.c.b16 %v2176, %v2170
        %v2735 = vpack.c.b16 %v2183, %v2177
        %v2736 = vpack.c.b16 %v2184, %v2178
        %v2737 = vpack.c.b16 %v2185, %v2179
        %v2738 = vpack.c.b16 %v2186, %v2180
        %v2739 = vpack.c.b16 %v2187, %v2181
        %v2740 = vpack.c.b16 %v2188, %v2182
        %v2741 = vpack.c.b16 %v2195, %v2189
        %v2742 = vpack.c.b16 %v2196, %v2190
        %v2743 = vpack.c.b16 %v2197, %v2191
        %v2744 = vpack.c.b16 %v2198, %v2192
        %v2745 = vpack.c.b16 %v2199, %v2193
        %v2746 = vpack.c.b16 %v2200, %v2194
        %v2747 = vpack.c.b16 %v2207, %v2201
        %v2748 = vpack.c.b16 %v2208, %v2202
        %v2749 = vpack.c.b16 %v2209, %v2203
        %v2750 = vpack.c.b16 %v2210, %v2204
        %v2751 = vpack.c.b16 %v2211, %v2205
        %v2752 = vpack.c.b16 %v2212, %v2206
        %v2753 = vpack.c.b16 %v2219, %v2213
        %v2754 = vpack.c.b16 %v2220, %v2214
        %v2755 = vpack.c.b16 %v2221, %v2215
        %v2756 = vpack.c.b16 %v2222, %v2216
        %v2757 = vpack.c.b16 %v2223, %v2217
        %v2758 = vpack.c.b16 %v2224, %v2218
        %v2759 = vpack.c.b16 %v2231, %v2225
        %v2760 = vpack.c.b16 %v2232, %v2226
        %v2761 = vpack.c.b16 %v2233, %v2227
        %v2762 = vpack.c.b16 %v2234, %v2228
        %v2763 = vpack.c.b16 %v2235, %v2229
        %v2764 = vpack.c.b16 %v2236, %v2230
        %v2765 = vpack.c.b16 %v2243, %v2237
        %v2766 = vpack.c.b16 %v2244, %v2238
        %v2767 = vpack.c.b16 %v2245, %v2239
        %v2768 = vpack.c.b16 %v2246, %v2240
        %v2769 = vpack.c.b16 %v2247, %v2241
        %v2770 = vpack.c.b16 %v2248, %v2242
        %v2771 = vpack.c.b16 %v2255, %v2249
        %v2772 = vpack.c.b16 %v2256, %v2250
        %v2773 = vpack.c.b16 %v2257, %v2251
        %v2774 = vpack.c.b16 %v2258, %v2252
        %v2775 = vpack.c.b16 %v2259, %v2253
        %v2776 = vpack.c.b16 %v2260, %v2254
        %v2777 = vpack.c.b16 %v2267, %v2261
        %v2778 = vpack.c.b16 %v2268, %v2262
        %v2779 = vpack.c.b16 %v2269, %v2263
        %v2780 = vpack.c.b16 %v2270, %v2264
        %v2781 = vpack.c.b16 %v2271, %v2265
        %v2782 = vpack.c.b16 %v2272, %v2266
        %v2783 = vpack.c.b16 %v2279, %v2273
        %v2784 = vpack.c.b16 %v2280, %v2274
        %v2785 = vpack.c.b16 %v2281, %v2275
        %v2786 = vpack.c.b16 %v2282, %v2276
        %v2787 = vpack.c.b16 %v2283, %v2277
        %v2788 = vpack.c.b16 %v2284, %v2278
        %v2789 = vpack.c.b16 %v2291, %v2285
        %v2790 = vpack.c.b16 %v2292, %v2286
        %v2791 = vpack.c.b16 %v2293, %v2287
        %v2792 = vpack.c.b16 %v2294, %v2288
        %v2793 = vpack.c.b16 %v2295, %v2289
        %v2794 = vpack.c.b16 %v2296, %v2290
        %v2795 = vpack.c.b16 %v2303, %v2297
        %v2796 = vpack.c.b16 %v2304, %v2298
        %v2797 = vpack.c.b16 %v2305, %v2299
        %v2798 = vpack.c.b16 %v2306, %v2300
        %v2799 = vpack.c.b16 %v2307, %v2301
        %v2800 = vpack.c.b16 %v2308, %v2302
        %v2801 = vpack.c.b16 %v2315, %v2309
        %v2802 = vpack.c.b16 %v2316, %v2310
        %v2803 = vpack.c.b16 %v2317, %v2311
        %v2804 = vpack.c.b16 %v2318, %v2312
        %v2805 = vpack.c.b16 %v2319, %v2313
        %v2806 = vpack.c.b16 %v2320, %v2314
        %v2807 = vpack.c.b16 %v2327, %v2321
        %v2808 = vpack.c.b16 %v2328, %v2322
        %v2809 = vpack.c.b16 %v2329, %v2323
        %v2810 = vpack.c.b16 %v2330, %v2324
        %v2811 = vpack.c.b16 %v2331, %v2325
        %v2812 = vpack.c.b16 %v2332, %v2326
        %v2813 = vpack.c.b16 %v2339, %v2333
        %v2814 = vpack.c.b16 %v2340, %v2334
        %v2815 = vpack.c.b16 %v2341, %v2335
        %v2816 = vpack.c.b16 %v2342, %v2336
        %v2817 = vpack.c.b16 %v2343, %v2337
        %v2818 = vpack.c.b16 %v2344, %v2338
        %v2819 = vpack.c.b16 %v2351, %v2345
        %v2820 = vpack.c.b16 %v2352, %v2346
        %v2821 = vpack.c.b16 %v2353, %v2347
        %v2822 = vpack.c.b16 %v2354, %v2348
        %v2823 = vpack.c.b16 %v2355, %v2349
        %v2824 = vpack.c.b16 %v2356, %v2350
        %v2825 = vpack.c.b16 %v2363, %v2357
        %v2826 = vpack.c.b16 %v2364, %v2358
        %v2827 = vpack.c.b16 %v2365, %v2359
        %v2828 = vpack.c.b16 %v2366, %v2360
        %v2829 = vpack.c.b16 %v2367, %v2361
        %v2830 = vpack.c.b16 %v2368, %v2362
        %v2831 = vpack.c.b16 %v2375, %v2369
        %v2832 = vpack.c.b16 %v2376, %v2370
        %v2833 = vpack.c.b16 %v2377, %v2371
        %v2834 = vpack.c.b16 %v2378, %v2372
        %v2835 = vpack.c.b16 %v2379, %v2373
        %v2836 = vpack.c.b16 %v2380, %v2374
        %v2837 = vpack.c.b16 %v2387, %v2381
        %v2838 = vpack.c.b16 %v2388, %v2382
        %v2839 = vpack.c.b16 %v2389, %v2383
        %v2840 = vpack.c.b16 %v2390, %v2384
        %v2841 = vpack.c.b16 %v2391, %v2385
        %v2842 = vpack.c.b16 %v2392, %v2386
        %v2843 = vpack.c.b16 %v2399, %v2393
        %v2844 = vpack.c.b16 %v2400, %v2394
        %v2845 = vpack.c.b16 %v2401, %v2395
        %v2846 = vpack.c.b16 %v2402, %v2396
        %v2847 = vpack.c.b16 %v2403, %v2397
        %v2848 = vpack.c.b16 %v2404, %v2398
        %v2849 = vpack.c.b16 %v2411, %v2405
        %v2850 = vpack.c.b16 %v2412, %v2406
        %v2851 = vpack.c.b16 %v2413, %v2407
        %v2852 = vpack.c.b16 %v2414, %v2408
        %v2853 = vpack.c.b16 %v2415, %v2409
        %v2854 = vpack.c.b16 %v2416, %v2410
        %v2855 = vpack.c.b16 %v2423, %v2417
        %v2856 = vpack.c.b16 %v2424, %v2418
        %v2857 = vpack.c.b16 %v2425, %v2419
        %v2858 = vpack.c.b16 %v2426, %v2420
        %v2859 = vpack.c.b16 %v2427, %v2421
        %v2860 = vpack.c.b16 %v2428, %v2422
        %v2861 = vpack.c.b16 %v2435, %v2429
        %v2862 = vpack.c.b16 %v2436, %v2430
        %v2863 = vpack.c.b16 %v2437, %v2431
        %v2864 = vpack.c.b16 %v2438, %v2432
        %v2865 = vpack.c.b16 %v2439, %v2433
        %v2866 = vpack.c.b16 %v2440, %v2434
        %v2867 = vpack.c.b16 %v2447, %v2441
        %v2868 = vpack.c.b16 %v2448, %v2442
        %v2869 = vpack.c.b16 %v2449, %v2443
        %v2870 = vpack.c.b16 %v2450, %v2444
        %v2871 = vpack.c.b16 %v2451, %v2445
        %v2872 = vpack.c.b16 %v2452, %v2446
        %v2873 = vpack.c.b16 %v2459, %v2453
        %v2874 = vpack.c.b16 %v2460, %v2454
        %v2875 = vpack.c.b16 %v2461, %v2455
        %v2876 = vpack.c.b16 %v2462, %v2456
        %v2877 = vpack.c.b16 %v2463, %v2457
        %v2878 = vpack.c.b16 %v2464, %v2458
        %v2879 = vpack.c.b16 %v2471, %v2465
        %v2880 = vpack.c.b16 %v2472, %v2466
        %v2881 = vpack.c.b16 %v2473, %v2467
        %v2882 = vpack.c.b16 %v2474, %v2468
        %v2883 = vpack.c.b16 %v2475, %v2469
        %v2884 = vpack.c.b16 %v2476, %v2470
        %v2885 = vpack.c.b16 %v2483, %v2477
        %v2886 = vpack.c.b16 %v2484, %v2478
        %v2887 = vpack.c.b16 %v2485, %v2479
        %v2888 = vpack.c.b16 %v2486, %v2480
        %v2889 = vpack.c.b16 %v2487, %v2481
        %v2890 = vpack.c.b16 %v2488, %v2482
        %v2891 = vpack.c.b16 %v2495, %v2489
        %v2892 = vpack.c.b16 %v2496, %v2490
        %v2893 = vpack.c.b16 %v2497, %v2491
        %v2894 = vpack.c.b16 %v2498, %v2492
        %v2895 = vpack.c.b16 %v2499, %v2493
        %v2896 = vpack.c.b16 %v2500, %v2494
        %v2897 = vpack.c.b16 %v2507, %v2501
        %v2898 = vpack.c.b16 %v2508, %v2502
        %v2899 = vpack.c.b16 %v2509, %v2503
        %v2900 = vpack.c.b16 %v2510, %v2504
        %v2901 = vpack.c.b16 %v2511, %v2505
        %v2902 = vpack.c.b16 %v2512, %v2506
        %v2903 = vpack.c.b16 %v2519, %v2513
        %v2904 = vpack.c.b16 %v2520, %v2514
        %v2905 = vpack.c.b16 %v2521, %v2515
        %v2906 = vpack.c.b16 %v2522, %v2516
        %v2907 = vpack.c.b16 %v2523, %v2517
        %v2908 = vpack.c.b16 %v2524, %v2518
        %v2909 = vpack.c.b16 %v2531, %v2525
        %v2910 = vpack.c.b16 %v2532, %v2526
        %v2911 = vpack.c.b16 %v2533, %v2527
        %v2912 = vpack.c.b16 %v2534, %v2528
        %v2913 = vpack.c.b16 %v2535, %v2529
        %v2914 = vpack.c.b16 %v2536, %v2530
        %v2915 = vpack.c.b16 %v2543, %v2537
        %v2916 = vpack.c.b16 %v2544, %v2538
        %v2917 = vpack.c.b16 %v2545, %v2539
        %v2918 = vpack.c.b16 %v2546, %v2540
        %v2919 = vpack.c.b16 %v2547, %v2541
        %v2920 = vpack.c.b16 %v2548, %v2542
        %v2921 = vpack.c.b16 %v2555, %v2549
        %v2922 = vpack.c.b16 %v2556, %v2550
        %v2923 = vpack.c.b16 %v2557, %v2551
        %v2924 = vpack.c.b16 %v2558, %v2552
        %v2925 = vpack.c.b16 %v2559, %v2553
        %v2926 = vpack.c.b16 %v2560, %v2554
        %v2927 = vpack.c.b16 %v2567, %v2561
        %v2928 = vpack.c.b16 %v2568, %v2562
        %v2929 = vpack.c.b16 %v2569, %v2563
        %v2930 = vpack.c.b16 %v2570, %v2564
        %v2931 = vpack.c.b16 %v2571, %v2565
        %v2932 = vpack.c.b16 %v2572, %v2566
        %v2933 = vpack.c.b16 %v2579, %v2573
        %v2934 = vpack.c.b16 %v2580, %v2574
        %v2935 = vpack.c.b16 %v2581, %v2575
        %v2936 = vpack.c.b16 %v2582, %v2576
        %v2937 = vpack.c.b16 %v2583, %v2577
        %v2938 = vpack.c.b16 %v2584, %v2578
        %v2939 = vpack.c.b16 %v2591, %v2585
        %v2940 = vpack.c.b16 %v2592, %v2586
        %v2941 = vpack.c.b16 %v2593, %v2587
        %v2942 = vpack.c.b16 %v2594, %v2588
        %v2943 = vpack.c.b16 %v2595, %v2589
        %v2944 = vpack.c.b16 %v2596, %v2590
        %v2945 = vpack.c.b16 %v2603, %v2597
        %v2946 = vpack.c.b16 %v2604, %v2598
        %v2947 = vpack.c.b16 %v2605, %v2599
        %v2948 = vpack.c.b16 %v2606, %v2600
        %v2949 = vpack.c.b16 %v2607, %v2601
        %v2950 = vpack.c.b16 %v2608, %v2602
        %v2951 = vpack.c.b16 %v2615, %v2609
        %v2952 = vpack.c.b16 %v2616, %v2610
        %v2953 = vpack.c.b16 %v2617, %v2611
        %v2954 = vpack.c.b16 %v2618, %v2612
        %v2955 = vpack.c.b16 %v2619, %v2613
        %v2956 = vpack.c.b16 %v2620, %v2614
        %v2957 = vpack.c.b16 %v2627, %v2621
        %v2958 = vpack.c.b16 %v2628, %v2622
        %v2959 = vpack.c.b16 %v2629, %v2623
        %v2960 = vpack.c.b16 %v2630, %v2624
        %v2961 = vpack.c.b16 %v2631, %v2625
        %v2962 = vpack.c.b16 %v2632, %v2626
        %v2963 = vpack.c.b16 %v2639, %v2633
        %v2964 = vpack.c.b16 %v2640, %v2634
        %v2965 = vpack.c.b16 %v2641, %v2635
        %v2966 = vpack.c.b16 %v2642, %v2636
        %v2967 = vpack.c.b16 %v2643, %v2637
        %v2968 = vpack.c.b16 %v2644, %v2638
        %v2969 = vpack.c.b16 %v2651, %v2645
        %v2970 = vpack.c.b16 %v2652, %v2646
        %v2971 = vpack.c.b16 %v2653, %v2647
        %v2972 = vpack.c.b16 %v2654, %v2648
        %v2973 = vpack.c.b16 %v2655, %v2649
        %v2974 = vpack.c.b16 %v2656, %v2650
        %v2975 = vpack.c.b16 %v2663, %v2657
        %v2976 = vpack.c.b16 %v2664, %v2658
        %v2977 = vpack.c.b16 %v2665, %v2659
        %v2978 = vpack.c.b16 %v2666, %v2660
        %v2979 = vpack.c.b16 %v2667, %v2661
        %v2980 = vpack.c.b16 %v2668, %v2662
        %v2981 = vpack.c.b16 %v2675, %v2669
        %v2982 = vpack.c.b16 %v2676, %v2670
        %v2983 = vpack.c.b16 %v2677, %v2671
        %v2984 = vpack.c.b16 %v2678, %v2672
        %v2985 = vpack.c.b16 %v2679, %v2673
        %v2986 = vpack.c.b16 %v2680, %v2674
        %v2987 = vpack.c.b16 %v2687, %v2681
        %v2988 = vpack.c.b16 %v2688, %v2682
        %v2989 = vpack.c.b16 %v2689, %v2683
        %v2990 = vpack.c.b16 %v2690, %v2684
        %v2991 = vpack.c.b16 %v2691, %v2685
        %v2992 = vpack.c.b16 %v2692, %v2686
        %v2993 = vpack.c.b16 %v2699, %v2693
        %v2994 = vpack.c.b16 %v2700, %v2694
        %v2995 = vpack.c.b16 %v2701, %v2695
        %v2996 = vpack.c.b16 %v2702, %v2696
        %v2997 = vpack.c.b16 %v2703, %v2697
        %v2998 = vpack.c.b16 %v2704, %v2698
        %v2999 = vpack.c.b16 %v2711, %v2705
        %v3000 = vpack.c.b16 %v2712, %v2706
        %v3001 = vpack.c.b16 %v2713, %v2707
        %v3002 = vpack.c.b16 %v2714, %v2708
        %v3003 = vpack.c.b16 %v2715, %v2709
        %v3004 = vpack.c.b16 %v2716, %v2710
        %3293 = vmatprep.subr.bf16.mxu0 %v2718
        %3294 = vmatpush1.bf16.msra.mxu0 %v2717
        %3295 = vmatprep.subr.bf16.mxu0 %v2724
        %3296 = vmatpush1.bf16.msra.mxu0 %v2723
        %3297 = vmatprep.subr.bf16.mxu0 %v2730
        %3298 = vmatpush1.bf16.msra.mxu0 %v2729
        %3299 = vmatprep.subr.bf16.mxu0 %v2736
        %3300 = vmatpush1.bf16.msra.mxu0 %v2735
        %3301 = vmatprep.subr.bf16.mxu0 %v2742
        %3302 = vmatpush1.bf16.msra.mxu0 %v2741
        %3303 = vmatprep.subr.bf16.mxu0 %v2748
        %3304 = vmatpush1.bf16.msra.mxu0 %v2747
        %3305 = vmatprep.subr.bf16.mxu0 %v2754
        %3306 = vmatpush1.bf16.msra.mxu0 %v2753
        %3307 = vmatprep.subr.bf16.mxu0 %v2760
        %3308 = vmatpush1.bf16.msra.mxu0 %v2759
        %3309 = vmatprep.subr.bf16.mxu0 %v2766
        %3310 = vmatpush1.bf16.msra.mxu0 %v2765
        %3311 = vmatprep.subr.bf16.mxu0 %v2772
        %3312 = vmatpush1.bf16.msra.mxu0 %v2771
        %3313 = vmatprep.subr.bf16.mxu0 %v2778
        %3314 = vmatpush1.bf16.msra.mxu0 %v2777
        %3315 = vmatprep.subr.bf16.mxu0 %v2784
        %3316 = vmatpush1.bf16.msra.mxu0 %v2783
        %3317 = vmatprep.subr.bf16.mxu0 %v2790
        %3318 = vmatpush1.bf16.msra.mxu0 %v2789
        %3319 = vmatprep.subr.bf16.mxu0 %v2796
        %3320 = vmatpush1.bf16.msra.mxu0 %v2795
        %3321 = vmatprep.subr.bf16.mxu0 %v2802
        %3322 = vmatpush1.bf16.msra.mxu0 %v2801
        %3323 = vmatprep.subr.bf16.mxu0 %v2808
        %3324 = vmatpush1.bf16.msra.mxu0 %v2807
        %3325 = vmatprep.mubr.bf16.mxu0 %v1486
        %3326 = vmatmul.mubr.bf16.gmra.mrb[0].mxu0 %v1485
        %v3327 = vpop.f32.mrb[0].mxu0
        %v3328 = vadd.f32 %v1826, %v3327
        %v3329 = vpop.f32.mrb[0].mxu0
        %v3330 = vadd.f32 %v1830, %v3329
        %v3331 = vpop.f32.mrb[0].mxu0
        %v3332 = vadd.f32 %v1826, %v3331
        %v3333 = vpop.f32.mrb[0].mxu0
        %v3334 = vadd.f32 %v1830, %v3333
        %3335 = vmatprep.mubr.bf16.mxu0 %v1492
        %3336 = vmatmul.mubr.bf16.gmra.mrb[0].mxu0 %v1491
        %v3337 = vpop.f32.mrb[0].mxu0
        %v3338 = vadd.f32 %v1826, %v3337
        %v3339 = vpop.f32.mrb[0].mxu0
        %v3340 = vadd.f32 %v1830, %v3339
        %v3341 = vpop.f32.mrb[0].mxu0
        %v3342 = vadd.f32 %v1826, %v3341
        %v3343 = vpop.f32.mrb[0].mxu0
        %v3344 = vadd.f32 %v1830, %v3343
        %3345 = vmatprep.mubr.bf16.mxu0 %v1498
        %3346 = vmatmul.mubr.bf16.gmra.mrb[0].mxu0 %v1497
        %v3347 = vpop.f32.mrb[0].mxu0
        %v3348 = vadd.f32 %v1826, %v3347
        %v3349 = vpop.f32.mrb[0].mxu0
        %v3350 = vadd.f32 %v1830, %v3349
        %v3351 = vpop.f32.mrb[0].mxu0
        %v3352 = vadd.f32 %v1826, %v3351
        %v3353 = vpop.f32.mrb[0].mxu0
        %v3354 = vadd.f32 %v1830, %v3353
        %3355 = vmatprep.mubr.bf16.mxu0 %v1504
        %3356 = vmatmul.mubr.bf16.gmra.mrb[0].mxu0 %v1503
        %v3357 = vpop.f32.mrb[0].mxu0
        %v3358 = vadd.f32 %v1826, %v3357
        %v3359 = vpop.f32.mrb[0].mxu0
        %v3360 = vadd.f32 %v1830, %v3359
        %v3361 = vpop.f32.mrb[0].mxu0
        %v3362 = vadd.f32 %v1826, %v3361
        %v3363 = vpop.f32.mrb[0].mxu0
        %v3364 = vadd.f32 %v1830, %v3363
        %3365 = vmatprep.mubr.bf16.mxu0 %v1510
        %3366 = vmatmul.mubr.bf16.gmra.mrb[0].mxu0 %v1509
        %v3367 = vpop.f32.mrb[0].mxu0
        %v3368 = vadd.f32 %v1826, %v3367
        %v3369 = vpop.f32.mrb[0].mxu0
        %v3370 = vadd.f32 %v1830, %v3369
        %v3371 = vpop.f32.mrb[0].mxu0
        %v3372 = vadd.f32 %v1826, %v3371
        %v3373 = vpop.f32.mrb[0].mxu0
        %v3374 = vadd.f32 %v1830, %v3373
        %3375 = vmatprep.mubr.bf16.mxu0 %v1516
        %3376 = vmatmul.mubr.bf16.gmra.mrb[0].mxu0 %v1515
        %v3377 = vpop.f32.mrb[0].mxu0
        %v3378 = vadd.f32 %v1826, %v3377
        %v3379 = vpop.f32.mrb[0].mxu0
        %v3380 = vadd.f32 %v1830, %v3379
        %v3381 = vpop.f32.mrb[0].mxu0
        %v3382 = vadd.f32 %v1826, %v3381
        %v3383 = vpop.f32.mrb[0].mxu0
        %v3384 = vadd.f32 %v1830, %v3383
        %3385 = vmatprep.mubr.bf16.mxu0 %v1522
        %3386 = vmatmul.mubr.bf16.gmra.mrb[0].mxu0 %v1521
        %v3387 = vpop.f32.mrb[0].mxu0
        %v3388 = vadd.f32 %v1826, %v3387
        %v3389 = vpop.f32.mrb[0].mxu0
        %v3390 = vadd.f32 %v1830, %v3389
        %v3391 = vpop.f32.mrb[0].mxu0
        %v3392 = vadd.f32 %v1826, %v3391
        %v3393 = vpop.f32.mrb[0].mxu0
        %v3394 = vadd.f32 %v1830, %v3393
        %3395 = vmatprep.mubr.bf16.mxu0 %v1528
        %3396 = vmatmul.mubr.bf16.gmra.mrb[0].mxu0 %v1527
        %v3397 = vpop.f32.mrb[0].mxu0
        %v3398 = vadd.f32 %v1826, %v3397
        %v3399 = vpop.f32.mrb[0].mxu0
        %v3400 = vadd.f32 %v1830, %v3399
        %v3401 = vpop.f32.mrb[0].mxu0
        %v3402 = vadd.f32 %v1826, %v3401
        %v3403 = vpop.f32.mrb[0].mxu0
        %v3404 = vadd.f32 %v1830, %v3403
        %3405 = vdwg.mxu0
        %3406 = vmatprep.subr.bf16.mxu0 %v2814
        %3407 = vmatpush1.bf16.msra.mxu0 %v2813
        %3408 = vmatprep.subr.bf16.mxu0 %v2820
        %3409 = vmatpush1.bf16.msra.mxu0 %v2819
        %3410 = vmatprep.subr.bf16.mxu0 %v2826
        %3411 = vmatpush1.bf16.msra.mxu0 %v2825
        %3412 = vmatprep.subr.bf16.mxu0 %v2832
        %3413 = vmatpush1.bf16.msra.mxu0 %v2831
        %3414 = vmatprep.subr.bf16.mxu0 %v2838
        %3415 = vmatpush1.bf16.msra.mxu0 %v2837
        %3416 = vmatprep.subr.bf16.mxu0 %v2844
        %3417 = vmatpush1.bf16.msra.mxu0 %v2843
        %3418 = vmatprep.subr.bf16.mxu0 %v2850
        %3419 = vmatpush1.bf16.msra.mxu0 %v2849
        %3420 = vmatprep.subr.bf16.mxu0 %v2856
        %3421 = vmatpush1.bf16.msra.mxu0 %v2855
        %3422 = vmatprep.subr.bf16.mxu0 %v2862
        %3423 = vmatpush1.bf16.msra.mxu0 %v2861
        %3424 = vmatprep.subr.bf16.mxu0 %v2868
        %3425 = vmatpush1.bf16.msra.mxu0 %v2867
        %3426 = vmatprep.subr.bf16.mxu0 %v2874
        %3427 = vmatpush1.bf16.msra.mxu0 %v2873
        %3428 = vmatprep.subr.bf16.mxu0 %v2880
        %3429 = vmatpush1.bf16.msra.mxu0 %v2879
        %3430 = vmatprep.subr.bf16.mxu0 %v2886
        %3431 = vmatpush1.bf16.msra.mxu0 %v2885
        %3432 = vmatprep.subr.bf16.mxu0 %v2892
        %3433 = vmatpush1.bf16.msra.mxu0 %v2891
        %3434 = vmatprep.subr.bf16.mxu0 %v2898
        %3435 = vmatpush1.bf16.msra.mxu0 %v2897
        %3436 = vmatprep.subr.bf16.mxu0 %v2904
        %3437 = vmatpush1.bf16.msra.mxu0 %v2903
        %3438 = vmatprep.mubr.bf16.mxu0 %v1488
        %3439 = vmatmul.mubr.bf16.gmra.mrb[0].mxu0 %v1487
        %v3440 = vpop.f32.mrb[0].mxu0
        %v3441 = vadd.f32 %v3328, %v3440
        %v3442 = vpop.f32.mrb[0].mxu0
        %v3443 = vadd.f32 %v3330, %v3442
        %v3444 = vpop.f32.mrb[0].mxu0
        %v3445 = vadd.f32 %v3332, %v3444
        %v3446 = vpop.f32.mrb[0].mxu0
        %v3447 = vadd.f32 %v3334, %v3446
        %3448 = vmatprep.mubr.bf16.mxu0 %v1494
        %3449 = vmatmul.mubr.bf16.gmra.mrb[0].mxu0 %v1493
        %v3450 = vpop.f32.mrb[0].mxu0
        %v3451 = vadd.f32 %v3338, %v3450
        %v3452 = vpop.f32.mrb[0].mxu0
        %v3453 = vadd.f32 %v3340, %v3452
        %v3454 = vpop.f32.mrb[0].mxu0
        %v3455 = vadd.f32 %v3342, %v3454
        %v3456 = vpop.f32.mrb[0].mxu0
        %v3457 = vadd.f32 %v3344, %v3456
        %3458 = vmatprep.mubr.bf16.mxu0 %v1500
        %3459 = vmatmul.mubr.bf16.gmra.mrb[0].mxu0 %v1499
        %v3460 = vpop.f32.mrb[0].mxu0
        %v3461 = vadd.f32 %v3348, %v3460
        %v3462 = vpop.f32.mrb[0].mxu0
        %v3463 = vadd.f32 %v3350, %v3462
        %v3464 = vpop.f32.mrb[0].mxu0
        %v3465 = vadd.f32 %v3352, %v3464
        %v3466 = vpop.f32.mrb[0].mxu0
        %v3467 = vadd.f32 %v3354, %v3466
        %3468 = vmatprep.mubr.bf16.mxu0 %v1506
        %3469 = vmatmul.mubr.bf16.gmra.mrb[0].mxu0 %v1505
        %v3470 = vpop.f32.mrb[0].mxu0
        %v3471 = vadd.f32 %v3358, %v3470
        %v3472 = vpop.f32.mrb[0].mxu0
        %v3473 = vadd.f32 %v3360, %v3472
        %v3474 = vpop.f32.mrb[0].mxu0
        %v3475 = vadd.f32 %v3362, %v3474
        %v3476 = vpop.f32.mrb[0].mxu0
        %v3477 = vadd.f32 %v3364, %v3476
        %3478 = vmatprep.mubr.bf16.mxu0 %v1512
        %3479 = vmatmul.mubr.bf16.gmra.mrb[0].mxu0 %v1511
        %v3480 = vpop.f32.mrb[0].mxu0
        %v3481 = vadd.f32 %v3368, %v3480
        %v3482 = vpop.f32.mrb[0].mxu0
        %v3483 = vadd.f32 %v3370, %v3482
        %v3484 = vpop.f32.mrb[0].mxu0
        %v3485 = vadd.f32 %v3372, %v3484
        %v3486 = vpop.f32.mrb[0].mxu0
        %v3487 = vadd.f32 %v3374, %v3486
        %3488 = vmatprep.mubr.bf16.mxu0 %v1518
        %3489 = vmatmul.mubr.bf16.gmra.mrb[0].mxu0 %v1517
        %v3490 = vpop.f32.mrb[0].mxu0
        %v3491 = vadd.f32 %v3378, %v3490
        %v3492 = vpop.f32.mrb[0].mxu0
        %v3493 = vadd.f32 %v3380, %v3492
        %v3494 = vpop.f32.mrb[0].mxu0
        %v3495 = vadd.f32 %v3382, %v3494
        %v3496 = vpop.f32.mrb[0].mxu0
        %v3497 = vadd.f32 %v3384, %v3496
        %3498 = vmatprep.mubr.bf16.mxu0 %v1524
        %3499 = vmatmul.mubr.bf16.gmra.mrb[0].mxu0 %v1523
        %v3500 = vpop.f32.mrb[0].mxu0
        %v3501 = vadd.f32 %v3388, %v3500
        %v3502 = vpop.f32.mrb[0].mxu0
        %v3503 = vadd.f32 %v3390, %v3502
        %v3504 = vpop.f32.mrb[0].mxu0
        %v3505 = vadd.f32 %v3392, %v3504
        %v3506 = vpop.f32.mrb[0].mxu0
        %v3507 = vadd.f32 %v3394, %v3506
        %3508 = vmatprep.mubr.bf16.mxu0 %v1530
        %3509 = vmatmul.mubr.bf16.gmra.mrb[0].mxu0 %v1529
        %v3510 = vpop.f32.mrb[0].mxu0
        %v3511 = vadd.f32 %v3398, %v3510
        %v3512 = vpop.f32.mrb[0].mxu0
        %v3513 = vadd.f32 %v3400, %v3512
        %v3514 = vpop.f32.mrb[0].mxu0
        %v3515 = vadd.f32 %v3402, %v3514
        %v3516 = vpop.f32.mrb[0].mxu0
        %v3517 = vadd.f32 %v3404, %v3516
        %3518 = vdwg.mxu0
        %3519 = vmatprep.subr.bf16.mxu0 %v2910
        %3520 = vmatpush1.bf16.msra.mxu0 %v2909
        %3521 = vmatprep.subr.bf16.mxu0 %v2916
        %3522 = vmatpush1.bf16.msra.mxu0 %v2915
        %3523 = vmatprep.subr.bf16.mxu0 %v2922
        %3524 = vmatpush1.bf16.msra.mxu0 %v2921
        %3525 = vmatprep.subr.bf16.mxu0 %v2928
        %3526 = vmatpush1.bf16.msra.mxu0 %v2927
        %3527 = vmatprep.subr.bf16.mxu0 %v2934
        %3528 = vmatpush1.bf16.msra.mxu0 %v2933
        %3529 = vmatprep.subr.bf16.mxu0 %v2940
        %3530 = vmatpush1.bf16.msra.mxu0 %v2939
        %3531 = vmatprep.subr.bf16.mxu0 %v2946
        %3532 = vmatpush1.bf16.msra.mxu0 %v2945
        %3533 = vmatprep.subr.bf16.mxu0 %v2952
        %3534 = vmatpush1.bf16.msra.mxu0 %v2951
        %3535 = vmatprep.subr.bf16.mxu0 %v2958
        %3536 = vmatpush1.bf16.msra.mxu0 %v2957
        %3537 = vmatprep.subr.bf16.mxu0 %v2964
        %3538 = vmatpush1.bf16.msra.mxu0 %v2963
        %3539 = vmatprep.subr.bf16.mxu0 %v2970
        %3540 = vmatpush1.bf16.msra.mxu0 %v2969
        %3541 = vmatprep.subr.bf16.mxu0 %v2976
        %3542 = vmatpush1.bf16.msra.mxu0 %v2975
        %3543 = vmatprep.subr.bf16.mxu0 %v2982
        %3544 = vmatpush1.bf16.msra.mxu0 %v2981
        %3545 = vmatprep.subr.bf16.mxu0 %v2988
        %3546 = vmatpush1.bf16.msra.mxu0 %v2987
        %3547 = vmatprep.subr.bf16.mxu0 %v2994
        %3548 = vmatpush1.bf16.msra.mxu0 %v2993
        %3549 = vmatprep.subr.bf16.mxu0 %v3000
        %3550 = vmatpush1.bf16.msra.mxu0 %v2999
        %3551 = vmatprep.mubr.bf16.mxu0 %v1490
        %3552 = vmatmul.mubr.bf16.gmra.mrb[0].mxu0 %v1489
        %v3553 = vpop.f32.mrb[0].mxu0
        %v3554 = vadd.f32 %v3441, %v3553
        %v3555 = vpop.f32.mrb[0].mxu0
        %v3556 = vadd.f32 %v3443, %v3555
        %v3557 = vpop.f32.mrb[0].mxu0
        %v3558 = vadd.f32 %v3445, %v3557
        %v3559 = vpop.f32.mrb[0].mxu0
        %v3560 = vadd.f32 %v3447, %v3559
        %3561 = vmatprep.mubr.bf16.mxu0 %v1496
        %3562 = vmatmul.mubr.bf16.gmra.mrb[0].mxu0 %v1495
        %v3563 = vpop.f32.mrb[0].mxu0
        %v3564 = vadd.f32 %v3451, %v3563
        %v3565 = vpop.f32.mrb[0].mxu0
        %v3566 = vadd.f32 %v3453, %v3565
        %v3567 = vpop.f32.mrb[0].mxu0
        %v3568 = vadd.f32 %v3455, %v3567
        %v3569 = vpop.f32.mrb[0].mxu0
        %v3570 = vadd.f32 %v3457, %v3569
        %3571 = vmatprep.mubr.bf16.mxu0 %v1502
        %3572 = vmatmul.mubr.bf16.gmra.mrb[0].mxu0 %v1501
        %v3573 = vpop.f32.mrb[0].mxu0
        %v3574 = vadd.f32 %v3461, %v3573
        %v3575 = vpop.f32.mrb[0].mxu0
        %v3576 = vadd.f32 %v3463, %v3575
        %v3577 = vpop.f32.mrb[0].mxu0
        %v3578 = vadd.f32 %v3465, %v3577
        %v3579 = vpop.f32.mrb[0].mxu0
        %v3580 = vadd.f32 %v3467, %v3579
        %3581 = vmatprep.mubr.bf16.mxu0 %v1508
        %3582 = vmatmul.mubr.bf16.gmra.mrb[0].mxu0 %v1507
        %v3583 = vpop.f32.mrb[0].mxu0
        %v3584 = vadd.f32 %v3471, %v3583
        %v3585 = vpop.f32.mrb[0].mxu0
        %v3586 = vadd.f32 %v3473, %v3585
        %v3587 = vpop.f32.mrb[0].mxu0
        %v3588 = vadd.f32 %v3475, %v3587
        %v3589 = vpop.f32.mrb[0].mxu0
        %v3590 = vadd.f32 %v3477, %v3589
        %3591 = vmatprep.mubr.bf16.mxu0 %v1514
        %3592 = vmatmul.mubr.bf16.gmra.mrb[0].mxu0 %v1513
        %v3593 = vpop.f32.mrb[0].mxu0
        %v3594 = vadd.f32 %v3481, %v3593
        %v3595 = vpop.f32.mrb[0].mxu0
        %v3596 = vadd.f32 %v3483, %v3595
        %v3597 = vpop.f32.mrb[0].mxu0
        %v3598 = vadd.f32 %v3485, %v3597
        %v3599 = vpop.f32.mrb[0].mxu0
        %v3600 = vadd.f32 %v3487, %v3599
        %3601 = vmatprep.mubr.bf16.mxu0 %v1520
        %3602 = vmatmul.mubr.bf16.gmra.mrb[0].mxu0 %v1519
        %v3603 = vpop.f32.mrb[0].mxu0
        %v3604 = vadd.f32 %v3491, %v3603
        %v3605 = vpop.f32.mrb[0].mxu0
        %v3606 = vadd.f32 %v3493, %v3605
        %v3607 = vpop.f32.mrb[0].mxu0
        %v3608 = vadd.f32 %v3495, %v3607
        %v3609 = vpop.f32.mrb[0].mxu0
        %v3610 = vadd.f32 %v3497, %v3609
        %3611 = vmatprep.mubr.bf16.mxu0 %v1526
        %3612 = vmatmul.mubr.bf16.gmra.mrb[0].mxu0 %v1525
        %v3613 = vpop.f32.mrb[0].mxu0
        %v3614 = vadd.f32 %v3501, %v3613
        %v3615 = vpop.f32.mrb[0].mxu0
        %v3616 = vadd.f32 %v3503, %v3615
        %v3617 = vpop.f32.mrb[0].mxu0
        %v3618 = vadd.f32 %v3505, %v3617
        %v3619 = vpop.f32.mrb[0].mxu0
        %v3620 = vadd.f32 %v3507, %v3619
        %3621 = vmatprep.mubr.bf16.mxu0 %v1532
        %3622 = vmatmul.mubr.bf16.gmra.mrb[0].mxu0 %v1531
        %v3623 = vpop.f32.mrb[0].mxu0
        %v3624 = vadd.f32 %v3511, %v3623
        %v3625 = vpop.f32.mrb[0].mxu0
        %v3626 = vadd.f32 %v3513, %v3625
        %v3627 = vpop.f32.mrb[0].mxu0
        %v3628 = vadd.f32 %v3515, %v3627
        %v3629 = vpop.f32.mrb[0].mxu0
        %v3630 = vadd.f32 %v3517, %v3629
        %3631 = vdwg.mxu0
        %3632 = vmatprep.subr.bf16.mxu0 %v2720
        %3633 = vmatpush1.bf16.msra.mxu0 %v2719
        %3634 = vmatprep.subr.bf16.mxu0 %v2726
        %3635 = vmatpush1.bf16.msra.mxu0 %v2725
        %3636 = vmatprep.subr.bf16.mxu0 %v2732
        %3637 = vmatpush1.bf16.msra.mxu0 %v2731
        %3638 = vmatprep.subr.bf16.mxu0 %v2738
        %3639 = vmatpush1.bf16.msra.mxu0 %v2737
        %3640 = vmatprep.subr.bf16.mxu0 %v2744
        %3641 = vmatpush1.bf16.msra.mxu0 %v2743
        %3642 = vmatprep.subr.bf16.mxu0 %v2750
        %3643 = vmatpush1.bf16.msra.mxu0 %v2749
        %3644 = vmatprep.subr.bf16.mxu0 %v2756
        %3645 = vmatpush1.bf16.msra.mxu0 %v2755
        %3646 = vmatprep.subr.bf16.mxu0 %v2762
        %3647 = vmatpush1.bf16.msra.mxu0 %v2761
        %3648 = vmatprep.subr.bf16.mxu0 %v2768
        %3649 = vmatpush1.bf16.msra.mxu0 %v2767
        %3650 = vmatprep.subr.bf16.mxu0 %v2774
        %3651 = vmatpush1.bf16.msra.mxu0 %v2773
        %3652 = vmatprep.subr.bf16.mxu0 %v2780
        %3653 = vmatpush1.bf16.msra.mxu0 %v2779
        %3654 = vmatprep.subr.bf16.mxu0 %v2786
        %3655 = vmatpush1.bf16.msra.mxu0 %v2785
        %3656 = vmatprep.subr.bf16.mxu0 %v2792
        %3657 = vmatpush1.bf16.msra.mxu0 %v2791
        %3658 = vmatprep.subr.bf16.mxu0 %v2798
        %3659 = vmatpush1.bf16.msra.mxu0 %v2797
        %3660 = vmatprep.subr.bf16.mxu0 %v2804
        %3661 = vmatpush1.bf16.msra.mxu0 %v2803
        %3662 = vmatprep.subr.bf16.mxu0 %v2810
        %3663 = vmatpush1.bf16.msra.mxu0 %v2809
        %3664 = vmatprep.mubr.bf16.mxu0 %v1486
        %3665 = vmatmul.mubr.bf16.gmra.mrb[0].mxu0 %v1485
        %v3666 = vpop.f32.mrb[0].mxu0
        %v3667 = vadd.f32 %v1834, %v3666
        %v3668 = vpop.f32.mrb[0].mxu0
        %v3669 = vadd.f32 %v1838, %v3668
        %v3670 = vpop.f32.mrb[0].mxu0
        %v3671 = vadd.f32 %v1834, %v3670
        %v3672 = vpop.f32.mrb[0].mxu0
        %v3673 = vadd.f32 %v1838, %v3672
        %3674 = vmatprep.mubr.bf16.mxu0 %v1492
        %3675 = vmatmul.mubr.bf16.gmra.mrb[0].mxu0 %v1491
        %v3676 = vpop.f32.mrb[0].mxu0
        %v3677 = vadd.f32 %v1834, %v3676
        %v3678 = vpop.f32.mrb[0].mxu0
        %v3679 = vadd.f32 %v1838, %v3678
        %v3680 = vpop.f32.mrb[0].mxu0
        %v3681 = vadd.f32 %v1834, %v3680
        %v3682 = vpop.f32.mrb[0].mxu0
        %v3683 = vadd.f32 %v1838, %v3682
        %3684 = vmatprep.mubr.bf16.mxu0 %v1498
        %3685 = vmatmul.mubr.bf16.gmra.mrb[0].mxu0 %v1497
        %v3686 = vpop.f32.mrb[0].mxu0
        %v3687 = vadd.f32 %v1834, %v3686
        %v3688 = vpop.f32.mrb[0].mxu0
        %v3689 = vadd.f32 %v1838, %v3688
        %v3690 = vpop.f32.mrb[0].mxu0
        %v3691 = vadd.f32 %v1834, %v3690
        %v3692 = vpop.f32.mrb[0].mxu0
        %v3693 = vadd.f32 %v1838, %v3692
        %3694 = vmatprep.mubr.bf16.mxu0 %v1504
        %3695 = vmatmul.mubr.bf16.gmra.mrb[0].mxu0 %v1503
        %v3696 = vpop.f32.mrb[0].mxu0
        %v3697 = vadd.f32 %v1834, %v3696
        %v3698 = vpop.f32.mrb[0].mxu0
        %v3699 = vadd.f32 %v1838, %v3698
        %v3700 = vpop.f32.mrb[0].mxu0
        %v3701 = vadd.f32 %v1834, %v3700
        %v3702 = vpop.f32.mrb[0].mxu0
        %v3703 = vadd.f32 %v1838, %v3702
        %3704 = vmatprep.mubr.bf16.mxu0 %v1510
        %3705 = vmatmul.mubr.bf16.gmra.mrb[0].mxu0 %v1509
        %v3706 = vpop.f32.mrb[0].mxu0
        %v3707 = vadd.f32 %v1834, %v3706
        %v3708 = vpop.f32.mrb[0].mxu0
        %v3709 = vadd.f32 %v1838, %v3708
        %v3710 = vpop.f32.mrb[0].mxu0
        %v3711 = vadd.f32 %v1834, %v3710
        %v3712 = vpop.f32.mrb[0].mxu0
        %v3713 = vadd.f32 %v1838, %v3712
        %3714 = vmatprep.mubr.bf16.mxu0 %v1516
        %3715 = vmatmul.mubr.bf16.gmra.mrb[0].mxu0 %v1515
        %v3716 = vpop.f32.mrb[0].mxu0
        %v3717 = vadd.f32 %v1834, %v3716
        %v3718 = vpop.f32.mrb[0].mxu0
        %v3719 = vadd.f32 %v1838, %v3718
        %v3720 = vpop.f32.mrb[0].mxu0
        %v3721 = vadd.f32 %v1834, %v3720
        %v3722 = vpop.f32.mrb[0].mxu0
        %v3723 = vadd.f32 %v1838, %v3722
        %3724 = vmatprep.mubr.bf16.mxu0 %v1522
        %3725 = vmatmul.mubr.bf16.gmra.mrb[0].mxu0 %v1521
        %v3726 = vpop.f32.mrb[0].mxu0
        %v3727 = vadd.f32 %v1834, %v3726
        %v3728 = vpop.f32.mrb[0].mxu0
        %v3729 = vadd.f32 %v1838, %v3728
        %v3730 = vpop.f32.mrb[0].mxu0
        %v3731 = vadd.f32 %v1834, %v3730
        %v3732 = vpop.f32.mrb[0].mxu0
        %v3733 = vadd.f32 %v1838, %v3732
        %3734 = vmatprep.mubr.bf16.mxu0 %v1528
        %3735 = vmatmul.mubr.bf16.gmra.mrb[0].mxu0 %v1527
        %v3736 = vpop.f32.mrb[0].mxu0
        %v3737 = vadd.f32 %v1834, %v3736
        %v3738 = vpop.f32.mrb[0].mxu0
        %v3739 = vadd.f32 %v1838, %v3738
        %v3740 = vpop.f32.mrb[0].mxu0
        %v3741 = vadd.f32 %v1834, %v3740
        %v3742 = vpop.f32.mrb[0].mxu0
        %v3743 = vadd.f32 %v1838, %v3742
        %3744 = vdwg.mxu0
        %3745 = vmatprep.subr.bf16.mxu0 %v2816
        %3746 = vmatpush1.bf16.msra.mxu0 %v2815
        %3747 = vmatprep.subr.bf16.mxu0 %v2822
        %3748 = vmatpush1.bf16.msra.mxu0 %v2821
        %3749 = vmatprep.subr.bf16.mxu0 %v2828
        %3750 = vmatpush1.bf16.msra.mxu0 %v2827
        %3751 = vmatprep.subr.bf16.mxu0 %v2834
        %3752 = vmatpush1.bf16.msra.mxu0 %v2833
        %3753 = vmatprep.subr.bf16.mxu0 %v2840
        %3754 = vmatpush1.bf16.msra.mxu0 %v2839
        %3755 = vmatprep.subr.bf16.mxu0 %v2846
        %3756 = vmatpush1.bf16.msra.mxu0 %v2845
        %3757 = vmatprep.subr.bf16.mxu0 %v2852
        %3758 = vmatpush1.bf16.msra.mxu0 %v2851
        %3759 = vmatprep.subr.bf16.mxu0 %v2858
        %3760 = vmatpush1.bf16.msra.mxu0 %v2857
        %3761 = vmatprep.subr.bf16.mxu0 %v2864
        %3762 = vmatpush1.bf16.msra.mxu0 %v2863
        %3763 = vmatprep.subr.bf16.mxu0 %v2870
        %3764 = vmatpush1.bf16.msra.mxu0 %v2869
        %3765 = vmatprep.subr.bf16.mxu0 %v2876
        %3766 = vmatpush1.bf16.msra.mxu0 %v2875
        %3767 = vmatprep.subr.bf16.mxu0 %v2882
        %3768 = vmatpush1.bf16.msra.mxu0 %v2881
        %3769 = vmatprep.subr.bf16.mxu0 %v2888
        %3770 = vmatpush1.bf16.msra.mxu0 %v2887
        %3771 = vmatprep.subr.bf16.mxu0 %v2894
        %3772 = vmatpush1.bf16.msra.mxu0 %v2893
        %3773 = vmatprep.subr.bf16.mxu0 %v2900
        %3774 = vmatpush1.bf16.msra.mxu0 %v2899
        %3775 = vmatprep.subr.bf16.mxu0 %v2906
        %3776 = vmatpush1.bf16.msra.mxu0 %v2905
        %3777 = vmatprep.mubr.bf16.mxu0 %v1488
        %3778 = vmatmul.mubr.bf16.gmra.mrb[0].mxu0 %v1487
        %v3779 = vpop.f32.mrb[0].mxu0
        %v3780 = vadd.f32 %v3667, %v3779
        %v3781 = vpop.f32.mrb[0].mxu0
        %v3782 = vadd.f32 %v3669, %v3781
        %v3783 = vpop.f32.mrb[0].mxu0
        %v3784 = vadd.f32 %v3671, %v3783
        %v3785 = vpop.f32.mrb[0].mxu0
        %v3786 = vadd.f32 %v3673, %v3785
        %3787 = vmatprep.mubr.bf16.mxu0 %v1494
        %3788 = vmatmul.mubr.bf16.gmra.mrb[0].mxu0 %v1493
        %v3789 = vpop.f32.mrb[0].mxu0
        %v3790 = vadd.f32 %v3677, %v3789
        %v3791 = vpop.f32.mrb[0].mxu0
        %v3792 = vadd.f32 %v3679, %v3791
        %v3793 = vpop.f32.mrb[0].mxu0
        %v3794 = vadd.f32 %v3681, %v3793
        %v3795 = vpop.f32.mrb[0].mxu0
        %v3796 = vadd.f32 %v3683, %v3795
        %3797 = vmatprep.mubr.bf16.mxu0 %v1500
        %3798 = vmatmul.mubr.bf16.gmra.mrb[0].mxu0 %v1499
        %v3799 = vpop.f32.mrb[0].mxu0
        %v3800 = vadd.f32 %v3687, %v3799
        %v3801 = vpop.f32.mrb[0].mxu0
        %v3802 = vadd.f32 %v3689, %v3801
        %v3803 = vpop.f32.mrb[0].mxu0
        %v3804 = vadd.f32 %v3691, %v3803
        %v3805 = vpop.f32.mrb[0].mxu0
        %v3806 = vadd.f32 %v3693, %v3805
        %3807 = vmatprep.mubr.bf16.mxu0 %v1506
        %3808 = vmatmul.mubr.bf16.gmra.mrb[0].mxu0 %v1505
        %v3809 = vpop.f32.mrb[0].mxu0
        %v3810 = vadd.f32 %v3697, %v3809
        %v3811 = vpop.f32.mrb[0].mxu0
        %v3812 = vadd.f32 %v3699, %v3811
        %v3813 = vpop.f32.mrb[0].mxu0
        %v3814 = vadd.f32 %v3701, %v3813
        %v3815 = vpop.f32.mrb[0].mxu0
        %v3816 = vadd.f32 %v3703, %v3815
        %3817 = vmatprep.mubr.bf16.mxu0 %v1512
        %3818 = vmatmul.mubr.bf16.gmra.mrb[0].mxu0 %v1511
        %v3819 = vpop.f32.mrb[0].mxu0
        %v3820 = vadd.f32 %v3707, %v3819
        %v3821 = vpop.f32.mrb[0].mxu0
        %v3822 = vadd.f32 %v3709, %v3821
        %v3823 = vpop.f32.mrb[0].mxu0
        %v3824 = vadd.f32 %v3711, %v3823
        %v3825 = vpop.f32.mrb[0].mxu0
        %v3826 = vadd.f32 %v3713, %v3825
        %3827 = vmatprep.mubr.bf16.mxu0 %v1518
        %3828 = vmatmul.mubr.bf16.gmra.mrb[0].mxu0 %v1517
        %v3829 = vpop.f32.mrb[0].mxu0
        %v3830 = vadd.f32 %v3717, %v3829
        %v3831 = vpop.f32.mrb[0].mxu0
        %v3832 = vadd.f32 %v3719, %v3831
        %v3833 = vpop.f32.mrb[0].mxu0
        %v3834 = vadd.f32 %v3721, %v3833
        %v3835 = vpop.f32.mrb[0].mxu0
        %v3836 = vadd.f32 %v3723, %v3835
        %3837 = vmatprep.mubr.bf16.mxu0 %v1524
        %3838 = vmatmul.mubr.bf16.gmra.mrb[0].mxu0 %v1523
        %v3839 = vpop.f32.mrb[0].mxu0
        %v3840 = vadd.f32 %v3727, %v3839
        %v3841 = vpop.f32.mrb[0].mxu0
        %v3842 = vadd.f32 %v3729, %v3841
        %v3843 = vpop.f32.mrb[0].mxu0
        %v3844 = vadd.f32 %v3731, %v3843
        %v3845 = vpop.f32.mrb[0].mxu0
        %v3846 = vadd.f32 %v3733, %v3845
        %3847 = vmatprep.mubr.bf16.mxu0 %v1530
        %3848 = vmatmul.mubr.bf16.gmra.mrb[0].mxu0 %v1529
        %v3849 = vpop.f32.mrb[0].mxu0
        %v3850 = vadd.f32 %v3737, %v3849
        %v3851 = vpop.f32.mrb[0].mxu0
        %v3852 = vadd.f32 %v3739, %v3851
        %v3853 = vpop.f32.mrb[0].mxu0
        %v3854 = vadd.f32 %v3741, %v3853
        %v3855 = vpop.f32.mrb[0].mxu0
        %v3856 = vadd.f32 %v3743, %v3855
        %3857 = vdwg.mxu0
        %3858 = vmatprep.subr.bf16.mxu0 %v2912
        %3859 = vmatpush1.bf16.msra.mxu0 %v2911
        %3860 = vmatprep.subr.bf16.mxu0 %v2918
        %3861 = vmatpush1.bf16.msra.mxu0 %v2917
        %3862 = vmatprep.subr.bf16.mxu0 %v2924
        %3863 = vmatpush1.bf16.msra.mxu0 %v2923
        %3864 = vmatprep.subr.bf16.mxu0 %v2930
        %3865 = vmatpush1.bf16.msra.mxu0 %v2929
        %3866 = vmatprep.subr.bf16.mxu0 %v2936
        %3867 = vmatpush1.bf16.msra.mxu0 %v2935
        %3868 = vmatprep.subr.bf16.mxu0 %v2942
        %3869 = vmatpush1.bf16.msra.mxu0 %v2941
        %3870 = vmatprep.subr.bf16.mxu0 %v2948
        %3871 = vmatpush1.bf16.msra.mxu0 %v2947
        %3872 = vmatprep.subr.bf16.mxu0 %v2954
        %3873 = vmatpush1.bf16.msra.mxu0 %v2953
        %3874 = vmatprep.subr.bf16.mxu0 %v2960
        %3875 = vmatpush1.bf16.msra.mxu0 %v2959
        %3876 = vmatprep.subr.bf16.mxu0 %v2966
        %3877 = vmatpush1.bf16.msra.mxu0 %v2965
        %3878 = vmatprep.subr.bf16.mxu0 %v2972
        %3879 = vmatpush1.bf16.msra.mxu0 %v2971
        %3880 = vmatprep.subr.bf16.mxu0 %v2978
        %3881 = vmatpush1.bf16.msra.mxu0 %v2977
        %3882 = vmatprep.subr.bf16.mxu0 %v2984
        %3883 = vmatpush1.bf16.msra.mxu0 %v2983
        %3884 = vmatprep.subr.bf16.mxu0 %v2990
        %3885 = vmatpush1.bf16.msra.mxu0 %v2989
        %3886 = vmatprep.subr.bf16.mxu0 %v2996
        %3887 = vmatpush1.bf16.msra.mxu0 %v2995
        %3888 = vmatprep.subr.bf16.mxu0 %v3002
        %3889 = vmatpush1.bf16.msra.mxu0 %v3001
        %3890 = vmatprep.mubr.bf16.mxu0 %v1490
        %3891 = vmatmul.mubr.bf16.gmra.mrb[0].mxu0 %v1489
        %v3892 = vpop.f32.mrb[0].mxu0
        %v3893 = vadd.f32 %v3780, %v3892
        %v3894 = vpop.f32.mrb[0].mxu0
        %v3895 = vadd.f32 %v3782, %v3894
        %v3896 = vpop.f32.mrb[0].mxu0
        %v3897 = vadd.f32 %v3784, %v3896
        %v3898 = vpop.f32.mrb[0].mxu0
        %v3899 = vadd.f32 %v3786, %v3898
        %3900 = vmatprep.mubr.bf16.mxu0 %v1496
        %3901 = vmatmul.mubr.bf16.gmra.mrb[0].mxu0 %v1495
        %v3902 = vpop.f32.mrb[0].mxu0
        %v3903 = vadd.f32 %v3790, %v3902
        %v3904 = vpop.f32.mrb[0].mxu0
        %v3905 = vadd.f32 %v3792, %v3904
        %v3906 = vpop.f32.mrb[0].mxu0
        %v3907 = vadd.f32 %v3794, %v3906
        %v3908 = vpop.f32.mrb[0].mxu0
        %v3909 = vadd.f32 %v3796, %v3908
        %3910 = vmatprep.mubr.bf16.mxu0 %v1502
        %3911 = vmatmul.mubr.bf16.gmra.mrb[0].mxu0 %v1501
        %v3912 = vpop.f32.mrb[0].mxu0
        %v3913 = vadd.f32 %v3800, %v3912
        %v3914 = vpop.f32.mrb[0].mxu0
        %v3915 = vadd.f32 %v3802, %v3914
        %v3916 = vpop.f32.mrb[0].mxu0
        %v3917 = vadd.f32 %v3804, %v3916
        %v3918 = vpop.f32.mrb[0].mxu0
        %v3919 = vadd.f32 %v3806, %v3918
        %3920 = vmatprep.mubr.bf16.mxu0 %v1508
        %3921 = vmatmul.mubr.bf16.gmra.mrb[0].mxu0 %v1507
        %v3922 = vpop.f32.mrb[0].mxu0
        %v3923 = vadd.f32 %v3810, %v3922
        %v3924 = vpop.f32.mrb[0].mxu0
        %v3925 = vadd.f32 %v3812, %v3924
        %v3926 = vpop.f32.mrb[0].mxu0
        %v3927 = vadd.f32 %v3814, %v3926
        %v3928 = vpop.f32.mrb[0].mxu0
        %v3929 = vadd.f32 %v3816, %v3928
        %3930 = vmatprep.mubr.bf16.mxu0 %v1514
        %3931 = vmatmul.mubr.bf16.gmra.mrb[0].mxu0 %v1513
        %v3932 = vpop.f32.mrb[0].mxu0
        %v3933 = vadd.f32 %v3820, %v3932
        %v3934 = vpop.f32.mrb[0].mxu0
        %v3935 = vadd.f32 %v3822, %v3934
        %v3936 = vpop.f32.mrb[0].mxu0
        %v3937 = vadd.f32 %v3824, %v3936
        %v3938 = vpop.f32.mrb[0].mxu0
        %v3939 = vadd.f32 %v3826, %v3938
        %3940 = vmatprep.mubr.bf16.mxu0 %v1520
        %3941 = vmatmul.mubr.bf16.gmra.mrb[0].mxu0 %v1519
        %v3942 = vpop.f32.mrb[0].mxu0
        %v3943 = vadd.f32 %v3830, %v3942
        %v3944 = vpop.f32.mrb[0].mxu0
        %v3945 = vadd.f32 %v3832, %v3944
        %v3946 = vpop.f32.mrb[0].mxu0
        %v3947 = vadd.f32 %v3834, %v3946
        %v3948 = vpop.f32.mrb[0].mxu0
        %v3949 = vadd.f32 %v3836, %v3948
        %3950 = vmatprep.mubr.bf16.mxu0 %v1526
        %3951 = vmatmul.mubr.bf16.gmra.mrb[0].mxu0 %v1525
        %v3952 = vpop.f32.mrb[0].mxu0
        %v3953 = vadd.f32 %v3840, %v3952
        %v3954 = vpop.f32.mrb[0].mxu0
        %v3955 = vadd.f32 %v3842, %v3954
        %v3956 = vpop.f32.mrb[0].mxu0
        %v3957 = vadd.f32 %v3844, %v3956
        %v3958 = vpop.f32.mrb[0].mxu0
        %v3959 = vadd.f32 %v3846, %v3958
        %3960 = vmatprep.mubr.bf16.mxu0 %v1532
        %3961 = vmatmul.mubr.bf16.gmra.mrb[0].mxu0 %v1531
        %v3962 = vpop.f32.mrb[0].mxu0
        %v3963 = vadd.f32 %v3850, %v3962
        %v3964 = vpop.f32.mrb[0].mxu0
        %v3965 = vadd.f32 %v3852, %v3964
        %v3966 = vpop.f32.mrb[0].mxu0
        %v3967 = vadd.f32 %v3854, %v3966
        %v3968 = vpop.f32.mrb[0].mxu0
        %v3969 = vadd.f32 %v3856, %v3968
        %3970 = vdwg.mxu0
        %3971 = vmatprep.subr.bf16.mxu0 %v2722
        %3972 = vmatpush1.bf16.msra.mxu0 %v2721
        %3973 = vmatprep.subr.bf16.mxu0 %v2728
        %3974 = vmatpush1.bf16.msra.mxu0 %v2727
        %3975 = vmatprep.subr.bf16.mxu0 %v2734
        %3976 = vmatpush1.bf16.msra.mxu0 %v2733
        %3977 = vmatprep.subr.bf16.mxu0 %v2740
        %3978 = vmatpush1.bf16.msra.mxu0 %v2739
        %3979 = vmatprep.subr.bf16.mxu0 %v2746
        %3980 = vmatpush1.bf16.msra.mxu0 %v2745
        %3981 = vmatprep.subr.bf16.mxu0 %v2752
        %3982 = vmatpush1.bf16.msra.mxu0 %v2751
        %3983 = vmatprep.subr.bf16.mxu0 %v2758
        %3984 = vmatpush1.bf16.msra.mxu0 %v2757
        %3985 = vmatprep.subr.bf16.mxu0 %v2764
        %3986 = vmatpush1.bf16.msra.mxu0 %v2763
        %3987 = vmatprep.subr.bf16.mxu0 %v2770
        %3988 = vmatpush1.bf16.msra.mxu0 %v2769
        %3989 = vmatprep.subr.bf16.mxu0 %v2776
        %3990 = vmatpush1.bf16.msra.mxu0 %v2775
        %3991 = vmatprep.subr.bf16.mxu0 %v2782
        %3992 = vmatpush1.bf16.msra.mxu0 %v2781
        %3993 = vmatprep.subr.bf16.mxu0 %v2788
        %3994 = vmatpush1.bf16.msra.mxu0 %v2787
        %3995 = vmatprep.subr.bf16.mxu0 %v2794
        %3996 = vmatpush1.bf16.msra.mxu0 %v2793
        %3997 = vmatprep.subr.bf16.mxu0 %v2800
        %3998 = vmatpush1.bf16.msra.mxu0 %v2799
        %3999 = vmatprep.subr.bf16.mxu0 %v2806
        %4000 = vmatpush1.bf16.msra.mxu0 %v2805
        %4001 = vmatprep.subr.bf16.mxu0 %v2812
        %4002 = vmatpush1.bf16.msra.mxu0 %v2811
        %4003 = vmatprep.mubr.bf16.mxu0 %v1486
        %4004 = vmatmul.mubr.bf16.gmra.mrb[0].mxu0 %v1485
        %v4005 = vpop.f32.mrb[0].mxu0
        %v4006 = vadd.f32 %v1842, %v4005
        %v4007 = vpop.f32.mrb[0].mxu0
        %v4008 = vadd.f32 %v1846, %v4007
        %v4009 = vpop.f32.mrb[0].mxu0
        %v4010 = vadd.f32 %v1842, %v4009
        %v4011 = vpop.f32.mrb[0].mxu0
        %v4012 = vadd.f32 %v1846, %v4011
        %4013 = vmatprep.mubr.bf16.mxu0 %v1492
        %4014 = vmatmul.mubr.bf16.gmra.mrb[0].mxu0 %v1491
        %v4015 = vpop.f32.mrb[0].mxu0
        %v4016 = vadd.f32 %v1842, %v4015
        %v4017 = vpop.f32.mrb[0].mxu0
        %v4018 = vadd.f32 %v1846, %v4017
        %v4019 = vpop.f32.mrb[0].mxu0
        %v4020 = vadd.f32 %v1842, %v4019
        %v4021 = vpop.f32.mrb[0].mxu0
        %v4022 = vadd.f32 %v1846, %v4021
        %4023 = vmatprep.mubr.bf16.mxu0 %v1498
        %4024 = vmatmul.mubr.bf16.gmra.mrb[0].mxu0 %v1497
        %v4025 = vpop.f32.mrb[0].mxu0
        %v4026 = vadd.f32 %v1842, %v4025
        %v4027 = vpop.f32.mrb[0].mxu0
        %v4028 = vadd.f32 %v1846, %v4027
        %v4029 = vpop.f32.mrb[0].mxu0
        %v4030 = vadd.f32 %v1842, %v4029
        %v4031 = vpop.f32.mrb[0].mxu0
        %v4032 = vadd.f32 %v1846, %v4031
        %4033 = vmatprep.mubr.bf16.mxu0 %v1504
        %4034 = vmatmul.mubr.bf16.gmra.mrb[0].mxu0 %v1503
        %v4035 = vpop.f32.mrb[0].mxu0
        %v4036 = vadd.f32 %v1842, %v4035
        %v4037 = vpop.f32.mrb[0].mxu0
        %v4038 = vadd.f32 %v1846, %v4037
        %v4039 = vpop.f32.mrb[0].mxu0
        %v4040 = vadd.f32 %v1842, %v4039
        %v4041 = vpop.f32.mrb[0].mxu0
        %v4042 = vadd.f32 %v1846, %v4041
        %4043 = vmatprep.mubr.bf16.mxu0 %v1510
        %4044 = vmatmul.mubr.bf16.gmra.mrb[0].mxu0 %v1509
        %v4045 = vpop.f32.mrb[0].mxu0
        %v4046 = vadd.f32 %v1842, %v4045
        %v4047 = vpop.f32.mrb[0].mxu0
        %v4048 = vadd.f32 %v1846, %v4047
        %v4049 = vpop.f32.mrb[0].mxu0
        %v4050 = vadd.f32 %v1842, %v4049
        %v4051 = vpop.f32.mrb[0].mxu0
        %v4052 = vadd.f32 %v1846, %v4051
        %4053 = vmatprep.mubr.bf16.mxu0 %v1516
        %4054 = vmatmul.mubr.bf16.gmra.mrb[0].mxu0 %v1515
        %v4055 = vpop.f32.mrb[0].mxu0
        %v4056 = vadd.f32 %v1842, %v4055
        %v4057 = vpop.f32.mrb[0].mxu0
        %v4058 = vadd.f32 %v1846, %v4057
        %v4059 = vpop.f32.mrb[0].mxu0
        %v4060 = vadd.f32 %v1842, %v4059
        %v4061 = vpop.f32.mrb[0].mxu0
        %v4062 = vadd.f32 %v1846, %v4061
        %4063 = vmatprep.mubr.bf16.mxu0 %v1522
        %4064 = vmatmul.mubr.bf16.gmra.mrb[0].mxu0 %v1521
        %v4065 = vpop.f32.mrb[0].mxu0
        %v4066 = vadd.f32 %v1842, %v4065
        %v4067 = vpop.f32.mrb[0].mxu0
        %v4068 = vadd.f32 %v1846, %v4067
        %v4069 = vpop.f32.mrb[0].mxu0
        %v4070 = vadd.f32 %v1842, %v4069
        %v4071 = vpop.f32.mrb[0].mxu0
        %v4072 = vadd.f32 %v1846, %v4071
        %4073 = vmatprep.mubr.bf16.mxu0 %v1528
        %4074 = vmatmul.mubr.bf16.gmra.mrb[0].mxu0 %v1527
        %v4075 = vpop.f32.mrb[0].mxu0
        %v4076 = vadd.f32 %v1842, %v4075
        %v4077 = vpop.f32.mrb[0].mxu0
        %v4078 = vadd.f32 %v1846, %v4077
        %v4079 = vpop.f32.mrb[0].mxu0
        %v4080 = vadd.f32 %v1842, %v4079
        %v4081 = vpop.f32.mrb[0].mxu0
        %v4082 = vadd.f32 %v1846, %v4081
        %4083 = vdwg.mxu0
        %4084 = vmatprep.subr.bf16.mxu0 %v2818
        %4085 = vmatpush1.bf16.msra.mxu0 %v2817
        %4086 = vmatprep.subr.bf16.mxu0 %v2824
        %4087 = vmatpush1.bf16.msra.mxu0 %v2823
        %4088 = vmatprep.subr.bf16.mxu0 %v2830
        %4089 = vmatpush1.bf16.msra.mxu0 %v2829
        %4090 = vmatprep.subr.bf16.mxu0 %v2836
        %4091 = vmatpush1.bf16.msra.mxu0 %v2835
        %4092 = vmatprep.subr.bf16.mxu0 %v2842
        %4093 = vmatpush1.bf16.msra.mxu0 %v2841
        %4094 = vmatprep.subr.bf16.mxu0 %v2848
        %4095 = vmatpush1.bf16.msra.mxu0 %v2847
        %4096 = vmatprep.subr.bf16.mxu0 %v2854
        %4097 = vmatpush1.bf16.msra.mxu0 %v2853
        %4098 = vmatprep.subr.bf16.mxu0 %v2860
        %4099 = vmatpush1.bf16.msra.mxu0 %v2859
        %4100 = vmatprep.subr.bf16.mxu0 %v2866
        %4101 = vmatpush1.bf16.msra.mxu0 %v2865
        %4102 = vmatprep.subr.bf16.mxu0 %v2872
        %4103 = vmatpush1.bf16.msra.mxu0 %v2871
        %4104 = vmatprep.subr.bf16.mxu0 %v2878
        %4105 = vmatpush1.bf16.msra.mxu0 %v2877
        %4106 = vmatprep.subr.bf16.mxu0 %v2884
        %4107 = vmatpush1.bf16.msra.mxu0 %v2883
        %4108 = vmatprep.subr.bf16.mxu0 %v2890
        %4109 = vmatpush1.bf16.msra.mxu0 %v2889
        %4110 = vmatprep.subr.bf16.mxu0 %v2896
        %4111 = vmatpush1.bf16.msra.mxu0 %v2895
        %4112 = vmatprep.subr.bf16.mxu0 %v2902
        %4113 = vmatpush1.bf16.msra.mxu0 %v2901
        %4114 = vmatprep.subr.bf16.mxu0 %v2908
        %4115 = vmatpush1.bf16.msra.mxu0 %v2907
        %4116 = vmatprep.mubr.bf16.mxu0 %v1488
        %4117 = vmatmul.mubr.bf16.gmra.mrb[0].mxu0 %v1487
        %v4118 = vpop.f32.mrb[0].mxu0
        %v4119 = vadd.f32 %v4006, %v4118
        %v4120 = vpop.f32.mrb[0].mxu0
        %v4121 = vadd.f32 %v4008, %v4120
        %v4122 = vpop.f32.mrb[0].mxu0
        %v4123 = vadd.f32 %v4010, %v4122
        %v4124 = vpop.f32.mrb[0].mxu0
        %v4125 = vadd.f32 %v4012, %v4124
        %4126 = vmatprep.mubr.bf16.mxu0 %v1494
        %4127 = vmatmul.mubr.bf16.gmra.mrb[0].mxu0 %v1493
        %v4128 = vpop.f32.mrb[0].mxu0
        %v4129 = vadd.f32 %v4016, %v4128
        %v4130 = vpop.f32.mrb[0].mxu0
        %v4131 = vadd.f32 %v4018, %v4130
        %v4132 = vpop.f32.mrb[0].mxu0
        %v4133 = vadd.f32 %v4020, %v4132
        %v4134 = vpop.f32.mrb[0].mxu0
        %v4135 = vadd.f32 %v4022, %v4134
        %4136 = vmatprep.mubr.bf16.mxu0 %v1500
        %4137 = vmatmul.mubr.bf16.gmra.mrb[0].mxu0 %v1499
        %v4138 = vpop.f32.mrb[0].mxu0
        %v4139 = vadd.f32 %v4026, %v4138
        %v4140 = vpop.f32.mrb[0].mxu0
        %v4141 = vadd.f32 %v4028, %v4140
        %v4142 = vpop.f32.mrb[0].mxu0
        %v4143 = vadd.f32 %v4030, %v4142
        %v4144 = vpop.f32.mrb[0].mxu0
        %v4145 = vadd.f32 %v4032, %v4144
        %4146 = vmatprep.mubr.bf16.mxu0 %v1506
        %4147 = vmatmul.mubr.bf16.gmra.mrb[0].mxu0 %v1505
        %v4148 = vpop.f32.mrb[0].mxu0
        %v4149 = vadd.f32 %v4036, %v4148
        %v4150 = vpop.f32.mrb[0].mxu0
        %v4151 = vadd.f32 %v4038, %v4150
        %v4152 = vpop.f32.mrb[0].mxu0
        %v4153 = vadd.f32 %v4040, %v4152
        %v4154 = vpop.f32.mrb[0].mxu0
        %v4155 = vadd.f32 %v4042, %v4154
        %4156 = vmatprep.mubr.bf16.mxu0 %v1512
        %4157 = vmatmul.mubr.bf16.gmra.mrb[0].mxu0 %v1511
        %v4158 = vpop.f32.mrb[0].mxu0
        %v4159 = vadd.f32 %v4046, %v4158
        %v4160 = vpop.f32.mrb[0].mxu0
        %v4161 = vadd.f32 %v4048, %v4160
        %v4162 = vpop.f32.mrb[0].mxu0
        %v4163 = vadd.f32 %v4050, %v4162
        %v4164 = vpop.f32.mrb[0].mxu0
        %v4165 = vadd.f32 %v4052, %v4164
        %4166 = vmatprep.mubr.bf16.mxu0 %v1518
        %4167 = vmatmul.mubr.bf16.gmra.mrb[0].mxu0 %v1517
        %v4168 = vpop.f32.mrb[0].mxu0
        %v4169 = vadd.f32 %v4056, %v4168
        %v4170 = vpop.f32.mrb[0].mxu0
        %v4171 = vadd.f32 %v4058, %v4170
        %v4172 = vpop.f32.mrb[0].mxu0
        %v4173 = vadd.f32 %v4060, %v4172
        %v4174 = vpop.f32.mrb[0].mxu0
        %v4175 = vadd.f32 %v4062, %v4174
        %4176 = vmatprep.mubr.bf16.mxu0 %v1524
        %4177 = vmatmul.mubr.bf16.gmra.mrb[0].mxu0 %v1523
        %v4178 = vpop.f32.mrb[0].mxu0
        %v4179 = vadd.f32 %v4066, %v4178
        %v4180 = vpop.f32.mrb[0].mxu0
        %v4181 = vadd.f32 %v4068, %v4180
        %v4182 = vpop.f32.mrb[0].mxu0
        %v4183 = vadd.f32 %v4070, %v4182
        %v4184 = vpop.f32.mrb[0].mxu0
        %v4185 = vadd.f32 %v4072, %v4184
        %4186 = vmatprep.mubr.bf16.mxu0 %v1530
        %4187 = vmatmul.mubr.bf16.gmra.mrb[0].mxu0 %v1529
        %v4188 = vpop.f32.mrb[0].mxu0
        %v4189 = vadd.f32 %v4076, %v4188
        %v4190 = vpop.f32.mrb[0].mxu0
        %v4191 = vadd.f32 %v4078, %v4190
        %v4192 = vpop.f32.mrb[0].mxu0
        %v4193 = vadd.f32 %v4080, %v4192
        %v4194 = vpop.f32.mrb[0].mxu0
        %v4195 = vadd.f32 %v4082, %v4194
        %4196 = vdwg.mxu0
        %4197 = vmatprep.subr.bf16.mxu0 %v2914
        %4198 = vmatpush1.bf16.msra.mxu0 %v2913
        %4199 = vmatprep.subr.bf16.mxu0 %v2920
        %4200 = vmatpush1.bf16.msra.mxu0 %v2919
        %4201 = vmatprep.subr.bf16.mxu0 %v2926
        %4202 = vmatpush1.bf16.msra.mxu0 %v2925
        %4203 = vmatprep.subr.bf16.mxu0 %v2932
        %4204 = vmatpush1.bf16.msra.mxu0 %v2931
        %4205 = vmatprep.subr.bf16.mxu0 %v2938
        %4206 = vmatpush1.bf16.msra.mxu0 %v2937
        %4207 = vmatprep.subr.bf16.mxu0 %v2944
        %4208 = vmatpush1.bf16.msra.mxu0 %v2943
        %4209 = vmatprep.subr.bf16.mxu0 %v2950
        %4210 = vmatpush1.bf16.msra.mxu0 %v2949
        %4211 = vmatprep.subr.bf16.mxu0 %v2956
        %4212 = vmatpush1.bf16.msra.mxu0 %v2955
        %4213 = vmatprep.subr.bf16.mxu0 %v2962
        %4214 = vmatpush1.bf16.msra.mxu0 %v2961
        %4215 = vmatprep.subr.bf16.mxu0 %v2968
        %4216 = vmatpush1.bf16.msra.mxu0 %v2967
        %4217 = vmatprep.subr.bf16.mxu0 %v2974
        %4218 = vmatpush1.bf16.msra.mxu0 %v2973
        %4219 = vmatprep.subr.bf16.mxu0 %v2980
        %4220 = vmatpush1.bf16.msra.mxu0 %v2979
        %4221 = vmatprep.subr.bf16.mxu0 %v2986
        %4222 = vmatpush1.bf16.msra.mxu0 %v2985
        %4223 = vmatprep.subr.bf16.mxu0 %v2992
        %4224 = vmatpush1.bf16.msra.mxu0 %v2991
        %4225 = vmatprep.subr.bf16.mxu0 %v2998
        %4226 = vmatpush1.bf16.msra.mxu0 %v2997
        %4227 = vmatprep.subr.bf16.mxu0 %v3004
        %4228 = vmatpush1.bf16.msra.mxu0 %v3003
        %4229 = vmatprep.mubr.bf16.mxu0 %v1490
        %4230 = vmatmul.mubr.bf16.gmra.mrb[0].mxu0 %v1489
        %v4231 = vpop.f32.mrb[0].mxu0
        %v4232 = vadd.f32 %v4119, %v4231
        %v4233 = vpop.f32.mrb[0].mxu0
        %v4234 = vadd.f32 %v4121, %v4233
        %v4235 = vpop.f32.mrb[0].mxu0
        %v4236 = vadd.f32 %v4123, %v4235
        %v4237 = vpop.f32.mrb[0].mxu0
        %v4238 = vadd.f32 %v4125, %v4237
        %4239 = vmatprep.mubr.bf16.mxu0 %v1496
        %4240 = vmatmul.mubr.bf16.gmra.mrb[0].mxu0 %v1495
        %v4241 = vpop.f32.mrb[0].mxu0
        %v4242 = vadd.f32 %v4129, %v4241
        %v4243 = vpop.f32.mrb[0].mxu0
        %v4244 = vadd.f32 %v4131, %v4243
        %v4245 = vpop.f32.mrb[0].mxu0
        %v4246 = vadd.f32 %v4133, %v4245
        %v4247 = vpop.f32.mrb[0].mxu0
        %v4248 = vadd.f32 %v4135, %v4247
        %4249 = vmatprep.mubr.bf16.mxu0 %v1502
        %4250 = vmatmul.mubr.bf16.gmra.mrb[0].mxu0 %v1501
        %v4251 = vpop.f32.mrb[0].mxu0
        %v4252 = vadd.f32 %v4139, %v4251
        %v4253 = vpop.f32.mrb[0].mxu0
        %v4254 = vadd.f32 %v4141, %v4253
        %v4255 = vpop.f32.mrb[0].mxu0
        %v4256 = vadd.f32 %v4143, %v4255
        %v4257 = vpop.f32.mrb[0].mxu0
        %v4258 = vadd.f32 %v4145, %v4257
        %4259 = vmatprep.mubr.bf16.mxu0 %v1508
        %4260 = vmatmul.mubr.bf16.gmra.mrb[0].mxu0 %v1507
        %v4261 = vpop.f32.mrb[0].mxu0
        %v4262 = vadd.f32 %v4149, %v4261
        %v4263 = vpop.f32.mrb[0].mxu0
        %v4264 = vadd.f32 %v4151, %v4263
        %v4265 = vpop.f32.mrb[0].mxu0
        %v4266 = vadd.f32 %v4153, %v4265
        %v4267 = vpop.f32.mrb[0].mxu0
        %v4268 = vadd.f32 %v4155, %v4267
        %4269 = vmatprep.mubr.bf16.mxu0 %v1514
        %4270 = vmatmul.mubr.bf16.gmra.mrb[0].mxu0 %v1513
        %v4271 = vpop.f32.mrb[0].mxu0
        %v4272 = vadd.f32 %v4159, %v4271
        %v4273 = vpop.f32.mrb[0].mxu0
        %v4274 = vadd.f32 %v4161, %v4273
        %v4275 = vpop.f32.mrb[0].mxu0
        %v4276 = vadd.f32 %v4163, %v4275
        %v4277 = vpop.f32.mrb[0].mxu0
        %v4278 = vadd.f32 %v4165, %v4277
        %4279 = vmatprep.mubr.bf16.mxu0 %v1520
        %4280 = vmatmul.mubr.bf16.gmra.mrb[0].mxu0 %v1519
        %v4281 = vpop.f32.mrb[0].mxu0
        %v4282 = vadd.f32 %v4169, %v4281
        %v4283 = vpop.f32.mrb[0].mxu0
        %v4284 = vadd.f32 %v4171, %v4283
        %v4285 = vpop.f32.mrb[0].mxu0
        %v4286 = vadd.f32 %v4173, %v4285
        %v4287 = vpop.f32.mrb[0].mxu0
        %v4288 = vadd.f32 %v4175, %v4287
        %4289 = vmatprep.mubr.bf16.mxu0 %v1526
        %4290 = vmatmul.mubr.bf16.gmra.mrb[0].mxu0 %v1525
        %v4291 = vpop.f32.mrb[0].mxu0
        %v4292 = vadd.f32 %v4179, %v4291
        %v4293 = vpop.f32.mrb[0].mxu0
        %v4294 = vadd.f32 %v4181, %v4293
        %v4295 = vpop.f32.mrb[0].mxu0
        %v4296 = vadd.f32 %v4183, %v4295
        %v4297 = vpop.f32.mrb[0].mxu0
        %v4298 = vadd.f32 %v4185, %v4297
        %4299 = vmatprep.mubr.bf16.mxu0 %v1532
        %4300 = vmatmul.mubr.bf16.gmra.mrb[0].mxu0 %v1531
        %v4301 = vpop.f32.mrb[0].mxu0
        %v4302 = vadd.f32 %v4189, %v4301
        %v4303 = vpop.f32.mrb[0].mxu0
        %v4304 = vadd.f32 %v4191, %v4303
        %v4305 = vpop.f32.mrb[0].mxu0
        %v4306 = vadd.f32 %v4193, %v4305
        %v4307 = vpop.f32.mrb[0].mxu0
        %v4308 = vadd.f32 %v4195, %v4307
        %4309 = vdwg.mxu0
        %v4310 = vmul.f32 %v3554, 0.125
        %v4311 = vmul.f32 %v3556, 0.125
        %v4312 = vmul.f32 %v3893, 0.125
        %v4313 = vmul.f32 %v3895, 0.125
        %v4314 = vmul.f32 %v4232, 0.125
        %v4315 = vmul.f32 %v4234, 0.125
        %v4316 = vmul.f32 %v3558, 0.125
        %v4317 = vmul.f32 %v3560, 0.125
        %v4318 = vmul.f32 %v3897, 0.125
        %v4319 = vmul.f32 %v3899, 0.125
        %v4320 = vmul.f32 %v4236, 0.125
        %v4321 = vmul.f32 %v4238, 0.125
        %v4322 = vmul.f32 %v3564, 0.125
        %v4323 = vmul.f32 %v3566, 0.125
        %v4324 = vmul.f32 %v3903, 0.125
        %v4325 = vmul.f32 %v3905, 0.125
        %v4326 = vmul.f32 %v4242, 0.125
        %v4327 = vmul.f32 %v4244, 0.125
        %v4328 = vmul.f32 %v3568, 0.125
        %v4329 = vmul.f32 %v3570, 0.125
        %v4330 = vmul.f32 %v3907, 0.125
        %v4331 = vmul.f32 %v3909, 0.125
        %v4332 = vmul.f32 %v4246, 0.125
        %v4333 = vmul.f32 %v4248, 0.125
        %v4334 = vmul.f32 %v3574, 0.125
        %v4335 = vmul.f32 %v3576, 0.125
        %v4336 = vmul.f32 %v3913, 0.125
        %v4337 = vmul.f32 %v3915, 0.125
        %v4338 = vmul.f32 %v4252, 0.125
        %v4339 = vmul.f32 %v4254, 0.125
        %v4340 = vmul.f32 %v3578, 0.125
        %v4341 = vmul.f32 %v3580, 0.125
        %v4342 = vmul.f32 %v3917, 0.125
        %v4343 = vmul.f32 %v3919, 0.125
        %v4344 = vmul.f32 %v4256, 0.125
        %v4345 = vmul.f32 %v4258, 0.125
        %v4346 = vmul.f32 %v3584, 0.125
        %v4347 = vmul.f32 %v3586, 0.125
        %v4348 = vmul.f32 %v3923, 0.125
        %v4349 = vmul.f32 %v3925, 0.125
        %v4350 = vmul.f32 %v4262, 0.125
        %v4351 = vmul.f32 %v4264, 0.125
        %v4352 = vmul.f32 %v3588, 0.125
        %v4353 = vmul.f32 %v3590, 0.125
        %v4354 = vmul.f32 %v3927, 0.125
        %v4355 = vmul.f32 %v3929, 0.125
        %v4356 = vmul.f32 %v4266, 0.125
        %v4357 = vmul.f32 %v4268, 0.125
        %v4358 = vmul.f32 %v3594, 0.125
        %v4359 = vmul.f32 %v3596, 0.125
        %v4360 = vmul.f32 %v3933, 0.125
        %v4361 = vmul.f32 %v3935, 0.125
        %v4362 = vmul.f32 %v4272, 0.125
        %v4363 = vmul.f32 %v4274, 0.125
        %v4364 = vmul.f32 %v3598, 0.125
        %v4365 = vmul.f32 %v3600, 0.125
        %v4366 = vmul.f32 %v3937, 0.125
        %v4367 = vmul.f32 %v3939, 0.125
        %v4368 = vmul.f32 %v4276, 0.125
        %v4369 = vmul.f32 %v4278, 0.125
        %v4370 = vmul.f32 %v3604, 0.125
        %v4371 = vmul.f32 %v3606, 0.125
        %v4372 = vmul.f32 %v3943, 0.125
        %v4373 = vmul.f32 %v3945, 0.125
        %v4374 = vmul.f32 %v4282, 0.125
        %v4375 = vmul.f32 %v4284, 0.125
        %v4376 = vmul.f32 %v3608, 0.125
        %v4377 = vmul.f32 %v3610, 0.125
        %v4378 = vmul.f32 %v3947, 0.125
        %v4379 = vmul.f32 %v3949, 0.125
        %v4380 = vmul.f32 %v4286, 0.125
        %v4381 = vmul.f32 %v4288, 0.125
        %v4382 = vmul.f32 %v3614, 0.125
        %v4383 = vmul.f32 %v3616, 0.125
        %v4384 = vmul.f32 %v3953, 0.125
        %v4385 = vmul.f32 %v3955, 0.125
        %v4386 = vmul.f32 %v4292, 0.125
        %v4387 = vmul.f32 %v4294, 0.125
        %v4388 = vmul.f32 %v3618, 0.125
        %v4389 = vmul.f32 %v3620, 0.125
        %v4390 = vmul.f32 %v3957, 0.125
        %v4391 = vmul.f32 %v3959, 0.125
        %v4392 = vmul.f32 %v4296, 0.125
        %v4393 = vmul.f32 %v4298, 0.125
        %v4394 = vmul.f32 %v3624, 0.125
        %v4395 = vmul.f32 %v3626, 0.125
        %v4396 = vmul.f32 %v3963, 0.125
        %v4397 = vmul.f32 %v3965, 0.125
        %v4398 = vmul.f32 %v4302, 0.125
        %v4399 = vmul.f32 %v4304, 0.125
        %v4400 = vmul.f32 %v3628, 0.125
        %v4401 = vmul.f32 %v3630, 0.125
        %v4402 = vmul.f32 %v3967, 0.125
        %v4403 = vmul.f32 %v3969, 0.125
        %v4404 = vmul.f32 %v4306, 0.125
        %v4405 = vmul.f32 %v4308, 0.125
        %v4406 = vpack.c.bf16 %v4316, %v4310
        %v4407 = vpack.c.bf16 %v4317, %v4311
        %v4408 = vpack.c.bf16 %v4318, %v4312
        %v4409 = vpack.c.bf16 %v4319, %v4313
        %v4410 = vpack.c.bf16 %v4320, %v4314
        %v4411 = vpack.c.bf16 %v4321, %v4315
        %v4412 = vpack.c.bf16 %v4328, %v4322
        %v4413 = vpack.c.bf16 %v4329, %v4323
        %v4414 = vpack.c.bf16 %v4330, %v4324
        %v4415 = vpack.c.bf16 %v4331, %v4325
        %v4416 = vpack.c.bf16 %v4332, %v4326
        %v4417 = vpack.c.bf16 %v4333, %v4327
        %v4418 = vpack.c.bf16 %v4340, %v4334
        %v4419 = vpack.c.bf16 %v4341, %v4335
        %v4420 = vpack.c.bf16 %v4342, %v4336
        %v4421 = vpack.c.bf16 %v4343, %v4337
        %v4422 = vpack.c.bf16 %v4344, %v4338
        %v4423 = vpack.c.bf16 %v4345, %v4339
        %v4424 = vpack.c.bf16 %v4352, %v4346
        %v4425 = vpack.c.bf16 %v4353, %v4347
        %v4426 = vpack.c.bf16 %v4354, %v4348
        %v4427 = vpack.c.bf16 %v4355, %v4349
        %v4428 = vpack.c.bf16 %v4356, %v4350
        %v4429 = vpack.c.bf16 %v4357, %v4351
        %v4430 = vpack.c.bf16 %v4364, %v4358
        %v4431 = vpack.c.bf16 %v4365, %v4359
        %v4432 = vpack.c.bf16 %v4366, %v4360
        %v4433 = vpack.c.bf16 %v4367, %v4361
        %v4434 = vpack.c.bf16 %v4368, %v4362
        %v4435 = vpack.c.bf16 %v4369, %v4363
        %v4436 = vpack.c.bf16 %v4376, %v4370
        %v4437 = vpack.c.bf16 %v4377, %v4371
        %v4438 = vpack.c.bf16 %v4378, %v4372
        %v4439 = vpack.c.bf16 %v4379, %v4373
        %v4440 = vpack.c.bf16 %v4380, %v4374
        %v4441 = vpack.c.bf16 %v4381, %v4375
        %v4442 = vpack.c.bf16 %v4388, %v4382
        %v4443 = vpack.c.bf16 %v4389, %v4383
        %v4444 = vpack.c.bf16 %v4390, %v4384
        %v4445 = vpack.c.bf16 %v4391, %v4385
        %v4446 = vpack.c.bf16 %v4392, %v4386
        %v4447 = vpack.c.bf16 %v4393, %v4387
        %v4448 = vpack.c.bf16 %v4400, %v4394
        %v4449 = vpack.c.bf16 %v4401, %v4395
        %v4450 = vpack.c.bf16 %v4402, %v4396
        %v4451 = vpack.c.bf16 %v4403, %v4397
        %v4452 = vpack.c.bf16 %v4404, %v4398
        %v4453 = vpack.c.bf16 %v4405, %v4399
        %v4502 = vunpack.c.l.b16 %v4406
        %v4503 = vunpack.c.l.b16 %v4407
        %v4504 = vunpack.c.l.b16 %v4408
        %v4505 = vunpack.c.l.b16 %v4409
        %v4506 = vunpack.c.l.b16 %v4410
        %v4507 = vunpack.c.l.b16 %v4411
        %v4508 = vunpack.c.h.b16 %v4406
        %v4509 = vunpack.c.h.b16 %v4407
        %v4510 = vunpack.c.h.b16 %v4408
        %v4511 = vunpack.c.h.b16 %v4409
        %v4512 = vunpack.c.h.b16 %v4410
        %v4513 = vunpack.c.h.b16 %v4411
        %v4514 = vunpack.c.l.b16 %v4412
        %v4515 = vunpack.c.l.b16 %v4413
        %v4516 = vunpack.c.l.b16 %v4414
        %v4517 = vunpack.c.l.b16 %v4415
        %v4518 = vunpack.c.l.b16 %v4416
        %v4519 = vunpack.c.l.b16 %v4417
        %v4520 = vunpack.c.h.b16 %v4412
        %v4521 = vunpack.c.h.b16 %v4413
        %v4522 = vunpack.c.h.b16 %v4414
        %v4523 = vunpack.c.h.b16 %v4415
        %v4524 = vunpack.c.h.b16 %v4416
        %v4525 = vunpack.c.h.b16 %v4417
        %v4526 = vunpack.c.l.b16 %v4418
        %v4527 = vunpack.c.l.b16 %v4419
        %v4528 = vunpack.c.l.b16 %v4420
        %v4529 = vunpack.c.l.b16 %v4421
        %v4530 = vunpack.c.l.b16 %v4422
        %v4531 = vunpack.c.l.b16 %v4423
        %v4532 = vunpack.c.h.b16 %v4418
        %v4533 = vunpack.c.h.b16 %v4419
        %v4534 = vunpack.c.h.b16 %v4420
        %v4535 = vunpack.c.h.b16 %v4421
        %v4536 = vunpack.c.h.b16 %v4422
        %v4537 = vunpack.c.h.b16 %v4423
        %v4538 = vunpack.c.l.b16 %v4424
        %v4539 = vunpack.c.l.b16 %v4425
        %v4540 = vunpack.c.l.b16 %v4426
        %v4541 = vunpack.c.l.b16 %v4427
        %v4542 = vunpack.c.l.b16 %v4428
        %v4543 = vunpack.c.l.b16 %v4429
        %v4544 = vunpack.c.h.b16 %v4424
        %v4545 = vunpack.c.h.b16 %v4425
        %v4546 = vunpack.c.h.b16 %v4426
        %v4547 = vunpack.c.h.b16 %v4427
        %v4548 = vunpack.c.h.b16 %v4428
        %v4549 = vunpack.c.h.b16 %v4429
        %v4550 = vunpack.c.l.b16 %v4430
        %v4551 = vunpack.c.l.b16 %v4431
        %v4552 = vunpack.c.l.b16 %v4432
        %v4553 = vunpack.c.l.b16 %v4433
        %v4554 = vunpack.c.l.b16 %v4434
        %v4555 = vunpack.c.l.b16 %v4435
        %v4556 = vunpack.c.h.b16 %v4430
        %v4557 = vunpack.c.h.b16 %v4431
        %v4558 = vunpack.c.h.b16 %v4432
        %v4559 = vunpack.c.h.b16 %v4433
        %v4560 = vunpack.c.h.b16 %v4434
        %v4561 = vunpack.c.h.b16 %v4435
        %v4562 = vunpack.c.l.b16 %v4436
        %v4563 = vunpack.c.l.b16 %v4437
        %v4564 = vunpack.c.l.b16 %v4438
        %v4565 = vunpack.c.l.b16 %v4439
        %v4566 = vunpack.c.l.b16 %v4440
        %v4567 = vunpack.c.l.b16 %v4441
        %v4568 = vunpack.c.h.b16 %v4436
        %v4569 = vunpack.c.h.b16 %v4437
        %v4570 = vunpack.c.h.b16 %v4438
        %v4571 = vunpack.c.h.b16 %v4439
        %v4572 = vunpack.c.h.b16 %v4440
        %v4573 = vunpack.c.h.b16 %v4441
        %v4574 = vunpack.c.l.b16 %v4442
        %v4575 = vunpack.c.l.b16 %v4443
        %v4576 = vunpack.c.l.b16 %v4444
        %v4577 = vunpack.c.l.b16 %v4445
        %v4578 = vunpack.c.l.b16 %v4446
        %v4579 = vunpack.c.l.b16 %v4447
        %v4580 = vunpack.c.h.b16 %v4442
        %v4581 = vunpack.c.h.b16 %v4443
        %v4582 = vunpack.c.h.b16 %v4444
        %v4583 = vunpack.c.h.b16 %v4445
        %v4584 = vunpack.c.h.b16 %v4446
        %v4585 = vunpack.c.h.b16 %v4447
        %v4586 = vunpack.c.l.b16 %v4448
        %v4587 = vunpack.c.l.b16 %v4449
        %v4588 = vunpack.c.l.b16 %v4450
        %v4589 = vunpack.c.l.b16 %v4451
        %v4590 = vunpack.c.l.b16 %v4452
        %v4591 = vunpack.c.l.b16 %v4453
        %v4592 = vunpack.c.h.b16 %v4448
        %v4593 = vunpack.c.h.b16 %v4449
        %v4594 = vunpack.c.h.b16 %v4450
        %v4595 = vunpack.c.h.b16 %v4451
        %v4596 = vunpack.c.h.b16 %v4452
        %v4597 = vunpack.c.h.b16 %v4453
        %v4598 = vpack.c.b16 %v4503, %v4502
        %v4599 = vpack.c.b16 %v4505, %v4504
        %v4600 = vpack.c.b16 %v4507, %v4506
        %v4601 = vpack.c.b16 %v4509, %v4508
        %v4602 = vpack.c.b16 %v4511, %v4510
        %v4603 = vpack.c.b16 %v4513, %v4512
        %v4604 = vpack.c.b16 %v4515, %v4514
        %v4605 = vpack.c.b16 %v4517, %v4516
        %v4606 = vpack.c.b16 %v4519, %v4518
        %v4607 = vpack.c.b16 %v4521, %v4520
        %v4608 = vpack.c.b16 %v4523, %v4522
        %v4609 = vpack.c.b16 %v4525, %v4524
        %v4610 = vpack.c.b16 %v4527, %v4526
        %v4611 = vpack.c.b16 %v4529, %v4528
        %v4612 = vpack.c.b16 %v4531, %v4530
        %v4613 = vpack.c.b16 %v4533, %v4532
        %v4614 = vpack.c.b16 %v4535, %v4534
        %v4615 = vpack.c.b16 %v4537, %v4536
        %v4616 = vpack.c.b16 %v4539, %v4538
        %v4617 = vpack.c.b16 %v4541, %v4540
        %v4618 = vpack.c.b16 %v4543, %v4542
        %v4619 = vpack.c.b16 %v4545, %v4544
        %v4620 = vpack.c.b16 %v4547, %v4546
        %v4621 = vpack.c.b16 %v4549, %v4548
        %v4622 = vpack.c.b16 %v4551, %v4550
        %v4623 = vpack.c.b16 %v4553, %v4552
        %v4624 = vpack.c.b16 %v4555, %v4554
        %v4625 = vpack.c.b16 %v4557, %v4556
        %v4626 = vpack.c.b16 %v4559, %v4558
        %v4627 = vpack.c.b16 %v4561, %v4560
        %v4628 = vpack.c.b16 %v4563, %v4562
        %v4629 = vpack.c.b16 %v4565, %v4564
        %v4630 = vpack.c.b16 %v4567, %v4566
        %v4631 = vpack.c.b16 %v4569, %v4568
        %v4632 = vpack.c.b16 %v4571, %v4570
        %v4633 = vpack.c.b16 %v4573, %v4572
        %v4634 = vpack.c.b16 %v4575, %v4574
        %v4635 = vpack.c.b16 %v4577, %v4576
        %v4636 = vpack.c.b16 %v4579, %v4578
        %v4637 = vpack.c.b16 %v4581, %v4580
        %v4638 = vpack.c.b16 %v4583, %v4582
        %v4639 = vpack.c.b16 %v4585, %v4584
        %v4640 = vpack.c.b16 %v4587, %v4586
        %v4641 = vpack.c.b16 %v4589, %v4588
        %v4642 = vpack.c.b16 %v4591, %v4590
        %v4643 = vpack.c.b16 %v4593, %v4592
        %v4644 = vpack.c.b16 %v4595, %v4594
        %v4645 = vpack.c.b16 %v4597, %v4596
        %4694 = vst [vmem:[%s537] sm:$0xff] %v4598
        %4695 = vst [vmem:[%s537 + $0x8] sm:$0xff] %v4599
        %4696 = vst [vmem:[%s537 + $0x10] sm:$0xff] %v4600
        %4697 = vst [vmem:[%s537 + $0x18] sm:$0xff] %v4601
        %4698 = vst [vmem:[%s537 + $0x20] sm:$0xff] %v4602
        %4699 = vst [vmem:[%s537 + $0x28] sm:$0xff] %v4603
        %4700 = vst [vmem:[%s537 + $0x30] sm:$0xff] %v4604
        %4701 = vst [vmem:[%s537 + $0x38] sm:$0xff] %v4605
        %4702 = vst [vmem:[%s537 + $0x40] sm:$0xff] %v4606
        %4703 = vst [vmem:[%s537 + $0x48] sm:$0xff] %v4607
        %4704 = vst [vmem:[%s537 + $0x50] sm:$0xff] %v4608
        %4705 = vst [vmem:[%s537 + $0x58] sm:$0xff] %v4609
        %4706 = vst [vmem:[%s537 + $0x60] sm:$0xff] %v4610
        %4707 = vst [vmem:[%s537 + $0x68] sm:$0xff] %v4611
        %4708 = vst [vmem:[%s537 + $0x70] sm:$0xff] %v4612
        %4709 = vst [vmem:[%s537 + $0x78] sm:$0xff] %v4613
        %4710 = vst [vmem:[%s537 + $0x80] sm:$0xff] %v4614
        %4711 = vst [vmem:[%s537 + $0x88] sm:$0xff] %v4615
        %4712 = vst [vmem:[%s537 + $0x90] sm:$0xff] %v4616
        %4713 = vst [vmem:[%s537 + $0x98] sm:$0xff] %v4617
        %4714 = vst [vmem:[%s537 + $0xa0] sm:$0xff] %v4618
        %4715 = vst [vmem:[%s537 + $0xa8] sm:$0xff] %v4619
        %4716 = vst [vmem:[%s537 + $0xb0] sm:$0xff] %v4620
        %4717 = vst [vmem:[%s537 + $0xb8] sm:$0xff] %v4621
        %4718 = vst [vmem:[%s537 + $0xc0] sm:$0xff] %v4622
        %4719 = vst [vmem:[%s537 + $0xc8] sm:$0xff] %v4623
        %4720 = vst [vmem:[%s537 + $0xd0] sm:$0xff] %v4624
        %4721 = vst [vmem:[%s537 + $0xd8] sm:$0xff] %v4625
        %4722 = vst [vmem:[%s537 + $0xe0] sm:$0xff] %v4626
        %4723 = vst [vmem:[%s537 + $0xe8] sm:$0xff] %v4627
        %4724 = vst [vmem:[%s537 + $0xf0] sm:$0xff] %v4628
        %4725 = vst [vmem:[%s537 + $0xf8] sm:$0xff] %v4629
        %4726 = vst [vmem:[%s537 + $0x100] sm:$0xff] %v4630
        %4727 = vst [vmem:[%s537 + $0x108] sm:$0xff] %v4631
        %4728 = vst [vmem:[%s537 + $0x110] sm:$0xff] %v4632
        %4729 = vst [vmem:[%s537 + $0x118] sm:$0xff] %v4633
        %4730 = vst [vmem:[%s537 + $0x120] sm:$0xff] %v4634
        %4731 = vst [vmem:[%s537 + $0x128] sm:$0xff] %v4635
        %4732 = vst [vmem:[%s537 + $0x130] sm:$0xff] %v4636
        %4733 = vst [vmem:[%s537 + $0x138] sm:$0xff] %v4637
        %4734 = vst [vmem:[%s537 + $0x140] sm:$0xff] %v4638
        %4735 = vst [vmem:[%s537 + $0x148] sm:$0xff] %v4639
        %4736 = vst [vmem:[%s537 + $0x150] sm:$0xff] %v4640
        %4737 = vst [vmem:[%s537 + $0x158] sm:$0xff] %v4641
        %4738 = vst [vmem:[%s537 + $0x160] sm:$0xff] %v4642
        %4739 = vst [vmem:[%s537 + $0x168] sm:$0xff] %v4643
        %4740 = vst [vmem:[%s537 + $0x170] sm:$0xff] %v4644
        %4741 = vst [vmem:[%s537 + $0x178] sm:$0xff] %v4645
        %v4742 = vld [vmem:[#allocation10] sm:$0xff]
        %v4743 = vld [vmem:[#allocation10 + $0x8] sm:$0xff]
        %v4744 = vld [vmem:[#allocation10 + $0x10] sm:$0xff]
        %v4745 = vld [vmem:[#allocation10 + $0x18] sm:$0xff]
        %v4746 = vld [vmem:[#allocation10 + $0x20] sm:$0xff]
        %v4747 = vld [vmem:[#allocation10 + $0x28] sm:$0xff]
        %v4748 = vld [vmem:[#allocation10 + $0x30] sm:$0xff]
        %v4749 = vld [vmem:[#allocation10 + $0x38] sm:$0xff]
        %v4750 = vld [vmem:[#allocation10 + $0x40] sm:$0xff]
        %v4751 = vld [vmem:[#allocation10 + $0x48] sm:$0xff]
        %v4752 = vld [vmem:[#allocation10 + $0x50] sm:$0xff]
        %v4753 = vld [vmem:[#allocation10 + $0x58] sm:$0xff]
        %v4754 = vld [vmem:[#allocation10 + $0x60] sm:$0xff]
        %v4755 = vld [vmem:[#allocation10 + $0x68] sm:$0xff]
        %v4756 = vld [vmem:[#allocation10 + $0x70] sm:$0xff]
        %v4757 = vld [vmem:[#allocation10 + $0x78] sm:$0xff]
        %v4758 = vld [vmem:[#allocation10 + $0x80] sm:$0xff]
        %v4759 = vld [vmem:[#allocation10 + $0x88] sm:$0xff]
        %v4760 = vld [vmem:[#allocation10 + $0x90] sm:$0xff]
        %v4761 = vld [vmem:[#allocation10 + $0x98] sm:$0xff]
        %v4762 = vld [vmem:[#allocation10 + $0xa0] sm:$0xff]
        %v4763 = vld [vmem:[#allocation10 + $0xa8] sm:$0xff]
        %v4764 = vld [vmem:[#allocation10 + $0xb0] sm:$0xff]
        %v4765 = vld [vmem:[#allocation10 + $0xb8] sm:$0xff]
        %v4766 = vld [vmem:[#allocation10 + $0xc0] sm:$0xff]
        %v4767 = vld [vmem:[#allocation10 + $0xc8] sm:$0xff]
        %v4768 = vld [vmem:[#allocation10 + $0xd0] sm:$0xff]
        %v4769 = vld [vmem:[#allocation10 + $0xd8] sm:$0xff]
        %v4770 = vld [vmem:[#allocation10 + $0xe0] sm:$0xff]
        %v4771 = vld [vmem:[#allocation10 + $0xe8] sm:$0xff]
        %v4772 = vld [vmem:[#allocation10 + $0xf0] sm:$0xff]
        %v4773 = vld [vmem:[#allocation10 + $0xf8] sm:$0xff]
        %v4774 = vld [vmem:[#allocation10 + $0x100] sm:$0xff]
        %v4775 = vld [vmem:[#allocation10 + $0x108] sm:$0xff]
        %v4776 = vld [vmem:[#allocation10 + $0x110] sm:$0xff]
        %v4777 = vld [vmem:[#allocation10 + $0x118] sm:$0xff]
        %v4778 = vld [vmem:[#allocation10 + $0x120] sm:$0xff]
        %v4779 = vld [vmem:[#allocation10 + $0x128] sm:$0xff]
        %v4780 = vld [vmem:[#allocation10 + $0x130] sm:$0xff]
        %v4781 = vld [vmem:[#allocation10 + $0x138] sm:$0xff]
        %v4782 = vld [vmem:[#allocation10 + $0x140] sm:$0xff]
        %v4783 = vld [vmem:[#allocation10 + $0x148] sm:$0xff]
        %v4784 = vld [vmem:[#allocation10 + $0x150] sm:$0xff]
        %v4785 = vld [vmem:[#allocation10 + $0x158] sm:$0xff]
        %v4786 = vld [vmem:[#allocation10 + $0x160] sm:$0xff]
        %v4787 = vld [vmem:[#allocation10 + $0x168] sm:$0xff]
        %v4788 = vld [vmem:[#allocation10 + $0x170] sm:$0xff]
        %v4789 = vld [vmem:[#allocation10 + $0x178] sm:$0xff]
        %v4790 = vld [vmem:[#allocation10 + $0x180] sm:$0xff]
        %v4791 = vld [vmem:[#allocation10 + $0x188] sm:$0xff]
        %v4792 = vld [vmem:[#allocation10 + $0x190] sm:$0xff]
        %v4793 = vld [vmem:[#allocation10 + $0x198] sm:$0xff]
        %v4794 = vld [vmem:[#allocation10 + $0x1a0] sm:$0xff]
        %v4795 = vld [vmem:[#allocation10 + $0x1a8] sm:$0xff]
        %v4796 = vld [vmem:[#allocation10 + $0x1b0] sm:$0xff]
        %v4797 = vld [vmem:[#allocation10 + $0x1b8] sm:$0xff]
        %v4798 = vld [vmem:[#allocation10 + $0x1c0] sm:$0xff]
        %v4799 = vld [vmem:[#allocation10 + $0x1c8] sm:$0xff]
        %v4800 = vld [vmem:[#allocation10 + $0x1d0] sm:$0xff]
        %v4801 = vld [vmem:[#allocation10 + $0x1d8] sm:$0xff]
        %v4802 = vld [vmem:[#allocation10 + $0x1e0] sm:$0xff]
        %v4803 = vld [vmem:[#allocation10 + $0x1e8] sm:$0xff]
        %v4804 = vld [vmem:[#allocation10 + $0x1f0] sm:$0xff]
        %v4805 = vld [vmem:[#allocation10 + $0x1f8] sm:$0xff]
        %v4806 = vld [vmem:[#allocation10 + $0x200] sm:$0xff]
        %v4807 = vld [vmem:[#allocation10 + $0x208] sm:$0xff]
        %v4808 = vld [vmem:[#allocation10 + $0x210] sm:$0xff]
        %v4809 = vld [vmem:[#allocation10 + $0x218] sm:$0xff]
        %v4810 = vld [vmem:[#allocation10 + $0x220] sm:$0xff]
        %v4811 = vld [vmem:[#allocation10 + $0x228] sm:$0xff]
        %v4812 = vld [vmem:[#allocation10 + $0x230] sm:$0xff]
        %v4813 = vld [vmem:[#allocation10 + $0x238] sm:$0xff]
        %v4814 = vld [vmem:[#allocation10 + $0x240] sm:$0xff]
        %v4815 = vld [vmem:[#allocation10 + $0x248] sm:$0xff]
        %v4816 = vld [vmem:[#allocation10 + $0x250] sm:$0xff]
        %v4817 = vld [vmem:[#allocation10 + $0x258] sm:$0xff]
        %v4818 = vld [vmem:[#allocation10 + $0x260] sm:$0xff]
        %v4819 = vld [vmem:[#allocation10 + $0x268] sm:$0xff]
        %v4820 = vld [vmem:[#allocation10 + $0x270] sm:$0xff]
        %v4821 = vld [vmem:[#allocation10 + $0x278] sm:$0xff]
        %v4822 = vld [vmem:[#allocation10 + $0x280] sm:$0xff]
        %v4823 = vld [vmem:[#allocation10 + $0x288] sm:$0xff]
        %v4824 = vld [vmem:[#allocation10 + $0x290] sm:$0xff]
        %v4825 = vld [vmem:[#allocation10 + $0x298] sm:$0xff]
        %v4826 = vld [vmem:[#allocation10 + $0x2a0] sm:$0xff]
        %v4827 = vld [vmem:[#allocation10 + $0x2a8] sm:$0xff]
        %v4828 = vld [vmem:[#allocation10 + $0x2b0] sm:$0xff]
        %v4829 = vld [vmem:[#allocation10 + $0x2b8] sm:$0xff]
        %v4830 = vld [vmem:[#allocation10 + $0x2c0] sm:$0xff]
        %v4831 = vld [vmem:[#allocation10 + $0x2c8] sm:$0xff]
        %v4832 = vld [vmem:[#allocation10 + $0x2d0] sm:$0xff]
        %v4833 = vld [vmem:[#allocation10 + $0x2d8] sm:$0xff]
        %v4834 = vld [vmem:[#allocation10 + $0x2e0] sm:$0xff]
        %v4835 = vld [vmem:[#allocation10 + $0x2e8] sm:$0xff]
        %v4836 = vld [vmem:[#allocation10 + $0x2f0] sm:$0xff]
        %v4837 = vld [vmem:[#allocation10 + $0x2f8] sm:$0xff]
        %v4838 = vld [vmem:[#allocation10 + $0x300] sm:$0xff]
        %v4839 = vld [vmem:[#allocation10 + $0x308] sm:$0xff]
        %v4840 = vld [vmem:[#allocation10 + $0x310] sm:$0xff]
        %v4841 = vld [vmem:[#allocation10 + $0x318] sm:$0xff]
        %v4842 = vld [vmem:[#allocation10 + $0x320] sm:$0xff]
        %v4843 = vld [vmem:[#allocation10 + $0x328] sm:$0xff]
        %v4844 = vld [vmem:[#allocation10 + $0x330] sm:$0xff]
        %v4845 = vld [vmem:[#allocation10 + $0x338] sm:$0xff]
        %v4846 = vld [vmem:[#allocation10 + $0x340] sm:$0xff]
        %v4847 = vld [vmem:[#allocation10 + $0x348] sm:$0xff]
        %v4848 = vld [vmem:[#allocation10 + $0x350] sm:$0xff]
        %v4849 = vld [vmem:[#allocation10 + $0x358] sm:$0xff]
        %v4850 = vld [vmem:[#allocation10 + $0x360] sm:$0xff]
        %v4851 = vld [vmem:[#allocation10 + $0x368] sm:$0xff]
        %v4852 = vld [vmem:[#allocation10 + $0x370] sm:$0xff]
        %v4853 = vld [vmem:[#allocation10 + $0x378] sm:$0xff]
        %v4854 = vld [vmem:[#allocation10 + $0x380] sm:$0xff]
        %v4855 = vld [vmem:[#allocation10 + $0x388] sm:$0xff]
        %v4856 = vld [vmem:[#allocation10 + $0x390] sm:$0xff]
        %v4857 = vld [vmem:[#allocation10 + $0x398] sm:$0xff]
        %v4858 = vld [vmem:[#allocation10 + $0x3a0] sm:$0xff]
        %v4859 = vld [vmem:[#allocation10 + $0x3a8] sm:$0xff]
        %v4860 = vld [vmem:[#allocation10 + $0x3b0] sm:$0xff]
        %v4861 = vld [vmem:[#allocation10 + $0x3b8] sm:$0xff]
        %v4862 = vld [vmem:[#allocation10 + $0x3c0] sm:$0xff]
        %v4863 = vld [vmem:[#allocation10 + $0x3c8] sm:$0xff]
        %v4864 = vld [vmem:[#allocation10 + $0x3d0] sm:$0xff]
        %v4865 = vld [vmem:[#allocation10 + $0x3d8] sm:$0xff]
        %v4866 = vld [vmem:[#allocation10 + $0x3e0] sm:$0xff]
        %v4867 = vld [vmem:[#allocation10 + $0x3e8] sm:$0xff]
        %v4868 = vld [vmem:[#allocation10 + $0x3f0] sm:$0xff]
        %v4869 = vld [vmem:[#allocation10 + $0x3f8] sm:$0xff]
        %v4870 = vld [vmem:[#allocation10 + $0x400] sm:$0xff]
        %v4871 = vld [vmem:[#allocation10 + $0x408] sm:$0xff]
        %v4872 = vld [vmem:[#allocation10 + $0x410] sm:$0xff]
        %v4873 = vld [vmem:[#allocation10 + $0x418] sm:$0xff]
        %v4874 = vld [vmem:[#allocation10 + $0x420] sm:$0xff]
        %v4875 = vld [vmem:[#allocation10 + $0x428] sm:$0xff]
        %v4876 = vld [vmem:[#allocation10 + $0x430] sm:$0xff]
        %v4877 = vld [vmem:[#allocation10 + $0x438] sm:$0xff]
        %v4878 = vld [vmem:[#allocation10 + $0x440] sm:$0xff]
        %v4879 = vld [vmem:[#allocation10 + $0x448] sm:$0xff]
        %v4880 = vld [vmem:[#allocation10 + $0x450] sm:$0xff]
        %v4881 = vld [vmem:[#allocation10 + $0x458] sm:$0xff]
        %v4882 = vld [vmem:[#allocation10 + $0x460] sm:$0xff]
        %v4883 = vld [vmem:[#allocation10 + $0x468] sm:$0xff]
        %v4884 = vld [vmem:[#allocation10 + $0x470] sm:$0xff]
        %v4885 = vld [vmem:[#allocation10 + $0x478] sm:$0xff]
        %v4886 = vld [vmem:[#allocation10 + $0x480] sm:$0xff]
        %v4887 = vld [vmem:[#allocation10 + $0x488] sm:$0xff]
        %v4888 = vld [vmem:[#allocation10 + $0x490] sm:$0xff]
        %v4889 = vld [vmem:[#allocation10 + $0x498] sm:$0xff]
        %v4890 = vld [vmem:[#allocation10 + $0x4a0] sm:$0xff]
        %v4891 = vld [vmem:[#allocation10 + $0x4a8] sm:$0xff]
        %v4892 = vld [vmem:[#allocation10 + $0x4b0] sm:$0xff]
        %v4893 = vld [vmem:[#allocation10 + $0x4b8] sm:$0xff]
        %v4894 = vld [vmem:[#allocation10 + $0x4c0] sm:$0xff]
        %v4895 = vld [vmem:[#allocation10 + $0x4c8] sm:$0xff]
        %v4896 = vld [vmem:[#allocation10 + $0x4d0] sm:$0xff]
        %v4897 = vld [vmem:[#allocation10 + $0x4d8] sm:$0xff]
        %v4898 = vld [vmem:[#allocation10 + $0x4e0] sm:$0xff]
        %v4899 = vld [vmem:[#allocation10 + $0x4e8] sm:$0xff]
        %v4900 = vld [vmem:[#allocation10 + $0x4f0] sm:$0xff]
        %v4901 = vld [vmem:[#allocation10 + $0x4f8] sm:$0xff]
        %v4902 = vld [vmem:[#allocation10 + $0x500] sm:$0xff]
        %v4903 = vld [vmem:[#allocation10 + $0x508] sm:$0xff]
        %v4904 = vld [vmem:[#allocation10 + $0x510] sm:$0xff]
        %v4905 = vld [vmem:[#allocation10 + $0x518] sm:$0xff]
        %v4906 = vld [vmem:[#allocation10 + $0x520] sm:$0xff]
        %v4907 = vld [vmem:[#allocation10 + $0x528] sm:$0xff]
        %v4908 = vld [vmem:[#allocation10 + $0x530] sm:$0xff]
        %v4909 = vld [vmem:[#allocation10 + $0x538] sm:$0xff]
        %v4910 = vld [vmem:[#allocation10 + $0x540] sm:$0xff]
        %v4911 = vld [vmem:[#allocation10 + $0x548] sm:$0xff]
        %v4912 = vld [vmem:[#allocation10 + $0x550] sm:$0xff]
        %v4913 = vld [vmem:[#allocation10 + $0x558] sm:$0xff]
        %v4914 = vld [vmem:[#allocation10 + $0x560] sm:$0xff]
        %v4915 = vld [vmem:[#allocation10 + $0x568] sm:$0xff]
        %v4916 = vld [vmem:[#allocation10 + $0x570] sm:$0xff]
        %v4917 = vld [vmem:[#allocation10 + $0x578] sm:$0xff]
        %v4918 = vld [vmem:[#allocation10 + $0x580] sm:$0xff]
        %v4919 = vld [vmem:[#allocation10 + $0x588] sm:$0xff]
        %v4920 = vld [vmem:[#allocation10 + $0x590] sm:$0xff]
        %v4921 = vld [vmem:[#allocation10 + $0x598] sm:$0xff]
        %v4922 = vld [vmem:[#allocation10 + $0x5a0] sm:$0xff]
        %v4923 = vld [vmem:[#allocation10 + $0x5a8] sm:$0xff]
        %v4924 = vld [vmem:[#allocation10 + $0x5b0] sm:$0xff]
        %v4925 = vld [vmem:[#allocation10 + $0x5b8] sm:$0xff]
        %v4926 = vld [vmem:[#allocation10 + $0x5c0] sm:$0xff]
        %v4927 = vld [vmem:[#allocation10 + $0x5c8] sm:$0xff]
        %v4928 = vld [vmem:[#allocation10 + $0x5d0] sm:$0xff]
        %v4929 = vld [vmem:[#allocation10 + $0x5d8] sm:$0xff]
        %v4930 = vld [vmem:[#allocation10 + $0x5e0] sm:$0xff]
        %v4931 = vld [vmem:[#allocation10 + $0x5e8] sm:$0xff]
        %v4932 = vld [vmem:[#allocation10 + $0x5f0] sm:$0xff]
        %v4933 = vld [vmem:[#allocation10 + $0x5f8] sm:$0xff]
        %v4934 = vld [vmem:[#allocation10 + $0x600] sm:$0xff]
        %v4935 = vld [vmem:[#allocation10 + $0x608] sm:$0xff]
        %v4936 = vld [vmem:[#allocation10 + $0x610] sm:$0xff]
        %v4937 = vld [vmem:[#allocation10 + $0x618] sm:$0xff]
        %v4938 = vld [vmem:[#allocation10 + $0x620] sm:$0xff]
        %v4939 = vld [vmem:[#allocation10 + $0x628] sm:$0xff]
        %v4940 = vld [vmem:[#allocation10 + $0x630] sm:$0xff]
        %v4941 = vld [vmem:[#allocation10 + $0x638] sm:$0xff]
        %v4942 = vld [vmem:[#allocation10 + $0x640] sm:$0xff]
        %v4943 = vld [vmem:[#allocation10 + $0x648] sm:$0xff]
        %v4944 = vld [vmem:[#allocation10 + $0x650] sm:$0xff]
        %v4945 = vld [vmem:[#allocation10 + $0x658] sm:$0xff]
        %v4946 = vld [vmem:[#allocation10 + $0x660] sm:$0xff]
        %v4947 = vld [vmem:[#allocation10 + $0x668] sm:$0xff]
        %v4948 = vld [vmem:[#allocation10 + $0x670] sm:$0xff]
        %v4949 = vld [vmem:[#allocation10 + $0x678] sm:$0xff]
        %v4950 = vld [vmem:[#allocation10 + $0x680] sm:$0xff]
        %v4951 = vld [vmem:[#allocation10 + $0x688] sm:$0xff]
        %v4952 = vld [vmem:[#allocation10 + $0x690] sm:$0xff]
        %v4953 = vld [vmem:[#allocation10 + $0x698] sm:$0xff]
        %v4954 = vld [vmem:[#allocation10 + $0x6a0] sm:$0xff]
        %v4955 = vld [vmem:[#allocation10 + $0x6a8] sm:$0xff]
        %v4956 = vld [vmem:[#allocation10 + $0x6b0] sm:$0xff]
        %v4957 = vld [vmem:[#allocation10 + $0x6b8] sm:$0xff]
        %v4958 = vld [vmem:[#allocation10 + $0x6c0] sm:$0xff]
        %v4959 = vld [vmem:[#allocation10 + $0x6c8] sm:$0xff]
        %v4960 = vld [vmem:[#allocation10 + $0x6d0] sm:$0xff]
        %v4961 = vld [vmem:[#allocation10 + $0x6d8] sm:$0xff]
        %v4962 = vld [vmem:[#allocation10 + $0x6e0] sm:$0xff]
        %v4963 = vld [vmem:[#allocation10 + $0x6e8] sm:$0xff]
        %v4964 = vld [vmem:[#allocation10 + $0x6f0] sm:$0xff]
        %v4965 = vld [vmem:[#allocation10 + $0x6f8] sm:$0xff]
        %v4966 = vld [vmem:[#allocation10 + $0x700] sm:$0xff]
        %v4967 = vld [vmem:[#allocation10 + $0x708] sm:$0xff]
        %v4968 = vld [vmem:[#allocation10 + $0x710] sm:$0xff]
        %v4969 = vld [vmem:[#allocation10 + $0x718] sm:$0xff]
        %v4970 = vld [vmem:[#allocation10 + $0x720] sm:$0xff]
        %v4971 = vld [vmem:[#allocation10 + $0x728] sm:$0xff]
        %v4972 = vld [vmem:[#allocation10 + $0x730] sm:$0xff]
        %v4973 = vld [vmem:[#allocation10 + $0x738] sm:$0xff]
        %v4974 = vld [vmem:[#allocation10 + $0x740] sm:$0xff]
        %v4975 = vld [vmem:[#allocation10 + $0x748] sm:$0xff]
        %v4976 = vld [vmem:[#allocation10 + $0x750] sm:$0xff]
        %v4977 = vld [vmem:[#allocation10 + $0x758] sm:$0xff]
        %v4978 = vld [vmem:[#allocation10 + $0x760] sm:$0xff]
        %v4979 = vld [vmem:[#allocation10 + $0x768] sm:$0xff]
        %v4980 = vld [vmem:[#allocation10 + $0x770] sm:$0xff]
        %v4981 = vld [vmem:[#allocation10 + $0x778] sm:$0xff]
        %v4982 = vld [vmem:[#allocation10 + $0x780] sm:$0xff]
        %v4983 = vld [vmem:[#allocation10 + $0x788] sm:$0xff]
        %v4984 = vld [vmem:[#allocation10 + $0x790] sm:$0xff]
        %v4985 = vld [vmem:[#allocation10 + $0x798] sm:$0xff]
        %v4986 = vld [vmem:[#allocation10 + $0x7a0] sm:$0xff]
        %v4987 = vld [vmem:[#allocation10 + $0x7a8] sm:$0xff]
        %v4988 = vld [vmem:[#allocation10 + $0x7b0] sm:$0xff]
        %v4989 = vld [vmem:[#allocation10 + $0x7b8] sm:$0xff]
        %v4990 = vld [vmem:[#allocation10 + $0x7c0] sm:$0xff]
        %v4991 = vld [vmem:[#allocation10 + $0x7c8] sm:$0xff]
        %v4992 = vld [vmem:[#allocation10 + $0x7d0] sm:$0xff]
        %v4993 = vld [vmem:[#allocation10 + $0x7d8] sm:$0xff]
        %v4994 = vld [vmem:[#allocation10 + $0x7e0] sm:$0xff]
        %v4995 = vld [vmem:[#allocation10 + $0x7e8] sm:$0xff]
        %v4996 = vld [vmem:[#allocation10 + $0x7f0] sm:$0xff]
        %v4997 = vld [vmem:[#allocation10 + $0x7f8] sm:$0xff]
        %v4998 = vld [vmem:[#allocation10 + $0x800] sm:$0xff]
        %v4999 = vld [vmem:[#allocation10 + $0x808] sm:$0xff]
        %v5000 = vld [vmem:[#allocation10 + $0x810] sm:$0xff]
        %v5001 = vld [vmem:[#allocation10 + $0x818] sm:$0xff]
        %v5002 = vld [vmem:[#allocation10 + $0x820] sm:$0xff]
        %v5003 = vld [vmem:[#allocation10 + $0x828] sm:$0xff]
        %v5004 = vld [vmem:[#allocation10 + $0x830] sm:$0xff]
        %v5005 = vld [vmem:[#allocation10 + $0x838] sm:$0xff]
        %v5006 = vld [vmem:[#allocation10 + $0x840] sm:$0xff]
        %v5007 = vld [vmem:[#allocation10 + $0x848] sm:$0xff]
        %v5008 = vld [vmem:[#allocation10 + $0x850] sm:$0xff]
        %v5009 = vld [vmem:[#allocation10 + $0x858] sm:$0xff]
        %v5010 = vld [vmem:[#allocation10 + $0x860] sm:$0xff]
        %v5011 = vld [vmem:[#allocation10 + $0x868] sm:$0xff]
        %v5012 = vld [vmem:[#allocation10 + $0x870] sm:$0xff]
        %v5013 = vld [vmem:[#allocation10 + $0x878] sm:$0xff]
        %v5014 = vld [vmem:[#allocation10 + $0x880] sm:$0xff]
        %v5015 = vld [vmem:[#allocation10 + $0x888] sm:$0xff]
        %v5016 = vld [vmem:[#allocation10 + $0x890] sm:$0xff]
        %v5017 = vld [vmem:[#allocation10 + $0x898] sm:$0xff]
        %v5018 = vld [vmem:[#allocation10 + $0x8a0] sm:$0xff]
        %v5019 = vld [vmem:[#allocation10 + $0x8a8] sm:$0xff]
        %v5020 = vld [vmem:[#allocation10 + $0x8b0] sm:$0xff]
        %v5021 = vld [vmem:[#allocation10 + $0x8b8] sm:$0xff]
        %v5022 = vld [vmem:[#allocation10 + $0x8c0] sm:$0xff]
        %v5023 = vld [vmem:[#allocation10 + $0x8c8] sm:$0xff]
        %v5024 = vld [vmem:[#allocation10 + $0x8d0] sm:$0xff]
        %v5025 = vld [vmem:[#allocation10 + $0x8d8] sm:$0xff]
        %v5026 = vld [vmem:[#allocation10 + $0x8e0] sm:$0xff]
        %v5027 = vld [vmem:[#allocation10 + $0x8e8] sm:$0xff]
        %v5028 = vld [vmem:[#allocation10 + $0x8f0] sm:$0xff]
        %v5029 = vld [vmem:[#allocation10 + $0x8f8] sm:$0xff]
        %v5030 = vld [vmem:[#allocation14] sm:$0x3f]
        %v5032 = vlaneseq
        %v5033 = vshrl.u32 %v5032, 7
        %v5034 = vsub.s32 0, %v5033
        %v5035 = vrot.slane %v5030, %v5034
        %v5036 = vlaneseq
        %v5037 = vshrl.u32 %v5036, 7
        %v5038 = vsub.s32 1, %v5037
        %v5039 = vrot.slane %v5030, %v5038
        %v5040 = vlaneseq
        %v5041 = vshrl.u32 %v5040, 7
        %v5042 = vsub.s32 2, %v5041
        %v5043 = vrot.slane %v5030, %v5042
        %v5044 = vlaneseq
        %v5045 = vshrl.u32 %v5044, 7
        %v5046 = vsub.s32 3, %v5045
        %v5047 = vrot.slane %v5030, %v5046
        %v5048 = vlaneseq
        %v5049 = vshrl.u32 %v5048, 7
        %v5050 = vsub.s32 4, %v5049
        %v5051 = vrot.slane %v5030, %v5050
        %v5052 = vlaneseq
        %v5053 = vshrl.u32 %v5052, 7
        %v5054 = vsub.s32 5, %v5053
        %v5055 = vrot.slane %v5030, %v5054
        %v5350 = vunpack.c.l.b16 %v4742
        %v5351 = vunpack.c.h.b16 %v4742
        %v5352 = vunpack.c.l.b16 %v4743
        %v5353 = vunpack.c.h.b16 %v4743
        %v5354 = vunpack.c.l.b16 %v4744
        %v5355 = vunpack.c.h.b16 %v4744
        %v5356 = vunpack.c.l.b16 %v4745
        %v5357 = vunpack.c.h.b16 %v4745
        %v5358 = vunpack.c.l.b16 %v4746
        %v5359 = vunpack.c.h.b16 %v4746
        %v5360 = vunpack.c.l.b16 %v4747
        %v5361 = vunpack.c.h.b16 %v4747
        %v5362 = vunpack.c.l.b16 %v4748
        %v5363 = vunpack.c.h.b16 %v4748
        %v5364 = vunpack.c.l.b16 %v4749
        %v5365 = vunpack.c.h.b16 %v4749
        %v5366 = vunpack.c.l.b16 %v4750
        %v5367 = vunpack.c.h.b16 %v4750
        %v5368 = vunpack.c.l.b16 %v4751
        %v5369 = vunpack.c.h.b16 %v4751
        %v5370 = vunpack.c.l.b16 %v4752
        %v5371 = vunpack.c.h.b16 %v4752
        %v5372 = vunpack.c.l.b16 %v4753
        %v5373 = vunpack.c.h.b16 %v4753
        %v5374 = vunpack.c.l.b16 %v4754
        %v5375 = vunpack.c.h.b16 %v4754
        %v5376 = vunpack.c.l.b16 %v4755
        %v5377 = vunpack.c.h.b16 %v4755
        %v5378 = vunpack.c.l.b16 %v4756
        %v5379 = vunpack.c.h.b16 %v4756
        %v5380 = vunpack.c.l.b16 %v4757
        %v5381 = vunpack.c.h.b16 %v4757
        %v5382 = vunpack.c.l.b16 %v4758
        %v5383 = vunpack.c.h.b16 %v4758
        %v5384 = vunpack.c.l.b16 %v4759
        %v5385 = vunpack.c.h.b16 %v4759
        %v5386 = vunpack.c.l.b16 %v4760
        %v5387 = vunpack.c.h.b16 %v4760
        %v5388 = vunpack.c.l.b16 %v4761
        %v5389 = vunpack.c.h.b16 %v4761
        %v5390 = vunpack.c.l.b16 %v4762
        %v5391 = vunpack.c.h.b16 %v4762
        %v5392 = vunpack.c.l.b16 %v4763
        %v5393 = vunpack.c.h.b16 %v4763
        %v5394 = vunpack.c.l.b16 %v4764
        %v5395 = vunpack.c.h.b16 %v4764
        %v5396 = vunpack.c.l.b16 %v4765
        %v5397 = vunpack.c.h.b16 %v4765
        %v5398 = vunpack.c.l.b16 %v4766
        %v5399 = vunpack.c.h.b16 %v4766
        %v5400 = vunpack.c.l.b16 %v4767
        %v5401 = vunpack.c.h.b16 %v4767
        %v5402 = vunpack.c.l.b16 %v4768
        %v5403 = vunpack.c.h.b16 %v4768
        %v5404 = vunpack.c.l.b16 %v4769
        %v5405 = vunpack.c.h.b16 %v4769
        %v5406 = vunpack.c.l.b16 %v4770
        %v5407 = vunpack.c.h.b16 %v4770
        %v5408 = vunpack.c.l.b16 %v4771
        %v5409 = vunpack.c.h.b16 %v4771
        %v5410 = vunpack.c.l.b16 %v4772
        %v5411 = vunpack.c.h.b16 %v4772
        %v5412 = vunpack.c.l.b16 %v4773
        %v5413 = vunpack.c.h.b16 %v4773
        %v5414 = vunpack.c.l.b16 %v4774
        %v5415 = vunpack.c.h.b16 %v4774
        %v5416 = vunpack.c.l.b16 %v4775
        %v5417 = vunpack.c.h.b16 %v4775
        %v5418 = vunpack.c.l.b16 %v4776
        %v5419 = vunpack.c.h.b16 %v4776
        %v5420 = vunpack.c.l.b16 %v4777
        %v5421 = vunpack.c.h.b16 %v4777
        %v5422 = vunpack.c.l.b16 %v4778
        %v5423 = vunpack.c.h.b16 %v4778
        %v5424 = vunpack.c.l.b16 %v4779
        %v5425 = vunpack.c.h.b16 %v4779
        %v5426 = vunpack.c.l.b16 %v4780
        %v5427 = vunpack.c.h.b16 %v4780
        %v5428 = vunpack.c.l.b16 %v4781
        %v5429 = vunpack.c.h.b16 %v4781
        %v5430 = vunpack.c.l.b16 %v4782
        %v5431 = vunpack.c.h.b16 %v4782
        %v5432 = vunpack.c.l.b16 %v4783
        %v5433 = vunpack.c.h.b16 %v4783
        %v5434 = vunpack.c.l.b16 %v4784
        %v5435 = vunpack.c.h.b16 %v4784
        %v5436 = vunpack.c.l.b16 %v4785
        %v5437 = vunpack.c.h.b16 %v4785
        %v5438 = vunpack.c.l.b16 %v4786
        %v5439 = vunpack.c.h.b16 %v4786
        %v5440 = vunpack.c.l.b16 %v4787
        %v5441 = vunpack.c.h.b16 %v4787
        %v5442 = vunpack.c.l.b16 %v4788
        %v5443 = vunpack.c.h.b16 %v4788
        %v5444 = vunpack.c.l.b16 %v4789
        %v5445 = vunpack.c.h.b16 %v4789
        %v5446 = vunpack.c.l.b16 %v4790
        %v5447 = vunpack.c.h.b16 %v4790
        %v5448 = vunpack.c.l.b16 %v4791
        %v5449 = vunpack.c.h.b16 %v4791
        %v5450 = vunpack.c.l.b16 %v4792
        %v5451 = vunpack.c.h.b16 %v4792
        %v5452 = vunpack.c.l.b16 %v4793
        %v5453 = vunpack.c.h.b16 %v4793
        %v5454 = vunpack.c.l.b16 %v4794
        %v5455 = vunpack.c.h.b16 %v4794
        %v5456 = vunpack.c.l.b16 %v4795
        %v5457 = vunpack.c.h.b16 %v4795
        %v5458 = vunpack.c.l.b16 %v4796
        %v5459 = vunpack.c.h.b16 %v4796
        %v5460 = vunpack.c.l.b16 %v4797
        %v5461 = vunpack.c.h.b16 %v4797
        %v5462 = vunpack.c.l.b16 %v4798
        %v5463 = vunpack.c.h.b16 %v4798
        %v5464 = vunpack.c.l.b16 %v4799
        %v5465 = vunpack.c.h.b16 %v4799
        %v5466 = vunpack.c.l.b16 %v4800
        %v5467 = vunpack.c.h.b16 %v4800
        %v5468 = vunpack.c.l.b16 %v4801
        %v5469 = vunpack.c.h.b16 %v4801
        %v5470 = vunpack.c.l.b16 %v4802
        %v5471 = vunpack.c.h.b16 %v4802
        %v5472 = vunpack.c.l.b16 %v4803
        %v5473 = vunpack.c.h.b16 %v4803
        %v5474 = vunpack.c.l.b16 %v4804
        %v5475 = vunpack.c.h.b16 %v4804
        %v5476 = vunpack.c.l.b16 %v4805
        %v5477 = vunpack.c.h.b16 %v4805
        %v5478 = vunpack.c.l.b16 %v4806
        %v5479 = vunpack.c.h.b16 %v4806
        %v5480 = vunpack.c.l.b16 %v4807
        %v5481 = vunpack.c.h.b16 %v4807
        %v5482 = vunpack.c.l.b16 %v4808
        %v5483 = vunpack.c.h.b16 %v4808
        %v5484 = vunpack.c.l.b16 %v4809
        %v5485 = vunpack.c.h.b16 %v4809
        %v5486 = vunpack.c.l.b16 %v4810
        %v5487 = vunpack.c.h.b16 %v4810
        %v5488 = vunpack.c.l.b16 %v4811
        %v5489 = vunpack.c.h.b16 %v4811
        %v5490 = vunpack.c.l.b16 %v4812
        %v5491 = vunpack.c.h.b16 %v4812
        %v5492 = vunpack.c.l.b16 %v4813
        %v5493 = vunpack.c.h.b16 %v4813
        %v5494 = vunpack.c.l.b16 %v4814
        %v5495 = vunpack.c.h.b16 %v4814
        %v5496 = vunpack.c.l.b16 %v4815
        %v5497 = vunpack.c.h.b16 %v4815
        %v5498 = vunpack.c.l.b16 %v4816
        %v5499 = vunpack.c.h.b16 %v4816
        %v5500 = vunpack.c.l.b16 %v4817
        %v5501 = vunpack.c.h.b16 %v4817
        %v5502 = vunpack.c.l.b16 %v4818
        %v5503 = vunpack.c.h.b16 %v4818
        %v5504 = vunpack.c.l.b16 %v4819
        %v5505 = vunpack.c.h.b16 %v4819
        %v5506 = vunpack.c.l.b16 %v4820
        %v5507 = vunpack.c.h.b16 %v4820
        %v5508 = vunpack.c.l.b16 %v4821
        %v5509 = vunpack.c.h.b16 %v4821
        %v5510 = vunpack.c.l.b16 %v4822
        %v5511 = vunpack.c.h.b16 %v4822
        %v5512 = vunpack.c.l.b16 %v4823
        %v5513 = vunpack.c.h.b16 %v4823
        %v5514 = vunpack.c.l.b16 %v4824
        %v5515 = vunpack.c.h.b16 %v4824
        %v5516 = vunpack.c.l.b16 %v4825
        %v5517 = vunpack.c.h.b16 %v4825
        %v5518 = vunpack.c.l.b16 %v4826
        %v5519 = vunpack.c.h.b16 %v4826
        %v5520 = vunpack.c.l.b16 %v4827
        %v5521 = vunpack.c.h.b16 %v4827
        %v5522 = vunpack.c.l.b16 %v4828
        %v5523 = vunpack.c.h.b16 %v4828
        %v5524 = vunpack.c.l.b16 %v4829
        %v5525 = vunpack.c.h.b16 %v4829
        %v5526 = vunpack.c.l.b16 %v4830
        %v5527 = vunpack.c.h.b16 %v4830
        %v5528 = vunpack.c.l.b16 %v4831
        %v5529 = vunpack.c.h.b16 %v4831
        %v5530 = vunpack.c.l.b16 %v4832
        %v5531 = vunpack.c.h.b16 %v4832
        %v5532 = vunpack.c.l.b16 %v4833
        %v5533 = vunpack.c.h.b16 %v4833
        %v5534 = vunpack.c.l.b16 %v4834
        %v5535 = vunpack.c.h.b16 %v4834
        %v5536 = vunpack.c.l.b16 %v4835
        %v5537 = vunpack.c.h.b16 %v4835
        %v5538 = vunpack.c.l.b16 %v4836
        %v5539 = vunpack.c.h.b16 %v4836
        %v5540 = vunpack.c.l.b16 %v4837
        %v5541 = vunpack.c.h.b16 %v4837
        %v5542 = vunpack.c.l.b16 %v4838
        %v5543 = vunpack.c.h.b16 %v4838
        %v5544 = vunpack.c.l.b16 %v4839
        %v5545 = vunpack.c.h.b16 %v4839
        %v5546 = vunpack.c.l.b16 %v4840
        %v5547 = vunpack.c.h.b16 %v4840
        %v5548 = vunpack.c.l.b16 %v4841
        %v5549 = vunpack.c.h.b16 %v4841
        %v5550 = vunpack.c.l.b16 %v4842
        %v5551 = vunpack.c.h.b16 %v4842
        %v5552 = vunpack.c.l.b16 %v4843
        %v5553 = vunpack.c.h.b16 %v4843
        %v5554 = vunpack.c.l.b16 %v4844
        %v5555 = vunpack.c.h.b16 %v4844
        %v5556 = vunpack.c.l.b16 %v4845
        %v5557 = vunpack.c.h.b16 %v4845
        %v5558 = vunpack.c.l.b16 %v4846
        %v5559 = vunpack.c.h.b16 %v4846
        %v5560 = vunpack.c.l.b16 %v4847
        %v5561 = vunpack.c.h.b16 %v4847
        %v5562 = vunpack.c.l.b16 %v4848
        %v5563 = vunpack.c.h.b16 %v4848
        %v5564 = vunpack.c.l.b16 %v4849
        %v5565 = vunpack.c.h.b16 %v4849
        %v5566 = vunpack.c.l.b16 %v4850
        %v5567 = vunpack.c.h.b16 %v4850
        %v5568 = vunpack.c.l.b16 %v4851
        %v5569 = vunpack.c.h.b16 %v4851
        %v5570 = vunpack.c.l.b16 %v4852
        %v5571 = vunpack.c.h.b16 %v4852
        %v5572 = vunpack.c.l.b16 %v4853
        %v5573 = vunpack.c.h.b16 %v4853
        %v5574 = vunpack.c.l.b16 %v4854
        %v5575 = vunpack.c.h.b16 %v4854
        %v5576 = vunpack.c.l.b16 %v4855
        %v5577 = vunpack.c.h.b16 %v4855
        %v5578 = vunpack.c.l.b16 %v4856
        %v5579 = vunpack.c.h.b16 %v4856
        %v5580 = vunpack.c.l.b16 %v4857
        %v5581 = vunpack.c.h.b16 %v4857
        %v5582 = vunpack.c.l.b16 %v4858
        %v5583 = vunpack.c.h.b16 %v4858
        %v5584 = vunpack.c.l.b16 %v4859
        %v5585 = vunpack.c.h.b16 %v4859
        %v5586 = vunpack.c.l.b16 %v4860
        %v5587 = vunpack.c.h.b16 %v4860
        %v5588 = vunpack.c.l.b16 %v4861
        %v5589 = vunpack.c.h.b16 %v4861
        %v5590 = vunpack.c.l.b16 %v4862
        %v5591 = vunpack.c.h.b16 %v4862
        %v5592 = vunpack.c.l.b16 %v4863
        %v5593 = vunpack.c.h.b16 %v4863
        %v5594 = vunpack.c.l.b16 %v4864
        %v5595 = vunpack.c.h.b16 %v4864
        %v5596 = vunpack.c.l.b16 %v4865
        %v5597 = vunpack.c.h.b16 %v4865
        %v5598 = vunpack.c.l.b16 %v4866
        %v5599 = vunpack.c.h.b16 %v4866
        %v5600 = vunpack.c.l.b16 %v4867
        %v5601 = vunpack.c.h.b16 %v4867
        %v5602 = vunpack.c.l.b16 %v4868
        %v5603 = vunpack.c.h.b16 %v4868
        %v5604 = vunpack.c.l.b16 %v4869
        %v5605 = vunpack.c.h.b16 %v4869
        %v5606 = vunpack.c.l.b16 %v4870
        %v5607 = vunpack.c.h.b16 %v4870
        %v5608 = vunpack.c.l.b16 %v4871
        %v5609 = vunpack.c.h.b16 %v4871
        %v5610 = vunpack.c.l.b16 %v4872
        %v5611 = vunpack.c.h.b16 %v4872
        %v5612 = vunpack.c.l.b16 %v4873
        %v5613 = vunpack.c.h.b16 %v4873
        %v5614 = vunpack.c.l.b16 %v4874
        %v5615 = vunpack.c.h.b16 %v4874
        %v5616 = vunpack.c.l.b16 %v4875
        %v5617 = vunpack.c.h.b16 %v4875
        %v5618 = vunpack.c.l.b16 %v4876
        %v5619 = vunpack.c.h.b16 %v4876
        %v5620 = vunpack.c.l.b16 %v4877
        %v5621 = vunpack.c.h.b16 %v4877
        %v5622 = vunpack.c.l.b16 %v4878
        %v5623 = vunpack.c.h.b16 %v4878
        %v5624 = vunpack.c.l.b16 %v4879
        %v5625 = vunpack.c.h.b16 %v4879
        %v5626 = vunpack.c.l.b16 %v4880
        %v5627 = vunpack.c.h.b16 %v4880
        %v5628 = vunpack.c.l.b16 %v4881
        %v5629 = vunpack.c.h.b16 %v4881
        %v5630 = vunpack.c.l.b16 %v4882
        %v5631 = vunpack.c.h.b16 %v4882
        %v5632 = vunpack.c.l.b16 %v4883
        %v5633 = vunpack.c.h.b16 %v4883
        %v5634 = vunpack.c.l.b16 %v4884
        %v5635 = vunpack.c.h.b16 %v4884
        %v5636 = vunpack.c.l.b16 %v4885
        %v5637 = vunpack.c.h.b16 %v4885
        %v5638 = vunpack.c.l.b16 %v4886
        %v5639 = vunpack.c.h.b16 %v4886
        %v5640 = vunpack.c.l.b16 %v4887
        %v5641 = vunpack.c.h.b16 %v4887
        %v5642 = vunpack.c.l.b16 %v4888
        %v5643 = vunpack.c.h.b16 %v4888
        %v5644 = vunpack.c.l.b16 %v4889
        %v5645 = vunpack.c.h.b16 %v4889
        %v5646 = vunpack.c.l.b16 %v4890
        %v5647 = vunpack.c.h.b16 %v4890
        %v5648 = vunpack.c.l.b16 %v4891
        %v5649 = vunpack.c.h.b16 %v4891
        %v5650 = vunpack.c.l.b16 %v4892
        %v5651 = vunpack.c.h.b16 %v4892
        %v5652 = vunpack.c.l.b16 %v4893
        %v5653 = vunpack.c.h.b16 %v4893
        %v5654 = vunpack.c.l.b16 %v4894
        %v5655 = vunpack.c.h.b16 %v4894
        %v5656 = vunpack.c.l.b16 %v4895
        %v5657 = vunpack.c.h.b16 %v4895
        %v5658 = vunpack.c.l.b16 %v4896
        %v5659 = vunpack.c.h.b16 %v4896
        %v5660 = vunpack.c.l.b16 %v4897
        %v5661 = vunpack.c.h.b16 %v4897
        %v5662 = vunpack.c.l.b16 %v4898
        %v5663 = vunpack.c.h.b16 %v4898
        %v5664 = vunpack.c.l.b16 %v4899
        %v5665 = vunpack.c.h.b16 %v4899
        %v5666 = vunpack.c.l.b16 %v4900
        %v5667 = vunpack.c.h.b16 %v4900
        %v5668 = vunpack.c.l.b16 %v4901
        %v5669 = vunpack.c.h.b16 %v4901
        %v5670 = vunpack.c.l.b16 %v4902
        %v5671 = vunpack.c.h.b16 %v4902
        %v5672 = vunpack.c.l.b16 %v4903
        %v5673 = vunpack.c.h.b16 %v4903
        %v5674 = vunpack.c.l.b16 %v4904
        %v5675 = vunpack.c.h.b16 %v4904
        %v5676 = vunpack.c.l.b16 %v4905
        %v5677 = vunpack.c.h.b16 %v4905
        %v5678 = vunpack.c.l.b16 %v4906
        %v5679 = vunpack.c.h.b16 %v4906
        %v5680 = vunpack.c.l.b16 %v4907
        %v5681 = vunpack.c.h.b16 %v4907
        %v5682 = vunpack.c.l.b16 %v4908
        %v5683 = vunpack.c.h.b16 %v4908
        %v5684 = vunpack.c.l.b16 %v4909
        %v5685 = vunpack.c.h.b16 %v4909
        %v5686 = vunpack.c.l.b16 %v4910
        %v5687 = vunpack.c.h.b16 %v4910
        %v5688 = vunpack.c.l.b16 %v4911
        %v5689 = vunpack.c.h.b16 %v4911
        %v5690 = vunpack.c.l.b16 %v4912
        %v5691 = vunpack.c.h.b16 %v4912
        %v5692 = vunpack.c.l.b16 %v4913
        %v5693 = vunpack.c.h.b16 %v4913
        %v5694 = vunpack.c.l.b16 %v4914
        %v5695 = vunpack.c.h.b16 %v4914
        %v5696 = vunpack.c.l.b16 %v4915
        %v5697 = vunpack.c.h.b16 %v4915
        %v5698 = vunpack.c.l.b16 %v4916
        %v5699 = vunpack.c.h.b16 %v4916
        %v5700 = vunpack.c.l.b16 %v4917
        %v5701 = vunpack.c.h.b16 %v4917
        %v5702 = vunpack.c.l.b16 %v4918
        %v5703 = vunpack.c.h.b16 %v4918
        %v5704 = vunpack.c.l.b16 %v4919
        %v5705 = vunpack.c.h.b16 %v4919
        %v5706 = vunpack.c.l.b16 %v4920
        %v5707 = vunpack.c.h.b16 %v4920
        %v5708 = vunpack.c.l.b16 %v4921
        %v5709 = vunpack.c.h.b16 %v4921
        %v5710 = vunpack.c.l.b16 %v4922
        %v5711 = vunpack.c.h.b16 %v4922
        %v5712 = vunpack.c.l.b16 %v4923
        %v5713 = vunpack.c.h.b16 %v4923
        %v5714 = vunpack.c.l.b16 %v4924
        %v5715 = vunpack.c.h.b16 %v4924
        %v5716 = vunpack.c.l.b16 %v4925
        %v5717 = vunpack.c.h.b16 %v4925
        %v5718 = vunpack.c.l.b16 %v4926
        %v5719 = vunpack.c.h.b16 %v4926
        %v5720 = vunpack.c.l.b16 %v4927
        %v5721 = vunpack.c.h.b16 %v4927
        %v5722 = vunpack.c.l.b16 %v4928
        %v5723 = vunpack.c.h.b16 %v4928
        %v5724 = vunpack.c.l.b16 %v4929
        %v5725 = vunpack.c.h.b16 %v4929
        %v5726 = vunpack.c.l.b16 %v4930
        %v5727 = vunpack.c.h.b16 %v4930
        %v5728 = vunpack.c.l.b16 %v4931
        %v5729 = vunpack.c.h.b16 %v4931
        %v5730 = vunpack.c.l.b16 %v4932
        %v5731 = vunpack.c.h.b16 %v4932
        %v5732 = vunpack.c.l.b16 %v4933
        %v5733 = vunpack.c.h.b16 %v4933
        %v5734 = vunpack.c.l.b16 %v4934
        %v5735 = vunpack.c.h.b16 %v4934
        %v5736 = vunpack.c.l.b16 %v4935
        %v5737 = vunpack.c.h.b16 %v4935
        %v5738 = vunpack.c.l.b16 %v4936
        %v5739 = vunpack.c.h.b16 %v4936
        %v5740 = vunpack.c.l.b16 %v4937
        %v5741 = vunpack.c.h.b16 %v4937
        %v5742 = vunpack.c.l.b16 %v4938
        %v5743 = vunpack.c.h.b16 %v4938
        %v5744 = vunpack.c.l.b16 %v4939
        %v5745 = vunpack.c.h.b16 %v4939
        %v5746 = vunpack.c.l.b16 %v4940
        %v5747 = vunpack.c.h.b16 %v4940
        %v5748 = vunpack.c.l.b16 %v4941
        %v5749 = vunpack.c.h.b16 %v4941
        %v5750 = vunpack.c.l.b16 %v4942
        %v5751 = vunpack.c.h.b16 %v4942
        %v5752 = vunpack.c.l.b16 %v4943
        %v5753 = vunpack.c.h.b16 %v4943
        %v5754 = vunpack.c.l.b16 %v4944
        %v5755 = vunpack.c.h.b16 %v4944
        %v5756 = vunpack.c.l.b16 %v4945
        %v5757 = vunpack.c.h.b16 %v4945
        %v5758 = vunpack.c.l.b16 %v4946
        %v5759 = vunpack.c.h.b16 %v4946
        %v5760 = vunpack.c.l.b16 %v4947
        %v5761 = vunpack.c.h.b16 %v4947
        %v5762 = vunpack.c.l.b16 %v4948
        %v5763 = vunpack.c.h.b16 %v4948
        %v5764 = vunpack.c.l.b16 %v4949
        %v5765 = vunpack.c.h.b16 %v4949
        %v5766 = vunpack.c.l.b16 %v4950
        %v5767 = vunpack.c.h.b16 %v4950
        %v5768 = vunpack.c.l.b16 %v4951
        %v5769 = vunpack.c.h.b16 %v4951
        %v5770 = vunpack.c.l.b16 %v4952
        %v5771 = vunpack.c.h.b16 %v4952
        %v5772 = vunpack.c.l.b16 %v4953
        %v5773 = vunpack.c.h.b16 %v4953
        %v5774 = vunpack.c.l.b16 %v4954
        %v5775 = vunpack.c.h.b16 %v4954
        %v5776 = vunpack.c.l.b16 %v4955
        %v5777 = vunpack.c.h.b16 %v4955
        %v5778 = vunpack.c.l.b16 %v4956
        %v5779 = vunpack.c.h.b16 %v4956
        %v5780 = vunpack.c.l.b16 %v4957
        %v5781 = vunpack.c.h.b16 %v4957
        %v5782 = vunpack.c.l.b16 %v4958
        %v5783 = vunpack.c.h.b16 %v4958
        %v5784 = vunpack.c.l.b16 %v4959
        %v5785 = vunpack.c.h.b16 %v4959
        %v5786 = vunpack.c.l.b16 %v4960
        %v5787 = vunpack.c.h.b16 %v4960
        %v5788 = vunpack.c.l.b16 %v4961
        %v5789 = vunpack.c.h.b16 %v4961
        %v5790 = vunpack.c.l.b16 %v4962
        %v5791 = vunpack.c.h.b16 %v4962
        %v5792 = vunpack.c.l.b16 %v4963
        %v5793 = vunpack.c.h.b16 %v4963
        %v5794 = vunpack.c.l.b16 %v4964
        %v5795 = vunpack.c.h.b16 %v4964
        %v5796 = vunpack.c.l.b16 %v4965
        %v5797 = vunpack.c.h.b16 %v4965
        %v5798 = vunpack.c.l.b16 %v4966
        %v5799 = vunpack.c.h.b16 %v4966
        %v5800 = vunpack.c.l.b16 %v4967
        %v5801 = vunpack.c.h.b16 %v4967
        %v5802 = vunpack.c.l.b16 %v4968
        %v5803 = vunpack.c.h.b16 %v4968
        %v5804 = vunpack.c.l.b16 %v4969
        %v5805 = vunpack.c.h.b16 %v4969
        %v5806 = vunpack.c.l.b16 %v4970
        %v5807 = vunpack.c.h.b16 %v4970
        %v5808 = vunpack.c.l.b16 %v4971
        %v5809 = vunpack.c.h.b16 %v4971
        %v5810 = vunpack.c.l.b16 %v4972
        %v5811 = vunpack.c.h.b16 %v4972
        %v5812 = vunpack.c.l.b16 %v4973
        %v5813 = vunpack.c.h.b16 %v4973
        %v5814 = vunpack.c.l.b16 %v4974
        %v5815 = vunpack.c.h.b16 %v4974
        %v5816 = vunpack.c.l.b16 %v4975
        %v5817 = vunpack.c.h.b16 %v4975
        %v5818 = vunpack.c.l.b16 %v4976
        %v5819 = vunpack.c.h.b16 %v4976
        %v5820 = vunpack.c.l.b16 %v4977
        %v5821 = vunpack.c.h.b16 %v4977
        %v5822 = vunpack.c.l.b16 %v4978
        %v5823 = vunpack.c.h.b16 %v4978
        %v5824 = vunpack.c.l.b16 %v4979
        %v5825 = vunpack.c.h.b16 %v4979
        %v5826 = vunpack.c.l.b16 %v4980
        %v5827 = vunpack.c.h.b16 %v4980
        %v5828 = vunpack.c.l.b16 %v4981
        %v5829 = vunpack.c.h.b16 %v4981
        %v5830 = vunpack.c.l.b16 %v4982
        %v5831 = vunpack.c.h.b16 %v4982
        %v5832 = vunpack.c.l.b16 %v4983
        %v5833 = vunpack.c.h.b16 %v4983
        %v5834 = vunpack.c.l.b16 %v4984
        %v5835 = vunpack.c.h.b16 %v4984
        %v5836 = vunpack.c.l.b16 %v4985
        %v5837 = vunpack.c.h.b16 %v4985
        %v5838 = vunpack.c.l.b16 %v4986
        %v5839 = vunpack.c.h.b16 %v4986
        %v5840 = vunpack.c.l.b16 %v4987
        %v5841 = vunpack.c.h.b16 %v4987
        %v5842 = vunpack.c.l.b16 %v4988
        %v5843 = vunpack.c.h.b16 %v4988
        %v5844 = vunpack.c.l.b16 %v4989
        %v5845 = vunpack.c.h.b16 %v4989
        %v5846 = vunpack.c.l.b16 %v4990
        %v5847 = vunpack.c.h.b16 %v4990
        %v5848 = vunpack.c.l.b16 %v4991
        %v5849 = vunpack.c.h.b16 %v4991
        %v5850 = vunpack.c.l.b16 %v4992
        %v5851 = vunpack.c.h.b16 %v4992
        %v5852 = vunpack.c.l.b16 %v4993
        %v5853 = vunpack.c.h.b16 %v4993
        %v5854 = vunpack.c.l.b16 %v4994
        %v5855 = vunpack.c.h.b16 %v4994
        %v5856 = vunpack.c.l.b16 %v4995
        %v5857 = vunpack.c.h.b16 %v4995
        %v5858 = vunpack.c.l.b16 %v4996
        %v5859 = vunpack.c.h.b16 %v4996
        %v5860 = vunpack.c.l.b16 %v4997
        %v5861 = vunpack.c.h.b16 %v4997
        %v5862 = vunpack.c.l.b16 %v4998
        %v5863 = vunpack.c.h.b16 %v4998
        %v5864 = vunpack.c.l.b16 %v4999
        %v5865 = vunpack.c.h.b16 %v4999
        %v5866 = vunpack.c.l.b16 %v5000
        %v5867 = vunpack.c.h.b16 %v5000
        %v5868 = vunpack.c.l.b16 %v5001
        %v5869 = vunpack.c.h.b16 %v5001
        %v5870 = vunpack.c.l.b16 %v5002
        %v5871 = vunpack.c.h.b16 %v5002
        %v5872 = vunpack.c.l.b16 %v5003
        %v5873 = vunpack.c.h.b16 %v5003
        %v5874 = vunpack.c.l.b16 %v5004
        %v5875 = vunpack.c.h.b16 %v5004
        %v5876 = vunpack.c.l.b16 %v5005
        %v5877 = vunpack.c.h.b16 %v5005
        %v5878 = vunpack.c.l.b16 %v5006
        %v5879 = vunpack.c.h.b16 %v5006
        %v5880 = vunpack.c.l.b16 %v5007
        %v5881 = vunpack.c.h.b16 %v5007
        %v5882 = vunpack.c.l.b16 %v5008
        %v5883 = vunpack.c.h.b16 %v5008
        %v5884 = vunpack.c.l.b16 %v5009
        %v5885 = vunpack.c.h.b16 %v5009
        %v5886 = vunpack.c.l.b16 %v5010
        %v5887 = vunpack.c.h.b16 %v5010
        %v5888 = vunpack.c.l.b16 %v5011
        %v5889 = vunpack.c.h.b16 %v5011
        %v5890 = vunpack.c.l.b16 %v5012
        %v5891 = vunpack.c.h.b16 %v5012
        %v5892 = vunpack.c.l.b16 %v5013
        %v5893 = vunpack.c.h.b16 %v5013
        %v5894 = vunpack.c.l.b16 %v5014
        %v5895 = vunpack.c.h.b16 %v5014
        %v5896 = vunpack.c.l.b16 %v5015
        %v5897 = vunpack.c.h.b16 %v5015
        %v5898 = vunpack.c.l.b16 %v5016
        %v5899 = vunpack.c.h.b16 %v5016
        %v5900 = vunpack.c.l.b16 %v5017
        %v5901 = vunpack.c.h.b16 %v5017
        %v5902 = vunpack.c.l.b16 %v5018
        %v5903 = vunpack.c.h.b16 %v5018
        %v5904 = vunpack.c.l.b16 %v5019
        %v5905 = vunpack.c.h.b16 %v5019
        %v5906 = vunpack.c.l.b16 %v5020
        %v5907 = vunpack.c.h.b16 %v5020
        %v5908 = vunpack.c.l.b16 %v5021
        %v5909 = vunpack.c.h.b16 %v5021
        %v5910 = vunpack.c.l.b16 %v5022
        %v5911 = vunpack.c.h.b16 %v5022
        %v5912 = vunpack.c.l.b16 %v5023
        %v5913 = vunpack.c.h.b16 %v5023
        %v5914 = vunpack.c.l.b16 %v5024
        %v5915 = vunpack.c.h.b16 %v5024
        %v5916 = vunpack.c.l.b16 %v5025
        %v5917 = vunpack.c.h.b16 %v5025
        %v5918 = vunpack.c.l.b16 %v5026
        %v5919 = vunpack.c.h.b16 %v5026
        %v5920 = vunpack.c.l.b16 %v5027
        %v5921 = vunpack.c.h.b16 %v5027
        %v5922 = vunpack.c.l.b16 %v5028
        %v5923 = vunpack.c.h.b16 %v5028
        %v5924 = vunpack.c.l.b16 %v5029
        %v5925 = vunpack.c.h.b16 %v5029
        %v5926 = vpack.c.b16 %v5356, %v5350
        %v5927 = vpack.c.b16 %v5357, %v5351
        %v5928 = vpack.c.b16 %v5358, %v5352
        %v5929 = vpack.c.b16 %v5359, %v5353
        %v5930 = vpack.c.b16 %v5360, %v5354
        %v5931 = vpack.c.b16 %v5361, %v5355
        %v5932 = vpack.c.b16 %v5368, %v5362
        %v5933 = vpack.c.b16 %v5369, %v5363
        %v5934 = vpack.c.b16 %v5370, %v5364
        %v5935 = vpack.c.b16 %v5371, %v5365
        %v5936 = vpack.c.b16 %v5372, %v5366
        %v5937 = vpack.c.b16 %v5373, %v5367
        %v5938 = vpack.c.b16 %v5380, %v5374
        %v5939 = vpack.c.b16 %v5381, %v5375
        %v5940 = vpack.c.b16 %v5382, %v5376
        %v5941 = vpack.c.b16 %v5383, %v5377
        %v5942 = vpack.c.b16 %v5384, %v5378
        %v5943 = vpack.c.b16 %v5385, %v5379
        %v5944 = vpack.c.b16 %v5392, %v5386
        %v5945 = vpack.c.b16 %v5393, %v5387
        %v5946 = vpack.c.b16 %v5394, %v5388
        %v5947 = vpack.c.b16 %v5395, %v5389
        %v5948 = vpack.c.b16 %v5396, %v5390
        %v5949 = vpack.c.b16 %v5397, %v5391
        %v5950 = vpack.c.b16 %v5404, %v5398
        %v5951 = vpack.c.b16 %v5405, %v5399
        %v5952 = vpack.c.b16 %v5406, %v5400
        %v5953 = vpack.c.b16 %v5407, %v5401
        %v5954 = vpack.c.b16 %v5408, %v5402
        %v5955 = vpack.c.b16 %v5409, %v5403
        %v5956 = vpack.c.b16 %v5416, %v5410
        %v5957 = vpack.c.b16 %v5417, %v5411
        %v5958 = vpack.c.b16 %v5418, %v5412
        %v5959 = vpack.c.b16 %v5419, %v5413
        %v5960 = vpack.c.b16 %v5420, %v5414
        %v5961 = vpack.c.b16 %v5421, %v5415
        %v5962 = vpack.c.b16 %v5428, %v5422
        %v5963 = vpack.c.b16 %v5429, %v5423
        %v5964 = vpack.c.b16 %v5430, %v5424
        %v5965 = vpack.c.b16 %v5431, %v5425
        %v5966 = vpack.c.b16 %v5432, %v5426
        %v5967 = vpack.c.b16 %v5433, %v5427
        %v5968 = vpack.c.b16 %v5440, %v5434
        %v5969 = vpack.c.b16 %v5441, %v5435
        %v5970 = vpack.c.b16 %v5442, %v5436
        %v5971 = vpack.c.b16 %v5443, %v5437
        %v5972 = vpack.c.b16 %v5444, %v5438
        %v5973 = vpack.c.b16 %v5445, %v5439
        %v5974 = vpack.c.b16 %v5452, %v5446
        %v5975 = vpack.c.b16 %v5453, %v5447
        %v5976 = vpack.c.b16 %v5454, %v5448
        %v5977 = vpack.c.b16 %v5455, %v5449
        %v5978 = vpack.c.b16 %v5456, %v5450
        %v5979 = vpack.c.b16 %v5457, %v5451
        %v5980 = vpack.c.b16 %v5464, %v5458
        %v5981 = vpack.c.b16 %v5465, %v5459
        %v5982 = vpack.c.b16 %v5466, %v5460
        %v5983 = vpack.c.b16 %v5467, %v5461
        %v5984 = vpack.c.b16 %v5468, %v5462
        %v5985 = vpack.c.b16 %v5469, %v5463
        %v5986 = vpack.c.b16 %v5476, %v5470
        %v5987 = vpack.c.b16 %v5477, %v5471
        %v5988 = vpack.c.b16 %v5478, %v5472
        %v5989 = vpack.c.b16 %v5479, %v5473
        %v5990 = vpack.c.b16 %v5480, %v5474
        %v5991 = vpack.c.b16 %v5481, %v5475
        %v5992 = vpack.c.b16 %v5488, %v5482
        %v5993 = vpack.c.b16 %v5489, %v5483
        %v5994 = vpack.c.b16 %v5490, %v5484
        %v5995 = vpack.c.b16 %v5491, %v5485
        %v5996 = vpack.c.b16 %v5492, %v5486
        %v5997 = vpack.c.b16 %v5493, %v5487
        %v5998 = vpack.c.b16 %v5500, %v5494
        %v5999 = vpack.c.b16 %v5501, %v5495
        %v6000 = vpack.c.b16 %v5502, %v5496
        %v6001 = vpack.c.b16 %v5503, %v5497
        %v6002 = vpack.c.b16 %v5504, %v5498
        %v6003 = vpack.c.b16 %v5505, %v5499
        %v6004 = vpack.c.b16 %v5512, %v5506
        %v6005 = vpack.c.b16 %v5513, %v5507
        %v6006 = vpack.c.b16 %v5514, %v5508
        %v6007 = vpack.c.b16 %v5515, %v5509
        %v6008 = vpack.c.b16 %v5516, %v5510
        %v6009 = vpack.c.b16 %v5517, %v5511
        %v6010 = vpack.c.b16 %v5524, %v5518
        %v6011 = vpack.c.b16 %v5525, %v5519
        %v6012 = vpack.c.b16 %v5526, %v5520
        %v6013 = vpack.c.b16 %v5527, %v5521
        %v6014 = vpack.c.b16 %v5528, %v5522
        %v6015 = vpack.c.b16 %v5529, %v5523
        %v6016 = vpack.c.b16 %v5536, %v5530
        %v6017 = vpack.c.b16 %v5537, %v5531
        %v6018 = vpack.c.b16 %v5538, %v5532
        %v6019 = vpack.c.b16 %v5539, %v5533
        %v6020 = vpack.c.b16 %v5540, %v5534
        %v6021 = vpack.c.b16 %v5541, %v5535
        %v6022 = vpack.c.b16 %v5548, %v5542
        %v6023 = vpack.c.b16 %v5549, %v5543
        %v6024 = vpack.c.b16 %v5550, %v5544
        %v6025 = vpack.c.b16 %v5551, %v5545
        %v6026 = vpack.c.b16 %v5552, %v5546
        %v6027 = vpack.c.b16 %v5553, %v5547
        %v6028 = vpack.c.b16 %v5560, %v5554
        %v6029 = vpack.c.b16 %v5561, %v5555
        %v6030 = vpack.c.b16 %v5562, %v5556
        %v6031 = vpack.c.b16 %v5563, %v5557
        %v6032 = vpack.c.b16 %v5564, %v5558
        %v6033 = vpack.c.b16 %v5565, %v5559
        %v6034 = vpack.c.b16 %v5572, %v5566
        %v6035 = vpack.c.b16 %v5573, %v5567
        %v6036 = vpack.c.b16 %v5574, %v5568
        %v6037 = vpack.c.b16 %v5575, %v5569
        %v6038 = vpack.c.b16 %v5576, %v5570
        %v6039 = vpack.c.b16 %v5577, %v5571
        %v6040 = vpack.c.b16 %v5584, %v5578
        %v6041 = vpack.c.b16 %v5585, %v5579
        %v6042 = vpack.c.b16 %v5586, %v5580
        %v6043 = vpack.c.b16 %v5587, %v5581
        %v6044 = vpack.c.b16 %v5588, %v5582
        %v6045 = vpack.c.b16 %v5589, %v5583
        %v6046 = vpack.c.b16 %v5596, %v5590
        %v6047 = vpack.c.b16 %v5597, %v5591
        %v6048 = vpack.c.b16 %v5598, %v5592
        %v6049 = vpack.c.b16 %v5599, %v5593
        %v6050 = vpack.c.b16 %v5600, %v5594
        %v6051 = vpack.c.b16 %v5601, %v5595
        %v6052 = vpack.c.b16 %v5608, %v5602
        %v6053 = vpack.c.b16 %v5609, %v5603
        %v6054 = vpack.c.b16 %v5610, %v5604
        %v6055 = vpack.c.b16 %v5611, %v5605
        %v6056 = vpack.c.b16 %v5612, %v5606
        %v6057 = vpack.c.b16 %v5613, %v5607
        %v6058 = vpack.c.b16 %v5620, %v5614
        %v6059 = vpack.c.b16 %v5621, %v5615
        %v6060 = vpack.c.b16 %v5622, %v5616
        %v6061 = vpack.c.b16 %v5623, %v5617
        %v6062 = vpack.c.b16 %v5624, %v5618
        %v6063 = vpack.c.b16 %v5625, %v5619
        %v6064 = vpack.c.b16 %v5632, %v5626
        %v6065 = vpack.c.b16 %v5633, %v5627
        %v6066 = vpack.c.b16 %v5634, %v5628
        %v6067 = vpack.c.b16 %v5635, %v5629
        %v6068 = vpack.c.b16 %v5636, %v5630
        %v6069 = vpack.c.b16 %v5637, %v5631
        %v6070 = vpack.c.b16 %v5644, %v5638
        %v6071 = vpack.c.b16 %v5645, %v5639
        %v6072 = vpack.c.b16 %v5646, %v5640
        %v6073 = vpack.c.b16 %v5647, %v5641
        %v6074 = vpack.c.b16 %v5648, %v5642
        %v6075 = vpack.c.b16 %v5649, %v5643
        %v6076 = vpack.c.b16 %v5656, %v5650
        %v6077 = vpack.c.b16 %v5657, %v5651
        %v6078 = vpack.c.b16 %v5658, %v5652
        %v6079 = vpack.c.b16 %v5659, %v5653
        %v6080 = vpack.c.b16 %v5660, %v5654
        %v6081 = vpack.c.b16 %v5661, %v5655
        %v6082 = vpack.c.b16 %v5668, %v5662
        %v6083 = vpack.c.b16 %v5669, %v5663
        %v6084 = vpack.c.b16 %v5670, %v5664
        %v6085 = vpack.c.b16 %v5671, %v5665
        %v6086 = vpack.c.b16 %v5672, %v5666
        %v6087 = vpack.c.b16 %v5673, %v5667
        %v6088 = vpack.c.b16 %v5680, %v5674
        %v6089 = vpack.c.b16 %v5681, %v5675
        %v6090 = vpack.c.b16 %v5682, %v5676
        %v6091 = vpack.c.b16 %v5683, %v5677
        %v6092 = vpack.c.b16 %v5684, %v5678
        %v6093 = vpack.c.b16 %v5685, %v5679
        %v6094 = vpack.c.b16 %v5692, %v5686
        %v6095 = vpack.c.b16 %v5693, %v5687
        %v6096 = vpack.c.b16 %v5694, %v5688
        %v6097 = vpack.c.b16 %v5695, %v5689
        %v6098 = vpack.c.b16 %v5696, %v5690
        %v6099 = vpack.c.b16 %v5697, %v5691
        %v6100 = vpack.c.b16 %v5704, %v5698
        %v6101 = vpack.c.b16 %v5705, %v5699
        %v6102 = vpack.c.b16 %v5706, %v5700
        %v6103 = vpack.c.b16 %v5707, %v5701
        %v6104 = vpack.c.b16 %v5708, %v5702
        %v6105 = vpack.c.b16 %v5709, %v5703
        %v6106 = vpack.c.b16 %v5716, %v5710
        %v6107 = vpack.c.b16 %v5717, %v5711
        %v6108 = vpack.c.b16 %v5718, %v5712
        %v6109 = vpack.c.b16 %v5719, %v5713
        %v6110 = vpack.c.b16 %v5720, %v5714
        %v6111 = vpack.c.b16 %v5721, %v5715
        %v6112 = vpack.c.b16 %v5728, %v5722
        %v6113 = vpack.c.b16 %v5729, %v5723
        %v6114 = vpack.c.b16 %v5730, %v5724
        %v6115 = vpack.c.b16 %v5731, %v5725
        %v6116 = vpack.c.b16 %v5732, %v5726
        %v6117 = vpack.c.b16 %v5733, %v5727
        %v6118 = vpack.c.b16 %v5740, %v5734
        %v6119 = vpack.c.b16 %v5741, %v5735
        %v6120 = vpack.c.b16 %v5742, %v5736
        %v6121 = vpack.c.b16 %v5743, %v5737
        %v6122 = vpack.c.b16 %v5744, %v5738
        %v6123 = vpack.c.b16 %v5745, %v5739
        %v6124 = vpack.c.b16 %v5752, %v5746
        %v6125 = vpack.c.b16 %v5753, %v5747
        %v6126 = vpack.c.b16 %v5754, %v5748
        %v6127 = vpack.c.b16 %v5755, %v5749
        %v6128 = vpack.c.b16 %v5756, %v5750
        %v6129 = vpack.c.b16 %v5757, %v5751
        %v6130 = vpack.c.b16 %v5764, %v5758
        %v6131 = vpack.c.b16 %v5765, %v5759
        %v6132 = vpack.c.b16 %v5766, %v5760
        %v6133 = vpack.c.b16 %v5767, %v5761
        %v6134 = vpack.c.b16 %v5768, %v5762
        %v6135 = vpack.c.b16 %v5769, %v5763
        %v6136 = vpack.c.b16 %v5776, %v5770
        %v6137 = vpack.c.b16 %v5777, %v5771
        %v6138 = vpack.c.b16 %v5778, %v5772
        %v6139 = vpack.c.b16 %v5779, %v5773
        %v6140 = vpack.c.b16 %v5780, %v5774
        %v6141 = vpack.c.b16 %v5781, %v5775
        %v6142 = vpack.c.b16 %v5788, %v5782
        %v6143 = vpack.c.b16 %v5789, %v5783
        %v6144 = vpack.c.b16 %v5790, %v5784
        %v6145 = vpack.c.b16 %v5791, %v5785
        %v6146 = vpack.c.b16 %v5792, %v5786
        %v6147 = vpack.c.b16 %v5793, %v5787
        %v6148 = vpack.c.b16 %v5800, %v5794
        %v6149 = vpack.c.b16 %v5801, %v5795
        %v6150 = vpack.c.b16 %v5802, %v5796
        %v6151 = vpack.c.b16 %v5803, %v5797
        %v6152 = vpack.c.b16 %v5804, %v5798
        %v6153 = vpack.c.b16 %v5805, %v5799
        %v6154 = vpack.c.b16 %v5812, %v5806
        %v6155 = vpack.c.b16 %v5813, %v5807
        %v6156 = vpack.c.b16 %v5814, %v5808
        %v6157 = vpack.c.b16 %v5815, %v5809
        %v6158 = vpack.c.b16 %v5816, %v5810
        %v6159 = vpack.c.b16 %v5817, %v5811
        %v6160 = vpack.c.b16 %v5824, %v5818
        %v6161 = vpack.c.b16 %v5825, %v5819
        %v6162 = vpack.c.b16 %v5826, %v5820
        %v6163 = vpack.c.b16 %v5827, %v5821
        %v6164 = vpack.c.b16 %v5828, %v5822
        %v6165 = vpack.c.b16 %v5829, %v5823
        %v6166 = vpack.c.b16 %v5836, %v5830
        %v6167 = vpack.c.b16 %v5837, %v5831
        %v6168 = vpack.c.b16 %v5838, %v5832
        %v6169 = vpack.c.b16 %v5839, %v5833
        %v6170 = vpack.c.b16 %v5840, %v5834
        %v6171 = vpack.c.b16 %v5841, %v5835
        %v6172 = vpack.c.b16 %v5848, %v5842
        %v6173 = vpack.c.b16 %v5849, %v5843
        %v6174 = vpack.c.b16 %v5850, %v5844
        %v6175 = vpack.c.b16 %v5851, %v5845
        %v6176 = vpack.c.b16 %v5852, %v5846
        %v6177 = vpack.c.b16 %v5853, %v5847
        %v6178 = vpack.c.b16 %v5860, %v5854
        %v6179 = vpack.c.b16 %v5861, %v5855
        %v6180 = vpack.c.b16 %v5862, %v5856
        %v6181 = vpack.c.b16 %v5863, %v5857
        %v6182 = vpack.c.b16 %v5864, %v5858
        %v6183 = vpack.c.b16 %v5865, %v5859
        %v6184 = vpack.c.b16 %v5872, %v5866
        %v6185 = vpack.c.b16 %v5873, %v5867
        %v6186 = vpack.c.b16 %v5874, %v5868
        %v6187 = vpack.c.b16 %v5875, %v5869
        %v6188 = vpack.c.b16 %v5876, %v5870
        %v6189 = vpack.c.b16 %v5877, %v5871
        %v6190 = vpack.c.b16 %v5884, %v5878
        %v6191 = vpack.c.b16 %v5885, %v5879
        %v6192 = vpack.c.b16 %v5886, %v5880
        %v6193 = vpack.c.b16 %v5887, %v5881
        %v6194 = vpack.c.b16 %v5888, %v5882
        %v6195 = vpack.c.b16 %v5889, %v5883
        %v6196 = vpack.c.b16 %v5896, %v5890
        %v6197 = vpack.c.b16 %v5897, %v5891
        %v6198 = vpack.c.b16 %v5898, %v5892
        %v6199 = vpack.c.b16 %v5899, %v5893
        %v6200 = vpack.c.b16 %v5900, %v5894
        %v6201 = vpack.c.b16 %v5901, %v5895
        %v6202 = vpack.c.b16 %v5908, %v5902
        %v6203 = vpack.c.b16 %v5909, %v5903
        %v6204 = vpack.c.b16 %v5910, %v5904
        %v6205 = vpack.c.b16 %v5911, %v5905
        %v6206 = vpack.c.b16 %v5912, %v5906
        %v6207 = vpack.c.b16 %v5913, %v5907
        %v6208 = vpack.c.b16 %v5920, %v5914
        %v6209 = vpack.c.b16 %v5921, %v5915
        %v6210 = vpack.c.b16 %v5922, %v5916
        %v6211 = vpack.c.b16 %v5923, %v5917
        %v6212 = vpack.c.b16 %v5924, %v5918
        %v6213 = vpack.c.b16 %v5925, %v5919
        %6502 = vmatprep.subr.bf16.mxu0 %v5927
        %6503 = vmatpush1.bf16.msra.mxu0 %v5926
        %6504 = vmatprep.subr.bf16.mxu0 %v5933
        %6505 = vmatpush1.bf16.msra.mxu0 %v5932
        %6506 = vmatprep.subr.bf16.mxu0 %v5939
        %6507 = vmatpush1.bf16.msra.mxu0 %v5938
        %6508 = vmatprep.subr.bf16.mxu0 %v5945
        %6509 = vmatpush1.bf16.msra.mxu0 %v5944
        %6510 = vmatprep.subr.bf16.mxu0 %v5951
        %6511 = vmatpush1.bf16.msra.mxu0 %v5950
        %6512 = vmatprep.subr.bf16.mxu0 %v5957
        %6513 = vmatpush1.bf16.msra.mxu0 %v5956
        %6514 = vmatprep.subr.bf16.mxu0 %v5963
        %6515 = vmatpush1.bf16.msra.mxu0 %v5962
        %6516 = vmatprep.subr.bf16.mxu0 %v5969
        %6517 = vmatpush1.bf16.msra.mxu0 %v5968
        %6518 = vmatprep.subr.bf16.mxu0 %v5975
        %6519 = vmatpush1.bf16.msra.mxu0 %v5974
        %6520 = vmatprep.subr.bf16.mxu0 %v5981
        %6521 = vmatpush1.bf16.msra.mxu0 %v5980
        %6522 = vmatprep.subr.bf16.mxu0 %v5987
        %6523 = vmatpush1.bf16.msra.mxu0 %v5986
        %6524 = vmatprep.subr.bf16.mxu0 %v5993
        %6525 = vmatpush1.bf16.msra.mxu0 %v5992
        %6526 = vmatprep.subr.bf16.mxu0 %v5999
        %6527 = vmatpush1.bf16.msra.mxu0 %v5998
        %6528 = vmatprep.subr.bf16.mxu0 %v6005
        %6529 = vmatpush1.bf16.msra.mxu0 %v6004
        %6530 = vmatprep.subr.bf16.mxu0 %v6011
        %6531 = vmatpush1.bf16.msra.mxu0 %v6010
        %6532 = vmatprep.subr.bf16.mxu0 %v6017
        %6533 = vmatpush1.bf16.msra.mxu0 %v6016
        %6534 = vmatprep.mubr.bf16.mxu0 %v1486
        %6535 = vmatmul.mubr.bf16.gmra.mrb[0].mxu0 %v1485
        %v6536 = vpop.f32.mrb[0].mxu0
        %v6537 = vadd.f32 %v5035, %v6536
        %v6538 = vpop.f32.mrb[0].mxu0
        %v6539 = vadd.f32 %v5039, %v6538
        %v6540 = vpop.f32.mrb[0].mxu0
        %v6541 = vadd.f32 %v5035, %v6540
        %v6542 = vpop.f32.mrb[0].mxu0
        %v6543 = vadd.f32 %v5039, %v6542
        %6544 = vmatprep.mubr.bf16.mxu0 %v1492
        %6545 = vmatmul.mubr.bf16.gmra.mrb[0].mxu0 %v1491
        %v6546 = vpop.f32.mrb[0].mxu0
        %v6547 = vadd.f32 %v5035, %v6546
        %v6548 = vpop.f32.mrb[0].mxu0
        %v6549 = vadd.f32 %v5039, %v6548
        %v6550 = vpop.f32.mrb[0].mxu0
        %v6551 = vadd.f32 %v5035, %v6550
        %v6552 = vpop.f32.mrb[0].mxu0
        %v6553 = vadd.f32 %v5039, %v6552
        %6554 = vmatprep.mubr.bf16.mxu0 %v1498
        %6555 = vmatmul.mubr.bf16.gmra.mrb[0].mxu0 %v1497
        %v6556 = vpop.f32.mrb[0].mxu0
        %v6557 = vadd.f32 %v5035, %v6556
        %v6558 = vpop.f32.mrb[0].mxu0
        %v6559 = vadd.f32 %v5039, %v6558
        %v6560 = vpop.f32.mrb[0].mxu0
        %v6561 = vadd.f32 %v5035, %v6560
        %v6562 = vpop.f32.mrb[0].mxu0
        %v6563 = vadd.f32 %v5039, %v6562
        %6564 = vmatprep.mubr.bf16.mxu0 %v1504
        %6565 = vmatmul.mubr.bf16.gmra.mrb[0].mxu0 %v1503
        %v6566 = vpop.f32.mrb[0].mxu0
        %v6567 = vadd.f32 %v5035, %v6566
        %v6568 = vpop.f32.mrb[0].mxu0
        %v6569 = vadd.f32 %v5039, %v6568
        %v6570 = vpop.f32.mrb[0].mxu0
        %v6571 = vadd.f32 %v5035, %v6570
        %v6572 = vpop.f32.mrb[0].mxu0
        %v6573 = vadd.f32 %v5039, %v6572
        %6574 = vmatprep.mubr.bf16.mxu0 %v1510
        %6575 = vmatmul.mubr.bf16.gmra.mrb[0].mxu0 %v1509
        %v6576 = vpop.f32.mrb[0].mxu0
        %v6577 = vadd.f32 %v5035, %v6576
        %v6578 = vpop.f32.mrb[0].mxu0
        %v6579 = vadd.f32 %v5039, %v6578
        %v6580 = vpop.f32.mrb[0].mxu0
        %v6581 = vadd.f32 %v5035, %v6580
        %v6582 = vpop.f32.mrb[0].mxu0
        %v6583 = vadd.f32 %v5039, %v6582
        %6584 = vmatprep.mubr.bf16.mxu0 %v1516
        %6585 = vmatmul.mubr.bf16.gmra.mrb[0].mxu0 %v1515
        %v6586 = vpop.f32.mrb[0].mxu0
        %v6587 = vadd.f32 %v5035, %v6586
        %v6588 = vpop.f32.mrb[0].mxu0
        %v6589 = vadd.f32 %v5039, %v6588
        %v6590 = vpop.f32.mrb[0].mxu0
        %v6591 = vadd.f32 %v5035, %v6590
        %v6592 = vpop.f32.mrb[0].mxu0
        %v6593 = vadd.f32 %v5039, %v6592
        %6594 = vmatprep.mubr.bf16.mxu0 %v1522
        %6595 = vmatmul.mubr.bf16.gmra.mrb[0].mxu0 %v1521
        %v6596 = vpop.f32.mrb[0].mxu0
        %v6597 = vadd.f32 %v5035, %v6596
        %v6598 = vpop.f32.mrb[0].mxu0
        %v6599 = vadd.f32 %v5039, %v6598
        %v6600 = vpop.f32.mrb[0].mxu0
        %v6601 = vadd.f32 %v5035, %v6600
        %v6602 = vpop.f32.mrb[0].mxu0
        %v6603 = vadd.f32 %v5039, %v6602
        %6604 = vmatprep.mubr.bf16.mxu0 %v1528
        %6605 = vmatmul.mubr.bf16.gmra.mrb[0].mxu0 %v1527
        %v6606 = vpop.f32.mrb[0].mxu0
        %v6607 = vadd.f32 %v5035, %v6606
        %v6608 = vpop.f32.mrb[0].mxu0
        %v6609 = vadd.f32 %v5039, %v6608
        %v6610 = vpop.f32.mrb[0].mxu0
        %v6611 = vadd.f32 %v5035, %v6610
        %v6612 = vpop.f32.mrb[0].mxu0
        %v6613 = vadd.f32 %v5039, %v6612
        %6614 = vdwg.mxu0
        %6615 = vmatprep.subr.bf16.mxu0 %v6023
        %6616 = vmatpush1.bf16.msra.mxu0 %v6022
        %6617 = vmatprep.subr.bf16.mxu0 %v6029
        %6618 = vmatpush1.bf16.msra.mxu0 %v6028
        %6619 = vmatprep.subr.bf16.mxu0 %v6035
        %6620 = vmatpush1.bf16.msra.mxu0 %v6034
        %6621 = vmatprep.subr.bf16.mxu0 %v6041
        %6622 = vmatpush1.bf16.msra.mxu0 %v6040
        %6623 = vmatprep.subr.bf16.mxu0 %v6047
        %6624 = vmatpush1.bf16.msra.mxu0 %v6046
        %6625 = vmatprep.subr.bf16.mxu0 %v6053
        %6626 = vmatpush1.bf16.msra.mxu0 %v6052
        %6627 = vmatprep.subr.bf16.mxu0 %v6059
        %6628 = vmatpush1.bf16.msra.mxu0 %v6058
        %6629 = vmatprep.subr.bf16.mxu0 %v6065
        %6630 = vmatpush1.bf16.msra.mxu0 %v6064
        %6631 = vmatprep.subr.bf16.mxu0 %v6071
        %6632 = vmatpush1.bf16.msra.mxu0 %v6070
        %6633 = vmatprep.subr.bf16.mxu0 %v6077
        %6634 = vmatpush1.bf16.msra.mxu0 %v6076
        %6635 = vmatprep.subr.bf16.mxu0 %v6083
        %6636 = vmatpush1.bf16.msra.mxu0 %v6082
        %6637 = vmatprep.subr.bf16.mxu0 %v6089
        %6638 = vmatpush1.bf16.msra.mxu0 %v6088
        %6639 = vmatprep.subr.bf16.mxu0 %v6095
        %6640 = vmatpush1.bf16.msra.mxu0 %v6094
        %6641 = vmatprep.subr.bf16.mxu0 %v6101
        %6642 = vmatpush1.bf16.msra.mxu0 %v6100
        %6643 = vmatprep.subr.bf16.mxu0 %v6107
        %6644 = vmatpush1.bf16.msra.mxu0 %v6106
        %6645 = vmatprep.subr.bf16.mxu0 %v6113
        %6646 = vmatpush1.bf16.msra.mxu0 %v6112
        %6647 = vmatprep.mubr.bf16.mxu0 %v1488
        %6648 = vmatmul.mubr.bf16.gmra.mrb[0].mxu0 %v1487
        %v6649 = vpop.f32.mrb[0].mxu0
        %v6650 = vadd.f32 %v6537, %v6649
        %v6651 = vpop.f32.mrb[0].mxu0
        %v6652 = vadd.f32 %v6539, %v6651
        %v6653 = vpop.f32.mrb[0].mxu0
        %v6654 = vadd.f32 %v6541, %v6653
        %v6655 = vpop.f32.mrb[0].mxu0
        %v6656 = vadd.f32 %v6543, %v6655
        %6657 = vmatprep.mubr.bf16.mxu0 %v1494
        %6658 = vmatmul.mubr.bf16.gmra.mrb[0].mxu0 %v1493
        %v6659 = vpop.f32.mrb[0].mxu0
        %v6660 = vadd.f32 %v6547, %v6659
        %v6661 = vpop.f32.mrb[0].mxu0
        %v6662 = vadd.f32 %v6549, %v6661
        %v6663 = vpop.f32.mrb[0].mxu0
        %v6664 = vadd.f32 %v6551, %v6663
        %v6665 = vpop.f32.mrb[0].mxu0
        %v6666 = vadd.f32 %v6553, %v6665
        %6667 = vmatprep.mubr.bf16.mxu0 %v1500
        %6668 = vmatmul.mubr.bf16.gmra.mrb[0].mxu0 %v1499
        %v6669 = vpop.f32.mrb[0].mxu0
        %v6670 = vadd.f32 %v6557, %v6669
        %v6671 = vpop.f32.mrb[0].mxu0
        %v6672 = vadd.f32 %v6559, %v6671
        %v6673 = vpop.f32.mrb[0].mxu0
        %v6674 = vadd.f32 %v6561, %v6673
        %v6675 = vpop.f32.mrb[0].mxu0
        %v6676 = vadd.f32 %v6563, %v6675
        %6677 = vmatprep.mubr.bf16.mxu0 %v1506
        %6678 = vmatmul.mubr.bf16.gmra.mrb[0].mxu0 %v1505
        %v6679 = vpop.f32.mrb[0].mxu0
        %v6680 = vadd.f32 %v6567, %v6679
        %v6681 = vpop.f32.mrb[0].mxu0
        %v6682 = vadd.f32 %v6569, %v6681
        %v6683 = vpop.f32.mrb[0].mxu0
        %v6684 = vadd.f32 %v6571, %v6683
        %v6685 = vpop.f32.mrb[0].mxu0
        %v6686 = vadd.f32 %v6573, %v6685
        %6687 = vmatprep.mubr.bf16.mxu0 %v1512
        %6688 = vmatmul.mubr.bf16.gmra.mrb[0].mxu0 %v1511
        %v6689 = vpop.f32.mrb[0].mxu0
        %v6690 = vadd.f32 %v6577, %v6689
        %v6691 = vpop.f32.mrb[0].mxu0
        %v6692 = vadd.f32 %v6579, %v6691
        %v6693 = vpop.f32.mrb[0].mxu0
        %v6694 = vadd.f32 %v6581, %v6693
        %v6695 = vpop.f32.mrb[0].mxu0
        %v6696 = vadd.f32 %v6583, %v6695
        %6697 = vmatprep.mubr.bf16.mxu0 %v1518
        %6698 = vmatmul.mubr.bf16.gmra.mrb[0].mxu0 %v1517
        %v6699 = vpop.f32.mrb[0].mxu0
        %v6700 = vadd.f32 %v6587, %v6699
        %v6701 = vpop.f32.mrb[0].mxu0
        %v6702 = vadd.f32 %v6589, %v6701
        %v6703 = vpop.f32.mrb[0].mxu0
        %v6704 = vadd.f32 %v6591, %v6703
        %v6705 = vpop.f32.mrb[0].mxu0
        %v6706 = vadd.f32 %v6593, %v6705
        %6707 = vmatprep.mubr.bf16.mxu0 %v1524
        %6708 = vmatmul.mubr.bf16.gmra.mrb[0].mxu0 %v1523
        %v6709 = vpop.f32.mrb[0].mxu0
        %v6710 = vadd.f32 %v6597, %v6709
        %v6711 = vpop.f32.mrb[0].mxu0
        %v6712 = vadd.f32 %v6599, %v6711
        %v6713 = vpop.f32.mrb[0].mxu0
        %v6714 = vadd.f32 %v6601, %v6713
        %v6715 = vpop.f32.mrb[0].mxu0
        %v6716 = vadd.f32 %v6603, %v6715
        %6717 = vmatprep.mubr.bf16.mxu0 %v1530
        %6718 = vmatmul.mubr.bf16.gmra.mrb[0].mxu0 %v1529
        %v6719 = vpop.f32.mrb[0].mxu0
        %v6720 = vadd.f32 %v6607, %v6719
        %v6721 = vpop.f32.mrb[0].mxu0
        %v6722 = vadd.f32 %v6609, %v6721
        %v6723 = vpop.f32.mrb[0].mxu0
        %v6724 = vadd.f32 %v6611, %v6723
        %v6725 = vpop.f32.mrb[0].mxu0
        %v6726 = vadd.f32 %v6613, %v6725
        %6727 = vdwg.mxu0
        %6728 = vmatprep.subr.bf16.mxu0 %v6119
        %6729 = vmatpush1.bf16.msra.mxu0 %v6118
        %6730 = vmatprep.subr.bf16.mxu0 %v6125
        %6731 = vmatpush1.bf16.msra.mxu0 %v6124
        %6732 = vmatprep.subr.bf16.mxu0 %v6131
        %6733 = vmatpush1.bf16.msra.mxu0 %v6130
        %6734 = vmatprep.subr.bf16.mxu0 %v6137
        %6735 = vmatpush1.bf16.msra.mxu0 %v6136
        %6736 = vmatprep.subr.bf16.mxu0 %v6143
        %6737 = vmatpush1.bf16.msra.mxu0 %v6142
        %6738 = vmatprep.subr.bf16.mxu0 %v6149
        %6739 = vmatpush1.bf16.msra.mxu0 %v6148
        %6740 = vmatprep.subr.bf16.mxu0 %v6155
        %6741 = vmatpush1.bf16.msra.mxu0 %v6154
        %6742 = vmatprep.subr.bf16.mxu0 %v6161
        %6743 = vmatpush1.bf16.msra.mxu0 %v6160
        %6744 = vmatprep.subr.bf16.mxu0 %v6167
        %6745 = vmatpush1.bf16.msra.mxu0 %v6166
        %6746 = vmatprep.subr.bf16.mxu0 %v6173
        %6747 = vmatpush1.bf16.msra.mxu0 %v6172
        %6748 = vmatprep.subr.bf16.mxu0 %v6179
        %6749 = vmatpush1.bf16.msra.mxu0 %v6178
        %6750 = vmatprep.subr.bf16.mxu0 %v6185
        %6751 = vmatpush1.bf16.msra.mxu0 %v6184
        %6752 = vmatprep.subr.bf16.mxu0 %v6191
        %6753 = vmatpush1.bf16.msra.mxu0 %v6190
        %6754 = vmatprep.subr.bf16.mxu0 %v6197
        %6755 = vmatpush1.bf16.msra.mxu0 %v6196
        %6756 = vmatprep.subr.bf16.mxu0 %v6203
        %6757 = vmatpush1.bf16.msra.mxu0 %v6202
        %6758 = vmatprep.subr.bf16.mxu0 %v6209
        %6759 = vmatpush1.bf16.msra.mxu0 %v6208
        %6760 = vmatprep.mubr.bf16.mxu0 %v1490
        %6761 = vmatmul.mubr.bf16.gmra.mrb[0].mxu0 %v1489
        %v6762 = vpop.f32.mrb[0].mxu0
        %v6763 = vadd.f32 %v6650, %v6762
        %v6764 = vpop.f32.mrb[0].mxu0
        %v6765 = vadd.f32 %v6652, %v6764
        %v6766 = vpop.f32.mrb[0].mxu0
        %v6767 = vadd.f32 %v6654, %v6766
        %v6768 = vpop.f32.mrb[0].mxu0
        %v6769 = vadd.f32 %v6656, %v6768
        %6770 = vmatprep.mubr.bf16.mxu0 %v1496
        %6771 = vmatmul.mubr.bf16.gmra.mrb[0].mxu0 %v1495
        %v6772 = vpop.f32.mrb[0].mxu0
        %v6773 = vadd.f32 %v6660, %v6772
        %v6774 = vpop.f32.mrb[0].mxu0
        %v6775 = vadd.f32 %v6662, %v6774
        %v6776 = vpop.f32.mrb[0].mxu0
        %v6777 = vadd.f32 %v6664, %v6776
        %v6778 = vpop.f32.mrb[0].mxu0
        %v6779 = vadd.f32 %v6666, %v6778
        %6780 = vmatprep.mubr.bf16.mxu0 %v1502
        %6781 = vmatmul.mubr.bf16.gmra.mrb[0].mxu0 %v1501
        %v6782 = vpop.f32.mrb[0].mxu0
        %v6783 = vadd.f32 %v6670, %v6782
        %v6784 = vpop.f32.mrb[0].mxu0
        %v6785 = vadd.f32 %v6672, %v6784
        %v6786 = vpop.f32.mrb[0].mxu0
        %v6787 = vadd.f32 %v6674, %v6786
        %v6788 = vpop.f32.mrb[0].mxu0
        %v6789 = vadd.f32 %v6676, %v6788
        %6790 = vmatprep.mubr.bf16.mxu0 %v1508
        %6791 = vmatmul.mubr.bf16.gmra.mrb[0].mxu0 %v1507
        %v6792 = vpop.f32.mrb[0].mxu0
        %v6793 = vadd.f32 %v6680, %v6792
        %v6794 = vpop.f32.mrb[0].mxu0
        %v6795 = vadd.f32 %v6682, %v6794
        %v6796 = vpop.f32.mrb[0].mxu0
        %v6797 = vadd.f32 %v6684, %v6796
        %v6798 = vpop.f32.mrb[0].mxu0
        %v6799 = vadd.f32 %v6686, %v6798
        %6800 = vmatprep.mubr.bf16.mxu0 %v1514
        %6801 = vmatmul.mubr.bf16.gmra.mrb[0].mxu0 %v1513
        %v6802 = vpop.f32.mrb[0].mxu0
        %v6803 = vadd.f32 %v6690, %v6802
        %v6804 = vpop.f32.mrb[0].mxu0
        %v6805 = vadd.f32 %v6692, %v6804
        %v6806 = vpop.f32.mrb[0].mxu0
        %v6807 = vadd.f32 %v6694, %v6806
        %v6808 = vpop.f32.mrb[0].mxu0
        %v6809 = vadd.f32 %v6696, %v6808
        %6810 = vmatprep.mubr.bf16.mxu0 %v1520
        %6811 = vmatmul.mubr.bf16.gmra.mrb[0].mxu0 %v1519
        %v6812 = vpop.f32.mrb[0].mxu0
        %v6813 = vadd.f32 %v6700, %v6812
        %v6814 = vpop.f32.mrb[0].mxu0
        %v6815 = vadd.f32 %v6702, %v6814
        %v6816 = vpop.f32.mrb[0].mxu0
        %v6817 = vadd.f32 %v6704, %v6816
        %v6818 = vpop.f32.mrb[0].mxu0
        %v6819 = vadd.f32 %v6706, %v6818
        %6820 = vmatprep.mubr.bf16.mxu0 %v1526
        %6821 = vmatmul.mubr.bf16.gmra.mrb[0].mxu0 %v1525
        %v6822 = vpop.f32.mrb[0].mxu0
        %v6823 = vadd.f32 %v6710, %v6822
        %v6824 = vpop.f32.mrb[0].mxu0
        %v6825 = vadd.f32 %v6712, %v6824
        %v6826 = vpop.f32.mrb[0].mxu0
        %v6827 = vadd.f32 %v6714, %v6826
        %v6828 = vpop.f32.mrb[0].mxu0
        %v6829 = vadd.f32 %v6716, %v6828
        %6830 = vmatprep.mubr.bf16.mxu0 %v1532
        %6831 = vmatmul.mubr.bf16.gmra.mrb[0].mxu0 %v1531
        %v6832 = vpop.f32.mrb[0].mxu0
        %v6833 = vadd.f32 %v6720, %v6832
        %v6834 = vpop.f32.mrb[0].mxu0
        %v6835 = vadd.f32 %v6722, %v6834
        %v6836 = vpop.f32.mrb[0].mxu0
        %v6837 = vadd.f32 %v6724, %v6836
        %v6838 = vpop.f32.mrb[0].mxu0
        %v6839 = vadd.f32 %v6726, %v6838
        %6840 = vdwg.mxu0
        %6841 = vmatprep.subr.bf16.mxu0 %v5929
        %6842 = vmatpush1.bf16.msra.mxu0 %v5928
        %6843 = vmatprep.subr.bf16.mxu0 %v5935
        %6844 = vmatpush1.bf16.msra.mxu0 %v5934
        %6845 = vmatprep.subr.bf16.mxu0 %v5941
        %6846 = vmatpush1.bf16.msra.mxu0 %v5940
        %6847 = vmatprep.subr.bf16.mxu0 %v5947
        %6848 = vmatpush1.bf16.msra.mxu0 %v5946
        %6849 = vmatprep.subr.bf16.mxu0 %v5953
        %6850 = vmatpush1.bf16.msra.mxu0 %v5952
        %6851 = vmatprep.subr.bf16.mxu0 %v5959
        %6852 = vmatpush1.bf16.msra.mxu0 %v5958
        %6853 = vmatprep.subr.bf16.mxu0 %v5965
        %6854 = vmatpush1.bf16.msra.mxu0 %v5964
        %6855 = vmatprep.subr.bf16.mxu0 %v5971
        %6856 = vmatpush1.bf16.msra.mxu0 %v5970
        %6857 = vmatprep.subr.bf16.mxu0 %v5977
        %6858 = vmatpush1.bf16.msra.mxu0 %v5976
        %6859 = vmatprep.subr.bf16.mxu0 %v5983
        %6860 = vmatpush1.bf16.msra.mxu0 %v5982
        %6861 = vmatprep.subr.bf16.mxu0 %v5989
        %6862 = vmatpush1.bf16.msra.mxu0 %v5988
        %6863 = vmatprep.subr.bf16.mxu0 %v5995
        %6864 = vmatpush1.bf16.msra.mxu0 %v5994
        %6865 = vmatprep.subr.bf16.mxu0 %v6001
        %6866 = vmatpush1.bf16.msra.mxu0 %v6000
        %6867 = vmatprep.subr.bf16.mxu0 %v6007
        %6868 = vmatpush1.bf16.msra.mxu0 %v6006
        %6869 = vmatprep.subr.bf16.mxu0 %v6013
        %6870 = vmatpush1.bf16.msra.mxu0 %v6012
        %6871 = vmatprep.subr.bf16.mxu0 %v6019
        %6872 = vmatpush1.bf16.msra.mxu0 %v6018
        %6873 = vmatprep.mubr.bf16.mxu0 %v1486
        %6874 = vmatmul.mubr.bf16.gmra.mrb[0].mxu0 %v1485
        %v6875 = vpop.f32.mrb[0].mxu0
        %v6876 = vadd.f32 %v5043, %v6875
        %v6877 = vpop.f32.mrb[0].mxu0
        %v6878 = vadd.f32 %v5047, %v6877
        %v6879 = vpop.f32.mrb[0].mxu0
        %v6880 = vadd.f32 %v5043, %v6879
        %v6881 = vpop.f32.mrb[0].mxu0
        %v6882 = vadd.f32 %v5047, %v6881
        %6883 = vmatprep.mubr.bf16.mxu0 %v1492
        %6884 = vmatmul.mubr.bf16.gmra.mrb[0].mxu0 %v1491
        %v6885 = vpop.f32.mrb[0].mxu0
        %v6886 = vadd.f32 %v5043, %v6885
        %v6887 = vpop.f32.mrb[0].mxu0
        %v6888 = vadd.f32 %v5047, %v6887
        %v6889 = vpop.f32.mrb[0].mxu0
        %v6890 = vadd.f32 %v5043, %v6889
        %v6891 = vpop.f32.mrb[0].mxu0
        %v6892 = vadd.f32 %v5047, %v6891
        %6893 = vmatprep.mubr.bf16.mxu0 %v1498
        %6894 = vmatmul.mubr.bf16.gmra.mrb[0].mxu0 %v1497
        %v6895 = vpop.f32.mrb[0].mxu0
        %v6896 = vadd.f32 %v5043, %v6895
        %v6897 = vpop.f32.mrb[0].mxu0
        %v6898 = vadd.f32 %v5047, %v6897
        %v6899 = vpop.f32.mrb[0].mxu0
        %v6900 = vadd.f32 %v5043, %v6899
        %v6901 = vpop.f32.mrb[0].mxu0
        %v6902 = vadd.f32 %v5047, %v6901
        %6903 = vmatprep.mubr.bf16.mxu0 %v1504
        %6904 = vmatmul.mubr.bf16.gmra.mrb[0].mxu0 %v1503
        %v6905 = vpop.f32.mrb[0].mxu0
        %v6906 = vadd.f32 %v5043, %v6905
        %v6907 = vpop.f32.mrb[0].mxu0
        %v6908 = vadd.f32 %v5047, %v6907
        %v6909 = vpop.f32.mrb[0].mxu0
        %v6910 = vadd.f32 %v5043, %v6909
        %v6911 = vpop.f32.mrb[0].mxu0
        %v6912 = vadd.f32 %v5047, %v6911
        %6913 = vmatprep.mubr.bf16.mxu0 %v1510
        %6914 = vmatmul.mubr.bf16.gmra.mrb[0].mxu0 %v1509
        %v6915 = vpop.f32.mrb[0].mxu0
        %v6916 = vadd.f32 %v5043, %v6915
        %v6917 = vpop.f32.mrb[0].mxu0
        %v6918 = vadd.f32 %v5047, %v6917
        %v6919 = vpop.f32.mrb[0].mxu0
        %v6920 = vadd.f32 %v5043, %v6919
        %v6921 = vpop.f32.mrb[0].mxu0
        %v6922 = vadd.f32 %v5047, %v6921
        %6923 = vmatprep.mubr.bf16.mxu0 %v1516
        %6924 = vmatmul.mubr.bf16.gmra.mrb[0].mxu0 %v1515
        %v6925 = vpop.f32.mrb[0].mxu0
        %v6926 = vadd.f32 %v5043, %v6925
        %v6927 = vpop.f32.mrb[0].mxu0
        %v6928 = vadd.f32 %v5047, %v6927
        %v6929 = vpop.f32.mrb[0].mxu0
        %v6930 = vadd.f32 %v5043, %v6929
        %v6931 = vpop.f32.mrb[0].mxu0
        %v6932 = vadd.f32 %v5047, %v6931
        %6933 = vmatprep.mubr.bf16.mxu0 %v1522
        %6934 = vmatmul.mubr.bf16.gmra.mrb[0].mxu0 %v1521
        %v6935 = vpop.f32.mrb[0].mxu0
        %v6936 = vadd.f32 %v5043, %v6935
        %v6937 = vpop.f32.mrb[0].mxu0
        %v6938 = vadd.f32 %v5047, %v6937
        %v6939 = vpop.f32.mrb[0].mxu0
        %v6940 = vadd.f32 %v5043, %v6939
        %v6941 = vpop.f32.mrb[0].mxu0
        %v6942 = vadd.f32 %v5047, %v6941
        %6943 = vmatprep.mubr.bf16.mxu0 %v1528
        %6944 = vmatmul.mubr.bf16.gmra.mrb[0].mxu0 %v1527
        %v6945 = vpop.f32.mrb[0].mxu0
        %v6946 = vadd.f32 %v5043, %v6945
        %v6947 = vpop.f32.mrb[0].mxu0
        %v6948 = vadd.f32 %v5047, %v6947
        %v6949 = vpop.f32.mrb[0].mxu0
        %v6950 = vadd.f32 %v5043, %v6949
        %v6951 = vpop.f32.mrb[0].mxu0
        %v6952 = vadd.f32 %v5047, %v6951
        %6953 = vdwg.mxu0
        %6954 = vmatprep.subr.bf16.mxu0 %v6025
        %6955 = vmatpush1.bf16.msra.mxu0 %v6024
        %6956 = vmatprep.subr.bf16.mxu0 %v6031
        %6957 = vmatpush1.bf16.msra.mxu0 %v6030
        %6958 = vmatprep.subr.bf16.mxu0 %v6037
        %6959 = vmatpush1.bf16.msra.mxu0 %v6036
        %6960 = vmatprep.subr.bf16.mxu0 %v6043
        %6961 = vmatpush1.bf16.msra.mxu0 %v6042
        %6962 = vmatprep.subr.bf16.mxu0 %v6049
        %6963 = vmatpush1.bf16.msra.mxu0 %v6048
        %6964 = vmatprep.subr.bf16.mxu0 %v6055
        %6965 = vmatpush1.bf16.msra.mxu0 %v6054
        %6966 = vmatprep.subr.bf16.mxu0 %v6061
        %6967 = vmatpush1.bf16.msra.mxu0 %v6060
        %6968 = vmatprep.subr.bf16.mxu0 %v6067
        %6969 = vmatpush1.bf16.msra.mxu0 %v6066
        %6970 = vmatprep.subr.bf16.mxu0 %v6073
        %6971 = vmatpush1.bf16.msra.mxu0 %v6072
        %6972 = vmatprep.subr.bf16.mxu0 %v6079
        %6973 = vmatpush1.bf16.msra.mxu0 %v6078
        %6974 = vmatprep.subr.bf16.mxu0 %v6085
        %6975 = vmatpush1.bf16.msra.mxu0 %v6084
        %6976 = vmatprep.subr.bf16.mxu0 %v6091
        %6977 = vmatpush1.bf16.msra.mxu0 %v6090
        %6978 = vmatprep.subr.bf16.mxu0 %v6097
        %6979 = vmatpush1.bf16.msra.mxu0 %v6096
        %6980 = vmatprep.subr.bf16.mxu0 %v6103
        %6981 = vmatpush1.bf16.msra.mxu0 %v6102
        %6982 = vmatprep.subr.bf16.mxu0 %v6109
        %6983 = vmatpush1.bf16.msra.mxu0 %v6108
        %6984 = vmatprep.subr.bf16.mxu0 %v6115
        %6985 = vmatpush1.bf16.msra.mxu0 %v6114
        %6986 = vmatprep.mubr.bf16.mxu0 %v1488
        %6987 = vmatmul.mubr.bf16.gmra.mrb[0].mxu0 %v1487
        %v6988 = vpop.f32.mrb[0].mxu0
        %v6989 = vadd.f32 %v6876, %v6988
        %v6990 = vpop.f32.mrb[0].mxu0
        %v6991 = vadd.f32 %v6878, %v6990
        %v6992 = vpop.f32.mrb[0].mxu0
        %v6993 = vadd.f32 %v6880, %v6992
        %v6994 = vpop.f32.mrb[0].mxu0
        %v6995 = vadd.f32 %v6882, %v6994
        %6996 = vmatprep.mubr.bf16.mxu0 %v1494
        %6997 = vmatmul.mubr.bf16.gmra.mrb[0].mxu0 %v1493
        %v6998 = vpop.f32.mrb[0].mxu0
        %v6999 = vadd.f32 %v6886, %v6998
        %v7000 = vpop.f32.mrb[0].mxu0
        %v7001 = vadd.f32 %v6888, %v7000
        %v7002 = vpop.f32.mrb[0].mxu0
        %v7003 = vadd.f32 %v6890, %v7002
        %v7004 = vpop.f32.mrb[0].mxu0
        %v7005 = vadd.f32 %v6892, %v7004
        %7006 = vmatprep.mubr.bf16.mxu0 %v1500
        %7007 = vmatmul.mubr.bf16.gmra.mrb[0].mxu0 %v1499
        %v7008 = vpop.f32.mrb[0].mxu0
        %v7009 = vadd.f32 %v6896, %v7008
        %v7010 = vpop.f32.mrb[0].mxu0
        %v7011 = vadd.f32 %v6898, %v7010
        %v7012 = vpop.f32.mrb[0].mxu0
        %v7013 = vadd.f32 %v6900, %v7012
        %v7014 = vpop.f32.mrb[0].mxu0
        %v7015 = vadd.f32 %v6902, %v7014
        %7016 = vmatprep.mubr.bf16.mxu0 %v1506
        %7017 = vmatmul.mubr.bf16.gmra.mrb[0].mxu0 %v1505
        %v7018 = vpop.f32.mrb[0].mxu0
        %v7019 = vadd.f32 %v6906, %v7018
        %v7020 = vpop.f32.mrb[0].mxu0
        %v7021 = vadd.f32 %v6908, %v7020
        %v7022 = vpop.f32.mrb[0].mxu0
        %v7023 = vadd.f32 %v6910, %v7022
        %v7024 = vpop.f32.mrb[0].mxu0
        %v7025 = vadd.f32 %v6912, %v7024
        %7026 = vmatprep.mubr.bf16.mxu0 %v1512
        %7027 = vmatmul.mubr.bf16.gmra.mrb[0].mxu0 %v1511
        %v7028 = vpop.f32.mrb[0].mxu0
        %v7029 = vadd.f32 %v6916, %v7028
        %v7030 = vpop.f32.mrb[0].mxu0
        %v7031 = vadd.f32 %v6918, %v7030
        %v7032 = vpop.f32.mrb[0].mxu0
        %v7033 = vadd.f32 %v6920, %v7032
        %v7034 = vpop.f32.mrb[0].mxu0
        %v7035 = vadd.f32 %v6922, %v7034
        %7036 = vmatprep.mubr.bf16.mxu0 %v1518
        %7037 = vmatmul.mubr.bf16.gmra.mrb[0].mxu0 %v1517
        %v7038 = vpop.f32.mrb[0].mxu0
        %v7039 = vadd.f32 %v6926, %v7038
        %v7040 = vpop.f32.mrb[0].mxu0
        %v7041 = vadd.f32 %v6928, %v7040
        %v7042 = vpop.f32.mrb[0].mxu0
        %v7043 = vadd.f32 %v6930, %v7042
        %v7044 = vpop.f32.mrb[0].mxu0
        %v7045 = vadd.f32 %v6932, %v7044
        %7046 = vmatprep.mubr.bf16.mxu0 %v1524
        %7047 = vmatmul.mubr.bf16.gmra.mrb[0].mxu0 %v1523
        %v7048 = vpop.f32.mrb[0].mxu0
        %v7049 = vadd.f32 %v6936, %v7048
        %v7050 = vpop.f32.mrb[0].mxu0
        %v7051 = vadd.f32 %v6938, %v7050
        %v7052 = vpop.f32.mrb[0].mxu0
        %v7053 = vadd.f32 %v6940, %v7052
        %v7054 = vpop.f32.mrb[0].mxu0
        %v7055 = vadd.f32 %v6942, %v7054
        %7056 = vmatprep.mubr.bf16.mxu0 %v1530
        %7057 = vmatmul.mubr.bf16.gmra.mrb[0].mxu0 %v1529
        %v7058 = vpop.f32.mrb[0].mxu0
        %v7059 = vadd.f32 %v6946, %v7058
        %v7060 = vpop.f32.mrb[0].mxu0
        %v7061 = vadd.f32 %v6948, %v7060
        %v7062 = vpop.f32.mrb[0].mxu0
        %v7063 = vadd.f32 %v6950, %v7062
        %v7064 = vpop.f32.mrb[0].mxu0
        %v7065 = vadd.f32 %v6952, %v7064
        %7066 = vdwg.mxu0
        %7067 = vmatprep.subr.bf16.mxu0 %v6121
        %7068 = vmatpush1.bf16.msra.mxu0 %v6120
        %7069 = vmatprep.subr.bf16.mxu0 %v6127
        %7070 = vmatpush1.bf16.msra.mxu0 %v6126
        %7071 = vmatprep.subr.bf16.mxu0 %v6133
        %7072 = vmatpush1.bf16.msra.mxu0 %v6132
        %7073 = vmatprep.subr.bf16.mxu0 %v6139
        %7074 = vmatpush1.bf16.msra.mxu0 %v6138
        %7075 = vmatprep.subr.bf16.mxu0 %v6145
        %7076 = vmatpush1.bf16.msra.mxu0 %v6144
        %7077 = vmatprep.subr.bf16.mxu0 %v6151
        %7078 = vmatpush1.bf16.msra.mxu0 %v6150
        %7079 = vmatprep.subr.bf16.mxu0 %v6157
        %7080 = vmatpush1.bf16.msra.mxu0 %v6156
        %7081 = vmatprep.subr.bf16.mxu0 %v6163
        %7082 = vmatpush1.bf16.msra.mxu0 %v6162
        %7083 = vmatprep.subr.bf16.mxu0 %v6169
        %7084 = vmatpush1.bf16.msra.mxu0 %v6168
        %7085 = vmatprep.subr.bf16.mxu0 %v6175
        %7086 = vmatpush1.bf16.msra.mxu0 %v6174
        %7087 = vmatprep.subr.bf16.mxu0 %v6181
        %7088 = vmatpush1.bf16.msra.mxu0 %v6180
        %7089 = vmatprep.subr.bf16.mxu0 %v6187
        %7090 = vmatpush1.bf16.msra.mxu0 %v6186
        %7091 = vmatprep.subr.bf16.mxu0 %v6193
        %7092 = vmatpush1.bf16.msra.mxu0 %v6192
        %7093 = vmatprep.subr.bf16.mxu0 %v6199
        %7094 = vmatpush1.bf16.msra.mxu0 %v6198
        %7095 = vmatprep.subr.bf16.mxu0 %v6205
        %7096 = vmatpush1.bf16.msra.mxu0 %v6204
        %7097 = vmatprep.subr.bf16.mxu0 %v6211
        %7098 = vmatpush1.bf16.msra.mxu0 %v6210
        %7099 = vmatprep.mubr.bf16.mxu0 %v1490
        %7100 = vmatmul.mubr.bf16.gmra.mrb[0].mxu0 %v1489
        %v7101 = vpop.f32.mrb[0].mxu0
        %v7102 = vadd.f32 %v6989, %v7101
        %v7103 = vpop.f32.mrb[0].mxu0
        %v7104 = vadd.f32 %v6991, %v7103
        %v7105 = vpop.f32.mrb[0].mxu0
        %v7106 = vadd.f32 %v6993, %v7105
        %v7107 = vpop.f32.mrb[0].mxu0
        %v7108 = vadd.f32 %v6995, %v7107
        %7109 = vmatprep.mubr.bf16.mxu0 %v1496
        %7110 = vmatmul.mubr.bf16.gmra.mrb[0].mxu0 %v1495
        %v7111 = vpop.f32.mrb[0].mxu0
        %v7112 = vadd.f32 %v6999, %v7111
        %v7113 = vpop.f32.mrb[0].mxu0
        %v7114 = vadd.f32 %v7001, %v7113
        %v7115 = vpop.f32.mrb[0].mxu0
        %v7116 = vadd.f32 %v7003, %v7115
        %v7117 = vpop.f32.mrb[0].mxu0
        %v7118 = vadd.f32 %v7005, %v7117
        %7119 = vmatprep.mubr.bf16.mxu0 %v1502
        %7120 = vmatmul.mubr.bf16.gmra.mrb[0].mxu0 %v1501
        %v7121 = vpop.f32.mrb[0].mxu0
        %v7122 = vadd.f32 %v7009, %v7121
        %v7123 = vpop.f32.mrb[0].mxu0
        %v7124 = vadd.f32 %v7011, %v7123
        %v7125 = vpop.f32.mrb[0].mxu0
        %v7126 = vadd.f32 %v7013, %v7125
        %v7127 = vpop.f32.mrb[0].mxu0
        %v7128 = vadd.f32 %v7015, %v7127
        %7129 = vmatprep.mubr.bf16.mxu0 %v1508
        %7130 = vmatmul.mubr.bf16.gmra.mrb[0].mxu0 %v1507
        %v7131 = vpop.f32.mrb[0].mxu0
        %v7132 = vadd.f32 %v7019, %v7131
        %v7133 = vpop.f32.mrb[0].mxu0
        %v7134 = vadd.f32 %v7021, %v7133
        %v7135 = vpop.f32.mrb[0].mxu0
        %v7136 = vadd.f32 %v7023, %v7135
        %v7137 = vpop.f32.mrb[0].mxu0
        %v7138 = vadd.f32 %v7025, %v7137
        %7139 = vmatprep.mubr.bf16.mxu0 %v1514
        %7140 = vmatmul.mubr.bf16.gmra.mrb[0].mxu0 %v1513
        %v7141 = vpop.f32.mrb[0].mxu0
        %v7142 = vadd.f32 %v7029, %v7141
        %v7143 = vpop.f32.mrb[0].mxu0
        %v7144 = vadd.f32 %v7031, %v7143
        %v7145 = vpop.f32.mrb[0].mxu0
        %v7146 = vadd.f32 %v7033, %v7145
        %v7147 = vpop.f32.mrb[0].mxu0
        %v7148 = vadd.f32 %v7035, %v7147
        %7149 = vmatprep.mubr.bf16.mxu0 %v1520
        %7150 = vmatmul.mubr.bf16.gmra.mrb[0].mxu0 %v1519
        %v7151 = vpop.f32.mrb[0].mxu0
        %v7152 = vadd.f32 %v7039, %v7151
        %v7153 = vpop.f32.mrb[0].mxu0
        %v7154 = vadd.f32 %v7041, %v7153
        %v7155 = vpop.f32.mrb[0].mxu0
        %v7156 = vadd.f32 %v7043, %v7155
        %v7157 = vpop.f32.mrb[0].mxu0
        %v7158 = vadd.f32 %v7045, %v7157
        %7159 = vmatprep.mubr.bf16.mxu0 %v1526
        %7160 = vmatmul.mubr.bf16.gmra.mrb[0].mxu0 %v1525
        %v7161 = vpop.f32.mrb[0].mxu0
        %v7162 = vadd.f32 %v7049, %v7161
        %v7163 = vpop.f32.mrb[0].mxu0
        %v7164 = vadd.f32 %v7051, %v7163
        %v7165 = vpop.f32.mrb[0].mxu0
        %v7166 = vadd.f32 %v7053, %v7165
        %v7167 = vpop.f32.mrb[0].mxu0
        %v7168 = vadd.f32 %v7055, %v7167
        %7169 = vmatprep.mubr.bf16.mxu0 %v1532
        %7170 = vmatmul.mubr.bf16.gmra.mrb[0].mxu0 %v1531
        %v7171 = vpop.f32.mrb[0].mxu0
        %v7172 = vadd.f32 %v7059, %v7171
        %v7173 = vpop.f32.mrb[0].mxu0
        %v7174 = vadd.f32 %v7061, %v7173
        %v7175 = vpop.f32.mrb[0].mxu0
        %v7176 = vadd.f32 %v7063, %v7175
        %v7177 = vpop.f32.mrb[0].mxu0
        %v7178 = vadd.f32 %v7065, %v7177
        %7179 = vdwg.mxu0
        %7180 = vmatprep.subr.bf16.mxu0 %v5931
        %7181 = vmatpush1.bf16.msra.mxu0 %v5930
        %7182 = vmatprep.subr.bf16.mxu0 %v5937
        %7183 = vmatpush1.bf16.msra.mxu0 %v5936
        %7184 = vmatprep.subr.bf16.mxu0 %v5943
        %7185 = vmatpush1.bf16.msra.mxu0 %v5942
        %7186 = vmatprep.subr.bf16.mxu0 %v5949
        %7187 = vmatpush1.bf16.msra.mxu0 %v5948
        %7188 = vmatprep.subr.bf16.mxu0 %v5955
        %7189 = vmatpush1.bf16.msra.mxu0 %v5954
        %7190 = vmatprep.subr.bf16.mxu0 %v5961
        %7191 = vmatpush1.bf16.msra.mxu0 %v5960
        %7192 = vmatprep.subr.bf16.mxu0 %v5967
        %7193 = vmatpush1.bf16.msra.mxu0 %v5966
        %7194 = vmatprep.subr.bf16.mxu0 %v5973
        %7195 = vmatpush1.bf16.msra.mxu0 %v5972
        %7196 = vmatprep.subr.bf16.mxu0 %v5979
        %7197 = vmatpush1.bf16.msra.mxu0 %v5978
        %7198 = vmatprep.subr.bf16.mxu0 %v5985
        %7199 = vmatpush1.bf16.msra.mxu0 %v5984
        %7200 = vmatprep.subr.bf16.mxu0 %v5991
        %7201 = vmatpush1.bf16.msra.mxu0 %v5990
        %7202 = vmatprep.subr.bf16.mxu0 %v5997
        %7203 = vmatpush1.bf16.msra.mxu0 %v5996
        %7204 = vmatprep.subr.bf16.mxu0 %v6003
        %7205 = vmatpush1.bf16.msra.mxu0 %v6002
        %7206 = vmatprep.subr.bf16.mxu0 %v6009
        %7207 = vmatpush1.bf16.msra.mxu0 %v6008
        %7208 = vmatprep.subr.bf16.mxu0 %v6015
        %7209 = vmatpush1.bf16.msra.mxu0 %v6014
        %7210 = vmatprep.subr.bf16.mxu0 %v6021
        %7211 = vmatpush1.bf16.msra.mxu0 %v6020
        %7212 = vmatprep.mubr.bf16.mxu0 %v1486
        %7213 = vmatmul.mubr.bf16.gmra.mrb[0].mxu0 %v1485
        %v7214 = vpop.f32.mrb[0].mxu0
        %v7215 = vadd.f32 %v5051, %v7214
        %v7216 = vpop.f32.mrb[0].mxu0
        %v7217 = vadd.f32 %v5055, %v7216
        %v7218 = vpop.f32.mrb[0].mxu0
        %v7219 = vadd.f32 %v5051, %v7218
        %v7220 = vpop.f32.mrb[0].mxu0
        %v7221 = vadd.f32 %v5055, %v7220
        %7222 = vmatprep.mubr.bf16.mxu0 %v1492
        %7223 = vmatmul.mubr.bf16.gmra.mrb[0].mxu0 %v1491
        %v7224 = vpop.f32.mrb[0].mxu0
        %v7225 = vadd.f32 %v5051, %v7224
        %v7226 = vpop.f32.mrb[0].mxu0
        %v7227 = vadd.f32 %v5055, %v7226
        %v7228 = vpop.f32.mrb[0].mxu0
        %v7229 = vadd.f32 %v5051, %v7228
        %v7230 = vpop.f32.mrb[0].mxu0
        %v7231 = vadd.f32 %v5055, %v7230
        %7232 = vmatprep.mubr.bf16.mxu0 %v1498
        %7233 = vmatmul.mubr.bf16.gmra.mrb[0].mxu0 %v1497
        %v7234 = vpop.f32.mrb[0].mxu0
        %v7235 = vadd.f32 %v5051, %v7234
        %v7236 = vpop.f32.mrb[0].mxu0
        %v7237 = vadd.f32 %v5055, %v7236
        %v7238 = vpop.f32.mrb[0].mxu0
        %v7239 = vadd.f32 %v5051, %v7238
        %v7240 = vpop.f32.mrb[0].mxu0
        %v7241 = vadd.f32 %v5055, %v7240
        %7242 = vmatprep.mubr.bf16.mxu0 %v1504
        %7243 = vmatmul.mubr.bf16.gmra.mrb[0].mxu0 %v1503
        %v7244 = vpop.f32.mrb[0].mxu0
        %v7245 = vadd.f32 %v5051, %v7244
        %v7246 = vpop.f32.mrb[0].mxu0
        %v7247 = vadd.f32 %v5055, %v7246
        %v7248 = vpop.f32.mrb[0].mxu0
        %v7249 = vadd.f32 %v5051, %v7248
        %v7250 = vpop.f32.mrb[0].mxu0
        %v7251 = vadd.f32 %v5055, %v7250
        %7252 = vmatprep.mubr.bf16.mxu0 %v1510
        %7253 = vmatmul.mubr.bf16.gmra.mrb[0].mxu0 %v1509
        %v7254 = vpop.f32.mrb[0].mxu0
        %v7255 = vadd.f32 %v5051, %v7254
        %v7256 = vpop.f32.mrb[0].mxu0
        %v7257 = vadd.f32 %v5055, %v7256
        %v7258 = vpop.f32.mrb[0].mxu0
        %v7259 = vadd.f32 %v5051, %v7258
        %v7260 = vpop.f32.mrb[0].mxu0
        %v7261 = vadd.f32 %v5055, %v7260
        %7262 = vmatprep.mubr.bf16.mxu0 %v1516
        %7263 = vmatmul.mubr.bf16.gmra.mrb[0].mxu0 %v1515
        %v7264 = vpop.f32.mrb[0].mxu0
        %v7265 = vadd.f32 %v5051, %v7264
        %v7266 = vpop.f32.mrb[0].mxu0
        %v7267 = vadd.f32 %v5055, %v7266
        %v7268 = vpop.f32.mrb[0].mxu0
        %v7269 = vadd.f32 %v5051, %v7268
        %v7270 = vpop.f32.mrb[0].mxu0
        %v7271 = vadd.f32 %v5055, %v7270
        %7272 = vmatprep.mubr.bf16.mxu0 %v1522
        %7273 = vmatmul.mubr.bf16.gmra.mrb[0].mxu0 %v1521
        %v7274 = vpop.f32.mrb[0].mxu0
        %v7275 = vadd.f32 %v5051, %v7274
        %v7276 = vpop.f32.mrb[0].mxu0
        %v7277 = vadd.f32 %v5055, %v7276
        %v7278 = vpop.f32.mrb[0].mxu0
        %v7279 = vadd.f32 %v5051, %v7278
        %v7280 = vpop.f32.mrb[0].mxu0
        %v7281 = vadd.f32 %v5055, %v7280
        %7282 = vmatprep.mubr.bf16.mxu0 %v1528
        %7283 = vmatmul.mubr.bf16.gmra.mrb[0].mxu0 %v1527
        %v7284 = vpop.f32.mrb[0].mxu0
        %v7285 = vadd.f32 %v5051, %v7284
        %v7286 = vpop.f32.mrb[0].mxu0
        %v7287 = vadd.f32 %v5055, %v7286
        %v7288 = vpop.f32.mrb[0].mxu0
        %v7289 = vadd.f32 %v5051, %v7288
        %v7290 = vpop.f32.mrb[0].mxu0
        %v7291 = vadd.f32 %v5055, %v7290
        %7292 = vdwg.mxu0
        %7293 = vmatprep.subr.bf16.mxu0 %v6027
        %7294 = vmatpush1.bf16.msra.mxu0 %v6026
        %7295 = vmatprep.subr.bf16.mxu0 %v6033
        %7296 = vmatpush1.bf16.msra.mxu0 %v6032
        %7297 = vmatprep.subr.bf16.mxu0 %v6039
        %7298 = vmatpush1.bf16.msra.mxu0 %v6038
        %7299 = vmatprep.subr.bf16.mxu0 %v6045
        %7300 = vmatpush1.bf16.msra.mxu0 %v6044
        %7301 = vmatprep.subr.bf16.mxu0 %v6051
        %7302 = vmatpush1.bf16.msra.mxu0 %v6050
        %7303 = vmatprep.subr.bf16.mxu0 %v6057
        %7304 = vmatpush1.bf16.msra.mxu0 %v6056
        %7305 = vmatprep.subr.bf16.mxu0 %v6063
        %7306 = vmatpush1.bf16.msra.mxu0 %v6062
        %7307 = vmatprep.subr.bf16.mxu0 %v6069
        %7308 = vmatpush1.bf16.msra.mxu0 %v6068
        %7309 = vmatprep.subr.bf16.mxu0 %v6075
        %7310 = vmatpush1.bf16.msra.mxu0 %v6074
        %7311 = vmatprep.subr.bf16.mxu0 %v6081
        %7312 = vmatpush1.bf16.msra.mxu0 %v6080
        %7313 = vmatprep.subr.bf16.mxu0 %v6087
        %7314 = vmatpush1.bf16.msra.mxu0 %v6086
        %7315 = vmatprep.subr.bf16.mxu0 %v6093
        %7316 = vmatpush1.bf16.msra.mxu0 %v6092
        %7317 = vmatprep.subr.bf16.mxu0 %v6099
        %7318 = vmatpush1.bf16.msra.mxu0 %v6098
        %7319 = vmatprep.subr.bf16.mxu0 %v6105
        %7320 = vmatpush1.bf16.msra.mxu0 %v6104
        %7321 = vmatprep.subr.bf16.mxu0 %v6111
        %7322 = vmatpush1.bf16.msra.mxu0 %v6110
        %7323 = vmatprep.subr.bf16.mxu0 %v6117
        %7324 = vmatpush1.bf16.msra.mxu0 %v6116
        %7325 = vmatprep.mubr.bf16.mxu0 %v1488
        %7326 = vmatmul.mubr.bf16.gmra.mrb[0].mxu0 %v1487
        %v7327 = vpop.f32.mrb[0].mxu0
        %v7328 = vadd.f32 %v7215, %v7327
        %v7329 = vpop.f32.mrb[0].mxu0
        %v7330 = vadd.f32 %v7217, %v7329
        %v7331 = vpop.f32.mrb[0].mxu0
        %v7332 = vadd.f32 %v7219, %v7331
        %v7333 = vpop.f32.mrb[0].mxu0
        %v7334 = vadd.f32 %v7221, %v7333
        %7335 = vmatprep.mubr.bf16.mxu0 %v1494
        %7336 = vmatmul.mubr.bf16.gmra.mrb[0].mxu0 %v1493
        %v7337 = vpop.f32.mrb[0].mxu0
        %v7338 = vadd.f32 %v7225, %v7337
        %v7339 = vpop.f32.mrb[0].mxu0
        %v7340 = vadd.f32 %v7227, %v7339
        %v7341 = vpop.f32.mrb[0].mxu0
        %v7342 = vadd.f32 %v7229, %v7341
        %v7343 = vpop.f32.mrb[0].mxu0
        %v7344 = vadd.f32 %v7231, %v7343
        %7345 = vmatprep.mubr.bf16.mxu0 %v1500
        %7346 = vmatmul.mubr.bf16.gmra.mrb[0].mxu0 %v1499
        %v7347 = vpop.f32.mrb[0].mxu0
        %v7348 = vadd.f32 %v7235, %v7347
        %v7349 = vpop.f32.mrb[0].mxu0
        %v7350 = vadd.f32 %v7237, %v7349
        %v7351 = vpop.f32.mrb[0].mxu0
        %v7352 = vadd.f32 %v7239, %v7351
        %v7353 = vpop.f32.mrb[0].mxu0
        %v7354 = vadd.f32 %v7241, %v7353
        %7355 = vmatprep.mubr.bf16.mxu0 %v1506
        %7356 = vmatmul.mubr.bf16.gmra.mrb[0].mxu0 %v1505
        %v7357 = vpop.f32.mrb[0].mxu0
        %v7358 = vadd.f32 %v7245, %v7357
        %v7359 = vpop.f32.mrb[0].mxu0
        %v7360 = vadd.f32 %v7247, %v7359
        %v7361 = vpop.f32.mrb[0].mxu0
        %v7362 = vadd.f32 %v7249, %v7361
        %v7363 = vpop.f32.mrb[0].mxu0
        %v7364 = vadd.f32 %v7251, %v7363
        %7365 = vmatprep.mubr.bf16.mxu0 %v1512
        %7366 = vmatmul.mubr.bf16.gmra.mrb[0].mxu0 %v1511
        %v7367 = vpop.f32.mrb[0].mxu0
        %v7368 = vadd.f32 %v7255, %v7367
        %v7369 = vpop.f32.mrb[0].mxu0
        %v7370 = vadd.f32 %v7257, %v7369
        %v7371 = vpop.f32.mrb[0].mxu0
        %v7372 = vadd.f32 %v7259, %v7371
        %v7373 = vpop.f32.mrb[0].mxu0
        %v7374 = vadd.f32 %v7261, %v7373
        %7375 = vmatprep.mubr.bf16.mxu0 %v1518
        %7376 = vmatmul.mubr.bf16.gmra.mrb[0].mxu0 %v1517
        %v7377 = vpop.f32.mrb[0].mxu0
        %v7378 = vadd.f32 %v7265, %v7377
        %v7379 = vpop.f32.mrb[0].mxu0
        %v7380 = vadd.f32 %v7267, %v7379
        %v7381 = vpop.f32.mrb[0].mxu0
        %v7382 = vadd.f32 %v7269, %v7381
        %v7383 = vpop.f32.mrb[0].mxu0
        %v7384 = vadd.f32 %v7271, %v7383
        %7385 = vmatprep.mubr.bf16.mxu0 %v1524
        %7386 = vmatmul.mubr.bf16.gmra.mrb[0].mxu0 %v1523
        %v7387 = vpop.f32.mrb[0].mxu0
        %v7388 = vadd.f32 %v7275, %v7387
        %v7389 = vpop.f32.mrb[0].mxu0
        %v7390 = vadd.f32 %v7277, %v7389
        %v7391 = vpop.f32.mrb[0].mxu0
        %v7392 = vadd.f32 %v7279, %v7391
        %v7393 = vpop.f32.mrb[0].mxu0
        %v7394 = vadd.f32 %v7281, %v7393
        %7395 = vmatprep.mubr.bf16.mxu0 %v1530
        %7396 = vmatmul.mubr.bf16.gmra.mrb[0].mxu0 %v1529
        %v7397 = vpop.f32.mrb[0].mxu0
        %v7398 = vadd.f32 %v7285, %v7397
        %v7399 = vpop.f32.mrb[0].mxu0
        %v7400 = vadd.f32 %v7287, %v7399
        %v7401 = vpop.f32.mrb[0].mxu0
        %v7402 = vadd.f32 %v7289, %v7401
        %v7403 = vpop.f32.mrb[0].mxu0
        %v7404 = vadd.f32 %v7291, %v7403
        %7405 = vdwg.mxu0
        %7406 = vmatprep.subr.bf16.mxu0 %v6123
        %7407 = vmatpush1.bf16.msra.mxu0 %v6122
        %7408 = vmatprep.subr.bf16.mxu0 %v6129
        %7409 = vmatpush1.bf16.msra.mxu0 %v6128
        %7410 = vmatprep.subr.bf16.mxu0 %v6135
        %7411 = vmatpush1.bf16.msra.mxu0 %v6134
        %7412 = vmatprep.subr.bf16.mxu0 %v6141
        %7413 = vmatpush1.bf16.msra.mxu0 %v6140
        %7414 = vmatprep.subr.bf16.mxu0 %v6147
        %7415 = vmatpush1.bf16.msra.mxu0 %v6146
        %7416 = vmatprep.subr.bf16.mxu0 %v6153
        %7417 = vmatpush1.bf16.msra.mxu0 %v6152
        %7418 = vmatprep.subr.bf16.mxu0 %v6159
        %7419 = vmatpush1.bf16.msra.mxu0 %v6158
        %7420 = vmatprep.subr.bf16.mxu0 %v6165
        %7421 = vmatpush1.bf16.msra.mxu0 %v6164
        %7422 = vmatprep.subr.bf16.mxu0 %v6171
        %7423 = vmatpush1.bf16.msra.mxu0 %v6170
        %7424 = vmatprep.subr.bf16.mxu0 %v6177
        %7425 = vmatpush1.bf16.msra.mxu0 %v6176
        %7426 = vmatprep.subr.bf16.mxu0 %v6183
        %7427 = vmatpush1.bf16.msra.mxu0 %v6182
        %7428 = vmatprep.subr.bf16.mxu0 %v6189
        %7429 = vmatpush1.bf16.msra.mxu0 %v6188
        %7430 = vmatprep.subr.bf16.mxu0 %v6195
        %7431 = vmatpush1.bf16.msra.mxu0 %v6194
        %7432 = vmatprep.subr.bf16.mxu0 %v6201
        %7433 = vmatpush1.bf16.msra.mxu0 %v6200
        %7434 = vmatprep.subr.bf16.mxu0 %v6207
        %7435 = vmatpush1.bf16.msra.mxu0 %v6206
        %7436 = vmatprep.subr.bf16.mxu0 %v6213
        %7437 = vmatpush1.bf16.msra.mxu0 %v6212
        %7438 = vmatprep.mubr.bf16.mxu0 %v1490
        %7439 = vmatmul.mubr.bf16.gmra.mrb[0].mxu0 %v1489
        %v7440 = vpop.f32.mrb[0].mxu0
        %v7441 = vadd.f32 %v7328, %v7440
        %v7442 = vpop.f32.mrb[0].mxu0
        %v7443 = vadd.f32 %v7330, %v7442
        %v7444 = vpop.f32.mrb[0].mxu0
        %v7445 = vadd.f32 %v7332, %v7444
        %v7446 = vpop.f32.mrb[0].mxu0
        %v7447 = vadd.f32 %v7334, %v7446
        %7448 = vmatprep.mubr.bf16.mxu0 %v1496
        %7449 = vmatmul.mubr.bf16.gmra.mrb[0].mxu0 %v1495
        %v7450 = vpop.f32.mrb[0].mxu0
        %v7451 = vadd.f32 %v7338, %v7450
        %v7452 = vpop.f32.mrb[0].mxu0
        %v7453 = vadd.f32 %v7340, %v7452
        %v7454 = vpop.f32.mrb[0].mxu0
        %v7455 = vadd.f32 %v7342, %v7454
        %v7456 = vpop.f32.mrb[0].mxu0
        %v7457 = vadd.f32 %v7344, %v7456
        %7458 = vmatprep.mubr.bf16.mxu0 %v1502
        %7459 = vmatmul.mubr.bf16.gmra.mrb[0].mxu0 %v1501
        %v7460 = vpop.f32.mrb[0].mxu0
        %v7461 = vadd.f32 %v7348, %v7460
        %v7462 = vpop.f32.mrb[0].mxu0
        %v7463 = vadd.f32 %v7350, %v7462
        %v7464 = vpop.f32.mrb[0].mxu0
        %v7465 = vadd.f32 %v7352, %v7464
        %v7466 = vpop.f32.mrb[0].mxu0
        %v7467 = vadd.f32 %v7354, %v7466
        %7468 = vmatprep.mubr.bf16.mxu0 %v1508
        %7469 = vmatmul.mubr.bf16.gmra.mrb[0].mxu0 %v1507
        %v7470 = vpop.f32.mrb[0].mxu0
        %v7471 = vadd.f32 %v7358, %v7470
        %v7472 = vpop.f32.mrb[0].mxu0
        %v7473 = vadd.f32 %v7360, %v7472
        %v7474 = vpop.f32.mrb[0].mxu0
        %v7475 = vadd.f32 %v7362, %v7474
        %v7476 = vpop.f32.mrb[0].mxu0
        %v7477 = vadd.f32 %v7364, %v7476
        %7478 = vmatprep.mubr.bf16.mxu0 %v1514
        %7479 = vmatmul.mubr.bf16.gmra.mrb[0].mxu0 %v1513
        %v7480 = vpop.f32.mrb[0].mxu0
        %v7481 = vadd.f32 %v7368, %v7480
        %v7482 = vpop.f32.mrb[0].mxu0
        %v7483 = vadd.f32 %v7370, %v7482
        %v7484 = vpop.f32.mrb[0].mxu0
        %v7485 = vadd.f32 %v7372, %v7484
        %v7486 = vpop.f32.mrb[0].mxu0
        %v7487 = vadd.f32 %v7374, %v7486
        %7488 = vmatprep.mubr.bf16.mxu0 %v1520
        %7489 = vmatmul.mubr.bf16.gmra.mrb[0].mxu0 %v1519
        %v7490 = vpop.f32.mrb[0].mxu0
        %v7491 = vadd.f32 %v7378, %v7490
        %v7492 = vpop.f32.mrb[0].mxu0
        %v7493 = vadd.f32 %v7380, %v7492
        %v7494 = vpop.f32.mrb[0].mxu0
        %v7495 = vadd.f32 %v7382, %v7494
        %v7496 = vpop.f32.mrb[0].mxu0
        %v7497 = vadd.f32 %v7384, %v7496
        %7498 = vmatprep.mubr.bf16.mxu0 %v1526
        %7499 = vmatmul.mubr.bf16.gmra.mrb[0].mxu0 %v1525
        %v7500 = vpop.f32.mrb[0].mxu0
        %v7501 = vadd.f32 %v7388, %v7500
        %v7502 = vpop.f32.mrb[0].mxu0
        %v7503 = vadd.f32 %v7390, %v7502
        %v7504 = vpop.f32.mrb[0].mxu0
        %v7505 = vadd.f32 %v7392, %v7504
        %v7506 = vpop.f32.mrb[0].mxu0
        %v7507 = vadd.f32 %v7394, %v7506
        %7508 = vmatprep.mubr.bf16.mxu0 %v1532
        %7509 = vmatmul.mubr.bf16.gmra.mrb[0].mxu0 %v1531
        %v7510 = vpop.f32.mrb[0].mxu0
        %v7511 = vadd.f32 %v7398, %v7510
        %v7512 = vpop.f32.mrb[0].mxu0
        %v7513 = vadd.f32 %v7400, %v7512
        %v7514 = vpop.f32.mrb[0].mxu0
        %v7515 = vadd.f32 %v7402, %v7514
        %v7516 = vpop.f32.mrb[0].mxu0
        %v7517 = vadd.f32 %v7404, %v7516
        %7518 = vdwg.mxu0
        %v7519 = vpack.c.bf16 %v6767, %v6763
        %v7520 = vpack.c.bf16 %v6769, %v6765
        %v7521 = vpack.c.bf16 %v7106, %v7102
        %v7522 = vpack.c.bf16 %v7108, %v7104
        %v7523 = vpack.c.bf16 %v7445, %v7441
        %v7524 = vpack.c.bf16 %v7447, %v7443
        %v7525 = vpack.c.bf16 %v6777, %v6773
        %v7526 = vpack.c.bf16 %v6779, %v6775
        %v7527 = vpack.c.bf16 %v7116, %v7112
        %v7528 = vpack.c.bf16 %v7118, %v7114
        %v7529 = vpack.c.bf16 %v7455, %v7451
        %v7530 = vpack.c.bf16 %v7457, %v7453
        %v7531 = vpack.c.bf16 %v6787, %v6783
        %v7532 = vpack.c.bf16 %v6789, %v6785
        %v7533 = vpack.c.bf16 %v7126, %v7122
        %v7534 = vpack.c.bf16 %v7128, %v7124
        %v7535 = vpack.c.bf16 %v7465, %v7461
        %v7536 = vpack.c.bf16 %v7467, %v7463
        %v7537 = vpack.c.bf16 %v6797, %v6793
        %v7538 = vpack.c.bf16 %v6799, %v6795
        %v7539 = vpack.c.bf16 %v7136, %v7132
        %v7540 = vpack.c.bf16 %v7138, %v7134
        %v7541 = vpack.c.bf16 %v7475, %v7471
        %v7542 = vpack.c.bf16 %v7477, %v7473
        %v7543 = vpack.c.bf16 %v6807, %v6803
        %v7544 = vpack.c.bf16 %v6809, %v6805
        %v7545 = vpack.c.bf16 %v7146, %v7142
        %v7546 = vpack.c.bf16 %v7148, %v7144
        %v7547 = vpack.c.bf16 %v7485, %v7481
        %v7548 = vpack.c.bf16 %v7487, %v7483
        %v7549 = vpack.c.bf16 %v6817, %v6813
        %v7550 = vpack.c.bf16 %v6819, %v6815
        %v7551 = vpack.c.bf16 %v7156, %v7152
        %v7552 = vpack.c.bf16 %v7158, %v7154
        %v7553 = vpack.c.bf16 %v7495, %v7491
        %v7554 = vpack.c.bf16 %v7497, %v7493
        %v7555 = vpack.c.bf16 %v6827, %v6823
        %v7556 = vpack.c.bf16 %v6829, %v6825
        %v7557 = vpack.c.bf16 %v7166, %v7162
        %v7558 = vpack.c.bf16 %v7168, %v7164
        %v7559 = vpack.c.bf16 %v7505, %v7501
        %v7560 = vpack.c.bf16 %v7507, %v7503
        %v7561 = vpack.c.bf16 %v6837, %v6833
        %v7562 = vpack.c.bf16 %v6839, %v6835
        %v7563 = vpack.c.bf16 %v7176, %v7172
        %v7564 = vpack.c.bf16 %v7178, %v7174
        %v7565 = vpack.c.bf16 %v7515, %v7511
        %v7566 = vpack.c.bf16 %v7517, %v7513
        %v7615 = vunpack.c.l.b16 %v7519
        %v7616 = vunpack.c.l.b16 %v7520
        %v7617 = vunpack.c.l.b16 %v7521
        %v7618 = vunpack.c.l.b16 %v7522
        %v7619 = vunpack.c.l.b16 %v7523
        %v7620 = vunpack.c.l.b16 %v7524
        %v7621 = vunpack.c.h.b16 %v7519
        %v7622 = vunpack.c.h.b16 %v7520
        %v7623 = vunpack.c.h.b16 %v7521
        %v7624 = vunpack.c.h.b16 %v7522
        %v7625 = vunpack.c.h.b16 %v7523
        %v7626 = vunpack.c.h.b16 %v7524
        %v7627 = vunpack.c.l.b16 %v7525
        %v7628 = vunpack.c.l.b16 %v7526
        %v7629 = vunpack.c.l.b16 %v7527
        %v7630 = vunpack.c.l.b16 %v7528
        %v7631 = vunpack.c.l.b16 %v7529
        %v7632 = vunpack.c.l.b16 %v7530
        %v7633 = vunpack.c.h.b16 %v7525
        %v7634 = vunpack.c.h.b16 %v7526
        %v7635 = vunpack.c.h.b16 %v7527
        %v7636 = vunpack.c.h.b16 %v7528
        %v7637 = vunpack.c.h.b16 %v7529
        %v7638 = vunpack.c.h.b16 %v7530
        %v7639 = vunpack.c.l.b16 %v7531
        %v7640 = vunpack.c.l.b16 %v7532
        %v7641 = vunpack.c.l.b16 %v7533
        %v7642 = vunpack.c.l.b16 %v7534
        %v7643 = vunpack.c.l.b16 %v7535
        %v7644 = vunpack.c.l.b16 %v7536
        %v7645 = vunpack.c.h.b16 %v7531
        %v7646 = vunpack.c.h.b16 %v7532
        %v7647 = vunpack.c.h.b16 %v7533
        %v7648 = vunpack.c.h.b16 %v7534
        %v7649 = vunpack.c.h.b16 %v7535
        %v7650 = vunpack.c.h.b16 %v7536
        %v7651 = vunpack.c.l.b16 %v7537
        %v7652 = vunpack.c.l.b16 %v7538
        %v7653 = vunpack.c.l.b16 %v7539
        %v7654 = vunpack.c.l.b16 %v7540
        %v7655 = vunpack.c.l.b16 %v7541
        %v7656 = vunpack.c.l.b16 %v7542
        %v7657 = vunpack.c.h.b16 %v7537
        %v7658 = vunpack.c.h.b16 %v7538
        %v7659 = vunpack.c.h.b16 %v7539
        %v7660 = vunpack.c.h.b16 %v7540
        %v7661 = vunpack.c.h.b16 %v7541
        %v7662 = vunpack.c.h.b16 %v7542
        %v7663 = vunpack.c.l.b16 %v7543
        %v7664 = vunpack.c.l.b16 %v7544
        %v7665 = vunpack.c.l.b16 %v7545
        %v7666 = vunpack.c.l.b16 %v7546
        %v7667 = vunpack.c.l.b16 %v7547
        %v7668 = vunpack.c.l.b16 %v7548
        %v7669 = vunpack.c.h.b16 %v7543
        %v7670 = vunpack.c.h.b16 %v7544
        %v7671 = vunpack.c.h.b16 %v7545
        %v7672 = vunpack.c.h.b16 %v7546
        %v7673 = vunpack.c.h.b16 %v7547
        %v7674 = vunpack.c.h.b16 %v7548
        %v7675 = vunpack.c.l.b16 %v7549
        %v7676 = vunpack.c.l.b16 %v7550
        %v7677 = vunpack.c.l.b16 %v7551
        %v7678 = vunpack.c.l.b16 %v7552
        %v7679 = vunpack.c.l.b16 %v7553
        %v7680 = vunpack.c.l.b16 %v7554
        %v7681 = vunpack.c.h.b16 %v7549
        %v7682 = vunpack.c.h.b16 %v7550
        %v7683 = vunpack.c.h.b16 %v7551
        %v7684 = vunpack.c.h.b16 %v7552
        %v7685 = vunpack.c.h.b16 %v7553
        %v7686 = vunpack.c.h.b16 %v7554
        %v7687 = vunpack.c.l.b16 %v7555
        %v7688 = vunpack.c.l.b16 %v7556
        %v7689 = vunpack.c.l.b16 %v7557
        %v7690 = vunpack.c.l.b16 %v7558
        %v7691 = vunpack.c.l.b16 %v7559
        %v7692 = vunpack.c.l.b16 %v7560
        %v7693 = vunpack.c.h.b16 %v7555
        %v7694 = vunpack.c.h.b16 %v7556
        %v7695 = vunpack.c.h.b16 %v7557
        %v7696 = vunpack.c.h.b16 %v7558
        %v7697 = vunpack.c.h.b16 %v7559
        %v7698 = vunpack.c.h.b16 %v7560
        %v7699 = vunpack.c.l.b16 %v7561
        %v7700 = vunpack.c.l.b16 %v7562
        %v7701 = vunpack.c.l.b16 %v7563
        %v7702 = vunpack.c.l.b16 %v7564
        %v7703 = vunpack.c.l.b16 %v7565
        %v7704 = vunpack.c.l.b16 %v7566
        %v7705 = vunpack.c.h.b16 %v7561
        %v7706 = vunpack.c.h.b16 %v7562
        %v7707 = vunpack.c.h.b16 %v7563
        %v7708 = vunpack.c.h.b16 %v7564
        %v7709 = vunpack.c.h.b16 %v7565
        %v7710 = vunpack.c.h.b16 %v7566
        %v7711 = vpack.c.b16 %v7616, %v7615
        %v7712 = vpack.c.b16 %v7618, %v7617
        %v7713 = vpack.c.b16 %v7620, %v7619
        %v7714 = vpack.c.b16 %v7622, %v7621
        %v7715 = vpack.c.b16 %v7624, %v7623
        %v7716 = vpack.c.b16 %v7626, %v7625
        %v7717 = vpack.c.b16 %v7628, %v7627
        %v7718 = vpack.c.b16 %v7630, %v7629
        %v7719 = vpack.c.b16 %v7632, %v7631
        %v7720 = vpack.c.b16 %v7634, %v7633
        %v7721 = vpack.c.b16 %v7636, %v7635
        %v7722 = vpack.c.b16 %v7638, %v7637
        %v7723 = vpack.c.b16 %v7640, %v7639
        %v7724 = vpack.c.b16 %v7642, %v7641
        %v7725 = vpack.c.b16 %v7644, %v7643
        %v7726 = vpack.c.b16 %v7646, %v7645
        %v7727 = vpack.c.b16 %v7648, %v7647
        %v7728 = vpack.c.b16 %v7650, %v7649
        %v7729 = vpack.c.b16 %v7652, %v7651
        %v7730 = vpack.c.b16 %v7654, %v7653
        %v7731 = vpack.c.b16 %v7656, %v7655
        %v7732 = vpack.c.b16 %v7658, %v7657
        %v7733 = vpack.c.b16 %v7660, %v7659
        %v7734 = vpack.c.b16 %v7662, %v7661
        %v7735 = vpack.c.b16 %v7664, %v7663
        %v7736 = vpack.c.b16 %v7666, %v7665
        %v7737 = vpack.c.b16 %v7668, %v7667
        %v7738 = vpack.c.b16 %v7670, %v7669
        %v7739 = vpack.c.b16 %v7672, %v7671
        %v7740 = vpack.c.b16 %v7674, %v7673
        %v7741 = vpack.c.b16 %v7676, %v7675
        %v7742 = vpack.c.b16 %v7678, %v7677
        %v7743 = vpack.c.b16 %v7680, %v7679
        %v7744 = vpack.c.b16 %v7682, %v7681
        %v7745 = vpack.c.b16 %v7684, %v7683
        %v7746 = vpack.c.b16 %v7686, %v7685
        %v7747 = vpack.c.b16 %v7688, %v7687
        %v7748 = vpack.c.b16 %v7690, %v7689
        %v7749 = vpack.c.b16 %v7692, %v7691
        %v7750 = vpack.c.b16 %v7694, %v7693
        %v7751 = vpack.c.b16 %v7696, %v7695
        %v7752 = vpack.c.b16 %v7698, %v7697
        %v7753 = vpack.c.b16 %v7700, %v7699
        %v7754 = vpack.c.b16 %v7702, %v7701
        %v7755 = vpack.c.b16 %v7704, %v7703
        %v7756 = vpack.c.b16 %v7706, %v7705
        %v7757 = vpack.c.b16 %v7708, %v7707
        %v7758 = vpack.c.b16 %v7710, %v7709
        %7807 = vst [vmem:[%s544] sm:$0xff] %v7711
        %7808 = vst [vmem:[%s544 + $0x8] sm:$0xff] %v7712
        %7809 = vst [vmem:[%s544 + $0x10] sm:$0xff] %v7713
        %7810 = vst [vmem:[%s544 + $0x18] sm:$0xff] %v7714
        %7811 = vst [vmem:[%s544 + $0x20] sm:$0xff] %v7715
        %7812 = vst [vmem:[%s544 + $0x28] sm:$0xff] %v7716
        %7813 = vst [vmem:[%s544 + $0x30] sm:$0xff] %v7717
        %7814 = vst [vmem:[%s544 + $0x38] sm:$0xff] %v7718
        %7815 = vst [vmem:[%s544 + $0x40] sm:$0xff] %v7719
        %7816 = vst [vmem:[%s544 + $0x48] sm:$0xff] %v7720
        %7817 = vst [vmem:[%s544 + $0x50] sm:$0xff] %v7721
        %7818 = vst [vmem:[%s544 + $0x58] sm:$0xff] %v7722
        %7819 = vst [vmem:[%s544 + $0x60] sm:$0xff] %v7723
        %7820 = vst [vmem:[%s544 + $0x68] sm:$0xff] %v7724
        %7821 = vst [vmem:[%s544 + $0x70] sm:$0xff] %v7725
        %7822 = vst [vmem:[%s544 + $0x78] sm:$0xff] %v7726
        %7823 = vst [vmem:[%s544 + $0x80] sm:$0xff] %v7727
        %7824 = vst [vmem:[%s544 + $0x88] sm:$0xff] %v7728
        %7825 = vst [vmem:[%s544 + $0x90] sm:$0xff] %v7729
        %7826 = vst [vmem:[%s544 + $0x98] sm:$0xff] %v7730
        %7827 = vst [vmem:[%s544 + $0xa0] sm:$0xff] %v7731
        %7828 = vst [vmem:[%s544 + $0xa8] sm:$0xff] %v7732
        %7829 = vst [vmem:[%s544 + $0xb0] sm:$0xff] %v7733
        %7830 = vst [vmem:[%s544 + $0xb8] sm:$0xff] %v7734
        %7831 = vst [vmem:[%s544 + $0xc0] sm:$0xff] %v7735
        %7832 = vst [vmem:[%s544 + $0xc8] sm:$0xff] %v7736
        %7833 = vst [vmem:[%s544 + $0xd0] sm:$0xff] %v7737
        %7834 = vst [vmem:[%s544 + $0xd8] sm:$0xff] %v7738
        %7835 = vst [vmem:[%s544 + $0xe0] sm:$0xff] %v7739
        %7836 = vst [vmem:[%s544 + $0xe8] sm:$0xff] %v7740
        %7837 = vst [vmem:[%s544 + $0xf0] sm:$0xff] %v7741
        %7838 = vst [vmem:[%s544 + $0xf8] sm:$0xff] %v7742
        %7839 = vst [vmem:[%s544 + $0x100] sm:$0xff] %v7743
        %7840 = vst [vmem:[%s544 + $0x108] sm:$0xff] %v7744
        %7841 = vst [vmem:[%s544 + $0x110] sm:$0xff] %v7745
        %7842 = vst [vmem:[%s544 + $0x118] sm:$0xff] %v7746
        %7843 = vst [vmem:[%s544 + $0x120] sm:$0xff] %v7747
        %7844 = vst [vmem:[%s544 + $0x128] sm:$0xff] %v7748
        %7845 = vst [vmem:[%s544 + $0x130] sm:$0xff] %v7749
        %7846 = vst [vmem:[%s544 + $0x138] sm:$0xff] %v7750
        %7847 = vst [vmem:[%s544 + $0x140] sm:$0xff] %v7751
        %7848 = vst [vmem:[%s544 + $0x148] sm:$0xff] %v7752
        %7849 = vst [vmem:[%s544 + $0x150] sm:$0xff] %v7753
        %7850 = vst [vmem:[%s544 + $0x158] sm:$0xff] %v7754
        %7851 = vst [vmem:[%s544 + $0x160] sm:$0xff] %v7755
        %7852 = vst [vmem:[%s544 + $0x168] sm:$0xff] %v7756
        %7853 = vst [vmem:[%s544 + $0x170] sm:$0xff] %v7757
        %7854 = vst [vmem:[%s544 + $0x178] sm:$0xff] %v7758
        %v7855 = vld [vmem:[#allocation11] sm:$0xff]
        %v7856 = vld [vmem:[#allocation11 + $0x8] sm:$0xff]
        %v7857 = vld [vmem:[#allocation11 + $0x10] sm:$0xff]
        %v7858 = vld [vmem:[#allocation11 + $0x18] sm:$0xff]
        %v7859 = vld [vmem:[#allocation11 + $0x20] sm:$0xff]
        %v7860 = vld [vmem:[#allocation11 + $0x28] sm:$0xff]
        %v7861 = vld [vmem:[#allocation11 + $0x30] sm:$0xff]
        %v7862 = vld [vmem:[#allocation11 + $0x38] sm:$0xff]
        %v7863 = vld [vmem:[#allocation11 + $0x40] sm:$0xff]
        %v7864 = vld [vmem:[#allocation11 + $0x48] sm:$0xff]
        %v7865 = vld [vmem:[#allocation11 + $0x50] sm:$0xff]
        %v7866 = vld [vmem:[#allocation11 + $0x58] sm:$0xff]
        %v7867 = vld [vmem:[#allocation11 + $0x60] sm:$0xff]
        %v7868 = vld [vmem:[#allocation11 + $0x68] sm:$0xff]
        %v7869 = vld [vmem:[#allocation11 + $0x70] sm:$0xff]
        %v7870 = vld [vmem:[#allocation11 + $0x78] sm:$0xff]
        %v7871 = vld [vmem:[#allocation11 + $0x80] sm:$0xff]
        %v7872 = vld [vmem:[#allocation11 + $0x88] sm:$0xff]
        %v7873 = vld [vmem:[#allocation11 + $0x90] sm:$0xff]
        %v7874 = vld [vmem:[#allocation11 + $0x98] sm:$0xff]
        %v7875 = vld [vmem:[#allocation11 + $0xa0] sm:$0xff]
        %v7876 = vld [vmem:[#allocation11 + $0xa8] sm:$0xff]
        %v7877 = vld [vmem:[#allocation11 + $0xb0] sm:$0xff]
        %v7878 = vld [vmem:[#allocation11 + $0xb8] sm:$0xff]
        %v7879 = vld [vmem:[#allocation11 + $0xc0] sm:$0xff]
        %v7880 = vld [vmem:[#allocation11 + $0xc8] sm:$0xff]
        %v7881 = vld [vmem:[#allocation11 + $0xd0] sm:$0xff]
        %v7882 = vld [vmem:[#allocation11 + $0xd8] sm:$0xff]
        %v7883 = vld [vmem:[#allocation11 + $0xe0] sm:$0xff]
        %v7884 = vld [vmem:[#allocation11 + $0xe8] sm:$0xff]
        %v7885 = vld [vmem:[#allocation11 + $0xf0] sm:$0xff]
        %v7886 = vld [vmem:[#allocation11 + $0xf8] sm:$0xff]
        %v7887 = vld [vmem:[#allocation11 + $0x100] sm:$0xff]
        %v7888 = vld [vmem:[#allocation11 + $0x108] sm:$0xff]
        %v7889 = vld [vmem:[#allocation11 + $0x110] sm:$0xff]
        %v7890 = vld [vmem:[#allocation11 + $0x118] sm:$0xff]
        %v7891 = vld [vmem:[#allocation11 + $0x120] sm:$0xff]
        %v7892 = vld [vmem:[#allocation11 + $0x128] sm:$0xff]
        %v7893 = vld [vmem:[#allocation11 + $0x130] sm:$0xff]
        %v7894 = vld [vmem:[#allocation11 + $0x138] sm:$0xff]
        %v7895 = vld [vmem:[#allocation11 + $0x140] sm:$0xff]
        %v7896 = vld [vmem:[#allocation11 + $0x148] sm:$0xff]
        %v7897 = vld [vmem:[#allocation11 + $0x150] sm:$0xff]
        %v7898 = vld [vmem:[#allocation11 + $0x158] sm:$0xff]
        %v7899 = vld [vmem:[#allocation11 + $0x160] sm:$0xff]
        %v7900 = vld [vmem:[#allocation11 + $0x168] sm:$0xff]
        %v7901 = vld [vmem:[#allocation11 + $0x170] sm:$0xff]
        %v7902 = vld [vmem:[#allocation11 + $0x178] sm:$0xff]
        %v7903 = vld [vmem:[#allocation11 + $0x180] sm:$0xff]
        %v7904 = vld [vmem:[#allocation11 + $0x188] sm:$0xff]
        %v7905 = vld [vmem:[#allocation11 + $0x190] sm:$0xff]
        %v7906 = vld [vmem:[#allocation11 + $0x198] sm:$0xff]
        %v7907 = vld [vmem:[#allocation11 + $0x1a0] sm:$0xff]
        %v7908 = vld [vmem:[#allocation11 + $0x1a8] sm:$0xff]
        %v7909 = vld [vmem:[#allocation11 + $0x1b0] sm:$0xff]
        %v7910 = vld [vmem:[#allocation11 + $0x1b8] sm:$0xff]
        %v7911 = vld [vmem:[#allocation11 + $0x1c0] sm:$0xff]
        %v7912 = vld [vmem:[#allocation11 + $0x1c8] sm:$0xff]
        %v7913 = vld [vmem:[#allocation11 + $0x1d0] sm:$0xff]
        %v7914 = vld [vmem:[#allocation11 + $0x1d8] sm:$0xff]
        %v7915 = vld [vmem:[#allocation11 + $0x1e0] sm:$0xff]
        %v7916 = vld [vmem:[#allocation11 + $0x1e8] sm:$0xff]
        %v7917 = vld [vmem:[#allocation11 + $0x1f0] sm:$0xff]
        %v7918 = vld [vmem:[#allocation11 + $0x1f8] sm:$0xff]
        %v7919 = vld [vmem:[#allocation11 + $0x200] sm:$0xff]
        %v7920 = vld [vmem:[#allocation11 + $0x208] sm:$0xff]
        %v7921 = vld [vmem:[#allocation11 + $0x210] sm:$0xff]
        %v7922 = vld [vmem:[#allocation11 + $0x218] sm:$0xff]
        %v7923 = vld [vmem:[#allocation11 + $0x220] sm:$0xff]
        %v7924 = vld [vmem:[#allocation11 + $0x228] sm:$0xff]
        %v7925 = vld [vmem:[#allocation11 + $0x230] sm:$0xff]
        %v7926 = vld [vmem:[#allocation11 + $0x238] sm:$0xff]
        %v7927 = vld [vmem:[#allocation11 + $0x240] sm:$0xff]
        %v7928 = vld [vmem:[#allocation11 + $0x248] sm:$0xff]
        %v7929 = vld [vmem:[#allocation11 + $0x250] sm:$0xff]
        %v7930 = vld [vmem:[#allocation11 + $0x258] sm:$0xff]
        %v7931 = vld [vmem:[#allocation11 + $0x260] sm:$0xff]
        %v7932 = vld [vmem:[#allocation11 + $0x268] sm:$0xff]
        %v7933 = vld [vmem:[#allocation11 + $0x270] sm:$0xff]
        %v7934 = vld [vmem:[#allocation11 + $0x278] sm:$0xff]
        %v7935 = vld [vmem:[#allocation11 + $0x280] sm:$0xff]
        %v7936 = vld [vmem:[#allocation11 + $0x288] sm:$0xff]
        %v7937 = vld [vmem:[#allocation11 + $0x290] sm:$0xff]
        %v7938 = vld [vmem:[#allocation11 + $0x298] sm:$0xff]
        %v7939 = vld [vmem:[#allocation11 + $0x2a0] sm:$0xff]
        %v7940 = vld [vmem:[#allocation11 + $0x2a8] sm:$0xff]
        %v7941 = vld [vmem:[#allocation11 + $0x2b0] sm:$0xff]
        %v7942 = vld [vmem:[#allocation11 + $0x2b8] sm:$0xff]
        %v7943 = vld [vmem:[#allocation11 + $0x2c0] sm:$0xff]
        %v7944 = vld [vmem:[#allocation11 + $0x2c8] sm:$0xff]
        %v7945 = vld [vmem:[#allocation11 + $0x2d0] sm:$0xff]
        %v7946 = vld [vmem:[#allocation11 + $0x2d8] sm:$0xff]
        %v7947 = vld [vmem:[#allocation11 + $0x2e0] sm:$0xff]
        %v7948 = vld [vmem:[#allocation11 + $0x2e8] sm:$0xff]
        %v7949 = vld [vmem:[#allocation11 + $0x2f0] sm:$0xff]
        %v7950 = vld [vmem:[#allocation11 + $0x2f8] sm:$0xff]
        %v7951 = vld [vmem:[#allocation11 + $0x300] sm:$0xff]
        %v7952 = vld [vmem:[#allocation11 + $0x308] sm:$0xff]
        %v7953 = vld [vmem:[#allocation11 + $0x310] sm:$0xff]
        %v7954 = vld [vmem:[#allocation11 + $0x318] sm:$0xff]
        %v7955 = vld [vmem:[#allocation11 + $0x320] sm:$0xff]
        %v7956 = vld [vmem:[#allocation11 + $0x328] sm:$0xff]
        %v7957 = vld [vmem:[#allocation11 + $0x330] sm:$0xff]
        %v7958 = vld [vmem:[#allocation11 + $0x338] sm:$0xff]
        %v7959 = vld [vmem:[#allocation11 + $0x340] sm:$0xff]
        %v7960 = vld [vmem:[#allocation11 + $0x348] sm:$0xff]
        %v7961 = vld [vmem:[#allocation11 + $0x350] sm:$0xff]
        %v7962 = vld [vmem:[#allocation11 + $0x358] sm:$0xff]
        %v7963 = vld [vmem:[#allocation11 + $0x360] sm:$0xff]
        %v7964 = vld [vmem:[#allocation11 + $0x368] sm:$0xff]
        %v7965 = vld [vmem:[#allocation11 + $0x370] sm:$0xff]
        %v7966 = vld [vmem:[#allocation11 + $0x378] sm:$0xff]
        %v7967 = vld [vmem:[#allocation11 + $0x380] sm:$0xff]
        %v7968 = vld [vmem:[#allocation11 + $0x388] sm:$0xff]
        %v7969 = vld [vmem:[#allocation11 + $0x390] sm:$0xff]
        %v7970 = vld [vmem:[#allocation11 + $0x398] sm:$0xff]
        %v7971 = vld [vmem:[#allocation11 + $0x3a0] sm:$0xff]
        %v7972 = vld [vmem:[#allocation11 + $0x3a8] sm:$0xff]
        %v7973 = vld [vmem:[#allocation11 + $0x3b0] sm:$0xff]
        %v7974 = vld [vmem:[#allocation11 + $0x3b8] sm:$0xff]
        %v7975 = vld [vmem:[#allocation11 + $0x3c0] sm:$0xff]
        %v7976 = vld [vmem:[#allocation11 + $0x3c8] sm:$0xff]
        %v7977 = vld [vmem:[#allocation11 + $0x3d0] sm:$0xff]
        %v7978 = vld [vmem:[#allocation11 + $0x3d8] sm:$0xff]
        %v7979 = vld [vmem:[#allocation11 + $0x3e0] sm:$0xff]
        %v7980 = vld [vmem:[#allocation11 + $0x3e8] sm:$0xff]
        %v7981 = vld [vmem:[#allocation11 + $0x3f0] sm:$0xff]
        %v7982 = vld [vmem:[#allocation11 + $0x3f8] sm:$0xff]
        %v7983 = vld [vmem:[#allocation11 + $0x400] sm:$0xff]
        %v7984 = vld [vmem:[#allocation11 + $0x408] sm:$0xff]
        %v7985 = vld [vmem:[#allocation11 + $0x410] sm:$0xff]
        %v7986 = vld [vmem:[#allocation11 + $0x418] sm:$0xff]
        %v7987 = vld [vmem:[#allocation11 + $0x420] sm:$0xff]
        %v7988 = vld [vmem:[#allocation11 + $0x428] sm:$0xff]
        %v7989 = vld [vmem:[#allocation11 + $0x430] sm:$0xff]
        %v7990 = vld [vmem:[#allocation11 + $0x438] sm:$0xff]
        %v7991 = vld [vmem:[#allocation11 + $0x440] sm:$0xff]
        %v7992 = vld [vmem:[#allocation11 + $0x448] sm:$0xff]
        %v7993 = vld [vmem:[#allocation11 + $0x450] sm:$0xff]
        %v7994 = vld [vmem:[#allocation11 + $0x458] sm:$0xff]
        %v7995 = vld [vmem:[#allocation11 + $0x460] sm:$0xff]
        %v7996 = vld [vmem:[#allocation11 + $0x468] sm:$0xff]
        %v7997 = vld [vmem:[#allocation11 + $0x470] sm:$0xff]
        %v7998 = vld [vmem:[#allocation11 + $0x478] sm:$0xff]
        %v7999 = vld [vmem:[#allocation11 + $0x480] sm:$0xff]
        %v8000 = vld [vmem:[#allocation11 + $0x488] sm:$0xff]
        %v8001 = vld [vmem:[#allocation11 + $0x490] sm:$0xff]
        %v8002 = vld [vmem:[#allocation11 + $0x498] sm:$0xff]
        %v8003 = vld [vmem:[#allocation11 + $0x4a0] sm:$0xff]
        %v8004 = vld [vmem:[#allocation11 + $0x4a8] sm:$0xff]
        %v8005 = vld [vmem:[#allocation11 + $0x4b0] sm:$0xff]
        %v8006 = vld [vmem:[#allocation11 + $0x4b8] sm:$0xff]
        %v8007 = vld [vmem:[#allocation11 + $0x4c0] sm:$0xff]
        %v8008 = vld [vmem:[#allocation11 + $0x4c8] sm:$0xff]
        %v8009 = vld [vmem:[#allocation11 + $0x4d0] sm:$0xff]
        %v8010 = vld [vmem:[#allocation11 + $0x4d8] sm:$0xff]
        %v8011 = vld [vmem:[#allocation11 + $0x4e0] sm:$0xff]
        %v8012 = vld [vmem:[#allocation11 + $0x4e8] sm:$0xff]
        %v8013 = vld [vmem:[#allocation11 + $0x4f0] sm:$0xff]
        %v8014 = vld [vmem:[#allocation11 + $0x4f8] sm:$0xff]
        %v8015 = vld [vmem:[#allocation11 + $0x500] sm:$0xff]
        %v8016 = vld [vmem:[#allocation11 + $0x508] sm:$0xff]
        %v8017 = vld [vmem:[#allocation11 + $0x510] sm:$0xff]
        %v8018 = vld [vmem:[#allocation11 + $0x518] sm:$0xff]
        %v8019 = vld [vmem:[#allocation11 + $0x520] sm:$0xff]
        %v8020 = vld [vmem:[#allocation11 + $0x528] sm:$0xff]
        %v8021 = vld [vmem:[#allocation11 + $0x530] sm:$0xff]
        %v8022 = vld [vmem:[#allocation11 + $0x538] sm:$0xff]
        %v8023 = vld [vmem:[#allocation11 + $0x540] sm:$0xff]
        %v8024 = vld [vmem:[#allocation11 + $0x548] sm:$0xff]
        %v8025 = vld [vmem:[#allocation11 + $0x550] sm:$0xff]
        %v8026 = vld [vmem:[#allocation11 + $0x558] sm:$0xff]
        %v8027 = vld [vmem:[#allocation11 + $0x560] sm:$0xff]
        %v8028 = vld [vmem:[#allocation11 + $0x568] sm:$0xff]
        %v8029 = vld [vmem:[#allocation11 + $0x570] sm:$0xff]
        %v8030 = vld [vmem:[#allocation11 + $0x578] sm:$0xff]
        %v8031 = vld [vmem:[#allocation11 + $0x580] sm:$0xff]
        %v8032 = vld [vmem:[#allocation11 + $0x588] sm:$0xff]
        %v8033 = vld [vmem:[#allocation11 + $0x590] sm:$0xff]
        %v8034 = vld [vmem:[#allocation11 + $0x598] sm:$0xff]
        %v8035 = vld [vmem:[#allocation11 + $0x5a0] sm:$0xff]
        %v8036 = vld [vmem:[#allocation11 + $0x5a8] sm:$0xff]
        %v8037 = vld [vmem:[#allocation11 + $0x5b0] sm:$0xff]
        %v8038 = vld [vmem:[#allocation11 + $0x5b8] sm:$0xff]
        %v8039 = vld [vmem:[#allocation11 + $0x5c0] sm:$0xff]
        %v8040 = vld [vmem:[#allocation11 + $0x5c8] sm:$0xff]
        %v8041 = vld [vmem:[#allocation11 + $0x5d0] sm:$0xff]
        %v8042 = vld [vmem:[#allocation11 + $0x5d8] sm:$0xff]
        %v8043 = vld [vmem:[#allocation11 + $0x5e0] sm:$0xff]
        %v8044 = vld [vmem:[#allocation11 + $0x5e8] sm:$0xff]
        %v8045 = vld [vmem:[#allocation11 + $0x5f0] sm:$0xff]
        %v8046 = vld [vmem:[#allocation11 + $0x5f8] sm:$0xff]
        %v8047 = vld [vmem:[#allocation11 + $0x600] sm:$0xff]
        %v8048 = vld [vmem:[#allocation11 + $0x608] sm:$0xff]
        %v8049 = vld [vmem:[#allocation11 + $0x610] sm:$0xff]
        %v8050 = vld [vmem:[#allocation11 + $0x618] sm:$0xff]
        %v8051 = vld [vmem:[#allocation11 + $0x620] sm:$0xff]
        %v8052 = vld [vmem:[#allocation11 + $0x628] sm:$0xff]
        %v8053 = vld [vmem:[#allocation11 + $0x630] sm:$0xff]
        %v8054 = vld [vmem:[#allocation11 + $0x638] sm:$0xff]
        %v8055 = vld [vmem:[#allocation11 + $0x640] sm:$0xff]
        %v8056 = vld [vmem:[#allocation11 + $0x648] sm:$0xff]
        %v8057 = vld [vmem:[#allocation11 + $0x650] sm:$0xff]
        %v8058 = vld [vmem:[#allocation11 + $0x658] sm:$0xff]
        %v8059 = vld [vmem:[#allocation11 + $0x660] sm:$0xff]
        %v8060 = vld [vmem:[#allocation11 + $0x668] sm:$0xff]
        %v8061 = vld [vmem:[#allocation11 + $0x670] sm:$0xff]
        %v8062 = vld [vmem:[#allocation11 + $0x678] sm:$0xff]
        %v8063 = vld [vmem:[#allocation11 + $0x680] sm:$0xff]
        %v8064 = vld [vmem:[#allocation11 + $0x688] sm:$0xff]
        %v8065 = vld [vmem:[#allocation11 + $0x690] sm:$0xff]
        %v8066 = vld [vmem:[#allocation11 + $0x698] sm:$0xff]
        %v8067 = vld [vmem:[#allocation11 + $0x6a0] sm:$0xff]
        %v8068 = vld [vmem:[#allocation11 + $0x6a8] sm:$0xff]
        %v8069 = vld [vmem:[#allocation11 + $0x6b0] sm:$0xff]
        %v8070 = vld [vmem:[#allocation11 + $0x6b8] sm:$0xff]
        %v8071 = vld [vmem:[#allocation11 + $0x6c0] sm:$0xff]
        %v8072 = vld [vmem:[#allocation11 + $0x6c8] sm:$0xff]
        %v8073 = vld [vmem:[#allocation11 + $0x6d0] sm:$0xff]
        %v8074 = vld [vmem:[#allocation11 + $0x6d8] sm:$0xff]
        %v8075 = vld [vmem:[#allocation11 + $0x6e0] sm:$0xff]
        %v8076 = vld [vmem:[#allocation11 + $0x6e8] sm:$0xff]
        %v8077 = vld [vmem:[#allocation11 + $0x6f0] sm:$0xff]
        %v8078 = vld [vmem:[#allocation11 + $0x6f8] sm:$0xff]
        %v8079 = vld [vmem:[#allocation11 + $0x700] sm:$0xff]
        %v8080 = vld [vmem:[#allocation11 + $0x708] sm:$0xff]
        %v8081 = vld [vmem:[#allocation11 + $0x710] sm:$0xff]
        %v8082 = vld [vmem:[#allocation11 + $0x718] sm:$0xff]
        %v8083 = vld [vmem:[#allocation11 + $0x720] sm:$0xff]
        %v8084 = vld [vmem:[#allocation11 + $0x728] sm:$0xff]
        %v8085 = vld [vmem:[#allocation11 + $0x730] sm:$0xff]
        %v8086 = vld [vmem:[#allocation11 + $0x738] sm:$0xff]
        %v8087 = vld [vmem:[#allocation11 + $0x740] sm:$0xff]
        %v8088 = vld [vmem:[#allocation11 + $0x748] sm:$0xff]
        %v8089 = vld [vmem:[#allocation11 + $0x750] sm:$0xff]
        %v8090 = vld [vmem:[#allocation11 + $0x758] sm:$0xff]
        %v8091 = vld [vmem:[#allocation11 + $0x760] sm:$0xff]
        %v8092 = vld [vmem:[#allocation11 + $0x768] sm:$0xff]
        %v8093 = vld [vmem:[#allocation11 + $0x770] sm:$0xff]
        %v8094 = vld [vmem:[#allocation11 + $0x778] sm:$0xff]
        %v8095 = vld [vmem:[#allocation11 + $0x780] sm:$0xff]
        %v8096 = vld [vmem:[#allocation11 + $0x788] sm:$0xff]
        %v8097 = vld [vmem:[#allocation11 + $0x790] sm:$0xff]
        %v8098 = vld [vmem:[#allocation11 + $0x798] sm:$0xff]
        %v8099 = vld [vmem:[#allocation11 + $0x7a0] sm:$0xff]
        %v8100 = vld [vmem:[#allocation11 + $0x7a8] sm:$0xff]
        %v8101 = vld [vmem:[#allocation11 + $0x7b0] sm:$0xff]
        %v8102 = vld [vmem:[#allocation11 + $0x7b8] sm:$0xff]
        %v8103 = vld [vmem:[#allocation11 + $0x7c0] sm:$0xff]
        %v8104 = vld [vmem:[#allocation11 + $0x7c8] sm:$0xff]
        %v8105 = vld [vmem:[#allocation11 + $0x7d0] sm:$0xff]
        %v8106 = vld [vmem:[#allocation11 + $0x7d8] sm:$0xff]
        %v8107 = vld [vmem:[#allocation11 + $0x7e0] sm:$0xff]
        %v8108 = vld [vmem:[#allocation11 + $0x7e8] sm:$0xff]
        %v8109 = vld [vmem:[#allocation11 + $0x7f0] sm:$0xff]
        %v8110 = vld [vmem:[#allocation11 + $0x7f8] sm:$0xff]
        %v8111 = vld [vmem:[#allocation11 + $0x800] sm:$0xff]
        %v8112 = vld [vmem:[#allocation11 + $0x808] sm:$0xff]
        %v8113 = vld [vmem:[#allocation11 + $0x810] sm:$0xff]
        %v8114 = vld [vmem:[#allocation11 + $0x818] sm:$0xff]
        %v8115 = vld [vmem:[#allocation11 + $0x820] sm:$0xff]
        %v8116 = vld [vmem:[#allocation11 + $0x828] sm:$0xff]
        %v8117 = vld [vmem:[#allocation11 + $0x830] sm:$0xff]
        %v8118 = vld [vmem:[#allocation11 + $0x838] sm:$0xff]
        %v8119 = vld [vmem:[#allocation11 + $0x840] sm:$0xff]
        %v8120 = vld [vmem:[#allocation11 + $0x848] sm:$0xff]
        %v8121 = vld [vmem:[#allocation11 + $0x850] sm:$0xff]
        %v8122 = vld [vmem:[#allocation11 + $0x858] sm:$0xff]
        %v8123 = vld [vmem:[#allocation11 + $0x860] sm:$0xff]
        %v8124 = vld [vmem:[#allocation11 + $0x868] sm:$0xff]
        %v8125 = vld [vmem:[#allocation11 + $0x870] sm:$0xff]
        %v8126 = vld [vmem:[#allocation11 + $0x878] sm:$0xff]
        %v8127 = vld [vmem:[#allocation11 + $0x880] sm:$0xff]
        %v8128 = vld [vmem:[#allocation11 + $0x888] sm:$0xff]
        %v8129 = vld [vmem:[#allocation11 + $0x890] sm:$0xff]
        %v8130 = vld [vmem:[#allocation11 + $0x898] sm:$0xff]
        %v8131 = vld [vmem:[#allocation11 + $0x8a0] sm:$0xff]
        %v8132 = vld [vmem:[#allocation11 + $0x8a8] sm:$0xff]
        %v8133 = vld [vmem:[#allocation11 + $0x8b0] sm:$0xff]
        %v8134 = vld [vmem:[#allocation11 + $0x8b8] sm:$0xff]
        %v8135 = vld [vmem:[#allocation11 + $0x8c0] sm:$0xff]
        %v8136 = vld [vmem:[#allocation11 + $0x8c8] sm:$0xff]
        %v8137 = vld [vmem:[#allocation11 + $0x8d0] sm:$0xff]
        %v8138 = vld [vmem:[#allocation11 + $0x8d8] sm:$0xff]
        %v8139 = vld [vmem:[#allocation11 + $0x8e0] sm:$0xff]
        %v8140 = vld [vmem:[#allocation11 + $0x8e8] sm:$0xff]
        %v8141 = vld [vmem:[#allocation11 + $0x8f0] sm:$0xff]
        %v8142 = vld [vmem:[#allocation11 + $0x8f8] sm:$0xff]
        %v8143 = vld [vmem:[#allocation16] sm:$0x3f]
        %v8145 = vlaneseq
        %v8146 = vshrl.u32 %v8145, 7
        %v8147 = vsub.s32 0, %v8146
        %v8148 = vrot.slane %v8143, %v8147
        %v8149 = vlaneseq
        %v8150 = vshrl.u32 %v8149, 7
        %v8151 = vsub.s32 1, %v8150
        %v8152 = vrot.slane %v8143, %v8151
        %v8153 = vlaneseq
        %v8154 = vshrl.u32 %v8153, 7
        %v8155 = vsub.s32 2, %v8154
        %v8156 = vrot.slane %v8143, %v8155
        %v8157 = vlaneseq
        %v8158 = vshrl.u32 %v8157, 7
        %v8159 = vsub.s32 3, %v8158
        %v8160 = vrot.slane %v8143, %v8159
        %v8161 = vlaneseq
        %v8162 = vshrl.u32 %v8161, 7
        %v8163 = vsub.s32 4, %v8162
        %v8164 = vrot.slane %v8143, %v8163
        %v8165 = vlaneseq
        %v8166 = vshrl.u32 %v8165, 7
        %v8167 = vsub.s32 5, %v8166
        %v8168 = vrot.slane %v8143, %v8167
        %v8463 = vunpack.c.l.b16 %v7855
        %v8464 = vunpack.c.h.b16 %v7855
        %v8465 = vunpack.c.l.b16 %v7856
        %v8466 = vunpack.c.h.b16 %v7856
        %v8467 = vunpack.c.l.b16 %v7857
        %v8468 = vunpack.c.h.b16 %v7857
        %v8469 = vunpack.c.l.b16 %v7858
        %v8470 = vunpack.c.h.b16 %v7858
        %v8471 = vunpack.c.l.b16 %v7859
        %v8472 = vunpack.c.h.b16 %v7859
        %v8473 = vunpack.c.l.b16 %v7860
        %v8474 = vunpack.c.h.b16 %v7860
        %v8475 = vunpack.c.l.b16 %v7861
        %v8476 = vunpack.c.h.b16 %v7861
        %v8477 = vunpack.c.l.b16 %v7862
        %v8478 = vunpack.c.h.b16 %v7862
        %v8479 = vunpack.c.l.b16 %v7863
        %v8480 = vunpack.c.h.b16 %v7863
        %v8481 = vunpack.c.l.b16 %v7864
        %v8482 = vunpack.c.h.b16 %v7864
        %v8483 = vunpack.c.l.b16 %v7865
        %v8484 = vunpack.c.h.b16 %v7865
        %v8485 = vunpack.c.l.b16 %v7866
        %v8486 = vunpack.c.h.b16 %v7866
        %v8487 = vunpack.c.l.b16 %v7867
        %v8488 = vunpack.c.h.b16 %v7867
        %v8489 = vunpack.c.l.b16 %v7868
        %v8490 = vunpack.c.h.b16 %v7868
        %v8491 = vunpack.c.l.b16 %v7869
        %v8492 = vunpack.c.h.b16 %v7869
        %v8493 = vunpack.c.l.b16 %v7870
        %v8494 = vunpack.c.h.b16 %v7870
        %v8495 = vunpack.c.l.b16 %v7871
        %v8496 = vunpack.c.h.b16 %v7871
        %v8497 = vunpack.c.l.b16 %v7872
        %v8498 = vunpack.c.h.b16 %v7872
        %v8499 = vunpack.c.l.b16 %v7873
        %v8500 = vunpack.c.h.b16 %v7873
        %v8501 = vunpack.c.l.b16 %v7874
        %v8502 = vunpack.c.h.b16 %v7874
        %v8503 = vunpack.c.l.b16 %v7875
        %v8504 = vunpack.c.h.b16 %v7875
        %v8505 = vunpack.c.l.b16 %v7876
        %v8506 = vunpack.c.h.b16 %v7876
        %v8507 = vunpack.c.l.b16 %v7877
        %v8508 = vunpack.c.h.b16 %v7877
        %v8509 = vunpack.c.l.b16 %v7878
        %v8510 = vunpack.c.h.b16 %v7878
        %v8511 = vunpack.c.l.b16 %v7879
        %v8512 = vunpack.c.h.b16 %v7879
        %v8513 = vunpack.c.l.b16 %v7880
        %v8514 = vunpack.c.h.b16 %v7880
        %v8515 = vunpack.c.l.b16 %v7881
        %v8516 = vunpack.c.h.b16 %v7881
        %v8517 = vunpack.c.l.b16 %v7882
        %v8518 = vunpack.c.h.b16 %v7882
        %v8519 = vunpack.c.l.b16 %v7883
        %v8520 = vunpack.c.h.b16 %v7883
        %v8521 = vunpack.c.l.b16 %v7884
        %v8522 = vunpack.c.h.b16 %v7884
        %v8523 = vunpack.c.l.b16 %v7885
        %v8524 = vunpack.c.h.b16 %v7885
        %v8525 = vunpack.c.l.b16 %v7886
        %v8526 = vunpack.c.h.b16 %v7886
        %v8527 = vunpack.c.l.b16 %v7887
        %v8528 = vunpack.c.h.b16 %v7887
        %v8529 = vunpack.c.l.b16 %v7888
        %v8530 = vunpack.c.h.b16 %v7888
        %v8531 = vunpack.c.l.b16 %v7889
        %v8532 = vunpack.c.h.b16 %v7889
        %v8533 = vunpack.c.l.b16 %v7890
        %v8534 = vunpack.c.h.b16 %v7890
        %v8535 = vunpack.c.l.b16 %v7891
        %v8536 = vunpack.c.h.b16 %v7891
        %v8537 = vunpack.c.l.b16 %v7892
        %v8538 = vunpack.c.h.b16 %v7892
        %v8539 = vunpack.c.l.b16 %v7893
        %v8540 = vunpack.c.h.b16 %v7893
        %v8541 = vunpack.c.l.b16 %v7894
        %v8542 = vunpack.c.h.b16 %v7894
        %v8543 = vunpack.c.l.b16 %v7895
        %v8544 = vunpack.c.h.b16 %v7895
        %v8545 = vunpack.c.l.b16 %v7896
        %v8546 = vunpack.c.h.b16 %v7896
        %v8547 = vunpack.c.l.b16 %v7897
        %v8548 = vunpack.c.h.b16 %v7897
        %v8549 = vunpack.c.l.b16 %v7898
        %v8550 = vunpack.c.h.b16 %v7898
        %v8551 = vunpack.c.l.b16 %v7899
        %v8552 = vunpack.c.h.b16 %v7899
        %v8553 = vunpack.c.l.b16 %v7900
        %v8554 = vunpack.c.h.b16 %v7900
        %v8555 = vunpack.c.l.b16 %v7901
        %v8556 = vunpack.c.h.b16 %v7901
        %v8557 = vunpack.c.l.b16 %v7902
        %v8558 = vunpack.c.h.b16 %v7902
        %v8559 = vunpack.c.l.b16 %v7903
        %v8560 = vunpack.c.h.b16 %v7903
        %v8561 = vunpack.c.l.b16 %v7904
        %v8562 = vunpack.c.h.b16 %v7904
        %v8563 = vunpack.c.l.b16 %v7905
        %v8564 = vunpack.c.h.b16 %v7905
        %v8565 = vunpack.c.l.b16 %v7906
        %v8566 = vunpack.c.h.b16 %v7906
        %v8567 = vunpack.c.l.b16 %v7907
        %v8568 = vunpack.c.h.b16 %v7907
        %v8569 = vunpack.c.l.b16 %v7908
        %v8570 = vunpack.c.h.b16 %v7908
        %v8571 = vunpack.c.l.b16 %v7909
        %v8572 = vunpack.c.h.b16 %v7909
        %v8573 = vunpack.c.l.b16 %v7910
        %v8574 = vunpack.c.h.b16 %v7910
        %v8575 = vunpack.c.l.b16 %v7911
        %v8576 = vunpack.c.h.b16 %v7911
        %v8577 = vunpack.c.l.b16 %v7912
        %v8578 = vunpack.c.h.b16 %v7912
        %v8579 = vunpack.c.l.b16 %v7913
        %v8580 = vunpack.c.h.b16 %v7913
        %v8581 = vunpack.c.l.b16 %v7914
        %v8582 = vunpack.c.h.b16 %v7914
        %v8583 = vunpack.c.l.b16 %v7915
        %v8584 = vunpack.c.h.b16 %v7915
        %v8585 = vunpack.c.l.b16 %v7916
        %v8586 = vunpack.c.h.b16 %v7916
        %v8587 = vunpack.c.l.b16 %v7917
        %v8588 = vunpack.c.h.b16 %v7917
        %v8589 = vunpack.c.l.b16 %v7918
        %v8590 = vunpack.c.h.b16 %v7918
        %v8591 = vunpack.c.l.b16 %v7919
        %v8592 = vunpack.c.h.b16 %v7919
        %v8593 = vunpack.c.l.b16 %v7920
        %v8594 = vunpack.c.h.b16 %v7920
        %v8595 = vunpack.c.l.b16 %v7921
        %v8596 = vunpack.c.h.b16 %v7921
        %v8597 = vunpack.c.l.b16 %v7922
        %v8598 = vunpack.c.h.b16 %v7922
        %v8599 = vunpack.c.l.b16 %v7923
        %v8600 = vunpack.c.h.b16 %v7923
        %v8601 = vunpack.c.l.b16 %v7924
        %v8602 = vunpack.c.h.b16 %v7924
        %v8603 = vunpack.c.l.b16 %v7925
        %v8604 = vunpack.c.h.b16 %v7925
        %v8605 = vunpack.c.l.b16 %v7926
        %v8606 = vunpack.c.h.b16 %v7926
        %v8607 = vunpack.c.l.b16 %v7927
        %v8608 = vunpack.c.h.b16 %v7927
        %v8609 = vunpack.c.l.b16 %v7928
        %v8610 = vunpack.c.h.b16 %v7928
        %v8611 = vunpack.c.l.b16 %v7929
        %v8612 = vunpack.c.h.b16 %v7929
        %v8613 = vunpack.c.l.b16 %v7930
        %v8614 = vunpack.c.h.b16 %v7930
        %v8615 = vunpack.c.l.b16 %v7931
        %v8616 = vunpack.c.h.b16 %v7931
        %v8617 = vunpack.c.l.b16 %v7932
        %v8618 = vunpack.c.h.b16 %v7932
        %v8619 = vunpack.c.l.b16 %v7933
        %v8620 = vunpack.c.h.b16 %v7933
        %v8621 = vunpack.c.l.b16 %v7934
        %v8622 = vunpack.c.h.b16 %v7934
        %v8623 = vunpack.c.l.b16 %v7935
        %v8624 = vunpack.c.h.b16 %v7935
        %v8625 = vunpack.c.l.b16 %v7936
        %v8626 = vunpack.c.h.b16 %v7936
        %v8627 = vunpack.c.l.b16 %v7937
        %v8628 = vunpack.c.h.b16 %v7937
        %v8629 = vunpack.c.l.b16 %v7938
        %v8630 = vunpack.c.h.b16 %v7938
        %v8631 = vunpack.c.l.b16 %v7939
        %v8632 = vunpack.c.h.b16 %v7939
        %v8633 = vunpack.c.l.b16 %v7940
        %v8634 = vunpack.c.h.b16 %v7940
        %v8635 = vunpack.c.l.b16 %v7941
        %v8636 = vunpack.c.h.b16 %v7941
        %v8637 = vunpack.c.l.b16 %v7942
        %v8638 = vunpack.c.h.b16 %v7942
        %v8639 = vunpack.c.l.b16 %v7943
        %v8640 = vunpack.c.h.b16 %v7943
        %v8641 = vunpack.c.l.b16 %v7944
        %v8642 = vunpack.c.h.b16 %v7944
        %v8643 = vunpack.c.l.b16 %v7945
        %v8644 = vunpack.c.h.b16 %v7945
        %v8645 = vunpack.c.l.b16 %v7946
        %v8646 = vunpack.c.h.b16 %v7946
        %v8647 = vunpack.c.l.b16 %v7947
        %v8648 = vunpack.c.h.b16 %v7947
        %v8649 = vunpack.c.l.b16 %v7948
        %v8650 = vunpack.c.h.b16 %v7948
        %v8651 = vunpack.c.l.b16 %v7949
        %v8652 = vunpack.c.h.b16 %v7949
        %v8653 = vunpack.c.l.b16 %v7950
        %v8654 = vunpack.c.h.b16 %v7950
        %v8655 = vunpack.c.l.b16 %v7951
        %v8656 = vunpack.c.h.b16 %v7951
        %v8657 = vunpack.c.l.b16 %v7952
        %v8658 = vunpack.c.h.b16 %v7952
        %v8659 = vunpack.c.l.b16 %v7953
        %v8660 = vunpack.c.h.b16 %v7953
        %v8661 = vunpack.c.l.b16 %v7954
        %v8662 = vunpack.c.h.b16 %v7954
        %v8663 = vunpack.c.l.b16 %v7955
        %v8664 = vunpack.c.h.b16 %v7955
        %v8665 = vunpack.c.l.b16 %v7956
        %v8666 = vunpack.c.h.b16 %v7956
        %v8667 = vunpack.c.l.b16 %v7957
        %v8668 = vunpack.c.h.b16 %v7957
        %v8669 = vunpack.c.l.b16 %v7958
        %v8670 = vunpack.c.h.b16 %v7958
        %v8671 = vunpack.c.l.b16 %v7959
        %v8672 = vunpack.c.h.b16 %v7959
        %v8673 = vunpack.c.l.b16 %v7960
        %v8674 = vunpack.c.h.b16 %v7960
        %v8675 = vunpack.c.l.b16 %v7961
        %v8676 = vunpack.c.h.b16 %v7961
        %v8677 = vunpack.c.l.b16 %v7962
        %v8678 = vunpack.c.h.b16 %v7962
        %v8679 = vunpack.c.l.b16 %v7963
        %v8680 = vunpack.c.h.b16 %v7963
        %v8681 = vunpack.c.l.b16 %v7964
        %v8682 = vunpack.c.h.b16 %v7964
        %v8683 = vunpack.c.l.b16 %v7965
        %v8684 = vunpack.c.h.b16 %v7965
        %v8685 = vunpack.c.l.b16 %v7966
        %v8686 = vunpack.c.h.b16 %v7966
        %v8687 = vunpack.c.l.b16 %v7967
        %v8688 = vunpack.c.h.b16 %v7967
        %v8689 = vunpack.c.l.b16 %v7968
        %v8690 = vunpack.c.h.b16 %v7968
        %v8691 = vunpack.c.l.b16 %v7969
        %v8692 = vunpack.c.h.b16 %v7969
        %v8693 = vunpack.c.l.b16 %v7970
        %v8694 = vunpack.c.h.b16 %v7970
        %v8695 = vunpack.c.l.b16 %v7971
        %v8696 = vunpack.c.h.b16 %v7971
        %v8697 = vunpack.c.l.b16 %v7972
        %v8698 = vunpack.c.h.b16 %v7972
        %v8699 = vunpack.c.l.b16 %v7973
        %v8700 = vunpack.c.h.b16 %v7973
        %v8701 = vunpack.c.l.b16 %v7974
        %v8702 = vunpack.c.h.b16 %v7974
        %v8703 = vunpack.c.l.b16 %v7975
        %v8704 = vunpack.c.h.b16 %v7975
        %v8705 = vunpack.c.l.b16 %v7976
        %v8706 = vunpack.c.h.b16 %v7976
        %v8707 = vunpack.c.l.b16 %v7977
        %v8708 = vunpack.c.h.b16 %v7977
        %v8709 = vunpack.c.l.b16 %v7978
        %v8710 = vunpack.c.h.b16 %v7978
        %v8711 = vunpack.c.l.b16 %v7979
        %v8712 = vunpack.c.h.b16 %v7979
        %v8713 = vunpack.c.l.b16 %v7980
        %v8714 = vunpack.c.h.b16 %v7980
        %v8715 = vunpack.c.l.b16 %v7981
        %v8716 = vunpack.c.h.b16 %v7981
        %v8717 = vunpack.c.l.b16 %v7982
        %v8718 = vunpack.c.h.b16 %v7982
        %v8719 = vunpack.c.l.b16 %v7983
        %v8720 = vunpack.c.h.b16 %v7983
        %v8721 = vunpack.c.l.b16 %v7984
        %v8722 = vunpack.c.h.b16 %v7984
        %v8723 = vunpack.c.l.b16 %v7985
        %v8724 = vunpack.c.h.b16 %v7985
        %v8725 = vunpack.c.l.b16 %v7986
        %v8726 = vunpack.c.h.b16 %v7986
        %v8727 = vunpack.c.l.b16 %v7987
        %v8728 = vunpack.c.h.b16 %v7987
        %v8729 = vunpack.c.l.b16 %v7988
        %v8730 = vunpack.c.h.b16 %v7988
        %v8731 = vunpack.c.l.b16 %v7989
        %v8732 = vunpack.c.h.b16 %v7989
        %v8733 = vunpack.c.l.b16 %v7990
        %v8734 = vunpack.c.h.b16 %v7990
        %v8735 = vunpack.c.l.b16 %v7991
        %v8736 = vunpack.c.h.b16 %v7991
        %v8737 = vunpack.c.l.b16 %v7992
        %v8738 = vunpack.c.h.b16 %v7992
        %v8739 = vunpack.c.l.b16 %v7993
        %v8740 = vunpack.c.h.b16 %v7993
        %v8741 = vunpack.c.l.b16 %v7994
        %v8742 = vunpack.c.h.b16 %v7994
        %v8743 = vunpack.c.l.b16 %v7995
        %v8744 = vunpack.c.h.b16 %v7995
        %v8745 = vunpack.c.l.b16 %v7996
        %v8746 = vunpack.c.h.b16 %v7996
        %v8747 = vunpack.c.l.b16 %v7997
        %v8748 = vunpack.c.h.b16 %v7997
        %v8749 = vunpack.c.l.b16 %v7998
        %v8750 = vunpack.c.h.b16 %v7998
        %v8751 = vunpack.c.l.b16 %v7999
        %v8752 = vunpack.c.h.b16 %v7999
        %v8753 = vunpack.c.l.b16 %v8000
        %v8754 = vunpack.c.h.b16 %v8000
        %v8755 = vunpack.c.l.b16 %v8001
        %v8756 = vunpack.c.h.b16 %v8001
        %v8757 = vunpack.c.l.b16 %v8002
        %v8758 = vunpack.c.h.b16 %v8002
        %v8759 = vunpack.c.l.b16 %v8003
        %v8760 = vunpack.c.h.b16 %v8003
        %v8761 = vunpack.c.l.b16 %v8004
        %v8762 = vunpack.c.h.b16 %v8004
        %v8763 = vunpack.c.l.b16 %v8005
        %v8764 = vunpack.c.h.b16 %v8005
        %v8765 = vunpack.c.l.b16 %v8006
        %v8766 = vunpack.c.h.b16 %v8006
        %v8767 = vunpack.c.l.b16 %v8007
        %v8768 = vunpack.c.h.b16 %v8007
        %v8769 = vunpack.c.l.b16 %v8008
        %v8770 = vunpack.c.h.b16 %v8008
        %v8771 = vunpack.c.l.b16 %v8009
        %v8772 = vunpack.c.h.b16 %v8009
        %v8773 = vunpack.c.l.b16 %v8010
        %v8774 = vunpack.c.h.b16 %v8010
        %v8775 = vunpack.c.l.b16 %v8011
        %v8776 = vunpack.c.h.b16 %v8011
        %v8777 = vunpack.c.l.b16 %v8012
        %v8778 = vunpack.c.h.b16 %v8012
        %v8779 = vunpack.c.l.b16 %v8013
        %v8780 = vunpack.c.h.b16 %v8013
        %v8781 = vunpack.c.l.b16 %v8014
        %v8782 = vunpack.c.h.b16 %v8014
        %v8783 = vunpack.c.l.b16 %v8015
        %v8784 = vunpack.c.h.b16 %v8015
        %v8785 = vunpack.c.l.b16 %v8016
        %v8786 = vunpack.c.h.b16 %v8016
        %v8787 = vunpack.c.l.b16 %v8017
        %v8788 = vunpack.c.h.b16 %v8017
        %v8789 = vunpack.c.l.b16 %v8018
        %v8790 = vunpack.c.h.b16 %v8018
        %v8791 = vunpack.c.l.b16 %v8019
        %v8792 = vunpack.c.h.b16 %v8019
        %v8793 = vunpack.c.l.b16 %v8020
        %v8794 = vunpack.c.h.b16 %v8020
        %v8795 = vunpack.c.l.b16 %v8021
        %v8796 = vunpack.c.h.b16 %v8021
        %v8797 = vunpack.c.l.b16 %v8022
        %v8798 = vunpack.c.h.b16 %v8022
        %v8799 = vunpack.c.l.b16 %v8023
        %v8800 = vunpack.c.h.b16 %v8023
        %v8801 = vunpack.c.l.b16 %v8024
        %v8802 = vunpack.c.h.b16 %v8024
        %v8803 = vunpack.c.l.b16 %v8025
        %v8804 = vunpack.c.h.b16 %v8025
        %v8805 = vunpack.c.l.b16 %v8026
        %v8806 = vunpack.c.h.b16 %v8026
        %v8807 = vunpack.c.l.b16 %v8027
        %v8808 = vunpack.c.h.b16 %v8027
        %v8809 = vunpack.c.l.b16 %v8028
        %v8810 = vunpack.c.h.b16 %v8028
        %v8811 = vunpack.c.l.b16 %v8029
        %v8812 = vunpack.c.h.b16 %v8029
        %v8813 = vunpack.c.l.b16 %v8030
        %v8814 = vunpack.c.h.b16 %v8030
        %v8815 = vunpack.c.l.b16 %v8031
        %v8816 = vunpack.c.h.b16 %v8031
        %v8817 = vunpack.c.l.b16 %v8032
        %v8818 = vunpack.c.h.b16 %v8032
        %v8819 = vunpack.c.l.b16 %v8033
        %v8820 = vunpack.c.h.b16 %v8033
        %v8821 = vunpack.c.l.b16 %v8034
        %v8822 = vunpack.c.h.b16 %v8034
        %v8823 = vunpack.c.l.b16 %v8035
        %v8824 = vunpack.c.h.b16 %v8035
        %v8825 = vunpack.c.l.b16 %v8036
        %v8826 = vunpack.c.h.b16 %v8036
        %v8827 = vunpack.c.l.b16 %v8037
        %v8828 = vunpack.c.h.b16 %v8037
        %v8829 = vunpack.c.l.b16 %v8038
        %v8830 = vunpack.c.h.b16 %v8038
        %v8831 = vunpack.c.l.b16 %v8039
        %v8832 = vunpack.c.h.b16 %v8039
        %v8833 = vunpack.c.l.b16 %v8040
        %v8834 = vunpack.c.h.b16 %v8040
        %v8835 = vunpack.c.l.b16 %v8041
        %v8836 = vunpack.c.h.b16 %v8041
        %v8837 = vunpack.c.l.b16 %v8042
        %v8838 = vunpack.c.h.b16 %v8042
        %v8839 = vunpack.c.l.b16 %v8043
        %v8840 = vunpack.c.h.b16 %v8043
        %v8841 = vunpack.c.l.b16 %v8044
        %v8842 = vunpack.c.h.b16 %v8044
        %v8843 = vunpack.c.l.b16 %v8045
        %v8844 = vunpack.c.h.b16 %v8045
        %v8845 = vunpack.c.l.b16 %v8046
        %v8846 = vunpack.c.h.b16 %v8046
        %v8847 = vunpack.c.l.b16 %v8047
        %v8848 = vunpack.c.h.b16 %v8047
        %v8849 = vunpack.c.l.b16 %v8048
        %v8850 = vunpack.c.h.b16 %v8048
        %v8851 = vunpack.c.l.b16 %v8049
        %v8852 = vunpack.c.h.b16 %v8049
        %v8853 = vunpack.c.l.b16 %v8050
        %v8854 = vunpack.c.h.b16 %v8050
        %v8855 = vunpack.c.l.b16 %v8051
        %v8856 = vunpack.c.h.b16 %v8051
        %v8857 = vunpack.c.l.b16 %v8052
        %v8858 = vunpack.c.h.b16 %v8052
        %v8859 = vunpack.c.l.b16 %v8053
        %v8860 = vunpack.c.h.b16 %v8053
        %v8861 = vunpack.c.l.b16 %v8054
        %v8862 = vunpack.c.h.b16 %v8054
        %v8863 = vunpack.c.l.b16 %v8055
        %v8864 = vunpack.c.h.b16 %v8055
        %v8865 = vunpack.c.l.b16 %v8056
        %v8866 = vunpack.c.h.b16 %v8056
        %v8867 = vunpack.c.l.b16 %v8057
        %v8868 = vunpack.c.h.b16 %v8057
        %v8869 = vunpack.c.l.b16 %v8058
        %v8870 = vunpack.c.h.b16 %v8058
        %v8871 = vunpack.c.l.b16 %v8059
        %v8872 = vunpack.c.h.b16 %v8059
        %v8873 = vunpack.c.l.b16 %v8060
        %v8874 = vunpack.c.h.b16 %v8060
        %v8875 = vunpack.c.l.b16 %v8061
        %v8876 = vunpack.c.h.b16 %v8061
        %v8877 = vunpack.c.l.b16 %v8062
        %v8878 = vunpack.c.h.b16 %v8062
        %v8879 = vunpack.c.l.b16 %v8063
        %v8880 = vunpack.c.h.b16 %v8063
        %v8881 = vunpack.c.l.b16 %v8064
        %v8882 = vunpack.c.h.b16 %v8064
        %v8883 = vunpack.c.l.b16 %v8065
        %v8884 = vunpack.c.h.b16 %v8065
        %v8885 = vunpack.c.l.b16 %v8066
        %v8886 = vunpack.c.h.b16 %v8066
        %v8887 = vunpack.c.l.b16 %v8067
        %v8888 = vunpack.c.h.b16 %v8067
        %v8889 = vunpack.c.l.b16 %v8068
        %v8890 = vunpack.c.h.b16 %v8068
        %v8891 = vunpack.c.l.b16 %v8069
        %v8892 = vunpack.c.h.b16 %v8069
        %v8893 = vunpack.c.l.b16 %v8070
        %v8894 = vunpack.c.h.b16 %v8070
        %v8895 = vunpack.c.l.b16 %v8071
        %v8896 = vunpack.c.h.b16 %v8071
        %v8897 = vunpack.c.l.b16 %v8072
        %v8898 = vunpack.c.h.b16 %v8072
        %v8899 = vunpack.c.l.b16 %v8073
        %v8900 = vunpack.c.h.b16 %v8073
        %v8901 = vunpack.c.l.b16 %v8074
        %v8902 = vunpack.c.h.b16 %v8074
        %v8903 = vunpack.c.l.b16 %v8075
        %v8904 = vunpack.c.h.b16 %v8075
        %v8905 = vunpack.c.l.b16 %v8076
        %v8906 = vunpack.c.h.b16 %v8076
        %v8907 = vunpack.c.l.b16 %v8077
        %v8908 = vunpack.c.h.b16 %v8077
        %v8909 = vunpack.c.l.b16 %v8078
        %v8910 = vunpack.c.h.b16 %v8078
        %v8911 = vunpack.c.l.b16 %v8079
        %v8912 = vunpack.c.h.b16 %v8079
        %v8913 = vunpack.c.l.b16 %v8080
        %v8914 = vunpack.c.h.b16 %v8080
        %v8915 = vunpack.c.l.b16 %v8081
        %v8916 = vunpack.c.h.b16 %v8081
        %v8917 = vunpack.c.l.b16 %v8082
        %v8918 = vunpack.c.h.b16 %v8082
        %v8919 = vunpack.c.l.b16 %v8083
        %v8920 = vunpack.c.h.b16 %v8083
        %v8921 = vunpack.c.l.b16 %v8084
        %v8922 = vunpack.c.h.b16 %v8084
        %v8923 = vunpack.c.l.b16 %v8085
        %v8924 = vunpack.c.h.b16 %v8085
        %v8925 = vunpack.c.l.b16 %v8086
        %v8926 = vunpack.c.h.b16 %v8086
        %v8927 = vunpack.c.l.b16 %v8087
        %v8928 = vunpack.c.h.b16 %v8087
        %v8929 = vunpack.c.l.b16 %v8088
        %v8930 = vunpack.c.h.b16 %v8088
        %v8931 = vunpack.c.l.b16 %v8089
        %v8932 = vunpack.c.h.b16 %v8089
        %v8933 = vunpack.c.l.b16 %v8090
        %v8934 = vunpack.c.h.b16 %v8090
        %v8935 = vunpack.c.l.b16 %v8091
        %v8936 = vunpack.c.h.b16 %v8091
        %v8937 = vunpack.c.l.b16 %v8092
        %v8938 = vunpack.c.h.b16 %v8092
        %v8939 = vunpack.c.l.b16 %v8093
        %v8940 = vunpack.c.h.b16 %v8093
        %v8941 = vunpack.c.l.b16 %v8094
        %v8942 = vunpack.c.h.b16 %v8094
        %v8943 = vunpack.c.l.b16 %v8095
        %v8944 = vunpack.c.h.b16 %v8095
        %v8945 = vunpack.c.l.b16 %v8096
        %v8946 = vunpack.c.h.b16 %v8096
        %v8947 = vunpack.c.l.b16 %v8097
        %v8948 = vunpack.c.h.b16 %v8097
        %v8949 = vunpack.c.l.b16 %v8098
        %v8950 = vunpack.c.h.b16 %v8098
        %v8951 = vunpack.c.l.b16 %v8099
        %v8952 = vunpack.c.h.b16 %v8099
        %v8953 = vunpack.c.l.b16 %v8100
        %v8954 = vunpack.c.h.b16 %v8100
        %v8955 = vunpack.c.l.b16 %v8101
        %v8956 = vunpack.c.h.b16 %v8101
        %v8957 = vunpack.c.l.b16 %v8102
        %v8958 = vunpack.c.h.b16 %v8102
        %v8959 = vunpack.c.l.b16 %v8103
        %v8960 = vunpack.c.h.b16 %v8103
        %v8961 = vunpack.c.l.b16 %v8104
        %v8962 = vunpack.c.h.b16 %v8104
        %v8963 = vunpack.c.l.b16 %v8105
        %v8964 = vunpack.c.h.b16 %v8105
        %v8965 = vunpack.c.l.b16 %v8106
        %v8966 = vunpack.c.h.b16 %v8106
        %v8967 = vunpack.c.l.b16 %v8107
        %v8968 = vunpack.c.h.b16 %v8107
        %v8969 = vunpack.c.l.b16 %v8108
        %v8970 = vunpack.c.h.b16 %v8108
        %v8971 = vunpack.c.l.b16 %v8109
        %v8972 = vunpack.c.h.b16 %v8109
        %v8973 = vunpack.c.l.b16 %v8110
        %v8974 = vunpack.c.h.b16 %v8110
        %v8975 = vunpack.c.l.b16 %v8111
        %v8976 = vunpack.c.h.b16 %v8111
        %v8977 = vunpack.c.l.b16 %v8112
        %v8978 = vunpack.c.h.b16 %v8112
        %v8979 = vunpack.c.l.b16 %v8113
        %v8980 = vunpack.c.h.b16 %v8113
        %v8981 = vunpack.c.l.b16 %v8114
        %v8982 = vunpack.c.h.b16 %v8114
        %v8983 = vunpack.c.l.b16 %v8115
        %v8984 = vunpack.c.h.b16 %v8115
        %v8985 = vunpack.c.l.b16 %v8116
        %v8986 = vunpack.c.h.b16 %v8116
        %v8987 = vunpack.c.l.b16 %v8117
        %v8988 = vunpack.c.h.b16 %v8117
        %v8989 = vunpack.c.l.b16 %v8118
        %v8990 = vunpack.c.h.b16 %v8118
        %v8991 = vunpack.c.l.b16 %v8119
        %v8992 = vunpack.c.h.b16 %v8119
        %v8993 = vunpack.c.l.b16 %v8120
        %v8994 = vunpack.c.h.b16 %v8120
        %v8995 = vunpack.c.l.b16 %v8121
        %v8996 = vunpack.c.h.b16 %v8121
        %v8997 = vunpack.c.l.b16 %v8122
        %v8998 = vunpack.c.h.b16 %v8122
        %v8999 = vunpack.c.l.b16 %v8123
        %v9000 = vunpack.c.h.b16 %v8123
        %v9001 = vunpack.c.l.b16 %v8124
        %v9002 = vunpack.c.h.b16 %v8124
        %v9003 = vunpack.c.l.b16 %v8125
        %v9004 = vunpack.c.h.b16 %v8125
        %v9005 = vunpack.c.l.b16 %v8126
        %v9006 = vunpack.c.h.b16 %v8126
        %v9007 = vunpack.c.l.b16 %v8127
        %v9008 = vunpack.c.h.b16 %v8127
        %v9009 = vunpack.c.l.b16 %v8128
        %v9010 = vunpack.c.h.b16 %v8128
        %v9011 = vunpack.c.l.b16 %v8129
        %v9012 = vunpack.c.h.b16 %v8129
        %v9013 = vunpack.c.l.b16 %v8130
        %v9014 = vunpack.c.h.b16 %v8130
        %v9015 = vunpack.c.l.b16 %v8131
        %v9016 = vunpack.c.h.b16 %v8131
        %v9017 = vunpack.c.l.b16 %v8132
        %v9018 = vunpack.c.h.b16 %v8132
        %v9019 = vunpack.c.l.b16 %v8133
        %v9020 = vunpack.c.h.b16 %v8133
        %v9021 = vunpack.c.l.b16 %v8134
        %v9022 = vunpack.c.h.b16 %v8134
        %v9023 = vunpack.c.l.b16 %v8135
        %v9024 = vunpack.c.h.b16 %v8135
        %v9025 = vunpack.c.l.b16 %v8136
        %v9026 = vunpack.c.h.b16 %v8136
        %v9027 = vunpack.c.l.b16 %v8137
        %v9028 = vunpack.c.h.b16 %v8137
        %v9029 = vunpack.c.l.b16 %v8138
        %v9030 = vunpack.c.h.b16 %v8138
        %v9031 = vunpack.c.l.b16 %v8139
        %v9032 = vunpack.c.h.b16 %v8139
        %v9033 = vunpack.c.l.b16 %v8140
        %v9034 = vunpack.c.h.b16 %v8140
        %v9035 = vunpack.c.l.b16 %v8141
        %v9036 = vunpack.c.h.b16 %v8141
        %v9037 = vunpack.c.l.b16 %v8142
        %v9038 = vunpack.c.h.b16 %v8142
        %v9039 = vpack.c.b16 %v8469, %v8463
        %v9040 = vpack.c.b16 %v8470, %v8464
        %v9041 = vpack.c.b16 %v8471, %v8465
        %v9042 = vpack.c.b16 %v8472, %v8466
        %v9043 = vpack.c.b16 %v8473, %v8467
        %v9044 = vpack.c.b16 %v8474, %v8468
        %v9045 = vpack.c.b16 %v8481, %v8475
        %v9046 = vpack.c.b16 %v8482, %v8476
        %v9047 = vpack.c.b16 %v8483, %v8477
        %v9048 = vpack.c.b16 %v8484, %v8478
        %v9049 = vpack.c.b16 %v8485, %v8479
        %v9050 = vpack.c.b16 %v8486, %v8480
        %v9051 = vpack.c.b16 %v8493, %v8487
        %v9052 = vpack.c.b16 %v8494, %v8488
        %v9053 = vpack.c.b16 %v8495, %v8489
        %v9054 = vpack.c.b16 %v8496, %v8490
        %v9055 = vpack.c.b16 %v8497, %v8491
        %v9056 = vpack.c.b16 %v8498, %v8492
        %v9057 = vpack.c.b16 %v8505, %v8499
        %v9058 = vpack.c.b16 %v8506, %v8500
        %v9059 = vpack.c.b16 %v8507, %v8501
        %v9060 = vpack.c.b16 %v8508, %v8502
        %v9061 = vpack.c.b16 %v8509, %v8503
        %v9062 = vpack.c.b16 %v8510, %v8504
        %v9063 = vpack.c.b16 %v8517, %v8511
        %v9064 = vpack.c.b16 %v8518, %v8512
        %v9065 = vpack.c.b16 %v8519, %v8513
        %v9066 = vpack.c.b16 %v8520, %v8514
        %v9067 = vpack.c.b16 %v8521, %v8515
        %v9068 = vpack.c.b16 %v8522, %v8516
        %v9069 = vpack.c.b16 %v8529, %v8523
        %v9070 = vpack.c.b16 %v8530, %v8524
        %v9071 = vpack.c.b16 %v8531, %v8525
        %v9072 = vpack.c.b16 %v8532, %v8526
        %v9073 = vpack.c.b16 %v8533, %v8527
        %v9074 = vpack.c.b16 %v8534, %v8528
        %v9075 = vpack.c.b16 %v8541, %v8535
        %v9076 = vpack.c.b16 %v8542, %v8536
        %v9077 = vpack.c.b16 %v8543, %v8537
        %v9078 = vpack.c.b16 %v8544, %v8538
        %v9079 = vpack.c.b16 %v8545, %v8539
        %v9080 = vpack.c.b16 %v8546, %v8540
        %v9081 = vpack.c.b16 %v8553, %v8547
        %v9082 = vpack.c.b16 %v8554, %v8548
        %v9083 = vpack.c.b16 %v8555, %v8549
        %v9084 = vpack.c.b16 %v8556, %v8550
        %v9085 = vpack.c.b16 %v8557, %v8551
        %v9086 = vpack.c.b16 %v8558, %v8552
        %v9087 = vpack.c.b16 %v8565, %v8559
        %v9088 = vpack.c.b16 %v8566, %v8560
        %v9089 = vpack.c.b16 %v8567, %v8561
        %v9090 = vpack.c.b16 %v8568, %v8562
        %v9091 = vpack.c.b16 %v8569, %v8563
        %v9092 = vpack.c.b16 %v8570, %v8564
        %v9093 = vpack.c.b16 %v8577, %v8571
        %v9094 = vpack.c.b16 %v8578, %v8572
        %v9095 = vpack.c.b16 %v8579, %v8573
        %v9096 = vpack.c.b16 %v8580, %v8574
        %v9097 = vpack.c.b16 %v8581, %v8575
        %v9098 = vpack.c.b16 %v8582, %v8576
        %v9099 = vpack.c.b16 %v8589, %v8583
        %v9100 = vpack.c.b16 %v8590, %v8584
        %v9101 = vpack.c.b16 %v8591, %v8585
        %v9102 = vpack.c.b16 %v8592, %v8586
        %v9103 = vpack.c.b16 %v8593, %v8587
        %v9104 = vpack.c.b16 %v8594, %v8588
        %v9105 = vpack.c.b16 %v8601, %v8595
        %v9106 = vpack.c.b16 %v8602, %v8596
        %v9107 = vpack.c.b16 %v8603, %v8597
        %v9108 = vpack.c.b16 %v8604, %v8598
        %v9109 = vpack.c.b16 %v8605, %v8599
        %v9110 = vpack.c.b16 %v8606, %v8600
        %v9111 = vpack.c.b16 %v8613, %v8607
        %v9112 = vpack.c.b16 %v8614, %v8608
        %v9113 = vpack.c.b16 %v8615, %v8609
        %v9114 = vpack.c.b16 %v8616, %v8610
        %v9115 = vpack.c.b16 %v8617, %v8611
        %v9116 = vpack.c.b16 %v8618, %v8612
        %v9117 = vpack.c.b16 %v8625, %v8619
        %v9118 = vpack.c.b16 %v8626, %v8620
        %v9119 = vpack.c.b16 %v8627, %v8621
        %v9120 = vpack.c.b16 %v8628, %v8622
        %v9121 = vpack.c.b16 %v8629, %v8623
        %v9122 = vpack.c.b16 %v8630, %v8624
        %v9123 = vpack.c.b16 %v8637, %v8631
        %v9124 = vpack.c.b16 %v8638, %v8632
        %v9125 = vpack.c.b16 %v8639, %v8633
        %v9126 = vpack.c.b16 %v8640, %v8634
        %v9127 = vpack.c.b16 %v8641, %v8635
        %v9128 = vpack.c.b16 %v8642, %v8636
        %v9129 = vpack.c.b16 %v8649, %v8643
        %v9130 = vpack.c.b16 %v8650, %v8644
        %v9131 = vpack.c.b16 %v8651, %v8645
        %v9132 = vpack.c.b16 %v8652, %v8646
        %v9133 = vpack.c.b16 %v8653, %v8647
        %v9134 = vpack.c.b16 %v8654, %v8648
        %v9135 = vpack.c.b16 %v8661, %v8655
        %v9136 = vpack.c.b16 %v8662, %v8656
        %v9137 = vpack.c.b16 %v8663, %v8657
        %v9138 = vpack.c.b16 %v8664, %v8658
        %v9139 = vpack.c.b16 %v8665, %v8659
        %v9140 = vpack.c.b16 %v8666, %v8660
        %v9141 = vpack.c.b16 %v8673, %v8667
        %v9142 = vpack.c.b16 %v8674, %v8668
        %v9143 = vpack.c.b16 %v8675, %v8669
        %v9144 = vpack.c.b16 %v8676, %v8670
        %v9145 = vpack.c.b16 %v8677, %v8671
        %v9146 = vpack.c.b16 %v8678, %v8672
        %v9147 = vpack.c.b16 %v8685, %v8679
        %v9148 = vpack.c.b16 %v8686, %v8680
        %v9149 = vpack.c.b16 %v8687, %v8681
        %v9150 = vpack.c.b16 %v8688, %v8682
        %v9151 = vpack.c.b16 %v8689, %v8683
        %v9152 = vpack.c.b16 %v8690, %v8684
        %v9153 = vpack.c.b16 %v8697, %v8691
        %v9154 = vpack.c.b16 %v8698, %v8692
        %v9155 = vpack.c.b16 %v8699, %v8693
        %v9156 = vpack.c.b16 %v8700, %v8694
        %v9157 = vpack.c.b16 %v8701, %v8695
        %v9158 = vpack.c.b16 %v8702, %v8696
        %v9159 = vpack.c.b16 %v8709, %v8703
        %v9160 = vpack.c.b16 %v8710, %v8704
        %v9161 = vpack.c.b16 %v8711, %v8705
        %v9162 = vpack.c.b16 %v8712, %v8706
        %v9163 = vpack.c.b16 %v8713, %v8707
        %v9164 = vpack.c.b16 %v8714, %v8708
        %v9165 = vpack.c.b16 %v8721, %v8715
        %v9166 = vpack.c.b16 %v8722, %v8716
        %v9167 = vpack.c.b16 %v8723, %v8717
        %v9168 = vpack.c.b16 %v8724, %v8718
        %v9169 = vpack.c.b16 %v8725, %v8719
        %v9170 = vpack.c.b16 %v8726, %v8720
        %v9171 = vpack.c.b16 %v8733, %v8727
        %v9172 = vpack.c.b16 %v8734, %v8728
        %v9173 = vpack.c.b16 %v8735, %v8729
        %v9174 = vpack.c.b16 %v8736, %v8730
        %v9175 = vpack.c.b16 %v8737, %v8731
        %v9176 = vpack.c.b16 %v8738, %v8732
        %v9177 = vpack.c.b16 %v8745, %v8739
        %v9178 = vpack.c.b16 %v8746, %v8740
        %v9179 = vpack.c.b16 %v8747, %v8741
        %v9180 = vpack.c.b16 %v8748, %v8742
        %v9181 = vpack.c.b16 %v8749, %v8743
        %v9182 = vpack.c.b16 %v8750, %v8744
        %v9183 = vpack.c.b16 %v8757, %v8751
        %v9184 = vpack.c.b16 %v8758, %v8752
        %v9185 = vpack.c.b16 %v8759, %v8753
        %v9186 = vpack.c.b16 %v8760, %v8754
        %v9187 = vpack.c.b16 %v8761, %v8755
        %v9188 = vpack.c.b16 %v8762, %v8756
        %v9189 = vpack.c.b16 %v8769, %v8763
        %v9190 = vpack.c.b16 %v8770, %v8764
        %v9191 = vpack.c.b16 %v8771, %v8765
        %v9192 = vpack.c.b16 %v8772, %v8766
        %v9193 = vpack.c.b16 %v8773, %v8767
        %v9194 = vpack.c.b16 %v8774, %v8768
        %v9195 = vpack.c.b16 %v8781, %v8775
        %v9196 = vpack.c.b16 %v8782, %v8776
        %v9197 = vpack.c.b16 %v8783, %v8777
        %v9198 = vpack.c.b16 %v8784, %v8778
        %v9199 = vpack.c.b16 %v8785, %v8779
        %v9200 = vpack.c.b16 %v8786, %v8780
        %v9201 = vpack.c.b16 %v8793, %v8787
        %v9202 = vpack.c.b16 %v8794, %v8788
        %v9203 = vpack.c.b16 %v8795, %v8789
        %v9204 = vpack.c.b16 %v8796, %v8790
        %v9205 = vpack.c.b16 %v8797, %v8791
        %v9206 = vpack.c.b16 %v8798, %v8792
        %v9207 = vpack.c.b16 %v8805, %v8799
        %v9208 = vpack.c.b16 %v8806, %v8800
        %v9209 = vpack.c.b16 %v8807, %v8801
        %v9210 = vpack.c.b16 %v8808, %v8802
        %v9211 = vpack.c.b16 %v8809, %v8803
        %v9212 = vpack.c.b16 %v8810, %v8804
        %v9213 = vpack.c.b16 %v8817, %v8811
        %v9214 = vpack.c.b16 %v8818, %v8812
        %v9215 = vpack.c.b16 %v8819, %v8813
        %v9216 = vpack.c.b16 %v8820, %v8814
        %v9217 = vpack.c.b16 %v8821, %v8815
        %v9218 = vpack.c.b16 %v8822, %v8816
        %v9219 = vpack.c.b16 %v8829, %v8823
        %v9220 = vpack.c.b16 %v8830, %v8824
        %v9221 = vpack.c.b16 %v8831, %v8825
        %v9222 = vpack.c.b16 %v8832, %v8826
        %v9223 = vpack.c.b16 %v8833, %v8827
        %v9224 = vpack.c.b16 %v8834, %v8828
        %v9225 = vpack.c.b16 %v8841, %v8835
        %v9226 = vpack.c.b16 %v8842, %v8836
        %v9227 = vpack.c.b16 %v8843, %v8837
        %v9228 = vpack.c.b16 %v8844, %v8838
        %v9229 = vpack.c.b16 %v8845, %v8839
        %v9230 = vpack.c.b16 %v8846, %v8840
        %v9231 = vpack.c.b16 %v8853, %v8847
        %v9232 = vpack.c.b16 %v8854, %v8848
        %v9233 = vpack.c.b16 %v8855, %v8849
        %v9234 = vpack.c.b16 %v8856, %v8850
        %v9235 = vpack.c.b16 %v8857, %v8851
        %v9236 = vpack.c.b16 %v8858, %v8852
        %v9237 = vpack.c.b16 %v8865, %v8859
        %v9238 = vpack.c.b16 %v8866, %v8860
        %v9239 = vpack.c.b16 %v8867, %v8861
        %v9240 = vpack.c.b16 %v8868, %v8862
        %v9241 = vpack.c.b16 %v8869, %v8863
        %v9242 = vpack.c.b16 %v8870, %v8864
        %v9243 = vpack.c.b16 %v8877, %v8871
        %v9244 = vpack.c.b16 %v8878, %v8872
        %v9245 = vpack.c.b16 %v8879, %v8873
        %v9246 = vpack.c.b16 %v8880, %v8874
        %v9247 = vpack.c.b16 %v8881, %v8875
        %v9248 = vpack.c.b16 %v8882, %v8876
        %v9249 = vpack.c.b16 %v8889, %v8883
        %v9250 = vpack.c.b16 %v8890, %v8884
        %v9251 = vpack.c.b16 %v8891, %v8885
        %v9252 = vpack.c.b16 %v8892, %v8886
        %v9253 = vpack.c.b16 %v8893, %v8887
        %v9254 = vpack.c.b16 %v8894, %v8888
        %v9255 = vpack.c.b16 %v8901, %v8895
        %v9256 = vpack.c.b16 %v8902, %v8896
        %v9257 = vpack.c.b16 %v8903, %v8897
        %v9258 = vpack.c.b16 %v8904, %v8898
        %v9259 = vpack.c.b16 %v8905, %v8899
        %v9260 = vpack.c.b16 %v8906, %v8900
        %v9261 = vpack.c.b16 %v8913, %v8907
        %v9262 = vpack.c.b16 %v8914, %v8908
        %v9263 = vpack.c.b16 %v8915, %v8909
        %v9264 = vpack.c.b16 %v8916, %v8910
        %v9265 = vpack.c.b16 %v8917, %v8911
        %v9266 = vpack.c.b16 %v8918, %v8912
        %v9267 = vpack.c.b16 %v8925, %v8919
        %v9268 = vpack.c.b16 %v8926, %v8920
        %v9269 = vpack.c.b16 %v8927, %v8921
        %v9270 = vpack.c.b16 %v8928, %v8922
        %v9271 = vpack.c.b16 %v8929, %v8923
        %v9272 = vpack.c.b16 %v8930, %v8924
        %v9273 = vpack.c.b16 %v8937, %v8931
        %v9274 = vpack.c.b16 %v8938, %v8932
        %v9275 = vpack.c.b16 %v8939, %v8933
        %v9276 = vpack.c.b16 %v8940, %v8934
        %v9277 = vpack.c.b16 %v8941, %v8935
        %v9278 = vpack.c.b16 %v8942, %v8936
        %v9279 = vpack.c.b16 %v8949, %v8943
        %v9280 = vpack.c.b16 %v8950, %v8944
        %v9281 = vpack.c.b16 %v8951, %v8945
        %v9282 = vpack.c.b16 %v8952, %v8946
        %v9283 = vpack.c.b16 %v8953, %v8947
        %v9284 = vpack.c.b16 %v8954, %v8948
        %v9285 = vpack.c.b16 %v8961, %v8955
        %v9286 = vpack.c.b16 %v8962, %v8956
        %v9287 = vpack.c.b16 %v8963, %v8957
        %v9288 = vpack.c.b16 %v8964, %v8958
        %v9289 = vpack.c.b16 %v8965, %v8959
        %v9290 = vpack.c.b16 %v8966, %v8960
        %v9291 = vpack.c.b16 %v8973, %v8967
        %v9292 = vpack.c.b16 %v8974, %v8968
        %v9293 = vpack.c.b16 %v8975, %v8969
        %v9294 = vpack.c.b16 %v8976, %v8970
        %v9295 = vpack.c.b16 %v8977, %v8971
        %v9296 = vpack.c.b16 %v8978, %v8972
        %v9297 = vpack.c.b16 %v8985, %v8979
        %v9298 = vpack.c.b16 %v8986, %v8980
        %v9299 = vpack.c.b16 %v8987, %v8981
        %v9300 = vpack.c.b16 %v8988, %v8982
        %v9301 = vpack.c.b16 %v8989, %v8983
        %v9302 = vpack.c.b16 %v8990, %v8984
        %v9303 = vpack.c.b16 %v8997, %v8991
        %v9304 = vpack.c.b16 %v8998, %v8992
        %v9305 = vpack.c.b16 %v8999, %v8993
        %v9306 = vpack.c.b16 %v9000, %v8994
        %v9307 = vpack.c.b16 %v9001, %v8995
        %v9308 = vpack.c.b16 %v9002, %v8996
        %v9309 = vpack.c.b16 %v9009, %v9003
        %v9310 = vpack.c.b16 %v9010, %v9004
        %v9311 = vpack.c.b16 %v9011, %v9005
        %v9312 = vpack.c.b16 %v9012, %v9006
        %v9313 = vpack.c.b16 %v9013, %v9007
        %v9314 = vpack.c.b16 %v9014, %v9008
        %v9315 = vpack.c.b16 %v9021, %v9015
        %v9316 = vpack.c.b16 %v9022, %v9016
        %v9317 = vpack.c.b16 %v9023, %v9017
        %v9318 = vpack.c.b16 %v9024, %v9018
        %v9319 = vpack.c.b16 %v9025, %v9019
        %v9320 = vpack.c.b16 %v9026, %v9020
        %v9321 = vpack.c.b16 %v9033, %v9027
        %v9322 = vpack.c.b16 %v9034, %v9028
        %v9323 = vpack.c.b16 %v9035, %v9029
        %v9324 = vpack.c.b16 %v9036, %v9030
        %v9325 = vpack.c.b16 %v9037, %v9031
        %v9326 = vpack.c.b16 %v9038, %v9032
        %9615 = vmatprep.subr.bf16.mxu0 %v9040
        %9616 = vmatpush1.bf16.msra.mxu0 %v9039
        %9617 = vmatprep.subr.bf16.mxu0 %v9046
        %9618 = vmatpush1.bf16.msra.mxu0 %v9045
        %9619 = vmatprep.subr.bf16.mxu0 %v9052
        %9620 = vmatpush1.bf16.msra.mxu0 %v9051
        %9621 = vmatprep.subr.bf16.mxu0 %v9058
        %9622 = vmatpush1.bf16.msra.mxu0 %v9057
        %9623 = vmatprep.subr.bf16.mxu0 %v9064
        %9624 = vmatpush1.bf16.msra.mxu0 %v9063
        %9625 = vmatprep.subr.bf16.mxu0 %v9070
        %9626 = vmatpush1.bf16.msra.mxu0 %v9069
        %9627 = vmatprep.subr.bf16.mxu0 %v9076
        %9628 = vmatpush1.bf16.msra.mxu0 %v9075
        %9629 = vmatprep.subr.bf16.mxu0 %v9082
        %9630 = vmatpush1.bf16.msra.mxu0 %v9081
        %9631 = vmatprep.subr.bf16.mxu0 %v9088
        %9632 = vmatpush1.bf16.msra.mxu0 %v9087
        %9633 = vmatprep.subr.bf16.mxu0 %v9094
        %9634 = vmatpush1.bf16.msra.mxu0 %v9093
        %9635 = vmatprep.subr.bf16.mxu0 %v9100
        %9636 = vmatpush1.bf16.msra.mxu0 %v9099
        %9637 = vmatprep.subr.bf16.mxu0 %v9106
        %9638 = vmatpush1.bf16.msra.mxu0 %v9105
        %9639 = vmatprep.subr.bf16.mxu0 %v9112
        %9640 = vmatpush1.bf16.msra.mxu0 %v9111
        %9641 = vmatprep.subr.bf16.mxu0 %v9118
        %9642 = vmatpush1.bf16.msra.mxu0 %v9117
        %9643 = vmatprep.subr.bf16.mxu0 %v9124
        %9644 = vmatpush1.bf16.msra.mxu0 %v9123
        %9645 = vmatprep.subr.bf16.mxu0 %v9130
        %9646 = vmatpush1.bf16.msra.mxu0 %v9129
        %9647 = vmatprep.mubr.bf16.mxu0 %v1486
        %9648 = vmatmul.mubr.bf16.gmra.mrb[0].mxu0 %v1485
        %v9649 = vpop.f32.mrb[0].mxu0
        %v9650 = vadd.f32 %v8148, %v9649
        %v9651 = vpop.f32.mrb[0].mxu0
        %v9652 = vadd.f32 %v8152, %v9651
        %v9653 = vpop.f32.mrb[0].mxu0
        %v9654 = vadd.f32 %v8148, %v9653
        %v9655 = vpop.f32.mrb[0].mxu0
        %v9656 = vadd.f32 %v8152, %v9655
        %9657 = vmatprep.mubr.bf16.mxu0 %v1492
        %9658 = vmatmul.mubr.bf16.gmra.mrb[0].mxu0 %v1491
        %v9659 = vpop.f32.mrb[0].mxu0
        %v9660 = vadd.f32 %v8148, %v9659
        %v9661 = vpop.f32.mrb[0].mxu0
        %v9662 = vadd.f32 %v8152, %v9661
        %v9663 = vpop.f32.mrb[0].mxu0
        %v9664 = vadd.f32 %v8148, %v9663
        %v9665 = vpop.f32.mrb[0].mxu0
        %v9666 = vadd.f32 %v8152, %v9665
        %9667 = vmatprep.mubr.bf16.mxu0 %v1498
        %9668 = vmatmul.mubr.bf16.gmra.mrb[0].mxu0 %v1497
        %v9669 = vpop.f32.mrb[0].mxu0
        %v9670 = vadd.f32 %v8148, %v9669
        %v9671 = vpop.f32.mrb[0].mxu0
        %v9672 = vadd.f32 %v8152, %v9671
        %v9673 = vpop.f32.mrb[0].mxu0
        %v9674 = vadd.f32 %v8148, %v9673
        %v9675 = vpop.f32.mrb[0].mxu0
        %v9676 = vadd.f32 %v8152, %v9675
        %9677 = vmatprep.mubr.bf16.mxu0 %v1504
        %9678 = vmatmul.mubr.bf16.gmra.mrb[0].mxu0 %v1503
        %v9679 = vpop.f32.mrb[0].mxu0
        %v9680 = vadd.f32 %v8148, %v9679
        %v9681 = vpop.f32.mrb[0].mxu0
        %v9682 = vadd.f32 %v8152, %v9681
        %v9683 = vpop.f32.mrb[0].mxu0
        %v9684 = vadd.f32 %v8148, %v9683
        %v9685 = vpop.f32.mrb[0].mxu0
        %v9686 = vadd.f32 %v8152, %v9685
        %9687 = vmatprep.mubr.bf16.mxu0 %v1510
        %9688 = vmatmul.mubr.bf16.gmra.mrb[0].mxu0 %v1509
        %v9689 = vpop.f32.mrb[0].mxu0
        %v9690 = vadd.f32 %v8148, %v9689
        %v9691 = vpop.f32.mrb[0].mxu0
        %v9692 = vadd.f32 %v8152, %v9691
        %v9693 = vpop.f32.mrb[0].mxu0
        %v9694 = vadd.f32 %v8148, %v9693
        %v9695 = vpop.f32.mrb[0].mxu0
        %v9696 = vadd.f32 %v8152, %v9695
        %9697 = vmatprep.mubr.bf16.mxu0 %v1516
        %9698 = vmatmul.mubr.bf16.gmra.mrb[0].mxu0 %v1515
        %v9699 = vpop.f32.mrb[0].mxu0
        %v9700 = vadd.f32 %v8148, %v9699
        %v9701 = vpop.f32.mrb[0].mxu0
        %v9702 = vadd.f32 %v8152, %v9701
        %v9703 = vpop.f32.mrb[0].mxu0
        %v9704 = vadd.f32 %v8148, %v9703
        %v9705 = vpop.f32.mrb[0].mxu0
        %v9706 = vadd.f32 %v8152, %v9705
        %9707 = vmatprep.mubr.bf16.mxu0 %v1522
        %9708 = vmatmul.mubr.bf16.gmra.mrb[0].mxu0 %v1521
        %v9709 = vpop.f32.mrb[0].mxu0
        %v9710 = vadd.f32 %v8148, %v9709
        %v9711 = vpop.f32.mrb[0].mxu0
        %v9712 = vadd.f32 %v8152, %v9711
        %v9713 = vpop.f32.mrb[0].mxu0
        %v9714 = vadd.f32 %v8148, %v9713
        %v9715 = vpop.f32.mrb[0].mxu0
        %v9716 = vadd.f32 %v8152, %v9715
        %9717 = vmatprep.mubr.bf16.mxu0 %v1528
        %9718 = vmatmul.mubr.bf16.gmra.mrb[0].mxu0 %v1527
        %v9719 = vpop.f32.mrb[0].mxu0
        %v9720 = vadd.f32 %v8148, %v9719
        %v9721 = vpop.f32.mrb[0].mxu0
        %v9722 = vadd.f32 %v8152, %v9721
        %v9723 = vpop.f32.mrb[0].mxu0
        %v9724 = vadd.f32 %v8148, %v9723
        %v9725 = vpop.f32.mrb[0].mxu0
        %v9726 = vadd.f32 %v8152, %v9725
        %9727 = vdwg.mxu0
        %9728 = vmatprep.subr.bf16.mxu0 %v9136
        %9729 = vmatpush1.bf16.msra.mxu0 %v9135
        %9730 = vmatprep.subr.bf16.mxu0 %v9142
        %9731 = vmatpush1.bf16.msra.mxu0 %v9141
        %9732 = vmatprep.subr.bf16.mxu0 %v9148
        %9733 = vmatpush1.bf16.msra.mxu0 %v9147
        %9734 = vmatprep.subr.bf16.mxu0 %v9154
        %9735 = vmatpush1.bf16.msra.mxu0 %v9153
        %9736 = vmatprep.subr.bf16.mxu0 %v9160
        %9737 = vmatpush1.bf16.msra.mxu0 %v9159
        %9738 = vmatprep.subr.bf16.mxu0 %v9166
        %9739 = vmatpush1.bf16.msra.mxu0 %v9165
        %9740 = vmatprep.subr.bf16.mxu0 %v9172
        %9741 = vmatpush1.bf16.msra.mxu0 %v9171
        %9742 = vmatprep.subr.bf16.mxu0 %v9178
        %9743 = vmatpush1.bf16.msra.mxu0 %v9177
        %9744 = vmatprep.subr.bf16.mxu0 %v9184
        %9745 = vmatpush1.bf16.msra.mxu0 %v9183
        %9746 = vmatprep.subr.bf16.mxu0 %v9190
        %9747 = vmatpush1.bf16.msra.mxu0 %v9189
        %9748 = vmatprep.subr.bf16.mxu0 %v9196
        %9749 = vmatpush1.bf16.msra.mxu0 %v9195
        %9750 = vmatprep.subr.bf16.mxu0 %v9202
        %9751 = vmatpush1.bf16.msra.mxu0 %v9201
        %9752 = vmatprep.subr.bf16.mxu0 %v9208
        %9753 = vmatpush1.bf16.msra.mxu0 %v9207
        %9754 = vmatprep.subr.bf16.mxu0 %v9214
        %9755 = vmatpush1.bf16.msra.mxu0 %v9213
        %9756 = vmatprep.subr.bf16.mxu0 %v9220
        %9757 = vmatpush1.bf16.msra.mxu0 %v9219
        %9758 = vmatprep.subr.bf16.mxu0 %v9226
        %9759 = vmatpush1.bf16.msra.mxu0 %v9225
        %9760 = vmatprep.mubr.bf16.mxu0 %v1488
        %9761 = vmatmul.mubr.bf16.gmra.mrb[0].mxu0 %v1487
        %v9762 = vpop.f32.mrb[0].mxu0
        %v9763 = vadd.f32 %v9650, %v9762
        %v9764 = vpop.f32.mrb[0].mxu0
        %v9765 = vadd.f32 %v9652, %v9764
        %v9766 = vpop.f32.mrb[0].mxu0
        %v9767 = vadd.f32 %v9654, %v9766
        %v9768 = vpop.f32.mrb[0].mxu0
        %v9769 = vadd.f32 %v9656, %v9768
        %9770 = vmatprep.mubr.bf16.mxu0 %v1494
        %9771 = vmatmul.mubr.bf16.gmra.mrb[0].mxu0 %v1493
        %v9772 = vpop.f32.mrb[0].mxu0
        %v9773 = vadd.f32 %v9660, %v9772
        %v9774 = vpop.f32.mrb[0].mxu0
        %v9775 = vadd.f32 %v9662, %v9774
        %v9776 = vpop.f32.mrb[0].mxu0
        %v9777 = vadd.f32 %v9664, %v9776
        %v9778 = vpop.f32.mrb[0].mxu0
        %v9779 = vadd.f32 %v9666, %v9778
        %9780 = vmatprep.mubr.bf16.mxu0 %v1500
        %9781 = vmatmul.mubr.bf16.gmra.mrb[0].mxu0 %v1499
        %v9782 = vpop.f32.mrb[0].mxu0
        %v9783 = vadd.f32 %v9670, %v9782
        %v9784 = vpop.f32.mrb[0].mxu0
        %v9785 = vadd.f32 %v9672, %v9784
        %v9786 = vpop.f32.mrb[0].mxu0
        %v9787 = vadd.f32 %v9674, %v9786
        %v9788 = vpop.f32.mrb[0].mxu0
        %v9789 = vadd.f32 %v9676, %v9788
        %9790 = vmatprep.mubr.bf16.mxu0 %v1506
        %9791 = vmatmul.mubr.bf16.gmra.mrb[0].mxu0 %v1505
        %v9792 = vpop.f32.mrb[0].mxu0
        %v9793 = vadd.f32 %v9680, %v9792
        %v9794 = vpop.f32.mrb[0].mxu0
        %v9795 = vadd.f32 %v9682, %v9794
        %v9796 = vpop.f32.mrb[0].mxu0
        %v9797 = vadd.f32 %v9684, %v9796
        %v9798 = vpop.f32.mrb[0].mxu0
        %v9799 = vadd.f32 %v9686, %v9798
        %9800 = vmatprep.mubr.bf16.mxu0 %v1512
        %9801 = vmatmul.mubr.bf16.gmra.mrb[0].mxu0 %v1511
        %v9802 = vpop.f32.mrb[0].mxu0
        %v9803 = vadd.f32 %v9690, %v9802
        %v9804 = vpop.f32.mrb[0].mxu0
        %v9805 = vadd.f32 %v9692, %v9804
        %v9806 = vpop.f32.mrb[0].mxu0
        %v9807 = vadd.f32 %v9694, %v9806
        %v9808 = vpop.f32.mrb[0].mxu0
        %v9809 = vadd.f32 %v9696, %v9808
        %9810 = vmatprep.mubr.bf16.mxu0 %v1518
        %9811 = vmatmul.mubr.bf16.gmra.mrb[0].mxu0 %v1517
        %v9812 = vpop.f32.mrb[0].mxu0
        %v9813 = vadd.f32 %v9700, %v9812
        %v9814 = vpop.f32.mrb[0].mxu0
        %v9815 = vadd.f32 %v9702, %v9814
        %v9816 = vpop.f32.mrb[0].mxu0
        %v9817 = vadd.f32 %v9704, %v9816
        %v9818 = vpop.f32.mrb[0].mxu0
        %v9819 = vadd.f32 %v9706, %v9818
        %9820 = vmatprep.mubr.bf16.mxu0 %v1524
        %9821 = vmatmul.mubr.bf16.gmra.mrb[0].mxu0 %v1523
        %v9822 = vpop.f32.mrb[0].mxu0
        %v9823 = vadd.f32 %v9710, %v9822
        %v9824 = vpop.f32.mrb[0].mxu0
        %v9825 = vadd.f32 %v9712, %v9824
        %v9826 = vpop.f32.mrb[0].mxu0
        %v9827 = vadd.f32 %v9714, %v9826
        %v9828 = vpop.f32.mrb[0].mxu0
        %v9829 = vadd.f32 %v9716, %v9828
        %9830 = vmatprep.mubr.bf16.mxu0 %v1530
        %9831 = vmatmul.mubr.bf16.gmra.mrb[0].mxu0 %v1529
        %v9832 = vpop.f32.mrb[0].mxu0
        %v9833 = vadd.f32 %v9720, %v9832
        %v9834 = vpop.f32.mrb[0].mxu0
        %v9835 = vadd.f32 %v9722, %v9834
        %v9836 = vpop.f32.mrb[0].mxu0
        %v9837 = vadd.f32 %v9724, %v9836
        %v9838 = vpop.f32.mrb[0].mxu0
        %v9839 = vadd.f32 %v9726, %v9838
        %9840 = vdwg.mxu0
        %9841 = vmatprep.subr.bf16.mxu0 %v9232
        %9842 = vmatpush1.bf16.msra.mxu0 %v9231
        %9843 = vmatprep.subr.bf16.mxu0 %v9238
        %9844 = vmatpush1.bf16.msra.mxu0 %v9237
        %9845 = vmatprep.subr.bf16.mxu0 %v9244
        %9846 = vmatpush1.bf16.msra.mxu0 %v9243
        %9847 = vmatprep.subr.bf16.mxu0 %v9250
        %9848 = vmatpush1.bf16.msra.mxu0 %v9249
        %9849 = vmatprep.subr.bf16.mxu0 %v9256
        %9850 = vmatpush1.bf16.msra.mxu0 %v9255
        %9851 = vmatprep.subr.bf16.mxu0 %v9262
        %9852 = vmatpush1.bf16.msra.mxu0 %v9261
        %9853 = vmatprep.subr.bf16.mxu0 %v9268
        %9854 = vmatpush1.bf16.msra.mxu0 %v9267
        %9855 = vmatprep.subr.bf16.mxu0 %v9274
        %9856 = vmatpush1.bf16.msra.mxu0 %v9273
        %9857 = vmatprep.subr.bf16.mxu0 %v9280
        %9858 = vmatpush1.bf16.msra.mxu0 %v9279
        %9859 = vmatprep.subr.bf16.mxu0 %v9286
        %9860 = vmatpush1.bf16.msra.mxu0 %v9285
        %9861 = vmatprep.subr.bf16.mxu0 %v9292
        %9862 = vmatpush1.bf16.msra.mxu0 %v9291
        %9863 = vmatprep.subr.bf16.mxu0 %v9298
        %9864 = vmatpush1.bf16.msra.mxu0 %v9297
        %9865 = vmatprep.subr.bf16.mxu0 %v9304
        %9866 = vmatpush1.bf16.msra.mxu0 %v9303
        %9867 = vmatprep.subr.bf16.mxu0 %v9310
        %9868 = vmatpush1.bf16.msra.mxu0 %v9309
        %9869 = vmatprep.subr.bf16.mxu0 %v9316
        %9870 = vmatpush1.bf16.msra.mxu0 %v9315
        %9871 = vmatprep.subr.bf16.mxu0 %v9322
        %9872 = vmatpush1.bf16.msra.mxu0 %v9321
        %9873 = vmatprep.mubr.bf16.mxu0 %v1490
        %9874 = vmatmul.mubr.bf16.gmra.mrb[0].mxu0 %v1489
        %v9875 = vpop.f32.mrb[0].mxu0
        %v9876 = vadd.f32 %v9763, %v9875
        %v9877 = vpop.f32.mrb[0].mxu0
        %v9878 = vadd.f32 %v9765, %v9877
        %v9879 = vpop.f32.mrb[0].mxu0
        %v9880 = vadd.f32 %v9767, %v9879
        %v9881 = vpop.f32.mrb[0].mxu0
        %v9882 = vadd.f32 %v9769, %v9881
        %9883 = vmatprep.mubr.bf16.mxu0 %v1496
        %9884 = vmatmul.mubr.bf16.gmra.mrb[0].mxu0 %v1495
        %v9885 = vpop.f32.mrb[0].mxu0
        %v9886 = vadd.f32 %v9773, %v9885
        %v9887 = vpop.f32.mrb[0].mxu0
        %v9888 = vadd.f32 %v9775, %v9887
        %v9889 = vpop.f32.mrb[0].mxu0
        %v9890 = vadd.f32 %v9777, %v9889
        %v9891 = vpop.f32.mrb[0].mxu0
        %v9892 = vadd.f32 %v9779, %v9891
        %9893 = vmatprep.mubr.bf16.mxu0 %v1502
        %9894 = vmatmul.mubr.bf16.gmra.mrb[0].mxu0 %v1501
        %v9895 = vpop.f32.mrb[0].mxu0
        %v9896 = vadd.f32 %v9783, %v9895
        %v9897 = vpop.f32.mrb[0].mxu0
        %v9898 = vadd.f32 %v9785, %v9897
        %v9899 = vpop.f32.mrb[0].mxu0
        %v9900 = vadd.f32 %v9787, %v9899
        %v9901 = vpop.f32.mrb[0].mxu0
        %v9902 = vadd.f32 %v9789, %v9901
        %9903 = vmatprep.mubr.bf16.mxu0 %v1508
        %9904 = vmatmul.mubr.bf16.gmra.mrb[0].mxu0 %v1507
        %v9905 = vpop.f32.mrb[0].mxu0
        %v9906 = vadd.f32 %v9793, %v9905
        %v9907 = vpop.f32.mrb[0].mxu0
        %v9908 = vadd.f32 %v9795, %v9907
        %v9909 = vpop.f32.mrb[0].mxu0
        %v9910 = vadd.f32 %v9797, %v9909
        %v9911 = vpop.f32.mrb[0].mxu0
        %v9912 = vadd.f32 %v9799, %v9911
        %9913 = vmatprep.mubr.bf16.mxu0 %v1514
        %9914 = vmatmul.mubr.bf16.gmra.mrb[0].mxu0 %v1513
        %v9915 = vpop.f32.mrb[0].mxu0
        %v9916 = vadd.f32 %v9803, %v9915
        %v9917 = vpop.f32.mrb[0].mxu0
        %v9918 = vadd.f32 %v9805, %v9917
        %v9919 = vpop.f32.mrb[0].mxu0
        %v9920 = vadd.f32 %v9807, %v9919
        %v9921 = vpop.f32.mrb[0].mxu0
        %v9922 = vadd.f32 %v9809, %v9921
        %9923 = vmatprep.mubr.bf16.mxu0 %v1520
        %9924 = vmatmul.mubr.bf16.gmra.mrb[0].mxu0 %v1519
        %v9925 = vpop.f32.mrb[0].mxu0
        %v9926 = vadd.f32 %v9813, %v9925
        %v9927 = vpop.f32.mrb[0].mxu0
        %v9928 = vadd.f32 %v9815, %v9927
        %v9929 = vpop.f32.mrb[0].mxu0
        %v9930 = vadd.f32 %v9817, %v9929
        %v9931 = vpop.f32.mrb[0].mxu0
        %v9932 = vadd.f32 %v9819, %v9931
        %9933 = vmatprep.mubr.bf16.mxu0 %v1526
        %9934 = vmatmul.mubr.bf16.gmra.mrb[0].mxu0 %v1525
        %v9935 = vpop.f32.mrb[0].mxu0
        %v9936 = vadd.f32 %v9823, %v9935
        %v9937 = vpop.f32.mrb[0].mxu0
        %v9938 = vadd.f32 %v9825, %v9937
        %v9939 = vpop.f32.mrb[0].mxu0
        %v9940 = vadd.f32 %v9827, %v9939
        %v9941 = vpop.f32.mrb[0].mxu0
        %v9942 = vadd.f32 %v9829, %v9941
        %9943 = vmatprep.mubr.bf16.mxu0 %v1532
        %9944 = vmatmul.mubr.bf16.gmra.mrb[0].mxu0 %v1531
        %v9945 = vpop.f32.mrb[0].mxu0
        %v9946 = vadd.f32 %v9833, %v9945
        %v9947 = vpop.f32.mrb[0].mxu0
        %v9948 = vadd.f32 %v9835, %v9947
        %v9949 = vpop.f32.mrb[0].mxu0
        %v9950 = vadd.f32 %v9837, %v9949
        %v9951 = vpop.f32.mrb[0].mxu0
        %v9952 = vadd.f32 %v9839, %v9951
        %9953 = vdwg.mxu0
        %9954 = vmatprep.subr.bf16.mxu0 %v9042
        %9955 = vmatpush1.bf16.msra.mxu0 %v9041
        %9956 = vmatprep.subr.bf16.mxu0 %v9048
        %9957 = vmatpush1.bf16.msra.mxu0 %v9047
        %9958 = vmatprep.subr.bf16.mxu0 %v9054
        %9959 = vmatpush1.bf16.msra.mxu0 %v9053
        %9960 = vmatprep.subr.bf16.mxu0 %v9060
        %9961 = vmatpush1.bf16.msra.mxu0 %v9059
        %9962 = vmatprep.subr.bf16.mxu0 %v9066
        %9963 = vmatpush1.bf16.msra.mxu0 %v9065
        %9964 = vmatprep.subr.bf16.mxu0 %v9072
        %9965 = vmatpush1.bf16.msra.mxu0 %v9071
        %9966 = vmatprep.subr.bf16.mxu0 %v9078
        %9967 = vmatpush1.bf16.msra.mxu0 %v9077
        %9968 = vmatprep.subr.bf16.mxu0 %v9084
        %9969 = vmatpush1.bf16.msra.mxu0 %v9083
        %9970 = vmatprep.subr.bf16.mxu0 %v9090
        %9971 = vmatpush1.bf16.msra.mxu0 %v9089
        %9972 = vmatprep.subr.bf16.mxu0 %v9096
        %9973 = vmatpush1.bf16.msra.mxu0 %v9095
        %9974 = vmatprep.subr.bf16.mxu0 %v9102
        %9975 = vmatpush1.bf16.msra.mxu0 %v9101
        %9976 = vmatprep.subr.bf16.mxu0 %v9108
        %9977 = vmatpush1.bf16.msra.mxu0 %v9107
        %9978 = vmatprep.subr.bf16.mxu0 %v9114
        %9979 = vmatpush1.bf16.msra.mxu0 %v9113
        %9980 = vmatprep.subr.bf16.mxu0 %v9120
        %9981 = vmatpush1.bf16.msra.mxu0 %v9119
        %9982 = vmatprep.subr.bf16.mxu0 %v9126
        %9983 = vmatpush1.bf16.msra.mxu0 %v9125
        %9984 = vmatprep.subr.bf16.mxu0 %v9132
        %9985 = vmatpush1.bf16.msra.mxu0 %v9131
        %9986 = vmatprep.mubr.bf16.mxu0 %v1486
        %9987 = vmatmul.mubr.bf16.gmra.mrb[0].mxu0 %v1485
        %v9988 = vpop.f32.mrb[0].mxu0
        %v9989 = vadd.f32 %v8156, %v9988
        %v9990 = vpop.f32.mrb[0].mxu0
        %v9991 = vadd.f32 %v8160, %v9990
        %v9992 = vpop.f32.mrb[0].mxu0
        %v9993 = vadd.f32 %v8156, %v9992
        %v9994 = vpop.f32.mrb[0].mxu0
        %v9995 = vadd.f32 %v8160, %v9994
        %9996 = vmatprep.mubr.bf16.mxu0 %v1492
        %9997 = vmatmul.mubr.bf16.gmra.mrb[0].mxu0 %v1491
        %v9998 = vpop.f32.mrb[0].mxu0
        %v9999 = vadd.f32 %v8156, %v9998
        %v10000 = vpop.f32.mrb[0].mxu0
        %v10001 = vadd.f32 %v8160, %v10000
        %v10002 = vpop.f32.mrb[0].mxu0
        %v10003 = vadd.f32 %v8156, %v10002
        %v10004 = vpop.f32.mrb[0].mxu0
        %v10005 = vadd.f32 %v8160, %v10004
        %10006 = vmatprep.mubr.bf16.mxu0 %v1498
        %10007 = vmatmul.mubr.bf16.gmra.mrb[0].mxu0 %v1497
        %v10008 = vpop.f32.mrb[0].mxu0
        %v10009 = vadd.f32 %v8156, %v10008
        %v10010 = vpop.f32.mrb[0].mxu0
        %v10011 = vadd.f32 %v8160, %v10010
        %v10012 = vpop.f32.mrb[0].mxu0
        %v10013 = vadd.f32 %v8156, %v10012
        %v10014 = vpop.f32.mrb[0].mxu0
        %v10015 = vadd.f32 %v8160, %v10014
        %10016 = vmatprep.mubr.bf16.mxu0 %v1504
        %10017 = vmatmul.mubr.bf16.gmra.mrb[0].mxu0 %v1503
        %v10018 = vpop.f32.mrb[0].mxu0
        %v10019 = vadd.f32 %v8156, %v10018
        %v10020 = vpop.f32.mrb[0].mxu0
        %v10021 = vadd.f32 %v8160, %v10020
        %v10022 = vpop.f32.mrb[0].mxu0
        %v10023 = vadd.f32 %v8156, %v10022
        %v10024 = vpop.f32.mrb[0].mxu0
        %v10025 = vadd.f32 %v8160, %v10024
        %10026 = vmatprep.mubr.bf16.mxu0 %v1510
        %10027 = vmatmul.mubr.bf16.gmra.mrb[0].mxu0 %v1509
        %v10028 = vpop.f32.mrb[0].mxu0
        %v10029 = vadd.f32 %v8156, %v10028
        %v10030 = vpop.f32.mrb[0].mxu0
        %v10031 = vadd.f32 %v8160, %v10030
        %v10032 = vpop.f32.mrb[0].mxu0
        %v10033 = vadd.f32 %v8156, %v10032
        %v10034 = vpop.f32.mrb[0].mxu0
        %v10035 = vadd.f32 %v8160, %v10034
        %10036 = vmatprep.mubr.bf16.mxu0 %v1516
        %10037 = vmatmul.mubr.bf16.gmra.mrb[0].mxu0 %v1515
        %v10038 = vpop.f32.mrb[0].mxu0
        %v10039 = vadd.f32 %v8156, %v10038
        %v10040 = vpop.f32.mrb[0].mxu0
        %v10041 = vadd.f32 %v8160, %v10040
        %v10042 = vpop.f32.mrb[0].mxu0
        %v10043 = vadd.f32 %v8156, %v10042
        %v10044 = vpop.f32.mrb[0].mxu0
        %v10045 = vadd.f32 %v8160, %v10044
        %10046 = vmatprep.mubr.bf16.mxu0 %v1522
        %10047 = vmatmul.mubr.bf16.gmra.mrb[0].mxu0 %v1521
        %v10048 = vpop.f32.mrb[0].mxu0
        %v10049 = vadd.f32 %v8156, %v10048
        %v10050 = vpop.f32.mrb[0].mxu0
        %v10051 = vadd.f32 %v8160, %v10050
        %v10052 = vpop.f32.mrb[0].mxu0
        %v10053 = vadd.f32 %v8156, %v10052
        %v10054 = vpop.f32.mrb[0].mxu0
        %v10055 = vadd.f32 %v8160, %v10054
        %10056 = vmatprep.mubr.bf16.mxu0 %v1528
        %10057 = vmatmul.mubr.bf16.gmra.mrb[0].mxu0 %v1527
        %v10058 = vpop.f32.mrb[0].mxu0
        %v10059 = vadd.f32 %v8156, %v10058
        %v10060 = vpop.f32.mrb[0].mxu0
        %v10061 = vadd.f32 %v8160, %v10060
        %v10062 = vpop.f32.mrb[0].mxu0
        %v10063 = vadd.f32 %v8156, %v10062
        %v10064 = vpop.f32.mrb[0].mxu0
        %v10065 = vadd.f32 %v8160, %v10064
        %10066 = vdwg.mxu0
        %10067 = vmatprep.subr.bf16.mxu0 %v9138
        %10068 = vmatpush1.bf16.msra.mxu0 %v9137
        %10069 = vmatprep.subr.bf16.mxu0 %v9144
        %10070 = vmatpush1.bf16.msra.mxu0 %v9143
        %10071 = vmatprep.subr.bf16.mxu0 %v9150
        %10072 = vmatpush1.bf16.msra.mxu0 %v9149
        %10073 = vmatprep.subr.bf16.mxu0 %v9156
        %10074 = vmatpush1.bf16.msra.mxu0 %v9155
        %10075 = vmatprep.subr.bf16.mxu0 %v9162
        %10076 = vmatpush1.bf16.msra.mxu0 %v9161
        %10077 = vmatprep.subr.bf16.mxu0 %v9168
        %10078 = vmatpush1.bf16.msra.mxu0 %v9167
        %10079 = vmatprep.subr.bf16.mxu0 %v9174
        %10080 = vmatpush1.bf16.msra.mxu0 %v9173
        %10081 = vmatprep.subr.bf16.mxu0 %v9180
        %10082 = vmatpush1.bf16.msra.mxu0 %v9179
        %10083 = vmatprep.subr.bf16.mxu0 %v9186
        %10084 = vmatpush1.bf16.msra.mxu0 %v9185
        %10085 = vmatprep.subr.bf16.mxu0 %v9192
        %10086 = vmatpush1.bf16.msra.mxu0 %v9191
        %10087 = vmatprep.subr.bf16.mxu0 %v9198
        %10088 = vmatpush1.bf16.msra.mxu0 %v9197
        %10089 = vmatprep.subr.bf16.mxu0 %v9204
        %10090 = vmatpush1.bf16.msra.mxu0 %v9203
        %10091 = vmatprep.subr.bf16.mxu0 %v9210
        %10092 = vmatpush1.bf16.msra.mxu0 %v9209
        %10093 = vmatprep.subr.bf16.mxu0 %v9216
        %10094 = vmatpush1.bf16.msra.mxu0 %v9215
        %10095 = vmatprep.subr.bf16.mxu0 %v9222
        %10096 = vmatpush1.bf16.msra.mxu0 %v9221
        %10097 = vmatprep.subr.bf16.mxu0 %v9228
        %10098 = vmatpush1.bf16.msra.mxu0 %v9227
        %10099 = vmatprep.mubr.bf16.mxu0 %v1488
        %10100 = vmatmul.mubr.bf16.gmra.mrb[0].mxu0 %v1487
        %v10101 = vpop.f32.mrb[0].mxu0
        %v10102 = vadd.f32 %v9989, %v10101
        %v10103 = vpop.f32.mrb[0].mxu0
        %v10104 = vadd.f32 %v9991, %v10103
        %v10105 = vpop.f32.mrb[0].mxu0
        %v10106 = vadd.f32 %v9993, %v10105
        %v10107 = vpop.f32.mrb[0].mxu0
        %v10108 = vadd.f32 %v9995, %v10107
        %10109 = vmatprep.mubr.bf16.mxu0 %v1494
        %10110 = vmatmul.mubr.bf16.gmra.mrb[0].mxu0 %v1493
        %v10111 = vpop.f32.mrb[0].mxu0
        %v10112 = vadd.f32 %v9999, %v10111
        %v10113 = vpop.f32.mrb[0].mxu0
        %v10114 = vadd.f32 %v10001, %v10113
        %v10115 = vpop.f32.mrb[0].mxu0
        %v10116 = vadd.f32 %v10003, %v10115
        %v10117 = vpop.f32.mrb[0].mxu0
        %v10118 = vadd.f32 %v10005, %v10117
        %10119 = vmatprep.mubr.bf16.mxu0 %v1500
        %10120 = vmatmul.mubr.bf16.gmra.mrb[0].mxu0 %v1499
        %v10121 = vpop.f32.mrb[0].mxu0
        %v10122 = vadd.f32 %v10009, %v10121
        %v10123 = vpop.f32.mrb[0].mxu0
        %v10124 = vadd.f32 %v10011, %v10123
        %v10125 = vpop.f32.mrb[0].mxu0
        %v10126 = vadd.f32 %v10013, %v10125
        %v10127 = vpop.f32.mrb[0].mxu0
        %v10128 = vadd.f32 %v10015, %v10127
        %10129 = vmatprep.mubr.bf16.mxu0 %v1506
        %10130 = vmatmul.mubr.bf16.gmra.mrb[0].mxu0 %v1505
        %v10131 = vpop.f32.mrb[0].mxu0
        %v10132 = vadd.f32 %v10019, %v10131
        %v10133 = vpop.f32.mrb[0].mxu0
        %v10134 = vadd.f32 %v10021, %v10133
        %v10135 = vpop.f32.mrb[0].mxu0
        %v10136 = vadd.f32 %v10023, %v10135
        %v10137 = vpop.f32.mrb[0].mxu0
        %v10138 = vadd.f32 %v10025, %v10137
        %10139 = vmatprep.mubr.bf16.mxu0 %v1512
        %10140 = vmatmul.mubr.bf16.gmra.mrb[0].mxu0 %v1511
        %v10141 = vpop.f32.mrb[0].mxu0
        %v10142 = vadd.f32 %v10029, %v10141
        %v10143 = vpop.f32.mrb[0].mxu0
        %v10144 = vadd.f32 %v10031, %v10143
        %v10145 = vpop.f32.mrb[0].mxu0
        %v10146 = vadd.f32 %v10033, %v10145
        %v10147 = vpop.f32.mrb[0].mxu0
        %v10148 = vadd.f32 %v10035, %v10147
        %10149 = vmatprep.mubr.bf16.mxu0 %v1518
        %10150 = vmatmul.mubr.bf16.gmra.mrb[0].mxu0 %v1517
        %v10151 = vpop.f32.mrb[0].mxu0
        %v10152 = vadd.f32 %v10039, %v10151
        %v10153 = vpop.f32.mrb[0].mxu0
        %v10154 = vadd.f32 %v10041, %v10153
        %v10155 = vpop.f32.mrb[0].mxu0
        %v10156 = vadd.f32 %v10043, %v10155
        %v10157 = vpop.f32.mrb[0].mxu0
        %v10158 = vadd.f32 %v10045, %v10157
        %10159 = vmatprep.mubr.bf16.mxu0 %v1524
        %10160 = vmatmul.mubr.bf16.gmra.mrb[0].mxu0 %v1523
        %v10161 = vpop.f32.mrb[0].mxu0
        %v10162 = vadd.f32 %v10049, %v10161
        %v10163 = vpop.f32.mrb[0].mxu0
        %v10164 = vadd.f32 %v10051, %v10163
        %v10165 = vpop.f32.mrb[0].mxu0
        %v10166 = vadd.f32 %v10053, %v10165
        %v10167 = vpop.f32.mrb[0].mxu0
        %v10168 = vadd.f32 %v10055, %v10167
        %10169 = vmatprep.mubr.bf16.mxu0 %v1530
        %10170 = vmatmul.mubr.bf16.gmra.mrb[0].mxu0 %v1529
        %v10171 = vpop.f32.mrb[0].mxu0
        %v10172 = vadd.f32 %v10059, %v10171
        %v10173 = vpop.f32.mrb[0].mxu0
        %v10174 = vadd.f32 %v10061, %v10173
        %v10175 = vpop.f32.mrb[0].mxu0
        %v10176 = vadd.f32 %v10063, %v10175
        %v10177 = vpop.f32.mrb[0].mxu0
        %v10178 = vadd.f32 %v10065, %v10177
        %10179 = vdwg.mxu0
        %10180 = vmatprep.subr.bf16.mxu0 %v9234
        %10181 = vmatpush1.bf16.msra.mxu0 %v9233
        %10182 = vmatprep.subr.bf16.mxu0 %v9240
        %10183 = vmatpush1.bf16.msra.mxu0 %v9239
        %10184 = vmatprep.subr.bf16.mxu0 %v9246
        %10185 = vmatpush1.bf16.msra.mxu0 %v9245
        %10186 = vmatprep.subr.bf16.mxu0 %v9252
        %10187 = vmatpush1.bf16.msra.mxu0 %v9251
        %10188 = vmatprep.subr.bf16.mxu0 %v9258
        %10189 = vmatpush1.bf16.msra.mxu0 %v9257
        %10190 = vmatprep.subr.bf16.mxu0 %v9264
        %10191 = vmatpush1.bf16.msra.mxu0 %v9263
        %10192 = vmatprep.subr.bf16.mxu0 %v9270
        %10193 = vmatpush1.bf16.msra.mxu0 %v9269
        %10194 = vmatprep.subr.bf16.mxu0 %v9276
        %10195 = vmatpush1.bf16.msra.mxu0 %v9275
        %10196 = vmatprep.subr.bf16.mxu0 %v9282
        %10197 = vmatpush1.bf16.msra.mxu0 %v9281
        %10198 = vmatprep.subr.bf16.mxu0 %v9288
        %10199 = vmatpush1.bf16.msra.mxu0 %v9287
        %10200 = vmatprep.subr.bf16.mxu0 %v9294
        %10201 = vmatpush1.bf16.msra.mxu0 %v9293
        %10202 = vmatprep.subr.bf16.mxu0 %v9300
        %10203 = vmatpush1.bf16.msra.mxu0 %v9299
        %10204 = vmatprep.subr.bf16.mxu0 %v9306
        %10205 = vmatpush1.bf16.msra.mxu0 %v9305
        %10206 = vmatprep.subr.bf16.mxu0 %v9312
        %10207 = vmatpush1.bf16.msra.mxu0 %v9311
        %10208 = vmatprep.subr.bf16.mxu0 %v9318
        %10209 = vmatpush1.bf16.msra.mxu0 %v9317
        %10210 = vmatprep.subr.bf16.mxu0 %v9324
        %10211 = vmatpush1.bf16.msra.mxu0 %v9323
        %10212 = vmatprep.mubr.bf16.mxu0 %v1490
        %10213 = vmatmul.mubr.bf16.gmra.mrb[0].mxu0 %v1489
        %v10214 = vpop.f32.mrb[0].mxu0
        %v10215 = vadd.f32 %v10102, %v10214
        %v10216 = vpop.f32.mrb[0].mxu0
        %v10217 = vadd.f32 %v10104, %v10216
        %v10218 = vpop.f32.mrb[0].mxu0
        %v10219 = vadd.f32 %v10106, %v10218
        %v10220 = vpop.f32.mrb[0].mxu0
        %v10221 = vadd.f32 %v10108, %v10220
        %10222 = vmatprep.mubr.bf16.mxu0 %v1496
        %10223 = vmatmul.mubr.bf16.gmra.mrb[0].mxu0 %v1495
        %v10224 = vpop.f32.mrb[0].mxu0
        %v10225 = vadd.f32 %v10112, %v10224
        %v10226 = vpop.f32.mrb[0].mxu0
        %v10227 = vadd.f32 %v10114, %v10226
        %v10228 = vpop.f32.mrb[0].mxu0
        %v10229 = vadd.f32 %v10116, %v10228
        %v10230 = vpop.f32.mrb[0].mxu0
        %v10231 = vadd.f32 %v10118, %v10230
        %10232 = vmatprep.mubr.bf16.mxu0 %v1502
        %10233 = vmatmul.mubr.bf16.gmra.mrb[0].mxu0 %v1501
        %v10234 = vpop.f32.mrb[0].mxu0
        %v10235 = vadd.f32 %v10122, %v10234
        %v10236 = vpop.f32.mrb[0].mxu0
        %v10237 = vadd.f32 %v10124, %v10236
        %v10238 = vpop.f32.mrb[0].mxu0
        %v10239 = vadd.f32 %v10126, %v10238
        %v10240 = vpop.f32.mrb[0].mxu0
        %v10241 = vadd.f32 %v10128, %v10240
        %10242 = vmatprep.mubr.bf16.mxu0 %v1508
        %10243 = vmatmul.mubr.bf16.gmra.mrb[0].mxu0 %v1507
        %v10244 = vpop.f32.mrb[0].mxu0
        %v10245 = vadd.f32 %v10132, %v10244
        %v10246 = vpop.f32.mrb[0].mxu0
        %v10247 = vadd.f32 %v10134, %v10246
        %v10248 = vpop.f32.mrb[0].mxu0
        %v10249 = vadd.f32 %v10136, %v10248
        %v10250 = vpop.f32.mrb[0].mxu0
        %v10251 = vadd.f32 %v10138, %v10250
        %10252 = vmatprep.mubr.bf16.mxu0 %v1514
        %10253 = vmatmul.mubr.bf16.gmra.mrb[0].mxu0 %v1513
        %v10254 = vpop.f32.mrb[0].mxu0
        %v10255 = vadd.f32 %v10142, %v10254
        %v10256 = vpop.f32.mrb[0].mxu0
        %v10257 = vadd.f32 %v10144, %v10256
        %v10258 = vpop.f32.mrb[0].mxu0
        %v10259 = vadd.f32 %v10146, %v10258
        %v10260 = vpop.f32.mrb[0].mxu0
        %v10261 = vadd.f32 %v10148, %v10260
        %10262 = vmatprep.mubr.bf16.mxu0 %v1520
        %10263 = vmatmul.mubr.bf16.gmra.mrb[0].mxu0 %v1519
        %v10264 = vpop.f32.mrb[0].mxu0
        %v10265 = vadd.f32 %v10152, %v10264
        %v10266 = vpop.f32.mrb[0].mxu0
        %v10267 = vadd.f32 %v10154, %v10266
        %v10268 = vpop.f32.mrb[0].mxu0
        %v10269 = vadd.f32 %v10156, %v10268
        %v10270 = vpop.f32.mrb[0].mxu0
        %v10271 = vadd.f32 %v10158, %v10270
        %10272 = vmatprep.mubr.bf16.mxu0 %v1526
        %10273 = vmatmul.mubr.bf16.gmra.mrb[0].mxu0 %v1525
        %v10274 = vpop.f32.mrb[0].mxu0
        %v10275 = vadd.f32 %v10162, %v10274
        %v10276 = vpop.f32.mrb[0].mxu0
        %v10277 = vadd.f32 %v10164, %v10276
        %v10278 = vpop.f32.mrb[0].mxu0
        %v10279 = vadd.f32 %v10166, %v10278
        %v10280 = vpop.f32.mrb[0].mxu0
        %v10281 = vadd.f32 %v10168, %v10280
        %10282 = vmatprep.mubr.bf16.mxu0 %v1532
        %10283 = vmatmul.mubr.bf16.gmra.mrb[0].mxu0 %v1531
        %v10284 = vpop.f32.mrb[0].mxu0
        %v10285 = vadd.f32 %v10172, %v10284
        %v10286 = vpop.f32.mrb[0].mxu0
        %v10287 = vadd.f32 %v10174, %v10286
        %v10288 = vpop.f32.mrb[0].mxu0
        %v10289 = vadd.f32 %v10176, %v10288
        %v10290 = vpop.f32.mrb[0].mxu0
        %v10291 = vadd.f32 %v10178, %v10290
        %10292 = vdwg.mxu0
        %10293 = vmatprep.subr.bf16.mxu0 %v9044
        %10294 = vmatpush1.bf16.msra.mxu0 %v9043
        %10295 = vmatprep.subr.bf16.mxu0 %v9050
        %10296 = vmatpush1.bf16.msra.mxu0 %v9049
        %10297 = vmatprep.subr.bf16.mxu0 %v9056
        %10298 = vmatpush1.bf16.msra.mxu0 %v9055
        %10299 = vmatprep.subr.bf16.mxu0 %v9062
        %10300 = vmatpush1.bf16.msra.mxu0 %v9061
        %10301 = vmatprep.subr.bf16.mxu0 %v9068
        %10302 = vmatpush1.bf16.msra.mxu0 %v9067
        %10303 = vmatprep.subr.bf16.mxu0 %v9074
        %10304 = vmatpush1.bf16.msra.mxu0 %v9073
        %10305 = vmatprep.subr.bf16.mxu0 %v9080
        %10306 = vmatpush1.bf16.msra.mxu0 %v9079
        %10307 = vmatprep.subr.bf16.mxu0 %v9086
        %10308 = vmatpush1.bf16.msra.mxu0 %v9085
        %10309 = vmatprep.subr.bf16.mxu0 %v9092
        %10310 = vmatpush1.bf16.msra.mxu0 %v9091
        %10311 = vmatprep.subr.bf16.mxu0 %v9098
        %10312 = vmatpush1.bf16.msra.mxu0 %v9097
        %10313 = vmatprep.subr.bf16.mxu0 %v9104
        %10314 = vmatpush1.bf16.msra.mxu0 %v9103
        %10315 = vmatprep.subr.bf16.mxu0 %v9110
        %10316 = vmatpush1.bf16.msra.mxu0 %v9109
        %10317 = vmatprep.subr.bf16.mxu0 %v9116
        %10318 = vmatpush1.bf16.msra.mxu0 %v9115
        %10319 = vmatprep.subr.bf16.mxu0 %v9122
        %10320 = vmatpush1.bf16.msra.mxu0 %v9121
        %10321 = vmatprep.subr.bf16.mxu0 %v9128
        %10322 = vmatpush1.bf16.msra.mxu0 %v9127
        %10323 = vmatprep.subr.bf16.mxu0 %v9134
        %10324 = vmatpush1.bf16.msra.mxu0 %v9133
        %10325 = vmatprep.mubr.bf16.mxu0 %v1486
        %10326 = vmatmul.mubr.bf16.gmra.mrb[0].mxu0 %v1485
        %v10327 = vpop.f32.mrb[0].mxu0
        %v10328 = vadd.f32 %v8164, %v10327
        %v10329 = vpop.f32.mrb[0].mxu0
        %v10330 = vadd.f32 %v8168, %v10329
        %v10331 = vpop.f32.mrb[0].mxu0
        %v10332 = vadd.f32 %v8164, %v10331
        %v10333 = vpop.f32.mrb[0].mxu0
        %v10334 = vadd.f32 %v8168, %v10333
        %10335 = vmatprep.mubr.bf16.mxu0 %v1492
        %10336 = vmatmul.mubr.bf16.gmra.mrb[0].mxu0 %v1491
        %v10337 = vpop.f32.mrb[0].mxu0
        %v10338 = vadd.f32 %v8164, %v10337
        %v10339 = vpop.f32.mrb[0].mxu0
        %v10340 = vadd.f32 %v8168, %v10339
        %v10341 = vpop.f32.mrb[0].mxu0
        %v10342 = vadd.f32 %v8164, %v10341
        %v10343 = vpop.f32.mrb[0].mxu0
        %v10344 = vadd.f32 %v8168, %v10343
        %10345 = vmatprep.mubr.bf16.mxu0 %v1498
        %10346 = vmatmul.mubr.bf16.gmra.mrb[0].mxu0 %v1497
        %v10347 = vpop.f32.mrb[0].mxu0
        %v10348 = vadd.f32 %v8164, %v10347
        %v10349 = vpop.f32.mrb[0].mxu0
        %v10350 = vadd.f32 %v8168, %v10349
        %v10351 = vpop.f32.mrb[0].mxu0
        %v10352 = vadd.f32 %v8164, %v10351
        %v10353 = vpop.f32.mrb[0].mxu0
        %v10354 = vadd.f32 %v8168, %v10353
        %10355 = vmatprep.mubr.bf16.mxu0 %v1504
        %10356 = vmatmul.mubr.bf16.gmra.mrb[0].mxu0 %v1503
        %v10357 = vpop.f32.mrb[0].mxu0
        %v10358 = vadd.f32 %v8164, %v10357
        %v10359 = vpop.f32.mrb[0].mxu0
        %v10360 = vadd.f32 %v8168, %v10359
        %v10361 = vpop.f32.mrb[0].mxu0
        %v10362 = vadd.f32 %v8164, %v10361
        %v10363 = vpop.f32.mrb[0].mxu0
        %v10364 = vadd.f32 %v8168, %v10363
        %10365 = vmatprep.mubr.bf16.mxu0 %v1510
        %10366 = vmatmul.mubr.bf16.gmra.mrb[0].mxu0 %v1509
        %v10367 = vpop.f32.mrb[0].mxu0
        %v10368 = vadd.f32 %v8164, %v10367
        %v10369 = vpop.f32.mrb[0].mxu0
        %v10370 = vadd.f32 %v8168, %v10369
        %v10371 = vpop.f32.mrb[0].mxu0
        %v10372 = vadd.f32 %v8164, %v10371
        %v10373 = vpop.f32.mrb[0].mxu0
        %v10374 = vadd.f32 %v8168, %v10373
        %10375 = vmatprep.mubr.bf16.mxu0 %v1516
        %10376 = vmatmul.mubr.bf16.gmra.mrb[0].mxu0 %v1515
        %v10377 = vpop.f32.mrb[0].mxu0
        %v10378 = vadd.f32 %v8164, %v10377
        %v10379 = vpop.f32.mrb[0].mxu0
        %v10380 = vadd.f32 %v8168, %v10379
        %v10381 = vpop.f32.mrb[0].mxu0
        %v10382 = vadd.f32 %v8164, %v10381
        %v10383 = vpop.f32.mrb[0].mxu0
        %v10384 = vadd.f32 %v8168, %v10383
        %10385 = vmatprep.mubr.bf16.mxu0 %v1522
        %10386 = vmatmul.mubr.bf16.gmra.mrb[0].mxu0 %v1521
        %v10387 = vpop.f32.mrb[0].mxu0
        %v10388 = vadd.f32 %v8164, %v10387
        %v10389 = vpop.f32.mrb[0].mxu0
        %v10390 = vadd.f32 %v8168, %v10389
        %v10391 = vpop.f32.mrb[0].mxu0
        %v10392 = vadd.f32 %v8164, %v10391
        %v10393 = vpop.f32.mrb[0].mxu0
        %v10394 = vadd.f32 %v8168, %v10393
        %10395 = vmatprep.mubr.bf16.mxu0 %v1528
        %10396 = vmatmul.mubr.bf16.gmra.mrb[0].mxu0 %v1527
        %v10397 = vpop.f32.mrb[0].mxu0
        %v10398 = vadd.f32 %v8164, %v10397
        %v10399 = vpop.f32.mrb[0].mxu0
        %v10400 = vadd.f32 %v8168, %v10399
        %v10401 = vpop.f32.mrb[0].mxu0
        %v10402 = vadd.f32 %v8164, %v10401
        %v10403 = vpop.f32.mrb[0].mxu0
        %v10404 = vadd.f32 %v8168, %v10403
        %10405 = vdwg.mxu0
        %10406 = vmatprep.subr.bf16.mxu0 %v9140
        %10407 = vmatpush1.bf16.msra.mxu0 %v9139
        %10408 = vmatprep.subr.bf16.mxu0 %v9146
        %10409 = vmatpush1.bf16.msra.mxu0 %v9145
        %10410 = vmatprep.subr.bf16.mxu0 %v9152
        %10411 = vmatpush1.bf16.msra.mxu0 %v9151
        %10412 = vmatprep.subr.bf16.mxu0 %v9158
        %10413 = vmatpush1.bf16.msra.mxu0 %v9157
        %10414 = vmatprep.subr.bf16.mxu0 %v9164
        %10415 = vmatpush1.bf16.msra.mxu0 %v9163
        %10416 = vmatprep.subr.bf16.mxu0 %v9170
        %10417 = vmatpush1.bf16.msra.mxu0 %v9169
        %10418 = vmatprep.subr.bf16.mxu0 %v9176
        %10419 = vmatpush1.bf16.msra.mxu0 %v9175
        %10420 = vmatprep.subr.bf16.mxu0 %v9182
        %10421 = vmatpush1.bf16.msra.mxu0 %v9181
        %10422 = vmatprep.subr.bf16.mxu0 %v9188
        %10423 = vmatpush1.bf16.msra.mxu0 %v9187
        %10424 = vmatprep.subr.bf16.mxu0 %v9194
        %10425 = vmatpush1.bf16.msra.mxu0 %v9193
        %10426 = vmatprep.subr.bf16.mxu0 %v9200
        %10427 = vmatpush1.bf16.msra.mxu0 %v9199
        %10428 = vmatprep.subr.bf16.mxu0 %v9206
        %10429 = vmatpush1.bf16.msra.mxu0 %v9205
        %10430 = vmatprep.subr.bf16.mxu0 %v9212
        %10431 = vmatpush1.bf16.msra.mxu0 %v9211
        %10432 = vmatprep.subr.bf16.mxu0 %v9218
        %10433 = vmatpush1.bf16.msra.mxu0 %v9217
        %10434 = vmatprep.subr.bf16.mxu0 %v9224
        %10435 = vmatpush1.bf16.msra.mxu0 %v9223
        %10436 = vmatprep.subr.bf16.mxu0 %v9230
        %10437 = vmatpush1.bf16.msra.mxu0 %v9229
        %10438 = vmatprep.mubr.bf16.mxu0 %v1488
        %10439 = vmatmul.mubr.bf16.gmra.mrb[0].mxu0 %v1487
        %v10440 = vpop.f32.mrb[0].mxu0
        %v10441 = vadd.f32 %v10328, %v10440
        %v10442 = vpop.f32.mrb[0].mxu0
        %v10443 = vadd.f32 %v10330, %v10442
        %v10444 = vpop.f32.mrb[0].mxu0
        %v10445 = vadd.f32 %v10332, %v10444
        %v10446 = vpop.f32.mrb[0].mxu0
        %v10447 = vadd.f32 %v10334, %v10446
        %10448 = vmatprep.mubr.bf16.mxu0 %v1494
        %10449 = vmatmul.mubr.bf16.gmra.mrb[0].mxu0 %v1493
        %v10450 = vpop.f32.mrb[0].mxu0
        %v10451 = vadd.f32 %v10338, %v10450
        %v10452 = vpop.f32.mrb[0].mxu0
        %v10453 = vadd.f32 %v10340, %v10452
        %v10454 = vpop.f32.mrb[0].mxu0
        %v10455 = vadd.f32 %v10342, %v10454
        %v10456 = vpop.f32.mrb[0].mxu0
        %v10457 = vadd.f32 %v10344, %v10456
        %10458 = vmatprep.mubr.bf16.mxu0 %v1500
        %10459 = vmatmul.mubr.bf16.gmra.mrb[0].mxu0 %v1499
        %v10460 = vpop.f32.mrb[0].mxu0
        %v10461 = vadd.f32 %v10348, %v10460
        %v10462 = vpop.f32.mrb[0].mxu0
        %v10463 = vadd.f32 %v10350, %v10462
        %v10464 = vpop.f32.mrb[0].mxu0
        %v10465 = vadd.f32 %v10352, %v10464
        %v10466 = vpop.f32.mrb[0].mxu0
        %v10467 = vadd.f32 %v10354, %v10466
        %10468 = vmatprep.mubr.bf16.mxu0 %v1506
        %10469 = vmatmul.mubr.bf16.gmra.mrb[0].mxu0 %v1505
        %v10470 = vpop.f32.mrb[0].mxu0
        %v10471 = vadd.f32 %v10358, %v10470
        %v10472 = vpop.f32.mrb[0].mxu0
        %v10473 = vadd.f32 %v10360, %v10472
        %v10474 = vpop.f32.mrb[0].mxu0
        %v10475 = vadd.f32 %v10362, %v10474
        %v10476 = vpop.f32.mrb[0].mxu0
        %v10477 = vadd.f32 %v10364, %v10476
        %10478 = vmatprep.mubr.bf16.mxu0 %v1512
        %10479 = vmatmul.mubr.bf16.gmra.mrb[0].mxu0 %v1511
        %v10480 = vpop.f32.mrb[0].mxu0
        %v10481 = vadd.f32 %v10368, %v10480
        %v10482 = vpop.f32.mrb[0].mxu0
        %v10483 = vadd.f32 %v10370, %v10482
        %v10484 = vpop.f32.mrb[0].mxu0
        %v10485 = vadd.f32 %v10372, %v10484
        %v10486 = vpop.f32.mrb[0].mxu0
        %v10487 = vadd.f32 %v10374, %v10486
        %10488 = vmatprep.mubr.bf16.mxu0 %v1518
        %10489 = vmatmul.mubr.bf16.gmra.mrb[0].mxu0 %v1517
        %v10490 = vpop.f32.mrb[0].mxu0
        %v10491 = vadd.f32 %v10378, %v10490
        %v10492 = vpop.f32.mrb[0].mxu0
        %v10493 = vadd.f32 %v10380, %v10492
        %v10494 = vpop.f32.mrb[0].mxu0
        %v10495 = vadd.f32 %v10382, %v10494
        %v10496 = vpop.f32.mrb[0].mxu0
        %v10497 = vadd.f32 %v10384, %v10496
        %10498 = vmatprep.mubr.bf16.mxu0 %v1524
        %10499 = vmatmul.mubr.bf16.gmra.mrb[0].mxu0 %v1523
        %v10500 = vpop.f32.mrb[0].mxu0
        %v10501 = vadd.f32 %v10388, %v10500
        %v10502 = vpop.f32.mrb[0].mxu0
        %v10503 = vadd.f32 %v10390, %v10502
        %v10504 = vpop.f32.mrb[0].mxu0
        %v10505 = vadd.f32 %v10392, %v10504
        %v10506 = vpop.f32.mrb[0].mxu0
        %v10507 = vadd.f32 %v10394, %v10506
        %10508 = vmatprep.mubr.bf16.mxu0 %v1530
        %10509 = vmatmul.mubr.bf16.gmra.mrb[0].mxu0 %v1529
        %v10510 = vpop.f32.mrb[0].mxu0
        %v10511 = vadd.f32 %v10398, %v10510
        %v10512 = vpop.f32.mrb[0].mxu0
        %v10513 = vadd.f32 %v10400, %v10512
        %v10514 = vpop.f32.mrb[0].mxu0
        %v10515 = vadd.f32 %v10402, %v10514
        %v10516 = vpop.f32.mrb[0].mxu0
        %v10517 = vadd.f32 %v10404, %v10516
        %10518 = vdwg.mxu0
        %10519 = vmatprep.subr.bf16.mxu0 %v9236
        %10520 = vmatpush1.bf16.msra.mxu0 %v9235
        %10521 = vmatprep.subr.bf16.mxu0 %v9242
        %10522 = vmatpush1.bf16.msra.mxu0 %v9241
        %10523 = vmatprep.subr.bf16.mxu0 %v9248
        %10524 = vmatpush1.bf16.msra.mxu0 %v9247
        %10525 = vmatprep.subr.bf16.mxu0 %v9254
        %10526 = vmatpush1.bf16.msra.mxu0 %v9253
        %10527 = vmatprep.subr.bf16.mxu0 %v9260
        %10528 = vmatpush1.bf16.msra.mxu0 %v9259
        %10529 = vmatprep.subr.bf16.mxu0 %v9266
        %10530 = vmatpush1.bf16.msra.mxu0 %v9265
        %10531 = vmatprep.subr.bf16.mxu0 %v9272
        %10532 = vmatpush1.bf16.msra.mxu0 %v9271
        %10533 = vmatprep.subr.bf16.mxu0 %v9278
        %10534 = vmatpush1.bf16.msra.mxu0 %v9277
        %10535 = vmatprep.subr.bf16.mxu0 %v9284
        %10536 = vmatpush1.bf16.msra.mxu0 %v9283
        %10537 = vmatprep.subr.bf16.mxu0 %v9290
        %10538 = vmatpush1.bf16.msra.mxu0 %v9289
        %10539 = vmatprep.subr.bf16.mxu0 %v9296
        %10540 = vmatpush1.bf16.msra.mxu0 %v9295
        %10541 = vmatprep.subr.bf16.mxu0 %v9302
        %10542 = vmatpush1.bf16.msra.mxu0 %v9301
        %10543 = vmatprep.subr.bf16.mxu0 %v9308
        %10544 = vmatpush1.bf16.msra.mxu0 %v9307
        %10545 = vmatprep.subr.bf16.mxu0 %v9314
        %10546 = vmatpush1.bf16.msra.mxu0 %v9313
        %10547 = vmatprep.subr.bf16.mxu0 %v9320
        %10548 = vmatpush1.bf16.msra.mxu0 %v9319
        %10549 = vmatprep.subr.bf16.mxu0 %v9326
        %10550 = vmatpush1.bf16.msra.mxu0 %v9325
        %10551 = vmatprep.mubr.bf16.mxu0 %v1490
        %10552 = vmatmul.mubr.bf16.gmra.mrb[0].mxu0 %v1489
        %v10553 = vpop.f32.mrb[0].mxu0
        %v10554 = vadd.f32 %v10441, %v10553
        %v10555 = vpop.f32.mrb[0].mxu0
        %v10556 = vadd.f32 %v10443, %v10555
        %v10557 = vpop.f32.mrb[0].mxu0
        %v10558 = vadd.f32 %v10445, %v10557
        %v10559 = vpop.f32.mrb[0].mxu0
        %v10560 = vadd.f32 %v10447, %v10559
        %10561 = vmatprep.mubr.bf16.mxu0 %v1496
        %10562 = vmatmul.mubr.bf16.gmra.mrb[0].mxu0 %v1495
        %v10563 = vpop.f32.mrb[0].mxu0
        %v10564 = vadd.f32 %v10451, %v10563
        %v10565 = vpop.f32.mrb[0].mxu0
        %v10566 = vadd.f32 %v10453, %v10565
        %v10567 = vpop.f32.mrb[0].mxu0
        %v10568 = vadd.f32 %v10455, %v10567
        %v10569 = vpop.f32.mrb[0].mxu0
        %v10570 = vadd.f32 %v10457, %v10569
        %10571 = vmatprep.mubr.bf16.mxu0 %v1502
        %10572 = vmatmul.mubr.bf16.gmra.mrb[0].mxu0 %v1501
        %v10573 = vpop.f32.mrb[0].mxu0
        %v10574 = vadd.f32 %v10461, %v10573
        %v10575 = vpop.f32.mrb[0].mxu0
        %v10576 = vadd.f32 %v10463, %v10575
        %v10577 = vpop.f32.mrb[0].mxu0
        %v10578 = vadd.f32 %v10465, %v10577
        %v10579 = vpop.f32.mrb[0].mxu0
        %v10580 = vadd.f32 %v10467, %v10579
        %10581 = vmatprep.mubr.bf16.mxu0 %v1508
        %10582 = vmatmul.mubr.bf16.gmra.mrb[0].mxu0 %v1507
        %v10583 = vpop.f32.mrb[0].mxu0
        %v10584 = vadd.f32 %v10471, %v10583
        %v10585 = vpop.f32.mrb[0].mxu0
        %v10586 = vadd.f32 %v10473, %v10585
        %v10587 = vpop.f32.mrb[0].mxu0
        %v10588 = vadd.f32 %v10475, %v10587
        %v10589 = vpop.f32.mrb[0].mxu0
        %v10590 = vadd.f32 %v10477, %v10589
        %10591 = vmatprep.mubr.bf16.mxu0 %v1514
        %10592 = vmatmul.mubr.bf16.gmra.mrb[0].mxu0 %v1513
        %v10593 = vpop.f32.mrb[0].mxu0
        %v10594 = vadd.f32 %v10481, %v10593
        %v10595 = vpop.f32.mrb[0].mxu0
        %v10596 = vadd.f32 %v10483, %v10595
        %v10597 = vpop.f32.mrb[0].mxu0
        %v10598 = vadd.f32 %v10485, %v10597
        %v10599 = vpop.f32.mrb[0].mxu0
        %v10600 = vadd.f32 %v10487, %v10599
        %10601 = vmatprep.mubr.bf16.mxu0 %v1520
        %10602 = vmatmul.mubr.bf16.gmra.mrb[0].mxu0 %v1519
        %v10603 = vpop.f32.mrb[0].mxu0
        %v10604 = vadd.f32 %v10491, %v10603
        %v10605 = vpop.f32.mrb[0].mxu0
        %v10606 = vadd.f32 %v10493, %v10605
        %v10607 = vpop.f32.mrb[0].mxu0
        %v10608 = vadd.f32 %v10495, %v10607
        %v10609 = vpop.f32.mrb[0].mxu0
        %v10610 = vadd.f32 %v10497, %v10609
        %10611 = vmatprep.mubr.bf16.mxu0 %v1526
        %10612 = vmatmul.mubr.bf16.gmra.mrb[0].mxu0 %v1525
        %v10613 = vpop.f32.mrb[0].mxu0
        %v10614 = vadd.f32 %v10501, %v10613
        %v10615 = vpop.f32.mrb[0].mxu0
        %v10616 = vadd.f32 %v10503, %v10615
        %v10617 = vpop.f32.mrb[0].mxu0
        %v10618 = vadd.f32 %v10505, %v10617
        %v10619 = vpop.f32.mrb[0].mxu0
        %v10620 = vadd.f32 %v10507, %v10619
        %10621 = vmatprep.mubr.bf16.mxu0 %v1532
        %10622 = vmatmul.mubr.bf16.gmra.mrb[0].mxu0 %v1531
        %v10623 = vpop.f32.mrb[0].mxu0
        %v10624 = vadd.f32 %v10511, %v10623
        %v10625 = vpop.f32.mrb[0].mxu0
        %v10626 = vadd.f32 %v10513, %v10625
        %v10627 = vpop.f32.mrb[0].mxu0
        %v10628 = vadd.f32 %v10515, %v10627
        %v10629 = vpop.f32.mrb[0].mxu0
        %v10630 = vadd.f32 %v10517, %v10629
        %10631 = vdwg.mxu0
        %v10632 = vpack.c.bf16 %v9880, %v9876
        %v10633 = vpack.c.bf16 %v9882, %v9878
        %v10634 = vpack.c.bf16 %v10219, %v10215
        %v10635 = vpack.c.bf16 %v10221, %v10217
        %v10636 = vpack.c.bf16 %v10558, %v10554
        %v10637 = vpack.c.bf16 %v10560, %v10556
        %v10638 = vpack.c.bf16 %v9890, %v9886
        %v10639 = vpack.c.bf16 %v9892, %v9888
        %v10640 = vpack.c.bf16 %v10229, %v10225
        %v10641 = vpack.c.bf16 %v10231, %v10227
        %v10642 = vpack.c.bf16 %v10568, %v10564
        %v10643 = vpack.c.bf16 %v10570, %v10566
        %v10644 = vpack.c.bf16 %v9900, %v9896
        %v10645 = vpack.c.bf16 %v9902, %v9898
        %v10646 = vpack.c.bf16 %v10239, %v10235
        %v10647 = vpack.c.bf16 %v10241, %v10237
        %v10648 = vpack.c.bf16 %v10578, %v10574
        %v10649 = vpack.c.bf16 %v10580, %v10576
        %v10650 = vpack.c.bf16 %v9910, %v9906
        %v10651 = vpack.c.bf16 %v9912, %v9908
        %v10652 = vpack.c.bf16 %v10249, %v10245
        %v10653 = vpack.c.bf16 %v10251, %v10247
        %v10654 = vpack.c.bf16 %v10588, %v10584
        %v10655 = vpack.c.bf16 %v10590, %v10586
        %v10656 = vpack.c.bf16 %v9920, %v9916
        %v10657 = vpack.c.bf16 %v9922, %v9918
        %v10658 = vpack.c.bf16 %v10259, %v10255
        %v10659 = vpack.c.bf16 %v10261, %v10257
        %v10660 = vpack.c.bf16 %v10598, %v10594
        %v10661 = vpack.c.bf16 %v10600, %v10596
        %v10662 = vpack.c.bf16 %v9930, %v9926
        %v10663 = vpack.c.bf16 %v9932, %v9928
        %v10664 = vpack.c.bf16 %v10269, %v10265
        %v10665 = vpack.c.bf16 %v10271, %v10267
        %v10666 = vpack.c.bf16 %v10608, %v10604
        %v10667 = vpack.c.bf16 %v10610, %v10606
        %v10668 = vpack.c.bf16 %v9940, %v9936
        %v10669 = vpack.c.bf16 %v9942, %v9938
        %v10670 = vpack.c.bf16 %v10279, %v10275
        %v10671 = vpack.c.bf16 %v10281, %v10277
        %v10672 = vpack.c.bf16 %v10618, %v10614
        %v10673 = vpack.c.bf16 %v10620, %v10616
        %v10674 = vpack.c.bf16 %v9950, %v9946
        %v10675 = vpack.c.bf16 %v9952, %v9948
        %v10676 = vpack.c.bf16 %v10289, %v10285
        %v10677 = vpack.c.bf16 %v10291, %v10287
        %v10678 = vpack.c.bf16 %v10628, %v10624
        %v10679 = vpack.c.bf16 %v10630, %v10626
        %v10728 = vunpack.c.l.b16 %v10632
        %v10729 = vunpack.c.l.b16 %v10633
        %v10730 = vunpack.c.l.b16 %v10634
        %v10731 = vunpack.c.l.b16 %v10635
        %v10732 = vunpack.c.l.b16 %v10636
        %v10733 = vunpack.c.l.b16 %v10637
        %v10734 = vunpack.c.h.b16 %v10632
        %v10735 = vunpack.c.h.b16 %v10633
        %v10736 = vunpack.c.h.b16 %v10634
        %v10737 = vunpack.c.h.b16 %v10635
        %v10738 = vunpack.c.h.b16 %v10636
        %v10739 = vunpack.c.h.b16 %v10637
        %v10740 = vunpack.c.l.b16 %v10638
        %v10741 = vunpack.c.l.b16 %v10639
        %v10742 = vunpack.c.l.b16 %v10640
        %v10743 = vunpack.c.l.b16 %v10641
        %v10744 = vunpack.c.l.b16 %v10642
        %v10745 = vunpack.c.l.b16 %v10643
        %v10746 = vunpack.c.h.b16 %v10638
        %v10747 = vunpack.c.h.b16 %v10639
        %v10748 = vunpack.c.h.b16 %v10640
        %v10749 = vunpack.c.h.b16 %v10641
        %v10750 = vunpack.c.h.b16 %v10642
        %v10751 = vunpack.c.h.b16 %v10643
        %v10752 = vunpack.c.l.b16 %v10644
        %v10753 = vunpack.c.l.b16 %v10645
        %v10754 = vunpack.c.l.b16 %v10646
        %v10755 = vunpack.c.l.b16 %v10647
        %v10756 = vunpack.c.l.b16 %v10648
        %v10757 = vunpack.c.l.b16 %v10649
        %v10758 = vunpack.c.h.b16 %v10644
        %v10759 = vunpack.c.h.b16 %v10645
        %v10760 = vunpack.c.h.b16 %v10646
        %v10761 = vunpack.c.h.b16 %v10647
        %v10762 = vunpack.c.h.b16 %v10648
        %v10763 = vunpack.c.h.b16 %v10649
        %v10764 = vunpack.c.l.b16 %v10650
        %v10765 = vunpack.c.l.b16 %v10651
        %v10766 = vunpack.c.l.b16 %v10652
        %v10767 = vunpack.c.l.b16 %v10653
        %v10768 = vunpack.c.l.b16 %v10654
        %v10769 = vunpack.c.l.b16 %v10655
        %v10770 = vunpack.c.h.b16 %v10650
        %v10771 = vunpack.c.h.b16 %v10651
        %v10772 = vunpack.c.h.b16 %v10652
        %v10773 = vunpack.c.h.b16 %v10653
        %v10774 = vunpack.c.h.b16 %v10654
        %v10775 = vunpack.c.h.b16 %v10655
        %v10776 = vunpack.c.l.b16 %v10656
        %v10777 = vunpack.c.l.b16 %v10657
        %v10778 = vunpack.c.l.b16 %v10658
        %v10779 = vunpack.c.l.b16 %v10659
        %v10780 = vunpack.c.l.b16 %v10660
        %v10781 = vunpack.c.l.b16 %v10661
        %v10782 = vunpack.c.h.b16 %v10656
        %v10783 = vunpack.c.h.b16 %v10657
        %v10784 = vunpack.c.h.b16 %v10658
        %v10785 = vunpack.c.h.b16 %v10659
        %v10786 = vunpack.c.h.b16 %v10660
        %v10787 = vunpack.c.h.b16 %v10661
        %v10788 = vunpack.c.l.b16 %v10662
        %v10789 = vunpack.c.l.b16 %v10663
        %v10790 = vunpack.c.l.b16 %v10664
        %v10791 = vunpack.c.l.b16 %v10665
        %v10792 = vunpack.c.l.b16 %v10666
        %v10793 = vunpack.c.l.b16 %v10667
        %v10794 = vunpack.c.h.b16 %v10662
        %v10795 = vunpack.c.h.b16 %v10663
        %v10796 = vunpack.c.h.b16 %v10664
        %v10797 = vunpack.c.h.b16 %v10665
        %v10798 = vunpack.c.h.b16 %v10666
        %v10799 = vunpack.c.h.b16 %v10667
        %v10800 = vunpack.c.l.b16 %v10668
        %v10801 = vunpack.c.l.b16 %v10669
        %v10802 = vunpack.c.l.b16 %v10670
        %v10803 = vunpack.c.l.b16 %v10671
        %v10804 = vunpack.c.l.b16 %v10672
        %v10805 = vunpack.c.l.b16 %v10673
        %v10806 = vunpack.c.h.b16 %v10668
        %v10807 = vunpack.c.h.b16 %v10669
        %v10808 = vunpack.c.h.b16 %v10670
        %v10809 = vunpack.c.h.b16 %v10671
        %v10810 = vunpack.c.h.b16 %v10672
        %v10811 = vunpack.c.h.b16 %v10673
        %v10812 = vunpack.c.l.b16 %v10674
        %v10813 = vunpack.c.l.b16 %v10675
        %v10814 = vunpack.c.l.b16 %v10676
        %v10815 = vunpack.c.l.b16 %v10677
        %v10816 = vunpack.c.l.b16 %v10678
        %v10817 = vunpack.c.l.b16 %v10679
        %v10818 = vunpack.c.h.b16 %v10674
        %v10819 = vunpack.c.h.b16 %v10675
        %v10820 = vunpack.c.h.b16 %v10676
        %v10821 = vunpack.c.h.b16 %v10677
        %v10822 = vunpack.c.h.b16 %v10678
        %v10823 = vunpack.c.h.b16 %v10679
        %v10824 = vpack.c.b16 %v10729, %v10728
        %v10825 = vpack.c.b16 %v10731, %v10730
        %v10826 = vpack.c.b16 %v10733, %v10732
        %v10827 = vpack.c.b16 %v10735, %v10734
        %v10828 = vpack.c.b16 %v10737, %v10736
        %v10829 = vpack.c.b16 %v10739, %v10738
        %v10830 = vpack.c.b16 %v10741, %v10740
        %v10831 = vpack.c.b16 %v10743, %v10742
        %v10832 = vpack.c.b16 %v10745, %v10744
        %v10833 = vpack.c.b16 %v10747, %v10746
        %v10834 = vpack.c.b16 %v10749, %v10748
        %v10835 = vpack.c.b16 %v10751, %v10750
        %v10836 = vpack.c.b16 %v10753, %v10752
        %v10837 = vpack.c.b16 %v10755, %v10754
        %v10838 = vpack.c.b16 %v10757, %v10756
        %v10839 = vpack.c.b16 %v10759, %v10758
        %v10840 = vpack.c.b16 %v10761, %v10760
        %v10841 = vpack.c.b16 %v10763, %v10762
        %v10842 = vpack.c.b16 %v10765, %v10764
        %v10843 = vpack.c.b16 %v10767, %v10766
        %v10844 = vpack.c.b16 %v10769, %v10768
        %v10845 = vpack.c.b16 %v10771, %v10770
        %v10846 = vpack.c.b16 %v10773, %v10772
        %v10847 = vpack.c.b16 %v10775, %v10774
        %v10848 = vpack.c.b16 %v10777, %v10776
        %v10849 = vpack.c.b16 %v10779, %v10778
        %v10850 = vpack.c.b16 %v10781, %v10780
        %v10851 = vpack.c.b16 %v10783, %v10782
        %v10852 = vpack.c.b16 %v10785, %v10784
        %v10853 = vpack.c.b16 %v10787, %v10786
        %v10854 = vpack.c.b16 %v10789, %v10788
        %v10855 = vpack.c.b16 %v10791, %v10790
        %v10856 = vpack.c.b16 %v10793, %v10792
        %v10857 = vpack.c.b16 %v10795, %v10794
        %v10858 = vpack.c.b16 %v10797, %v10796
        %v10859 = vpack.c.b16 %v10799, %v10798
        %v10860 = vpack.c.b16 %v10801, %v10800
        %v10861 = vpack.c.b16 %v10803, %v10802
        %v10862 = vpack.c.b16 %v10805, %v10804
        %v10863 = vpack.c.b16 %v10807, %v10806
        %v10864 = vpack.c.b16 %v10809, %v10808
        %v10865 = vpack.c.b16 %v10811, %v10810
        %v10866 = vpack.c.b16 %v10813, %v10812
        %v10867 = vpack.c.b16 %v10815, %v10814
        %v10868 = vpack.c.b16 %v10817, %v10816
        %v10869 = vpack.c.b16 %v10819, %v10818
        %v10870 = vpack.c.b16 %v10821, %v10820
        %v10871 = vpack.c.b16 %v10823, %v10822
        %10920 = vst [vmem:[%s551] sm:$0xff] %v10824
        %10921 = vst [vmem:[%s551 + $0x8] sm:$0xff] %v10825
        %10922 = vst [vmem:[%s551 + $0x10] sm:$0xff] %v10826
        %10923 = vst [vmem:[%s551 + $0x18] sm:$0xff] %v10827
        %10924 = vst [vmem:[%s551 + $0x20] sm:$0xff] %v10828
        %10925 = vst [vmem:[%s551 + $0x28] sm:$0xff] %v10829
        %10926 = vst [vmem:[%s551 + $0x30] sm:$0xff] %v10830
        %10927 = vst [vmem:[%s551 + $0x38] sm:$0xff] %v10831
        %10928 = vst [vmem:[%s551 + $0x40] sm:$0xff] %v10832
        %10929 = vst [vmem:[%s551 + $0x48] sm:$0xff] %v10833
        %10930 = vst [vmem:[%s551 + $0x50] sm:$0xff] %v10834
        %10931 = vst [vmem:[%s551 + $0x58] sm:$0xff] %v10835
        %10932 = vst [vmem:[%s551 + $0x60] sm:$0xff] %v10836
        %10933 = vst [vmem:[%s551 + $0x68] sm:$0xff] %v10837
        %10934 = vst [vmem:[%s551 + $0x70] sm:$0xff] %v10838
        %10935 = vst [vmem:[%s551 + $0x78] sm:$0xff] %v10839
        %10936 = vst [vmem:[%s551 + $0x80] sm:$0xff] %v10840
        %10937 = vst [vmem:[%s551 + $0x88] sm:$0xff] %v10841
        %10938 = vst [vmem:[%s551 + $0x90] sm:$0xff] %v10842
        %10939 = vst [vmem:[%s551 + $0x98] sm:$0xff] %v10843
        %10940 = vst [vmem:[%s551 + $0xa0] sm:$0xff] %v10844
        %10941 = vst [vmem:[%s551 + $0xa8] sm:$0xff] %v10845
        %10942 = vst [vmem:[%s551 + $0xb0] sm:$0xff] %v10846
        %10943 = vst [vmem:[%s551 + $0xb8] sm:$0xff] %v10847
        %10944 = vst [vmem:[%s551 + $0xc0] sm:$0xff] %v10848
        %10945 = vst [vmem:[%s551 + $0xc8] sm:$0xff] %v10849
        %10946 = vst [vmem:[%s551 + $0xd0] sm:$0xff] %v10850
        %10947 = vst [vmem:[%s551 + $0xd8] sm:$0xff] %v10851
        %10948 = vst [vmem:[%s551 + $0xe0] sm:$0xff] %v10852
        %10949 = vst [vmem:[%s551 + $0xe8] sm:$0xff] %v10853
        %10950 = vst [vmem:[%s551 + $0xf0] sm:$0xff] %v10854
        %10951 = vst [vmem:[%s551 + $0xf8] sm:$0xff] %v10855
        %10952 = vst [vmem:[%s551 + $0x100] sm:$0xff] %v10856
        %10953 = vst [vmem:[%s551 + $0x108] sm:$0xff] %v10857
        %10954 = vst [vmem:[%s551 + $0x110] sm:$0xff] %v10858
        %10955 = vst [vmem:[%s551 + $0x118] sm:$0xff] %v10859
        %10956 = vst [vmem:[%s551 + $0x120] sm:$0xff] %v10860
        %10957 = vst [vmem:[%s551 + $0x128] sm:$0xff] %v10861
        %10958 = vst [vmem:[%s551 + $0x130] sm:$0xff] %v10862
        %10959 = vst [vmem:[%s551 + $0x138] sm:$0xff] %v10863
        %10960 = vst [vmem:[%s551 + $0x140] sm:$0xff] %v10864
        %10961 = vst [vmem:[%s551 + $0x148] sm:$0xff] %v10865
        %10962 = vst [vmem:[%s551 + $0x150] sm:$0xff] %v10866
        %10963 = vst [vmem:[%s551 + $0x158] sm:$0xff] %v10867
        %10964 = vst [vmem:[%s551 + $0x160] sm:$0xff] %v10868
        %10965 = vst [vmem:[%s551 + $0x168] sm:$0xff] %v10869
        %10966 = vst [vmem:[%s551 + $0x170] sm:$0xff] %v10870
        %10967 = vst [vmem:[%s551 + $0x178] sm:$0xff] %v10871
        %s10968 = sand.u32 %s254, 1
        %s10969 = scalar_lea.sflag [#allocation4], %s10968
        %s10970 = sand.u32 %s254, 1
        %s10971 = smul.addr %s10970, 384
        %s10972 = scalar_lea.vmem [#allocation17], %s10971
        %s10973 = sand.u32 %s36, 1
        %s10974 = scalar_lea.sflag [#allocation19], %s10973
        %s10975 = sand.u32 %s282, 1
        %s10976 = smul.addr %s10975, 384
        %s10977 = scalar_lea.vmem [#allocation18], %s10976
        %s10978 = sand.u32 %s36, 1
        %s10979 = scalar_lea.sflag [#allocation19], %s10978
        %s10980 = sand.u32 %s310, 1
        %s10981 = smul.addr %s10980, 384
        %s10982 = scalar_lea.vmem [#allocation20], %s10981
        // Predicated region
        $region93: #{tpu_custom_call.1} parent=55 // pred_check
          %p10983 = pneg %p264
        $region94: #{tpu_custom_call.1} parent=55 // pred_check_branch
          %10985 = sbr.rel (%p10983) target = $region96
        $region95: #{tpu_custom_call.1} parent=55 // pred_region
          %s10986 = smul.u32 16, %s41
          %s10988 = ssub.s32 6144, 6144
          %10989 = vsyncadd %s10969, %s10988
          %s10990 = smul.addr %s10986, 6
          %s10991 = smul.addr %s40, 96
          %s10992 = sadd.s32 %s10990, %s10991
          %s10993 = smul.addr %s10992, 64
          %s10994 = scalar_lea.hbm %s9, %s10993
          %s10995 = sshll.u32 %s10972, 4
          %s10996 = int_to_ptr.vmem [resolvable:$true] %s10995
          %11001 = dma.vmem_to_hbm [thread:$0]  %s10996, 6144, %s10994, %s10969, 384, 384, 24
        $region96: #{tpu_custom_call.1} parent=55 // pred_fallthru
          _
        // Predicated region
        $region97: #{tpu_custom_call.1} parent=55 // pred_check
          %p11002 = pneg %p292
        $region98: #{tpu_custom_call.1} parent=55 // pred_check_branch
          %11004 = sbr.rel (%p11002) target = $region100
        $region99: #{tpu_custom_call.1} parent=55 // pred_region
          %s11005 = smul.u32 16, %s41
          %s11007 = ssub.s32 6144, 6144
          %11008 = vsyncadd %s10974, %s11007
          %s11009 = smul.addr %s11005, 6
          %s11010 = smul.addr %s40, 96
          %s11011 = sadd.s32 %s11009, %s11010
          %s11012 = smul.addr %s11011, 64
          %s11013 = scalar_lea.hbm %s10, %s11012
          %s11014 = sshll.u32 %s10977, 4
          %s11015 = int_to_ptr.vmem [resolvable:$true] %s11014
          %11020 = dma.vmem_to_hbm [thread:$0]  %s11015, 6144, %s11013, %s10974, 384, 384, 24
        $region100: #{tpu_custom_call.1} parent=55 // pred_fallthru
          _
        // Predicated region
        $region101: #{tpu_custom_call.1} parent=55 // pred_check
          %p11021 = pneg %p320
        $region102: #{tpu_custom_call.1} parent=55 // pred_check_branch
          %11023 = sbr.rel (%p11021) target = $region104
        $region103: #{tpu_custom_call.1} parent=55 // pred_region
          %s11024 = smul.u32 16, %s41
          %s11026 = ssub.s32 6144, 6144
          %11027 = vsyncadd %s10979, %s11026
          %s11028 = smul.addr %s11024, 6
          %s11029 = smul.addr %s40, 96
          %s11030 = sadd.s32 %s11028, %s11029
          %s11031 = smul.addr %s11030, 64
          %s11032 = scalar_lea.hbm %s11, %s11031
          %s11033 = sshll.u32 %s10982, 4
          %s11034 = int_to_ptr.vmem [resolvable:$true] %s11033
          %11039 = dma.vmem_to_hbm [thread:$0]  %s11034, 6144, %s11032, %s10979, 384, 384, 24
        $region104: #{tpu_custom_call.1} parent=55 // pred_fallthru
          _
      $region56: #{tpu_custom_call.1} parent=5 // pred_fallthru
        _
      %p11040 = scmp.le.s32.totalorder 2, %s31
      // Predicated region
      $region105: #{tpu_custom_call.1} parent=5 // pred_check
        %p11041 = pneg %p11040
      $region106: #{tpu_custom_call.1} parent=5 // pred_check_branch
        %11043 = sbr.rel (%p11041) target = $region108
      $region107: #{tpu_custom_call.1} parent=5 // pred_region
        %s11044 = ssub.s32 %s31, 2
        // Predicated region
        $region109: #{tpu_custom_call.1} parent=107 // pred_check
          %p11045 = pneg %p270
        $region110: #{tpu_custom_call.1} parent=107 // pred_check_branch
          %11047 = sbr.rel (%p11045) target = $region112
        $region111: #{tpu_custom_call.1} parent=107 // pred_region
          %s11048 = sand.u32 %s255, 1
          %s11049 = scalar_lea.sflag [#allocation4], %s11048
          %s11050 = sand.u32 %s255, 1
          %s11051 = smul.addr %s11050, 384
          %s11052 = scalar_lea.vmem [#allocation17], %s11051
          %11053 = dma.done %s11049, 6144
        $region112: #{tpu_custom_call.1} parent=107 // pred_fallthru
          _
        // Predicated region
        $region113: #{tpu_custom_call.1} parent=107 // pred_check
          %p11054 = pneg %p298
        $region114: #{tpu_custom_call.1} parent=107 // pred_check_branch
          %11056 = sbr.rel (%p11054) target = $region116
        $region115: #{tpu_custom_call.1} parent=107 // pred_region
          %s11057 = sand.u32 %s37, 1
          %s11058 = scalar_lea.sflag [#allocation19], %s11057
          %s11059 = sand.u32 %s283, 1
          %s11060 = smul.addr %s11059, 384
          %s11061 = scalar_lea.vmem [#allocation18], %s11060
          %11062 = dma.done %s11058, 6144
        $region116: #{tpu_custom_call.1} parent=107 // pred_fallthru
          _
        // Predicated region
        $region117: #{tpu_custom_call.1} parent=107 // pred_check
          %p11063 = pneg %p326
        $region118: #{tpu_custom_call.1} parent=107 // pred_check_branch
          %11065 = sbr.rel (%p11063) target = $region120
        $region119: #{tpu_custom_call.1} parent=107 // pred_region
          %s11066 = sand.u32 %s37, 1
          %s11067 = scalar_lea.sflag [#allocation19], %s11066
          %s11068 = sand.u32 %s311, 1
          %s11069 = smul.addr %s11068, 384
          %s11070 = scalar_lea.vmem [#allocation20], %s11069
          %11071 = dma.done %s11067, 6144
        $region120: #{tpu_custom_call.1} parent=107 // pred_fallthru
          _
      $region108: #{tpu_custom_call.1} parent=5 // pred_fallthru
        _
    $region6: #{tpu_custom_call.1} parent=1 // loop_footer
      %s35 = sadd.s32 1, %s31
    $region7: #{tpu_custom_call.1} parent=1 // loop_footer_branch
      %30 = sbr.rel target = $region3
    $region8: #{tpu_custom_call.1} parent=1 // loop_exit
      _
    %11072 = vsyncpa [#allocation3], 1
    %s11073 = scalar_lea.sflag [#allocation3], 1
    %11074 = vsyncpa %s11073, 1
    %11075 = vsyncpa [#allocation6], 1
    %11076 = vsyncpa [#allocation9], 1
    %11077 = vsyncpa [#allocation12], 1
    %11078 = vsyncpa [#allocation15], 1
    %11079 = vsyncpa [#allocation4], 1
    %s11080 = scalar_lea.sflag [#allocation4], 1
    %11081 = vsyncpa %s11080, 1
    %11082 = vsyncpa [#allocation19], 1
    %s11083 = scalar_lea.sflag [#allocation19], 1
    %11084 = vsyncpa %s11083, 1

</llo_original>
